<compile_context>
chip_gen: v6e
topology: v6e:2x2x1
jax: 0.10.0
libtpu: 0.0.40
codegen_flags: <defaults>
</compile_context>

<pallas_src>
import functools

import jax
import jax.numpy as jnp
import numpy as np
from jax.experimental import pallas as pl
from jax.experimental.pallas import tpu as pltpu


def _round_up(n, m):
    return ((n + m - 1) // m) * m


# ------------------------------ fused kernel --------------------------------

def _make_fused_kernel(*, B, T, Din, K, H_pad, nlayers, noutput):
    Hp = H_pad
    G = 4 * Hp           # padded gates per timestep, PyTorch order i, f, g, o
    L = nlayers

    def kernel(x_ref, enc_ref, wih0_ref, bias_ref, wwave_ref, dec_ref,
               h0_ref, c0_ref, out_ref, xp0_scr, hlast_scr):
        # ---------------- encoder Linear (off the serial path) --------------
        z = (jnp.dot(x_ref[...], enc_ref[0:K, :],
                     preferred_element_type=jnp.float32)
             + enc_ref[K:K + 1, :])                            # (B, T*Din)

        # ------ hoisted layer-0 input projection x_t @ Wih0^T + b0 ----------
        wih0 = wih0_ref[...]                                   # (Din, G)
        b0 = bias_ref[0:1, :]                                  # (1, G)
        for t in range(T):                                     # off the chain
            xp0_scr[t * B:(t + 1) * B, :] = (
                jnp.dot(z[:, t * Din:(t + 1) * Din], wih0,
                        preferred_element_type=jnp.float32) + b0)

        # ------------------------ wavefront recurrence ----------------------
        wwave = wwave_ref[...]                                 # (L*Hp, L*G)
        b_l = [bias_ref[l:l + 1, :] if l > 0 else None for l in range(L)]
        h_state = [h0_ref[l] for l in range(L)]                # (B, Hp) each
        c_state = [c0_ref[l] for l in range(L)]

        for s in range(T + L - 1):                             # static unroll
            lhs = (h_state[0] if L == 1
                   else jnp.concatenate(h_state, axis=1))      # (B, L*Hp)
            # one fused MXU call for all live layers this wavefront step
            gates_cat = jnp.dot(lhs, wwave,
                                preferred_element_type=jnp.float32)  # (B, L*G)
            for l in range(L):
                t = s - l
                if t < 0 or t >= T:
                    continue                       # layer idle at this step
                g = gates_cat[:, l * G:(l + 1) * G]            # vreg-aligned
                if l == 0:
                    g = g + xp0_scr[t * B:(t + 1) * B, :]
                else:
                    g = g + b_l[l]
                # each gate block is a full 128-lane vreg block: no extracts
                i_g = jax.nn.sigmoid(g[:, 0 * Hp:1 * Hp])
                f_g = jax.nn.sigmoid(g[:, 1 * Hp:2 * Hp])
                g_g = jnp.tanh(g[:, 2 * Hp:3 * Hp])
                o_g = jax.nn.sigmoid(g[:, 3 * Hp:4 * Hp])
                c_new = f_g * c_state[l] + i_g * g_g
                h_new = o_g * jnp.tanh(c_new)
                c_state[l] = c_new
                h_state[l] = h_new
                if l == L - 1:                     # only last layer's seq kept
                    hlast_scr[t * B:(t + 1) * B, :] = h_new
            # inter-layer LSTM dropout: identity in eval mode

        # ---------------- decoder (dropout before it = identity) ------------
        out_ref[...] = (jnp.dot(hlast_scr[...], dec_ref[0:Hp, :],
                                preferred_element_type=jnp.float32)
                        + dec_ref[Hp:Hp + 1, :])               # (T*B, nout)

    return kernel


# --------------------------- one-time weight prep ----------------------------

def prepare_weights(params, *, ninput, n_rbm_unit, nhid, nlayers, noutput):
    """Pack / zero-pad weights into kernel slabs. Call ONCE, reuse per forward."""
    H, L = nhid, nlayers
    Hp = _round_up(H, 128)
    G = 4 * Hp
    T, Din = ninput, n_rbm_unit
    f32 = jnp.float32

    def pad_gate_cols(w_t, rows_pad):
        # w_t: (rows, 4H), gate order i,f,g,o -> (rows_pad, 4*Hp), zero padded
        rows = w_t.shape[0]
        out = jnp.zeros((rows_pad, G), f32)
        for k in range(4):
            out = out.at[:rows, k * Hp:k * Hp + H].set(w_t[:, k * H:(k + 1) * H])
        return out

    def pad_gate_vec(b):
        out = jnp.zeros((G,), f32)
        for k in range(4):
            out = out.at[k * Hp:k * Hp + H].set(b[k * H:(k + 1) * H])
        return out

    # encoder: W^T with the bias appended as one extra row  -> (K+1, T*Din)
    enc_slab = jnp.concatenate(
        [jnp.transpose(params["enc_w"]).astype(f32),
         params["enc_b"].reshape(1, T * Din).astype(f32)], axis=0)

    # layer-0 input projection weight (Din contraction, gate cols padded)
    wih0_slab = pad_gate_cols(jnp.transpose(params["lstm"][0][0]), rows_pad=Din)

    # combined LSTM biases (b_ih + b_hh), one row per layer   -> (L, G)
    bias_slab = jnp.stack(
        [pad_gate_vec(params["lstm"][l][2] + params["lstm"][l][3])
         for l in range(L)], axis=0)

    # wavefront weight: block (l, l) = W_hh_l^T, block (l, l+1) = W_ih_{l+1}^T
    wwave = jnp.zeros((L * Hp, L * G), f32)
    for l in range(L):
        whh_p = pad_gate_cols(jnp.transpose(params["lstm"][l][1]), rows_pad=Hp)
        wwave = wwave.at[l * Hp:(l + 1) * Hp, l * G:(l + 1) * G].set(whh_p)
        if l + 1 < L:
            wih_p = pad_gate_cols(jnp.transpose(params["lstm"][l + 1][0]),
                                  rows_pad=Hp)
            wwave = wwave.at[l * Hp:(l + 1) * Hp,
                             (l + 1) * G:(l + 2) * G].set(wih_p)

    # decoder: W^T (rows zero-padded to Hp) with bias as the last row
    dec_slab = jnp.zeros((Hp + 1, noutput), f32)
    dec_slab = dec_slab.at[:H, :].set(jnp.transpose(params["dec_w"]))
    dec_slab = dec_slab.at[Hp, :].set(params["dec_b"])

    return {"enc": enc_slab, "wih0": wih0_slab, "bias": bias_slab,
            "wwave": wwave, "dec": dec_slab}


# ------------------------------ model wrapper --------------------------------

def init_params(key, ninput, n_rbm_unit, nhid, nlayers, noutput):
    """Deterministic parameter init mirroring the PyTorch __init__ shapes."""
    initrange = 0.1
    keys = jax.random.split(key, 2 + 4 * nlayers)
    params = {}
    params["enc_w"] = jax.random.uniform(
        keys[0], (ninput * n_rbm_unit, ninput * ninput),
        minval=-initrange, maxval=initrange, dtype=jnp.float32)
    params["enc_b"] = jnp.zeros((ninput * n_rbm_unit,), jnp.float32)
    params["dec_w"] = jax.random.uniform(
        keys[1], (noutput, nhid),
        minval=-initrange, maxval=initrange, dtype=jnp.float32)
    params["dec_b"] = jnp.zeros((noutput,), jnp.float32)
    k = 1.0 / np.sqrt(nhid)
    lstm = []
    for l in range(nlayers):
        d_in = n_rbm_unit if l == 0 else nhid
        k0, k1, k2, k3 = keys[2 + 4 * l: 2 + 4 * (l + 1)]
        w_ih = jax.random.uniform(k0, (4 * nhid, d_in), minval=-k, maxval=k,
                                  dtype=jnp.float32)
        w_hh = jax.random.uniform(k1, (4 * nhid, nhid), minval=-k, maxval=k,
                                  dtype=jnp.float32)
        b_ih = jax.random.uniform(k2, (4 * nhid,), minval=-k, maxval=k,
                                  dtype=jnp.float32)
        b_hh = jax.random.uniform(k3, (4 * nhid,), minval=-k, maxval=k,
                                  dtype=jnp.float32)
        lstm.append((w_ih, w_hh, b_ih, b_hh))
    params["lstm"] = lstm
    return params


def rbm_lstm_forward(prep, x, hidden, *, ninput, n_rbm_unit, nhid, nlayers,
                     noutput):
    """Mirrors RBMLSTMModel.forward (eval mode). x: (B, ninput, ninput)."""
    B = x.shape[0]
    T, Din = ninput, n_rbm_unit       # seq_len / LSTM input size
    K = ninput * ninput               # encoder in_features (== T*Din here)
    H, L = nhid, nlayers
    Hp = _round_up(H, 128)
    G = 4 * Hp

    x_flat = x.reshape(B, K).astype(jnp.float32)
    h0, c0 = hidden                   # each (L, B, H)
    h0p = jnp.zeros((L, B, Hp), jnp.float32).at[:, :, :H].set(h0)
    c0p = jnp.zeros((L, B, Hp), jnp.float32).at[:, :, :H].set(c0)

    kernel = _make_fused_kernel(B=B, T=T, Din=Din, K=K, H_pad=Hp,
                                nlayers=L, noutput=noutput)

    out = pl.pallas_call(
        kernel,
        out_shape=jax.ShapeDtypeStruct((T * B, noutput), jnp.float32),
        scratch_shapes=[pltpu.VMEM((T * B, G), jnp.float32),    # xp0, time-major
                        pltpu.VMEM((T * B, Hp), jnp.float32)],  # last-layer h seq
    )(x_flat, prep["enc"], prep["wih0"], prep["bias"], prep["wwave"],
      prep["dec"], h0p, c0p)

    # kernel rows are time-major (t*B + b); present batch_first (B, T, nout)
    return jnp.transpose(out.reshape(T, B, noutput), (1, 0, 2))


# --------------------------- pure-JAX reference ------------------------------

def reference_forward(params, x, hidden, *, ninput, n_rbm_unit, nhid, nlayers,
                      noutput):
    B = x.shape[0]
    z = x.reshape(B, ninput * n_rbm_unit) @ params["enc_w"].T + params["enc_b"]
    z = z.reshape(B, ninput, n_rbm_unit)
    h0_all, c0_all = hidden
    seq = z
    for l in range(nlayers):
        w_ih, w_hh, b_ih, b_hh = params["lstm"][l]
        h = h0_all[l]
        c = c0_all[l]
        ys = []
        for t in range(ninput):
            g = seq[:, t, :] @ w_ih.T + b_ih + h @ w_hh.T + b_hh
            i_g = jax.nn.sigmoid(g[:, 0 * nhid:1 * nhid])
            f_g = jax.nn.sigmoid(g[:, 1 * nhid:2 * nhid])
            g_g = jnp.tanh(g[:, 2 * nhid:3 * nhid])
            o_g = jax.nn.sigmoid(g[:, 3 * nhid:4 * nhid])
            c = f_g * c + i_g * g_g
            h = o_g * jnp.tanh(c)
            ys.append(h)
        seq = jnp.stack(ys, axis=1)
    return seq @ params["dec_w"].T + params["dec_b"]


# ----------------------------------- main ------------------------------------

if __name__ == "__main__":
    # The torch reshape to (-1, ninput * n_rbm_unit) only matches the encoder's
    # in_features (ninput*ninput) when n_rbm_unit == ninput, so they are equal here.
    B, ninput, n_rbm_unit, nhid, nlayers, noutput = 2, 16, 16, 32, 2, 8

    key = jax.random.PRNGKey(0)
    k_param, k_x = jax.random.split(key)
    params = init_params(k_param, ninput, n_rbm_unit, nhid, nlayers, noutput)

    x = jax.random.normal(k_x, (B, ninput, ninput), dtype=jnp.float32)
    hidden = (jnp.zeros((nlayers, B, nhid), jnp.float32),
              jnp.zeros((nlayers, B, nhid), jnp.float32))

    # One-time weight packing, kept OUT of the per-call jit so the padded slabs
    # are not re-materialized to HBM on every forward.
    prep = prepare_weights(params, ninput=ninput, n_rbm_unit=n_rbm_unit,
                           nhid=nhid, nlayers=nlayers, noutput=noutput)

    fwd = jax.jit(functools.partial(
        rbm_lstm_forward, ninput=ninput, n_rbm_unit=n_rbm_unit, nhid=nhid,
        nlayers=nlayers, noutput=noutput))

    out = fwd(prep, x, hidden)
    out = jax.block_until_ready(out)
    assert out.shape == (B, ninput, noutput), out.shape

    ref = reference_forward(
        params, x, hidden, ninput=ninput, n_rbm_unit=n_rbm_unit, nhid=nhid,
        nlayers=nlayers, noutput=noutput)
    np.testing.assert_allclose(np.asarray(out), np.asarray(ref),
                               rtol=2e-4, atol=2e-4)

    print("KERNEL_OK")
</pallas_src>

<mosaic_0001>
module attributes {stable_mosaic.version = 11 : i64} {
  func.func @kernel(%arg0: memref<2x256xf32, #tpu.memory_space<vmem>>, %arg1: memref<257x256xf32, #tpu.memory_space<vmem>>, %arg2: memref<16x512xf32, #tpu.memory_space<vmem>>, %arg3: memref<2x512xf32, #tpu.memory_space<vmem>>, %arg4: memref<256x1024xf32, #tpu.memory_space<vmem>>, %arg5: memref<129x8xf32, #tpu.memory_space<vmem>>, %arg6: memref<2x2x128xf32, #tpu.memory_space<vmem>>, %arg7: memref<2x2x128xf32, #tpu.memory_space<vmem>>, %arg8: memref<32x8xf32, #tpu.memory_space<vmem>>, %arg9: memref<32x512xf32, #tpu.memory_space<vmem>>, %arg10: memref<32x128xf32, #tpu.memory_space<vmem>>) attributes {dimension_semantics = [], scalar_prefetch = 0 : i64, scratch_operands = 2 : i64, tpu.core_type = #tpu.core_type<tc>} {
    %c0 = arith.constant 0 : index
    %c0_0 = arith.constant 0 : index
    %0 = vector.load %arg0[%c0, %c0_0] : memref<2x256xf32, #tpu.memory_space<vmem>>, vector<2x256xf32>
    %c0_1 = arith.constant 0 : index
    %c0_2 = arith.constant 0 : index
    %1 = vector.load %arg1[%c0_1, %c0_2] : memref<257x256xf32, #tpu.memory_space<vmem>>, vector<256x256xf32>
    %cst = arith.constant dense<0.000000e+00> : vector<2x256xf32>
    %2 = tpu.matmul %0, %1, %cst {dimension_numbers = #tpu.dot_dimension_numbers<[1], [0], [0], [1], [0, 0, 1, 1], [], []>} : vector<2x256xf32>, vector<256x256xf32>, vector<2x256xf32> -> vector<2x256xf32>
    %c256 = arith.constant 256 : index
    %c0_3 = arith.constant 0 : index
    %3 = vector.load %arg1[%c256, %c0_3] : memref<257x256xf32, #tpu.memory_space<vmem>>, vector<1x256xf32>
    %4 = vector.broadcast %3 : vector<1x256xf32> to vector<2x256xf32>
    %5 = arith.addf %2, %4 : vector<2x256xf32>
    %c0_4 = arith.constant 0 : index
    %c0_5 = arith.constant 0 : index
    %6 = vector.load %arg2[%c0_4, %c0_5] : memref<16x512xf32, #tpu.memory_space<vmem>>, vector<16x512xf32>
    %c0_6 = arith.constant 0 : index
    %c0_7 = arith.constant 0 : index
    %7 = vector.load %arg3[%c0_6, %c0_7] : memref<2x512xf32, #tpu.memory_space<vmem>>, vector<1x512xf32>
    %8 = vector.extract_strided_slice %5 {offsets = [0, 0], sizes = [2, 16], strides = [1, 1]} : vector<2x256xf32> to vector<2x16xf32>
    %cst_8 = arith.constant dense<0.000000e+00> : vector<2x512xf32>
    %9 = tpu.matmul %8, %6, %cst_8 {dimension_numbers = #tpu.dot_dimension_numbers<[1], [0], [0], [1], [0, 0, 1, 1], [], []>} : vector<2x16xf32>, vector<16x512xf32>, vector<2x512xf32> -> vector<2x512xf32>
    %10 = vector.broadcast %7 : vector<1x512xf32> to vector<2x512xf32>
    %11 = arith.addf %9, %10 : vector<2x512xf32>
    %c0_9 = arith.constant 0 : index
    %c0_10 = arith.constant 0 : index
    %12 = vector.load %arg9[%c0_9, %c0_10] : memref<32x512xf32, #tpu.memory_space<vmem>>, vector<2x512xf32>
    tpu.vector_store %arg9[%c0_9, %c0_10], %11 {strides = array<i32>} : memref<32x512xf32, #tpu.memory_space<vmem>>, vector<2x512xf32>,
    %13 = vector.extract_strided_slice %5 {offsets = [0, 16], sizes = [2, 16], strides = [1, 1]} : vector<2x256xf32> to vector<2x16xf32>
    %cst_11 = arith.constant dense<0.000000e+00> : vector<2x512xf32>
    %14 = tpu.matmul %13, %6, %cst_11 {dimension_numbers = #tpu.dot_dimension_numbers<[1], [0], [0], [1], [0, 0, 1, 1], [], []>} : vector<2x16xf32>, vector<16x512xf32>, vector<2x512xf32> -> vector<2x512xf32>
    %15 = vector.broadcast %7 : vector<1x512xf32> to vector<2x512xf32>
    %16 = arith.addf %14, %15 : vector<2x512xf32>
    %c2 = arith.constant 2 : index
    %c0_12 = arith.constant 0 : index
    %17 = vector.load %arg9[%c2, %c0_12] : memref<32x512xf32, #tpu.memory_space<vmem>>, vector<2x512xf32>
    tpu.vector_store %arg9[%c2, %c0_12], %16 {strides = array<i32>} : memref<32x512xf32, #tpu.memory_space<vmem>>, vector<2x512xf32>,
    %18 = vector.extract_strided_slice %5 {offsets = [0, 32], sizes = [2, 16], strides = [1, 1]} : vector<2x256xf32> to vector<2x16xf32>
    %cst_13 = arith.constant dense<0.000000e+00> : vector<2x512xf32>
    %19 = tpu.matmul %18, %6, %cst_13 {dimension_numbers = #tpu.dot_dimension_numbers<[1], [0], [0], [1], [0, 0, 1, 1], [], []>} : vector<2x16xf32>, vector<16x512xf32>, vector<2x512xf32> -> vector<2x512xf32>
    %20 = vector.broadcast %7 : vector<1x512xf32> to vector<2x512xf32>
    %21 = arith.addf %19, %20 : vector<2x512xf32>
    %c4 = arith.constant 4 : index
    %c0_14 = arith.constant 0 : index
    %22 = vector.load %arg9[%c4, %c0_14] : memref<32x512xf32, #tpu.memory_space<vmem>>, vector<2x512xf32>
    tpu.vector_store %arg9[%c4, %c0_14], %21 {strides = array<i32>} : memref<32x512xf32, #tpu.memory_space<vmem>>, vector<2x512xf32>,
    %23 = vector.extract_strided_slice %5 {offsets = [0, 48], sizes = [2, 16], strides = [1, 1]} : vector<2x256xf32> to vector<2x16xf32>
    %cst_15 = arith.constant dense<0.000000e+00> : vector<2x512xf32>
    %24 = tpu.matmul %23, %6, %cst_15 {dimension_numbers = #tpu.dot_dimension_numbers<[1], [0], [0], [1], [0, 0, 1, 1], [], []>} : vector<2x16xf32>, vector<16x512xf32>, vector<2x512xf32> -> vector<2x512xf32>
    %25 = vector.broadcast %7 : vector<1x512xf32> to vector<2x512xf32>
    %26 = arith.addf %24, %25 : vector<2x512xf32>
    %c6 = arith.constant 6 : index
    %c0_16 = arith.constant 0 : index
    %27 = vector.load %arg9[%c6, %c0_16] : memref<32x512xf32, #tpu.memory_space<vmem>>, vector<2x512xf32>
    tpu.vector_store %arg9[%c6, %c0_16], %26 {strides = array<i32>} : memref<32x512xf32, #tpu.memory_space<vmem>>, vector<2x512xf32>,
    %28 = vector.extract_strided_slice %5 {offsets = [0, 64], sizes = [2, 16], strides = [1, 1]} : vector<2x256xf32> to vector<2x16xf32>
    %cst_17 = arith.constant dense<0.000000e+00> : vector<2x512xf32>
    %29 = tpu.matmul %28, %6, %cst_17 {dimension_numbers = #tpu.dot_dimension_numbers<[1], [0], [0], [1], [0, 0, 1, 1], [], []>} : vector<2x16xf32>, vector<16x512xf32>, vector<2x512xf32> -> vector<2x512xf32>
    %30 = vector.broadcast %7 : vector<1x512xf32> to vector<2x512xf32>
    %31 = arith.addf %29, %30 : vector<2x512xf32>
    %c8 = arith.constant 8 : index
    %c0_18 = arith.constant 0 : index
    %32 = vector.load %arg9[%c8, %c0_18] : memref<32x512xf32, #tpu.memory_space<vmem>>, vector<2x512xf32>
    tpu.vector_store %arg9[%c8, %c0_18], %31 {strides = array<i32>} : memref<32x512xf32, #tpu.memory_space<vmem>>, vector<2x512xf32>,
    %33 = vector.extract_strided_slice %5 {offsets = [0, 80], sizes = [2, 16], strides = [1, 1]} : vector<2x256xf32> to vector<2x16xf32>
    %cst_19 = arith.constant dense<0.000000e+00> : vector<2x512xf32>
    %34 = tpu.matmul %33, %6, %cst_19 {dimension_numbers = #tpu.dot_dimension_numbers<[1], [0], [0], [1], [0, 0, 1, 1], [], []>} : vector<2x16xf32>, vector<16x512xf32>, vector<2x512xf32> -> vector<2x512xf32>
    %35 = vector.broadcast %7 : vector<1x512xf32> to vector<2x512xf32>
    %36 = arith.addf %34, %35 : vector<2x512xf32>
    %c10 = arith.constant 10 : index
    %c0_20 = arith.constant 0 : index
    %37 = vector.load %arg9[%c10, %c0_20] : memref<32x512xf32, #tpu.memory_space<vmem>>, vector<2x512xf32>
    tpu.vector_store %arg9[%c10, %c0_20], %36 {strides = array<i32>} : memref<32x512xf32, #tpu.memory_space<vmem>>, vector<2x512xf32>,
    %38 = vector.extract_strided_slice %5 {offsets = [0, 96], sizes = [2, 16], strides = [1, 1]} : vector<2x256xf32> to vector<2x16xf32>
    %cst_21 = arith.constant dense<0.000000e+00> : vector<2x512xf32>
    %39 = tpu.matmul %38, %6, %cst_21 {dimension_numbers = #tpu.dot_dimension_numbers<[1], [0], [0], [1], [0, 0, 1, 1], [], []>} : vector<2x16xf32>, vector<16x512xf32>, vector<2x512xf32> -> vector<2x512xf32>
    %40 = vector.broadcast %7 : vector<1x512xf32> to vector<2x512xf32>
    %41 = arith.addf %39, %40 : vector<2x512xf32>
    %c12 = arith.constant 12 : index
    %c0_22 = arith.constant 0 : index
    %42 = vector.load %arg9[%c12, %c0_22] : memref<32x512xf32, #tpu.memory_space<vmem>>, vector<2x512xf32>
    tpu.vector_store %arg9[%c12, %c0_22], %41 {strides = array<i32>} : memref<32x512xf32, #tpu.memory_space<vmem>>, vector<2x512xf32>,
    %43 = vector.extract_strided_slice %5 {offsets = [0, 112], sizes = [2, 16], strides = [1, 1]} : vector<2x256xf32> to vector<2x16xf32>
    %cst_23 = arith.constant dense<0.000000e+00> : vector<2x512xf32>
    %44 = tpu.matmul %43, %6, %cst_23 {dimension_numbers = #tpu.dot_dimension_numbers<[1], [0], [0], [1], [0, 0, 1, 1], [], []>} : vector<2x16xf32>, vector<16x512xf32>, vector<2x512xf32> -> vector<2x512xf32>
    %45 = vector.broadcast %7 : vector<1x512xf32> to vector<2x512xf32>
    %46 = arith.addf %44, %45 : vector<2x512xf32>
    %c14 = arith.constant 14 : index
    %c0_24 = arith.constant 0 : index
    %47 = vector.load %arg9[%c14, %c0_24] : memref<32x512xf32, #tpu.memory_space<vmem>>, vector<2x512xf32>
    tpu.vector_store %arg9[%c14, %c0_24], %46 {strides = array<i32>} : memref<32x512xf32, #tpu.memory_space<vmem>>, vector<2x512xf32>,
    %48 = vector.extract_strided_slice %5 {offsets = [0, 128], sizes = [2, 16], strides = [1, 1]} : vector<2x256xf32> to vector<2x16xf32>
    %cst_25 = arith.constant dense<0.000000e+00> : vector<2x512xf32>
    %49 = tpu.matmul %48, %6, %cst_25 {dimension_numbers = #tpu.dot_dimension_numbers<[1], [0], [0], [1], [0, 0, 1, 1], [], []>} : vector<2x16xf32>, vector<16x512xf32>, vector<2x512xf32> -> vector<2x512xf32>
    %50 = vector.broadcast %7 : vector<1x512xf32> to vector<2x512xf32>
    %51 = arith.addf %49, %50 : vector<2x512xf32>
    %c16 = arith.constant 16 : index
    %c0_26 = arith.constant 0 : index
    %52 = vector.load %arg9[%c16, %c0_26] : memref<32x512xf32, #tpu.memory_space<vmem>>, vector<2x512xf32>
    tpu.vector_store %arg9[%c16, %c0_26], %51 {strides = array<i32>} : memref<32x512xf32, #tpu.memory_space<vmem>>, vector<2x512xf32>,
    %53 = vector.extract_strided_slice %5 {offsets = [0, 144], sizes = [2, 16], strides = [1, 1]} : vector<2x256xf32> to vector<2x16xf32>
    %cst_27 = arith.constant dense<0.000000e+00> : vector<2x512xf32>
    %54 = tpu.matmul %53, %6, %cst_27 {dimension_numbers = #tpu.dot_dimension_numbers<[1], [0], [0], [1], [0, 0, 1, 1], [], []>} : vector<2x16xf32>, vector<16x512xf32>, vector<2x512xf32> -> vector<2x512xf32>
    %55 = vector.broadcast %7 : vector<1x512xf32> to vector<2x512xf32>
    %56 = arith.addf %54, %55 : vector<2x512xf32>
    %c18 = arith.constant 18 : index
    %c0_28 = arith.constant 0 : index
    %57 = vector.load %arg9[%c18, %c0_28] : memref<32x512xf32, #tpu.memory_space<vmem>>, vector<2x512xf32>
    tpu.vector_store %arg9[%c18, %c0_28], %56 {strides = array<i32>} : memref<32x512xf32, #tpu.memory_space<vmem>>, vector<2x512xf32>,
    %58 = vector.extract_strided_slice %5 {offsets = [0, 160], sizes = [2, 16], strides = [1, 1]} : vector<2x256xf32> to vector<2x16xf32>
    %cst_29 = arith.constant dense<0.000000e+00> : vector<2x512xf32>
    %59 = tpu.matmul %58, %6, %cst_29 {dimension_numbers = #tpu.dot_dimension_numbers<[1], [0], [0], [1], [0, 0, 1, 1], [], []>} : vector<2x16xf32>, vector<16x512xf32>, vector<2x512xf32> -> vector<2x512xf32>
    %60 = vector.broadcast %7 : vector<1x512xf32> to vector<2x512xf32>
    %61 = arith.addf %59, %60 : vector<2x512xf32>
    %c20 = arith.constant 20 : index
    %c0_30 = arith.constant 0 : index
    %62 = vector.load %arg9[%c20, %c0_30] : memref<32x512xf32, #tpu.memory_space<vmem>>, vector<2x512xf32>
    tpu.vector_store %arg9[%c20, %c0_30], %61 {strides = array<i32>} : memref<32x512xf32, #tpu.memory_space<vmem>>, vector<2x512xf32>,
    %63 = vector.extract_strided_slice %5 {offsets = [0, 176], sizes = [2, 16], strides = [1, 1]} : vector<2x256xf32> to vector<2x16xf32>
    %cst_31 = arith.constant dense<0.000000e+00> : vector<2x512xf32>
    %64 = tpu.matmul %63, %6, %cst_31 {dimension_numbers = #tpu.dot_dimension_numbers<[1], [0], [0], [1], [0, 0, 1, 1], [], []>} : vector<2x16xf32>, vector<16x512xf32>, vector<2x512xf32> -> vector<2x512xf32>
    %65 = vector.broadcast %7 : vector<1x512xf32> to vector<2x512xf32>
    %66 = arith.addf %64, %65 : vector<2x512xf32>
    %c22 = arith.constant 22 : index
    %c0_32 = arith.constant 0 : index
    %67 = vector.load %arg9[%c22, %c0_32] : memref<32x512xf32, #tpu.memory_space<vmem>>, vector<2x512xf32>
    tpu.vector_store %arg9[%c22, %c0_32], %66 {strides = array<i32>} : memref<32x512xf32, #tpu.memory_space<vmem>>, vector<2x512xf32>,
    %68 = vector.extract_strided_slice %5 {offsets = [0, 192], sizes = [2, 16], strides = [1, 1]} : vector<2x256xf32> to vector<2x16xf32>
    %cst_33 = arith.constant dense<0.000000e+00> : vector<2x512xf32>
    %69 = tpu.matmul %68, %6, %cst_33 {dimension_numbers = #tpu.dot_dimension_numbers<[1], [0], [0], [1], [0, 0, 1, 1], [], []>} : vector<2x16xf32>, vector<16x512xf32>, vector<2x512xf32> -> vector<2x512xf32>
    %70 = vector.broadcast %7 : vector<1x512xf32> to vector<2x512xf32>
    %71 = arith.addf %69, %70 : vector<2x512xf32>
    %c24 = arith.constant 24 : index
    %c0_34 = arith.constant 0 : index
    %72 = vector.load %arg9[%c24, %c0_34] : memref<32x512xf32, #tpu.memory_space<vmem>>, vector<2x512xf32>
    tpu.vector_store %arg9[%c24, %c0_34], %71 {strides = array<i32>} : memref<32x512xf32, #tpu.memory_space<vmem>>, vector<2x512xf32>,
    %73 = vector.extract_strided_slice %5 {offsets = [0, 208], sizes = [2, 16], strides = [1, 1]} : vector<2x256xf32> to vector<2x16xf32>
    %cst_35 = arith.constant dense<0.000000e+00> : vector<2x512xf32>
    %74 = tpu.matmul %73, %6, %cst_35 {dimension_numbers = #tpu.dot_dimension_numbers<[1], [0], [0], [1], [0, 0, 1, 1], [], []>} : vector<2x16xf32>, vector<16x512xf32>, vector<2x512xf32> -> vector<2x512xf32>
    %75 = vector.broadcast %7 : vector<1x512xf32> to vector<2x512xf32>
    %76 = arith.addf %74, %75 : vector<2x512xf32>
    %c26 = arith.constant 26 : index
    %c0_36 = arith.constant 0 : index
    %77 = vector.load %arg9[%c26, %c0_36] : memref<32x512xf32, #tpu.memory_space<vmem>>, vector<2x512xf32>
    tpu.vector_store %arg9[%c26, %c0_36], %76 {strides = array<i32>} : memref<32x512xf32, #tpu.memory_space<vmem>>, vector<2x512xf32>,
    %78 = vector.extract_strided_slice %5 {offsets = [0, 224], sizes = [2, 16], strides = [1, 1]} : vector<2x256xf32> to vector<2x16xf32>
    %cst_37 = arith.constant dense<0.000000e+00> : vector<2x512xf32>
    %79 = tpu.matmul %78, %6, %cst_37 {dimension_numbers = #tpu.dot_dimension_numbers<[1], [0], [0], [1], [0, 0, 1, 1], [], []>} : vector<2x16xf32>, vector<16x512xf32>, vector<2x512xf32> -> vector<2x512xf32>
    %80 = vector.broadcast %7 : vector<1x512xf32> to vector<2x512xf32>
    %81 = arith.addf %79, %80 : vector<2x512xf32>
    %c28 = arith.constant 28 : index
    %c0_38 = arith.constant 0 : index
    %82 = vector.load %arg9[%c28, %c0_38] : memref<32x512xf32, #tpu.memory_space<vmem>>, vector<2x512xf32>
    tpu.vector_store %arg9[%c28, %c0_38], %81 {strides = array<i32>} : memref<32x512xf32, #tpu.memory_space<vmem>>, vector<2x512xf32>,
    %83 = vector.extract_strided_slice %5 {offsets = [0, 240], sizes = [2, 16], strides = [1, 1]} : vector<2x256xf32> to vector<2x16xf32>
    %cst_39 = arith.constant dense<0.000000e+00> : vector<2x512xf32>
    %84 = tpu.matmul %83, %6, %cst_39 {dimension_numbers = #tpu.dot_dimension_numbers<[1], [0], [0], [1], [0, 0, 1, 1], [], []>} : vector<2x16xf32>, vector<16x512xf32>, vector<2x512xf32> -> vector<2x512xf32>
    %85 = vector.broadcast %7 : vector<1x512xf32> to vector<2x512xf32>
    %86 = arith.addf %84, %85 : vector<2x512xf32>
    %c30 = arith.constant 30 : index
    %c0_40 = arith.constant 0 : index
    %87 = vector.load %arg9[%c30, %c0_40] : memref<32x512xf32, #tpu.memory_space<vmem>>, vector<2x512xf32>
    tpu.vector_store %arg9[%c30, %c0_40], %86 {strides = array<i32>} : memref<32x512xf32, #tpu.memory_space<vmem>>, vector<2x512xf32>,
    %c0_41 = arith.constant 0 : index
    %c0_42 = arith.constant 0 : index
    %88 = vector.load %arg4[%c0_41, %c0_42] : memref<256x1024xf32, #tpu.memory_space<vmem>>, vector<256x1024xf32>
    %c1 = arith.constant 1 : index
    %c0_43 = arith.constant 0 : index
    %89 = vector.load %arg3[%c1, %c0_43] : memref<2x512xf32, #tpu.memory_space<vmem>>, vector<1x512xf32>
    %c0_44 = arith.constant 0 : index
    %c0_45 = arith.constant 0 : index
    %c0_46 = arith.constant 0 : index
    %90 = vector.load %arg6[%c0_44, %c0_45, %c0_46] : memref<2x2x128xf32, #tpu.memory_space<vmem>>, vector<1x2x128xf32>
    %91 = vector.shape_cast %90 : vector<1x2x128xf32> to vector<2x128xf32>
    %c1_47 = arith.constant 1 : index
    %c0_48 = arith.constant 0 : index
    %c0_49 = arith.constant 0 : index
    %92 = vector.load %arg6[%c1_47, %c0_48, %c0_49] : memref<2x2x128xf32, #tpu.memory_space<vmem>>, vector<1x2x128xf32>
    %93 = vector.shape_cast %92 : vector<1x2x128xf32> to vector<2x128xf32>
    %c0_50 = arith.constant 0 : index
    %c0_51 = arith.constant 0 : index
    %c0_52 = arith.constant 0 : index
    %94 = vector.load %arg7[%c0_50, %c0_51, %c0_52] : memref<2x2x128xf32, #tpu.memory_space<vmem>>, vector<1x2x128xf32>
    %95 = vector.shape_cast %94 : vector<1x2x128xf32> to vector<2x128xf32>
    %c1_53 = arith.constant 1 : index
    %c0_54 = arith.constant 0 : index
    %c0_55 = arith.constant 0 : index
    %96 = vector.load %arg7[%c1_53, %c0_54, %c0_55] : memref<2x2x128xf32, #tpu.memory_space<vmem>>, vector<1x2x128xf32>
    %97 = vector.shape_cast %96 : vector<1x2x128xf32> to vector<2x128xf32>
    %98 = tpu.concatenate %91, %93 in 1 : vector<2x128xf32>, vector<2x128xf32> -> vector<2x256xf32>
    %cst_56 = arith.constant dense<0.000000e+00> : vector<2x1024xf32>
    %99 = tpu.matmul %98, %88, %cst_56 {dimension_numbers = #tpu.dot_dimension_numbers<[1], [0], [0], [1], [0, 0, 1, 1], [], []>} : vector<2x256xf32>, vector<256x1024xf32>, vector<2x1024xf32> -> vector<2x1024xf32>
    %100 = vector.extract_strided_slice %99 {offsets = [0, 0], sizes = [2, 512], strides = [1, 1]} : vector<2x1024xf32> to vector<2x512xf32>
    %c0_57 = arith.constant 0 : index
    %c0_58 = arith.constant 0 : index
    %101 = vector.load %arg9[%c0_57, %c0_58] : memref<32x512xf32, #tpu.memory_space<vmem>>, vector<2x512xf32>
    %102 = arith.addf %100, %101 : vector<2x512xf32>
    %103 = vector.extract_strided_slice %102 {offsets = [0, 0], sizes = [2, 128], strides = [1, 1]} : vector<2x512xf32> to vector<2x128xf32>
    %104 = arith.negf %103 : vector<2x128xf32>
    %105 = math.exp %104 : vector<2x128xf32>
    %cst_59 = arith.constant 1.000000e+00 : f32
    %106 = vector.broadcast %cst_59 : f32 to vector<2x128xf32>
    %107 = arith.addf %106, %105 : vector<2x128xf32>
    %108 = arith.divf %106, %107 : vector<2x128xf32>
    %109 = vector.extract_strided_slice %102 {offsets = [0, 128], sizes = [2, 128], strides = [1, 1]} : vector<2x512xf32> to vector<2x128xf32>
    %110 = arith.negf %109 : vector<2x128xf32>
    %111 = math.exp %110 : vector<2x128xf32>
    %cst_60 = arith.constant 1.000000e+00 : f32
    %112 = vector.broadcast %cst_60 : f32 to vector<2x128xf32>
    %113 = arith.addf %112, %111 : vector<2x128xf32>
    %114 = arith.divf %112, %113 : vector<2x128xf32>
    %115 = vector.extract_strided_slice %102 {offsets = [0, 256], sizes = [2, 128], strides = [1, 1]} : vector<2x512xf32> to vector<2x128xf32>
    %116 = math.tanh %115 : vector<2x128xf32>
    %117 = vector.extract_strided_slice %102 {offsets = [0, 384], sizes = [2, 128], strides = [1, 1]} : vector<2x512xf32> to vector<2x128xf32>
    %118 = arith.negf %117 : vector<2x128xf32>
    %119 = math.exp %118 : vector<2x128xf32>
    %cst_61 = arith.constant 1.000000e+00 : f32
    %120 = vector.broadcast %cst_61 : f32 to vector<2x128xf32>
    %121 = arith.addf %120, %119 : vector<2x128xf32>
    %122 = arith.divf %120, %121 : vector<2x128xf32>
    %123 = arith.mulf %114, %95 : vector<2x128xf32>
    %124 = arith.mulf %108, %116 : vector<2x128xf32>
    %125 = arith.addf %123, %124 : vector<2x128xf32>
    %126 = math.tanh %125 : vector<2x128xf32>
    %127 = arith.mulf %122, %126 : vector<2x128xf32>
    %128 = tpu.concatenate %127, %93 in 1 : vector<2x128xf32>, vector<2x128xf32> -> vector<2x256xf32>
    %cst_62 = arith.constant dense<0.000000e+00> : vector<2x1024xf32>
    %129 = tpu.matmul %128, %88, %cst_62 {dimension_numbers = #tpu.dot_dimension_numbers<[1], [0], [0], [1], [0, 0, 1, 1], [], []>} : vector<2x256xf32>, vector<256x1024xf32>, vector<2x1024xf32> -> vector<2x1024xf32>
    %130 = vector.extract_strided_slice %129 {offsets = [0, 0], sizes = [2, 512], strides = [1, 1]} : vector<2x1024xf32> to vector<2x512xf32>
    %c2_63 = arith.constant 2 : index
    %c0_64 = arith.constant 0 : index
    %131 = vector.load %arg9[%c2_63, %c0_64] : memref<32x512xf32, #tpu.memory_space<vmem>>, vector<2x512xf32>
    %132 = arith.addf %130, %131 : vector<2x512xf32>
    %133 = vector.extract_strided_slice %132 {offsets = [0, 0], sizes = [2, 128], strides = [1, 1]} : vector<2x512xf32> to vector<2x128xf32>
    %134 = arith.negf %133 : vector<2x128xf32>
    %135 = math.exp %134 : vector<2x128xf32>
    %cst_65 = arith.constant 1.000000e+00 : f32
    %136 = vector.broadcast %cst_65 : f32 to vector<2x128xf32>
    %137 = arith.addf %136, %135 : vector<2x128xf32>
    %138 = arith.divf %136, %137 : vector<2x128xf32>
    %139 = vector.extract_strided_slice %132 {offsets = [0, 128], sizes = [2, 128], strides = [1, 1]} : vector<2x512xf32> to vector<2x128xf32>
    %140 = arith.negf %139 : vector<2x128xf32>
    %141 = math.exp %140 : vector<2x128xf32>
    %cst_66 = arith.constant 1.000000e+00 : f32
    %142 = vector.broadcast %cst_66 : f32 to vector<2x128xf32>
    %143 = arith.addf %142, %141 : vector<2x128xf32>
    %144 = arith.divf %142, %143 : vector<2x128xf32>
    %145 = vector.extract_strided_slice %132 {offsets = [0, 256], sizes = [2, 128], strides = [1, 1]} : vector<2x512xf32> to vector<2x128xf32>
    %146 = math.tanh %145 : vector<2x128xf32>
    %147 = vector.extract_strided_slice %132 {offsets = [0, 384], sizes = [2, 128], strides = [1, 1]} : vector<2x512xf32> to vector<2x128xf32>
    %148 = arith.negf %147 : vector<2x128xf32>
    %149 = math.exp %148 : vector<2x128xf32>
    %cst_67 = arith.constant 1.000000e+00 : f32
    %150 = vector.broadcast %cst_67 : f32 to vector<2x128xf32>
    %151 = arith.addf %150, %149 : vector<2x128xf32>
    %152 = arith.divf %150, %151 : vector<2x128xf32>
    %153 = arith.mulf %144, %125 : vector<2x128xf32>
    %154 = arith.mulf %138, %146 : vector<2x128xf32>
    %155 = arith.addf %153, %154 : vector<2x128xf32>
    %156 = math.tanh %155 : vector<2x128xf32>
    %157 = arith.mulf %152, %156 : vector<2x128xf32>
    %158 = vector.extract_strided_slice %129 {offsets = [0, 512], sizes = [2, 512], strides = [1, 1]} : vector<2x1024xf32> to vector<2x512xf32>
    %159 = vector.broadcast %89 : vector<1x512xf32> to vector<2x512xf32>
    %160 = arith.addf %158, %159 : vector<2x512xf32>
    %161 = vector.extract_strided_slice %160 {offsets = [0, 0], sizes = [2, 128], strides = [1, 1]} : vector<2x512xf32> to vector<2x128xf32>
    %162 = arith.negf %161 : vector<2x128xf32>
    %163 = math.exp %162 : vector<2x128xf32>
    %cst_68 = arith.constant 1.000000e+00 : f32
    %164 = vector.broadcast %cst_68 : f32 to vector<2x128xf32>
    %165 = arith.addf %164, %163 : vector<2x128xf32>
    %166 = arith.divf %164, %165 : vector<2x128xf32>
    %167 = vector.extract_strided_slice %160 {offsets = [0, 128], sizes = [2, 128], strides = [1, 1]} : vector<2x512xf32> to vector<2x128xf32>
    %168 = arith.negf %167 : vector<2x128xf32>
    %169 = math.exp %168 : vector<2x128xf32>
    %cst_69 = arith.constant 1.000000e+00 : f32
    %170 = vector.broadcast %cst_69 : f32 to vector<2x128xf32>
    %171 = arith.addf %170, %169 : vector<2x128xf32>
    %172 = arith.divf %170, %171 : vector<2x128xf32>
    %173 = vector.extract_strided_slice %160 {offsets = [0, 256], sizes = [2, 128], strides = [1, 1]} : vector<2x512xf32> to vector<2x128xf32>
    %174 = math.tanh %173 : vector<2x128xf32>
    %175 = vector.extract_strided_slice %160 {offsets = [0, 384], sizes = [2, 128], strides = [1, 1]} : vector<2x512xf32> to vector<2x128xf32>
    %176 = arith.negf %175 : vector<2x128xf32>
    %177 = math.exp %176 : vector<2x128xf32>
    %cst_70 = arith.constant 1.000000e+00 : f32
    %178 = vector.broadcast %cst_70 : f32 to vector<2x128xf32>
    %179 = arith.addf %178, %177 : vector<2x128xf32>
    %180 = arith.divf %178, %179 : vector<2x128xf32>
    %181 = arith.mulf %172, %97 : vector<2x128xf32>
    %182 = arith.mulf %166, %174 : vector<2x128xf32>
    %183 = arith.addf %181, %182 : vector<2x128xf32>
    %184 = math.tanh %183 : vector<2x128xf32>
    %185 = arith.mulf %180, %184 : vector<2x128xf32>
    %c0_71 = arith.constant 0 : index
    %c0_72 = arith.constant 0 : index
    %186 = vector.load %arg10[%c0_71, %c0_72] : memref<32x128xf32, #tpu.memory_space<vmem>>, vector<2x128xf32>
    tpu.vector_store %arg10[%c0_71, %c0_72], %185 {strides = array<i32>} : memref<32x128xf32, #tpu.memory_space<vmem>>, vector<2x128xf32>,
    %187 = tpu.concatenate %157, %185 in 1 : vector<2x128xf32>, vector<2x128xf32> -> vector<2x256xf32>
    %cst_73 = arith.constant dense<0.000000e+00> : vector<2x1024xf32>
    %188 = tpu.matmul %187, %88, %cst_73 {dimension_numbers = #tpu.dot_dimension_numbers<[1], [0], [0], [1], [0, 0, 1, 1], [], []>} : vector<2x256xf32>, vector<256x1024xf32>, vector<2x1024xf32> -> vector<2x1024xf32>
    %189 = vector.extract_strided_slice %188 {offsets = [0, 0], sizes = [2, 512], strides = [1, 1]} : vector<2x1024xf32> to vector<2x512xf32>
    %c4_74 = arith.constant 4 : index
    %c0_75 = arith.constant 0 : index
    %190 = vector.load %arg9[%c4_74, %c0_75] : memref<32x512xf32, #tpu.memory_space<vmem>>, vector<2x512xf32>
    %191 = arith.addf %189, %190 : vector<2x512xf32>
    %192 = vector.extract_strided_slice %191 {offsets = [0, 0], sizes = [2, 128], strides = [1, 1]} : vector<2x512xf32> to vector<2x128xf32>
    %193 = arith.negf %192 : vector<2x128xf32>
    %194 = math.exp %193 : vector<2x128xf32>
    %cst_76 = arith.constant 1.000000e+00 : f32
    %195 = vector.broadcast %cst_76 : f32 to vector<2x128xf32>
    %196 = arith.addf %195, %194 : vector<2x128xf32>
    %197 = arith.divf %195, %196 : vector<2x128xf32>
    %198 = vector.extract_strided_slice %191 {offsets = [0, 128], sizes = [2, 128], strides = [1, 1]} : vector<2x512xf32> to vector<2x128xf32>
    %199 = arith.negf %198 : vector<2x128xf32>
    %200 = math.exp %199 : vector<2x128xf32>
    %cst_77 = arith.constant 1.000000e+00 : f32
    %201 = vector.broadcast %cst_77 : f32 to vector<2x128xf32>
    %202 = arith.addf %201, %200 : vector<2x128xf32>
    %203 = arith.divf %201, %202 : vector<2x128xf32>
    %204 = vector.extract_strided_slice %191 {offsets = [0, 256], sizes = [2, 128], strides = [1, 1]} : vector<2x512xf32> to vector<2x128xf32>
    %205 = math.tanh %204 : vector<2x128xf32>
    %206 = vector.extract_strided_slice %191 {offsets = [0, 384], sizes = [2, 128], strides = [1, 1]} : vector<2x512xf32> to vector<2x128xf32>
    %207 = arith.negf %206 : vector<2x128xf32>
    %208 = math.exp %207 : vector<2x128xf32>
    %cst_78 = arith.constant 1.000000e+00 : f32
    %209 = vector.broadcast %cst_78 : f32 to vector<2x128xf32>
    %210 = arith.addf %209, %208 : vector<2x128xf32>
    %211 = arith.divf %209, %210 : vector<2x128xf32>
    %212 = arith.mulf %203, %155 : vector<2x128xf32>
    %213 = arith.mulf %197, %205 : vector<2x128xf32>
    %214 = arith.addf %212, %213 : vector<2x128xf32>
    %215 = math.tanh %214 : vector<2x128xf32>
    %216 = arith.mulf %211, %215 : vector<2x128xf32>
    %217 = vector.extract_strided_slice %188 {offsets = [0, 512], sizes = [2, 512], strides = [1, 1]} : vector<2x1024xf32> to vector<2x512xf32>
    %218 = vector.broadcast %89 : vector<1x512xf32> to vector<2x512xf32>
    %219 = arith.addf %217, %218 : vector<2x512xf32>
    %220 = vector.extract_strided_slice %219 {offsets = [0, 0], sizes = [2, 128], strides = [1, 1]} : vector<2x512xf32> to vector<2x128xf32>
    %221 = arith.negf %220 : vector<2x128xf32>
    %222 = math.exp %221 : vector<2x128xf32>
    %cst_79 = arith.constant 1.000000e+00 : f32
    %223 = vector.broadcast %cst_79 : f32 to vector<2x128xf32>
    %224 = arith.addf %223, %222 : vector<2x128xf32>
    %225 = arith.divf %223, %224 : vector<2x128xf32>
    %226 = vector.extract_strided_slice %219 {offsets = [0, 128], sizes = [2, 128], strides = [1, 1]} : vector<2x512xf32> to vector<2x128xf32>
    %227 = arith.negf %226 : vector<2x128xf32>
    %228 = math.exp %227 : vector<2x128xf32>
    %cst_80 = arith.constant 1.000000e+00 : f32
    %229 = vector.broadcast %cst_80 : f32 to vector<2x128xf32>
    %230 = arith.addf %229, %228 : vector<2x128xf32>
    %231 = arith.divf %229, %230 : vector<2x128xf32>
    %232 = vector.extract_strided_slice %219 {offsets = [0, 256], sizes = [2, 128], strides = [1, 1]} : vector<2x512xf32> to vector<2x128xf32>
    %233 = math.tanh %232 : vector<2x128xf32>
    %234 = vector.extract_strided_slice %219 {offsets = [0, 384], sizes = [2, 128], strides = [1, 1]} : vector<2x512xf32> to vector<2x128xf32>
    %235 = arith.negf %234 : vector<2x128xf32>
    %236 = math.exp %235 : vector<2x128xf32>
    %cst_81 = arith.constant 1.000000e+00 : f32
    %237 = vector.broadcast %cst_81 : f32 to vector<2x128xf32>
    %238 = arith.addf %237, %236 : vector<2x128xf32>
    %239 = arith.divf %237, %238 : vector<2x128xf32>
    %240 = arith.mulf %231, %183 : vector<2x128xf32>
    %241 = arith.mulf %225, %233 : vector<2x128xf32>
    %242 = arith.addf %240, %241 : vector<2x128xf32>
    %243 = math.tanh %242 : vector<2x128xf32>
    %244 = arith.mulf %239, %243 : vector<2x128xf32>
    %c2_82 = arith.constant 2 : index
    %c0_83 = arith.constant 0 : index
    %245 = vector.load %arg10[%c2_82, %c0_83] : memref<32x128xf32, #tpu.memory_space<vmem>>, vector<2x128xf32>
    tpu.vector_store %arg10[%c2_82, %c0_83], %244 {strides = array<i32>} : memref<32x128xf32, #tpu.memory_space<vmem>>, vector<2x128xf32>,
    %246 = tpu.concatenate %216, %244 in 1 : vector<2x128xf32>, vector<2x128xf32> -> vector<2x256xf32>
    %cst_84 = arith.constant dense<0.000000e+00> : vector<2x1024xf32>
    %247 = tpu.matmul %246, %88, %cst_84 {dimension_numbers = #tpu.dot_dimension_numbers<[1], [0], [0], [1], [0, 0, 1, 1], [], []>} : vector<2x256xf32>, vector<256x1024xf32>, vector<2x1024xf32> -> vector<2x1024xf32>
    %248 = vector.extract_strided_slice %247 {offsets = [0, 0], sizes = [2, 512], strides = [1, 1]} : vector<2x1024xf32> to vector<2x512xf32>
    %c6_85 = arith.constant 6 : index
    %c0_86 = arith.constant 0 : index
    %249 = vector.load %arg9[%c6_85, %c0_86] : memref<32x512xf32, #tpu.memory_space<vmem>>, vector<2x512xf32>
    %250 = arith.addf %248, %249 : vector<2x512xf32>
    %251 = vector.extract_strided_slice %250 {offsets = [0, 0], sizes = [2, 128], strides = [1, 1]} : vector<2x512xf32> to vector<2x128xf32>
    %252 = arith.negf %251 : vector<2x128xf32>
    %253 = math.exp %252 : vector<2x128xf32>
    %cst_87 = arith.constant 1.000000e+00 : f32
    %254 = vector.broadcast %cst_87 : f32 to vector<2x128xf32>
    %255 = arith.addf %254, %253 : vector<2x128xf32>
    %256 = arith.divf %254, %255 : vector<2x128xf32>
    %257 = vector.extract_strided_slice %250 {offsets = [0, 128], sizes = [2, 128], strides = [1, 1]} : vector<2x512xf32> to vector<2x128xf32>
    %258 = arith.negf %257 : vector<2x128xf32>
    %259 = math.exp %258 : vector<2x128xf32>
    %cst_88 = arith.constant 1.000000e+00 : f32
    %260 = vector.broadcast %cst_88 : f32 to vector<2x128xf32>
    %261 = arith.addf %260, %259 : vector<2x128xf32>
    %262 = arith.divf %260, %261 : vector<2x128xf32>
    %263 = vector.extract_strided_slice %250 {offsets = [0, 256], sizes = [2, 128], strides = [1, 1]} : vector<2x512xf32> to vector<2x128xf32>
    %264 = math.tanh %263 : vector<2x128xf32>
    %265 = vector.extract_strided_slice %250 {offsets = [0, 384], sizes = [2, 128], strides = [1, 1]} : vector<2x512xf32> to vector<2x128xf32>
    %266 = arith.negf %265 : vector<2x128xf32>
    %267 = math.exp %266 : vector<2x128xf32>
    %cst_89 = arith.constant 1.000000e+00 : f32
    %268 = vector.broadcast %cst_89 : f32 to vector<2x128xf32>
    %269 = arith.addf %268, %267 : vector<2x128xf32>
    %270 = arith.divf %268, %269 : vector<2x128xf32>
    %271 = arith.mulf %262, %214 : vector<2x128xf32>
    %272 = arith.mulf %256, %264 : vector<2x128xf32>
    %273 = arith.addf %271, %272 : vector<2x128xf32>
    %274 = math.tanh %273 : vector<2x128xf32>
    %275 = arith.mulf %270, %274 : vector<2x128xf32>
    %276 = vector.extract_strided_slice %247 {offsets = [0, 512], sizes = [2, 512], strides = [1, 1]} : vector<2x1024xf32> to vector<2x512xf32>
    %277 = vector.broadcast %89 : vector<1x512xf32> to vector<2x512xf32>
    %278 = arith.addf %276, %277 : vector<2x512xf32>
    %279 = vector.extract_strided_slice %278 {offsets = [0, 0], sizes = [2, 128], strides = [1, 1]} : vector<2x512xf32> to vector<2x128xf32>
    %280 = arith.negf %279 : vector<2x128xf32>
    %281 = math.exp %280 : vector<2x128xf32>
    %cst_90 = arith.constant 1.000000e+00 : f32
    %282 = vector.broadcast %cst_90 : f32 to vector<2x128xf32>
    %283 = arith.addf %282, %281 : vector<2x128xf32>
    %284 = arith.divf %282, %283 : vector<2x128xf32>
    %285 = vector.extract_strided_slice %278 {offsets = [0, 128], sizes = [2, 128], strides = [1, 1]} : vector<2x512xf32> to vector<2x128xf32>
    %286 = arith.negf %285 : vector<2x128xf32>
    %287 = math.exp %286 : vector<2x128xf32>
    %cst_91 = arith.constant 1.000000e+00 : f32
    %288 = vector.broadcast %cst_91 : f32 to vector<2x128xf32>
    %289 = arith.addf %288, %287 : vector<2x128xf32>
    %290 = arith.divf %288, %289 : vector<2x128xf32>
    %291 = vector.extract_strided_slice %278 {offsets = [0, 256], sizes = [2, 128], strides = [1, 1]} : vector<2x512xf32> to vector<2x128xf32>
    %292 = math.tanh %291 : vector<2x128xf32>
    %293 = vector.extract_strided_slice %278 {offsets = [0, 384], sizes = [2, 128], strides = [1, 1]} : vector<2x512xf32> to vector<2x128xf32>
    %294 = arith.negf %293 : vector<2x128xf32>
    %295 = math.exp %294 : vector<2x128xf32>
    %cst_92 = arith.constant 1.000000e+00 : f32
    %296 = vector.broadcast %cst_92 : f32 to vector<2x128xf32>
    %297 = arith.addf %296, %295 : vector<2x128xf32>
    %298 = arith.divf %296, %297 : vector<2x128xf32>
    %299 = arith.mulf %290, %242 : vector<2x128xf32>
    %300 = arith.mulf %284, %292 : vector<2x128xf32>
    %301 = arith.addf %299, %300 : vector<2x128xf32>
    %302 = math.tanh %301 : vector<2x128xf32>
    %303 = arith.mulf %298, %302 : vector<2x128xf32>
    %c4_93 = arith.constant 4 : index
    %c0_94 = arith.constant 0 : index
    %304 = vector.load %arg10[%c4_93, %c0_94] : memref<32x128xf32, #tpu.memory_space<vmem>>, vector<2x128xf32>
    tpu.vector_store %arg10[%c4_93, %c0_94], %303 {strides = array<i32>} : memref<32x128xf32, #tpu.memory_space<vmem>>, vector<2x128xf32>,
    %305 = tpu.concatenate %275, %303 in 1 : vector<2x128xf32>, vector<2x128xf32> -> vector<2x256xf32>
    %cst_95 = arith.constant dense<0.000000e+00> : vector<2x1024xf32>
    %306 = tpu.matmul %305, %88, %cst_95 {dimension_numbers = #tpu.dot_dimension_numbers<[1], [0], [0], [1], [0, 0, 1, 1], [], []>} : vector<2x256xf32>, vector<256x1024xf32>, vector<2x1024xf32> -> vector<2x1024xf32>
    %307 = vector.extract_strided_slice %306 {offsets = [0, 0], sizes = [2, 512], strides = [1, 1]} : vector<2x1024xf32> to vector<2x512xf32>
    %c8_96 = arith.constant 8 : index
    %c0_97 = arith.constant 0 : index
    %308 = vector.load %arg9[%c8_96, %c0_97] : memref<32x512xf32, #tpu.memory_space<vmem>>, vector<2x512xf32>
    %309 = arith.addf %307, %308 : vector<2x512xf32>
    %310 = vector.extract_strided_slice %309 {offsets = [0, 0], sizes = [2, 128], strides = [1, 1]} : vector<2x512xf32> to vector<2x128xf32>
    %311 = arith.negf %310 : vector<2x128xf32>
    %312 = math.exp %311 : vector<2x128xf32>
    %cst_98 = arith.constant 1.000000e+00 : f32
    %313 = vector.broadcast %cst_98 : f32 to vector<2x128xf32>
    %314 = arith.addf %313, %312 : vector<2x128xf32>
    %315 = arith.divf %313, %314 : vector<2x128xf32>
    %316 = vector.extract_strided_slice %309 {offsets = [0, 128], sizes = [2, 128], strides = [1, 1]} : vector<2x512xf32> to vector<2x128xf32>
    %317 = arith.negf %316 : vector<2x128xf32>
    %318 = math.exp %317 : vector<2x128xf32>
    %cst_99 = arith.constant 1.000000e+00 : f32
    %319 = vector.broadcast %cst_99 : f32 to vector<2x128xf32>
    %320 = arith.addf %319, %318 : vector<2x128xf32>
    %321 = arith.divf %319, %320 : vector<2x128xf32>
    %322 = vector.extract_strided_slice %309 {offsets = [0, 256], sizes = [2, 128], strides = [1, 1]} : vector<2x512xf32> to vector<2x128xf32>
    %323 = math.tanh %322 : vector<2x128xf32>
    %324 = vector.extract_strided_slice %309 {offsets = [0, 384], sizes = [2, 128], strides = [1, 1]} : vector<2x512xf32> to vector<2x128xf32>
    %325 = arith.negf %324 : vector<2x128xf32>
    %326 = math.exp %325 : vector<2x128xf32>
    %cst_100 = arith.constant 1.000000e+00 : f32
    %327 = vector.broadcast %cst_100 : f32 to vector<2x128xf32>
    %328 = arith.addf %327, %326 : vector<2x128xf32>
    %329 = arith.divf %327, %328 : vector<2x128xf32>
    %330 = arith.mulf %321, %273 : vector<2x128xf32>
    %331 = arith.mulf %315, %323 : vector<2x128xf32>
    %332 = arith.addf %330, %331 : vector<2x128xf32>
    %333 = math.tanh %332 : vector<2x128xf32>
    %334 = arith.mulf %329, %333 : vector<2x128xf32>
    %335 = vector.extract_strided_slice %306 {offsets = [0, 512], sizes = [2, 512], strides = [1, 1]} : vector<2x1024xf32> to vector<2x512xf32>
    %336 = vector.broadcast %89 : vector<1x512xf32> to vector<2x512xf32>
    %337 = arith.addf %335, %336 : vector<2x512xf32>
    %338 = vector.extract_strided_slice %337 {offsets = [0, 0], sizes = [2, 128], strides = [1, 1]} : vector<2x512xf32> to vector<2x128xf32>
    %339 = arith.negf %338 : vector<2x128xf32>
    %340 = math.exp %339 : vector<2x128xf32>
    %cst_101 = arith.constant 1.000000e+00 : f32
    %341 = vector.broadcast %cst_101 : f32 to vector<2x128xf32>
    %342 = arith.addf %341, %340 : vector<2x128xf32>
    %343 = arith.divf %341, %342 : vector<2x128xf32>
    %344 = vector.extract_strided_slice %337 {offsets = [0, 128], sizes = [2, 128], strides = [1, 1]} : vector<2x512xf32> to vector<2x128xf32>
    %345 = arith.negf %344 : vector<2x128xf32>
    %346 = math.exp %345 : vector<2x128xf32>
    %cst_102 = arith.constant 1.000000e+00 : f32
    %347 = vector.broadcast %cst_102 : f32 to vector<2x128xf32>
    %348 = arith.addf %347, %346 : vector<2x128xf32>
    %349 = arith.divf %347, %348 : vector<2x128xf32>
    %350 = vector.extract_strided_slice %337 {offsets = [0, 256], sizes = [2, 128], strides = [1, 1]} : vector<2x512xf32> to vector<2x128xf32>
    %351 = math.tanh %350 : vector<2x128xf32>
    %352 = vector.extract_strided_slice %337 {offsets = [0, 384], sizes = [2, 128], strides = [1, 1]} : vector<2x512xf32> to vector<2x128xf32>
    %353 = arith.negf %352 : vector<2x128xf32>
    %354 = math.exp %353 : vector<2x128xf32>
    %cst_103 = arith.constant 1.000000e+00 : f32
    %355 = vector.broadcast %cst_103 : f32 to vector<2x128xf32>
    %356 = arith.addf %355, %354 : vector<2x128xf32>
    %357 = arith.divf %355, %356 : vector<2x128xf32>
    %358 = arith.mulf %349, %301 : vector<2x128xf32>
    %359 = arith.mulf %343, %351 : vector<2x128xf32>
    %360 = arith.addf %358, %359 : vector<2x128xf32>
    %361 = math.tanh %360 : vector<2x128xf32>
    %362 = arith.mulf %357, %361 : vector<2x128xf32>
    %c6_104 = arith.constant 6 : index
    %c0_105 = arith.constant 0 : index
    %363 = vector.load %arg10[%c6_104, %c0_105] : memref<32x128xf32, #tpu.memory_space<vmem>>, vector<2x128xf32>
    tpu.vector_store %arg10[%c6_104, %c0_105], %362 {strides = array<i32>} : memref<32x128xf32, #tpu.memory_space<vmem>>, vector<2x128xf32>,
    %364 = tpu.concatenate %334, %362 in 1 : vector<2x128xf32>, vector<2x128xf32> -> vector<2x256xf32>
    %cst_106 = arith.constant dense<0.000000e+00> : vector<2x1024xf32>
    %365 = tpu.matmul %364, %88, %cst_106 {dimension_numbers = #tpu.dot_dimension_numbers<[1], [0], [0], [1], [0, 0, 1, 1], [], []>} : vector<2x256xf32>, vector<256x1024xf32>, vector<2x1024xf32> -> vector<2x1024xf32>
    %366 = vector.extract_strided_slice %365 {offsets = [0, 0], sizes = [2, 512], strides = [1, 1]} : vector<2x1024xf32> to vector<2x512xf32>
    %c10_107 = arith.constant 10 : index
    %c0_108 = arith.constant 0 : index
    %367 = vector.load %arg9[%c10_107, %c0_108] : memref<32x512xf32, #tpu.memory_space<vmem>>, vector<2x512xf32>
    %368 = arith.addf %366, %367 : vector<2x512xf32>
    %369 = vector.extract_strided_slice %368 {offsets = [0, 0], sizes = [2, 128], strides = [1, 1]} : vector<2x512xf32> to vector<2x128xf32>
    %370 = arith.negf %369 : vector<2x128xf32>
    %371 = math.exp %370 : vector<2x128xf32>
    %cst_109 = arith.constant 1.000000e+00 : f32
    %372 = vector.broadcast %cst_109 : f32 to vector<2x128xf32>
    %373 = arith.addf %372, %371 : vector<2x128xf32>
    %374 = arith.divf %372, %373 : vector<2x128xf32>
    %375 = vector.extract_strided_slice %368 {offsets = [0, 128], sizes = [2, 128], strides = [1, 1]} : vector<2x512xf32> to vector<2x128xf32>
    %376 = arith.negf %375 : vector<2x128xf32>
    %377 = math.exp %376 : vector<2x128xf32>
    %cst_110 = arith.constant 1.000000e+00 : f32
    %378 = vector.broadcast %cst_110 : f32 to vector<2x128xf32>
    %379 = arith.addf %378, %377 : vector<2x128xf32>
    %380 = arith.divf %378, %379 : vector<2x128xf32>
    %381 = vector.extract_strided_slice %368 {offsets = [0, 256], sizes = [2, 128], strides = [1, 1]} : vector<2x512xf32> to vector<2x128xf32>
    %382 = math.tanh %381 : vector<2x128xf32>
    %383 = vector.extract_strided_slice %368 {offsets = [0, 384], sizes = [2, 128], strides = [1, 1]} : vector<2x512xf32> to vector<2x128xf32>
    %384 = arith.negf %383 : vector<2x128xf32>
    %385 = math.exp %384 : vector<2x128xf32>
    %cst_111 = arith.constant 1.000000e+00 : f32
    %386 = vector.broadcast %cst_111 : f32 to vector<2x128xf32>
    %387 = arith.addf %386, %385 : vector<2x128xf32>
    %388 = arith.divf %386, %387 : vector<2x128xf32>
    %389 = arith.mulf %380, %332 : vector<2x128xf32>
    %390 = arith.mulf %374, %382 : vector<2x128xf32>
    %391 = arith.addf %389, %390 : vector<2x128xf32>
    %392 = math.tanh %391 : vector<2x128xf32>
    %393 = arith.mulf %388, %392 : vector<2x128xf32>
    %394 = vector.extract_strided_slice %365 {offsets = [0, 512], sizes = [2, 512], strides = [1, 1]} : vector<2x1024xf32> to vector<2x512xf32>
    %395 = vector.broadcast %89 : vector<1x512xf32> to vector<2x512xf32>
    %396 = arith.addf %394, %395 : vector<2x512xf32>
    %397 = vector.extract_strided_slice %396 {offsets = [0, 0], sizes = [2, 128], strides = [1, 1]} : vector<2x512xf32> to vector<2x128xf32>
    %398 = arith.negf %397 : vector<2x128xf32>
    %399 = math.exp %398 : vector<2x128xf32>
    %cst_112 = arith.constant 1.000000e+00 : f32
    %400 = vector.broadcast %cst_112 : f32 to vector<2x128xf32>
    %401 = arith.addf %400, %399 : vector<2x128xf32>
    %402 = arith.divf %400, %401 : vector<2x128xf32>
    %403 = vector.extract_strided_slice %396 {offsets = [0, 128], sizes = [2, 128], strides = [1, 1]} : vector<2x512xf32> to vector<2x128xf32>
    %404 = arith.negf %403 : vector<2x128xf32>
    %405 = math.exp %404 : vector<2x128xf32>
    %cst_113 = arith.constant 1.000000e+00 : f32
    %406 = vector.broadcast %cst_113 : f32 to vector<2x128xf32>
    %407 = arith.addf %406, %405 : vector<2x128xf32>
    %408 = arith.divf %406, %407 : vector<2x128xf32>
    %409 = vector.extract_strided_slice %396 {offsets = [0, 256], sizes = [2, 128], strides = [1, 1]} : vector<2x512xf32> to vector<2x128xf32>
    %410 = math.tanh %409 : vector<2x128xf32>
    %411 = vector.extract_strided_slice %396 {offsets = [0, 384], sizes = [2, 128], strides = [1, 1]} : vector<2x512xf32> to vector<2x128xf32>
    %412 = arith.negf %411 : vector<2x128xf32>
    %413 = math.exp %412 : vector<2x128xf32>
    %cst_114 = arith.constant 1.000000e+00 : f32
    %414 = vector.broadcast %cst_114 : f32 to vector<2x128xf32>
    %415 = arith.addf %414, %413 : vector<2x128xf32>
    %416 = arith.divf %414, %415 : vector<2x128xf32>
    %417 = arith.mulf %408, %360 : vector<2x128xf32>
    %418 = arith.mulf %402, %410 : vector<2x128xf32>
    %419 = arith.addf %417, %418 : vector<2x128xf32>
    %420 = math.tanh %419 : vector<2x128xf32>
    %421 = arith.mulf %416, %420 : vector<2x128xf32>
    %c8_115 = arith.constant 8 : index
    %c0_116 = arith.constant 0 : index
    %422 = vector.load %arg10[%c8_115, %c0_116] : memref<32x128xf32, #tpu.memory_space<vmem>>, vector<2x128xf32>
    tpu.vector_store %arg10[%c8_115, %c0_116], %421 {strides = array<i32>} : memref<32x128xf32, #tpu.memory_space<vmem>>, vector<2x128xf32>,
    %423 = tpu.concatenate %393, %421 in 1 : vector<2x128xf32>, vector<2x128xf32> -> vector<2x256xf32>
    %cst_117 = arith.constant dense<0.000000e+00> : vector<2x1024xf32>
    %424 = tpu.matmul %423, %88, %cst_117 {dimension_numbers = #tpu.dot_dimension_numbers<[1], [0], [0], [1], [0, 0, 1, 1], [], []>} : vector<2x256xf32>, vector<256x1024xf32>, vector<2x1024xf32> -> vector<2x1024xf32>
    %425 = vector.extract_strided_slice %424 {offsets = [0, 0], sizes = [2, 512], strides = [1, 1]} : vector<2x1024xf32> to vector<2x512xf32>
    %c12_118 = arith.constant 12 : index
    %c0_119 = arith.constant 0 : index
    %426 = vector.load %arg9[%c12_118, %c0_119] : memref<32x512xf32, #tpu.memory_space<vmem>>, vector<2x512xf32>
    %427 = arith.addf %425, %426 : vector<2x512xf32>
    %428 = vector.extract_strided_slice %427 {offsets = [0, 0], sizes = [2, 128], strides = [1, 1]} : vector<2x512xf32> to vector<2x128xf32>
    %429 = arith.negf %428 : vector<2x128xf32>
    %430 = math.exp %429 : vector<2x128xf32>
    %cst_120 = arith.constant 1.000000e+00 : f32
    %431 = vector.broadcast %cst_120 : f32 to vector<2x128xf32>
    %432 = arith.addf %431, %430 : vector<2x128xf32>
    %433 = arith.divf %431, %432 : vector<2x128xf32>
    %434 = vector.extract_strided_slice %427 {offsets = [0, 128], sizes = [2, 128], strides = [1, 1]} : vector<2x512xf32> to vector<2x128xf32>
    %435 = arith.negf %434 : vector<2x128xf32>
    %436 = math.exp %435 : vector<2x128xf32>
    %cst_121 = arith.constant 1.000000e+00 : f32
    %437 = vector.broadcast %cst_121 : f32 to vector<2x128xf32>
    %438 = arith.addf %437, %436 : vector<2x128xf32>
    %439 = arith.divf %437, %438 : vector<2x128xf32>
    %440 = vector.extract_strided_slice %427 {offsets = [0, 256], sizes = [2, 128], strides = [1, 1]} : vector<2x512xf32> to vector<2x128xf32>
    %441 = math.tanh %440 : vector<2x128xf32>
    %442 = vector.extract_strided_slice %427 {offsets = [0, 384], sizes = [2, 128], strides = [1, 1]} : vector<2x512xf32> to vector<2x128xf32>
    %443 = arith.negf %442 : vector<2x128xf32>
    %444 = math.exp %443 : vector<2x128xf32>
    %cst_122 = arith.constant 1.000000e+00 : f32
    %445 = vector.broadcast %cst_122 : f32 to vector<2x128xf32>
    %446 = arith.addf %445, %444 : vector<2x128xf32>
    %447 = arith.divf %445, %446 : vector<2x128xf32>
    %448 = arith.mulf %439, %391 : vector<2x128xf32>
    %449 = arith.mulf %433, %441 : vector<2x128xf32>
    %450 = arith.addf %448, %449 : vector<2x128xf32>
    %451 = math.tanh %450 : vector<2x128xf32>
    %452 = arith.mulf %447, %451 : vector<2x128xf32>
    %453 = vector.extract_strided_slice %424 {offsets = [0, 512], sizes = [2, 512], strides = [1, 1]} : vector<2x1024xf32> to vector<2x512xf32>
    %454 = vector.broadcast %89 : vector<1x512xf32> to vector<2x512xf32>
    %455 = arith.addf %453, %454 : vector<2x512xf32>
    %456 = vector.extract_strided_slice %455 {offsets = [0, 0], sizes = [2, 128], strides = [1, 1]} : vector<2x512xf32> to vector<2x128xf32>
    %457 = arith.negf %456 : vector<2x128xf32>
    %458 = math.exp %457 : vector<2x128xf32>
    %cst_123 = arith.constant 1.000000e+00 : f32
    %459 = vector.broadcast %cst_123 : f32 to vector<2x128xf32>
    %460 = arith.addf %459, %458 : vector<2x128xf32>
    %461 = arith.divf %459, %460 : vector<2x128xf32>
    %462 = vector.extract_strided_slice %455 {offsets = [0, 128], sizes = [2, 128], strides = [1, 1]} : vector<2x512xf32> to vector<2x128xf32>
    %463 = arith.negf %462 : vector<2x128xf32>
    %464 = math.exp %463 : vector<2x128xf32>
    %cst_124 = arith.constant 1.000000e+00 : f32
    %465 = vector.broadcast %cst_124 : f32 to vector<2x128xf32>
    %466 = arith.addf %465, %464 : vector<2x128xf32>
    %467 = arith.divf %465, %466 : vector<2x128xf32>
    %468 = vector.extract_strided_slice %455 {offsets = [0, 256], sizes = [2, 128], strides = [1, 1]} : vector<2x512xf32> to vector<2x128xf32>
    %469 = math.tanh %468 : vector<2x128xf32>
    %470 = vector.extract_strided_slice %455 {offsets = [0, 384], sizes = [2, 128], strides = [1, 1]} : vector<2x512xf32> to vector<2x128xf32>
    %471 = arith.negf %470 : vector<2x128xf32>
    %472 = math.exp %471 : vector<2x128xf32>
    %cst_125 = arith.constant 1.000000e+00 : f32
    %473 = vector.broadcast %cst_125 : f32 to vector<2x128xf32>
    %474 = arith.addf %473, %472 : vector<2x128xf32>
    %475 = arith.divf %473, %474 : vector<2x128xf32>
    %476 = arith.mulf %467, %419 : vector<2x128xf32>
    %477 = arith.mulf %461, %469 : vector<2x128xf32>
    %478 = arith.addf %476, %477 : vector<2x128xf32>
    %479 = math.tanh %478 : vector<2x128xf32>
    %480 = arith.mulf %475, %479 : vector<2x128xf32>
    %c10_126 = arith.constant 10 : index
    %c0_127 = arith.constant 0 : index
    %481 = vector.load %arg10[%c10_126, %c0_127] : memref<32x128xf32, #tpu.memory_space<vmem>>, vector<2x128xf32>
    tpu.vector_store %arg10[%c10_126, %c0_127], %480 {strides = array<i32>} : memref<32x128xf32, #tpu.memory_space<vmem>>, vector<2x128xf32>,
    %482 = tpu.concatenate %452, %480 in 1 : vector<2x128xf32>, vector<2x128xf32> -> vector<2x256xf32>
    %cst_128 = arith.constant dense<0.000000e+00> : vector<2x1024xf32>
    %483 = tpu.matmul %482, %88, %cst_128 {dimension_numbers = #tpu.dot_dimension_numbers<[1], [0], [0], [1], [0, 0, 1, 1], [], []>} : vector<2x256xf32>, vector<256x1024xf32>, vector<2x1024xf32> -> vector<2x1024xf32>
    %484 = vector.extract_strided_slice %483 {offsets = [0, 0], sizes = [2, 512], strides = [1, 1]} : vector<2x1024xf32> to vector<2x512xf32>
    %c14_129 = arith.constant 14 : index
    %c0_130 = arith.constant 0 : index
    %485 = vector.load %arg9[%c14_129, %c0_130] : memref<32x512xf32, #tpu.memory_space<vmem>>, vector<2x512xf32>
    %486 = arith.addf %484, %485 : vector<2x512xf32>
    %487 = vector.extract_strided_slice %486 {offsets = [0, 0], sizes = [2, 128], strides = [1, 1]} : vector<2x512xf32> to vector<2x128xf32>
    %488 = arith.negf %487 : vector<2x128xf32>
    %489 = math.exp %488 : vector<2x128xf32>
    %cst_131 = arith.constant 1.000000e+00 : f32
    %490 = vector.broadcast %cst_131 : f32 to vector<2x128xf32>
    %491 = arith.addf %490, %489 : vector<2x128xf32>
    %492 = arith.divf %490, %491 : vector<2x128xf32>
    %493 = vector.extract_strided_slice %486 {offsets = [0, 128], sizes = [2, 128], strides = [1, 1]} : vector<2x512xf32> to vector<2x128xf32>
    %494 = arith.negf %493 : vector<2x128xf32>
    %495 = math.exp %494 : vector<2x128xf32>
    %cst_132 = arith.constant 1.000000e+00 : f32
    %496 = vector.broadcast %cst_132 : f32 to vector<2x128xf32>
    %497 = arith.addf %496, %495 : vector<2x128xf32>
    %498 = arith.divf %496, %497 : vector<2x128xf32>
    %499 = vector.extract_strided_slice %486 {offsets = [0, 256], sizes = [2, 128], strides = [1, 1]} : vector<2x512xf32> to vector<2x128xf32>
    %500 = math.tanh %499 : vector<2x128xf32>
    %501 = vector.extract_strided_slice %486 {offsets = [0, 384], sizes = [2, 128], strides = [1, 1]} : vector<2x512xf32> to vector<2x128xf32>
    %502 = arith.negf %501 : vector<2x128xf32>
    %503 = math.exp %502 : vector<2x128xf32>
    %cst_133 = arith.constant 1.000000e+00 : f32
    %504 = vector.broadcast %cst_133 : f32 to vector<2x128xf32>
    %505 = arith.addf %504, %503 : vector<2x128xf32>
    %506 = arith.divf %504, %505 : vector<2x128xf32>
    %507 = arith.mulf %498, %450 : vector<2x128xf32>
    %508 = arith.mulf %492, %500 : vector<2x128xf32>
    %509 = arith.addf %507, %508 : vector<2x128xf32>
    %510 = math.tanh %509 : vector<2x128xf32>
    %511 = arith.mulf %506, %510 : vector<2x128xf32>
    %512 = vector.extract_strided_slice %483 {offsets = [0, 512], sizes = [2, 512], strides = [1, 1]} : vector<2x1024xf32> to vector<2x512xf32>
    %513 = vector.broadcast %89 : vector<1x512xf32> to vector<2x512xf32>
    %514 = arith.addf %512, %513 : vector<2x512xf32>
    %515 = vector.extract_strided_slice %514 {offsets = [0, 0], sizes = [2, 128], strides = [1, 1]} : vector<2x512xf32> to vector<2x128xf32>
    %516 = arith.negf %515 : vector<2x128xf32>
    %517 = math.exp %516 : vector<2x128xf32>
    %cst_134 = arith.constant 1.000000e+00 : f32
    %518 = vector.broadcast %cst_134 : f32 to vector<2x128xf32>
    %519 = arith.addf %518, %517 : vector<2x128xf32>
    %520 = arith.divf %518, %519 : vector<2x128xf32>
    %521 = vector.extract_strided_slice %514 {offsets = [0, 128], sizes = [2, 128], strides = [1, 1]} : vector<2x512xf32> to vector<2x128xf32>
    %522 = arith.negf %521 : vector<2x128xf32>
    %523 = math.exp %522 : vector<2x128xf32>
    %cst_135 = arith.constant 1.000000e+00 : f32
    %524 = vector.broadcast %cst_135 : f32 to vector<2x128xf32>
    %525 = arith.addf %524, %523 : vector<2x128xf32>
    %526 = arith.divf %524, %525 : vector<2x128xf32>
    %527 = vector.extract_strided_slice %514 {offsets = [0, 256], sizes = [2, 128], strides = [1, 1]} : vector<2x512xf32> to vector<2x128xf32>
    %528 = math.tanh %527 : vector<2x128xf32>
    %529 = vector.extract_strided_slice %514 {offsets = [0, 384], sizes = [2, 128], strides = [1, 1]} : vector<2x512xf32> to vector<2x128xf32>
    %530 = arith.negf %529 : vector<2x128xf32>
    %531 = math.exp %530 : vector<2x128xf32>
    %cst_136 = arith.constant 1.000000e+00 : f32
    %532 = vector.broadcast %cst_136 : f32 to vector<2x128xf32>
    %533 = arith.addf %532, %531 : vector<2x128xf32>
    %534 = arith.divf %532, %533 : vector<2x128xf32>
    %535 = arith.mulf %526, %478 : vector<2x128xf32>
    %536 = arith.mulf %520, %528 : vector<2x128xf32>
    %537 = arith.addf %535, %536 : vector<2x128xf32>
    %538 = math.tanh %537 : vector<2x128xf32>
    %539 = arith.mulf %534, %538 : vector<2x128xf32>
    %c12_137 = arith.constant 12 : index
    %c0_138 = arith.constant 0 : index
    %540 = vector.load %arg10[%c12_137, %c0_138] : memref<32x128xf32, #tpu.memory_space<vmem>>, vector<2x128xf32>
    tpu.vector_store %arg10[%c12_137, %c0_138], %539 {strides = array<i32>} : memref<32x128xf32, #tpu.memory_space<vmem>>, vector<2x128xf32>,
    %541 = tpu.concatenate %511, %539 in 1 : vector<2x128xf32>, vector<2x128xf32> -> vector<2x256xf32>
    %cst_139 = arith.constant dense<0.000000e+00> : vector<2x1024xf32>
    %542 = tpu.matmul %541, %88, %cst_139 {dimension_numbers = #tpu.dot_dimension_numbers<[1], [0], [0], [1], [0, 0, 1, 1], [], []>} : vector<2x256xf32>, vector<256x1024xf32>, vector<2x1024xf32> -> vector<2x1024xf32>
    %543 = vector.extract_strided_slice %542 {offsets = [0, 0], sizes = [2, 512], strides = [1, 1]} : vector<2x1024xf32> to vector<2x512xf32>
    %c16_140 = arith.constant 16 : index
    %c0_141 = arith.constant 0 : index
    %544 = vector.load %arg9[%c16_140, %c0_141] : memref<32x512xf32, #tpu.memory_space<vmem>>, vector<2x512xf32>
    %545 = arith.addf %543, %544 : vector<2x512xf32>
    %546 = vector.extract_strided_slice %545 {offsets = [0, 0], sizes = [2, 128], strides = [1, 1]} : vector<2x512xf32> to vector<2x128xf32>
    %547 = arith.negf %546 : vector<2x128xf32>
    %548 = math.exp %547 : vector<2x128xf32>
    %cst_142 = arith.constant 1.000000e+00 : f32
    %549 = vector.broadcast %cst_142 : f32 to vector<2x128xf32>
    %550 = arith.addf %549, %548 : vector<2x128xf32>
    %551 = arith.divf %549, %550 : vector<2x128xf32>
    %552 = vector.extract_strided_slice %545 {offsets = [0, 128], sizes = [2, 128], strides = [1, 1]} : vector<2x512xf32> to vector<2x128xf32>
    %553 = arith.negf %552 : vector<2x128xf32>
    %554 = math.exp %553 : vector<2x128xf32>
    %cst_143 = arith.constant 1.000000e+00 : f32
    %555 = vector.broadcast %cst_143 : f32 to vector<2x128xf32>
    %556 = arith.addf %555, %554 : vector<2x128xf32>
    %557 = arith.divf %555, %556 : vector<2x128xf32>
    %558 = vector.extract_strided_slice %545 {offsets = [0, 256], sizes = [2, 128], strides = [1, 1]} : vector<2x512xf32> to vector<2x128xf32>
    %559 = math.tanh %558 : vector<2x128xf32>
    %560 = vector.extract_strided_slice %545 {offsets = [0, 384], sizes = [2, 128], strides = [1, 1]} : vector<2x512xf32> to vector<2x128xf32>
    %561 = arith.negf %560 : vector<2x128xf32>
    %562 = math.exp %561 : vector<2x128xf32>
    %cst_144 = arith.constant 1.000000e+00 : f32
    %563 = vector.broadcast %cst_144 : f32 to vector<2x128xf32>
    %564 = arith.addf %563, %562 : vector<2x128xf32>
    %565 = arith.divf %563, %564 : vector<2x128xf32>
    %566 = arith.mulf %557, %509 : vector<2x128xf32>
    %567 = arith.mulf %551, %559 : vector<2x128xf32>
    %568 = arith.addf %566, %567 : vector<2x128xf32>
    %569 = math.tanh %568 : vector<2x128xf32>
    %570 = arith.mulf %565, %569 : vector<2x128xf32>
    %571 = vector.extract_strided_slice %542 {offsets = [0, 512], sizes = [2, 512], strides = [1, 1]} : vector<2x1024xf32> to vector<2x512xf32>
    %572 = vector.broadcast %89 : vector<1x512xf32> to vector<2x512xf32>
    %573 = arith.addf %571, %572 : vector<2x512xf32>
    %574 = vector.extract_strided_slice %573 {offsets = [0, 0], sizes = [2, 128], strides = [1, 1]} : vector<2x512xf32> to vector<2x128xf32>
    %575 = arith.negf %574 : vector<2x128xf32>
    %576 = math.exp %575 : vector<2x128xf32>
    %cst_145 = arith.constant 1.000000e+00 : f32
    %577 = vector.broadcast %cst_145 : f32 to vector<2x128xf32>
    %578 = arith.addf %577, %576 : vector<2x128xf32>
    %579 = arith.divf %577, %578 : vector<2x128xf32>
    %580 = vector.extract_strided_slice %573 {offsets = [0, 128], sizes = [2, 128], strides = [1, 1]} : vector<2x512xf32> to vector<2x128xf32>
    %581 = arith.negf %580 : vector<2x128xf32>
    %582 = math.exp %581 : vector<2x128xf32>
    %cst_146 = arith.constant 1.000000e+00 : f32
    %583 = vector.broadcast %cst_146 : f32 to vector<2x128xf32>
    %584 = arith.addf %583, %582 : vector<2x128xf32>
    %585 = arith.divf %583, %584 : vector<2x128xf32>
    %586 = vector.extract_strided_slice %573 {offsets = [0, 256], sizes = [2, 128], strides = [1, 1]} : vector<2x512xf32> to vector<2x128xf32>
    %587 = math.tanh %586 : vector<2x128xf32>
    %588 = vector.extract_strided_slice %573 {offsets = [0, 384], sizes = [2, 128], strides = [1, 1]} : vector<2x512xf32> to vector<2x128xf32>
    %589 = arith.negf %588 : vector<2x128xf32>
    %590 = math.exp %589 : vector<2x128xf32>
    %cst_147 = arith.constant 1.000000e+00 : f32
    %591 = vector.broadcast %cst_147 : f32 to vector<2x128xf32>
    %592 = arith.addf %591, %590 : vector<2x128xf32>
    %593 = arith.divf %591, %592 : vector<2x128xf32>
    %594 = arith.mulf %585, %537 : vector<2x128xf32>
    %595 = arith.mulf %579, %587 : vector<2x128xf32>
    %596 = arith.addf %594, %595 : vector<2x128xf32>
    %597 = math.tanh %596 : vector<2x128xf32>
    %598 = arith.mulf %593, %597 : vector<2x128xf32>
    %c14_148 = arith.constant 14 : index
    %c0_149 = arith.constant 0 : index
    %599 = vector.load %arg10[%c14_148, %c0_149] : memref<32x128xf32, #tpu.memory_space<vmem>>, vector<2x128xf32>
    tpu.vector_store %arg10[%c14_148, %c0_149], %598 {strides = array<i32>} : memref<32x128xf32, #tpu.memory_space<vmem>>, vector<2x128xf32>,
    %600 = tpu.concatenate %570, %598 in 1 : vector<2x128xf32>, vector<2x128xf32> -> vector<2x256xf32>
    %cst_150 = arith.constant dense<0.000000e+00> : vector<2x1024xf32>
    %601 = tpu.matmul %600, %88, %cst_150 {dimension_numbers = #tpu.dot_dimension_numbers<[1], [0], [0], [1], [0, 0, 1, 1], [], []>} : vector<2x256xf32>, vector<256x1024xf32>, vector<2x1024xf32> -> vector<2x1024xf32>
    %602 = vector.extract_strided_slice %601 {offsets = [0, 0], sizes = [2, 512], strides = [1, 1]} : vector<2x1024xf32> to vector<2x512xf32>
    %c18_151 = arith.constant 18 : index
    %c0_152 = arith.constant 0 : index
    %603 = vector.load %arg9[%c18_151, %c0_152] : memref<32x512xf32, #tpu.memory_space<vmem>>, vector<2x512xf32>
    %604 = arith.addf %602, %603 : vector<2x512xf32>
    %605 = vector.extract_strided_slice %604 {offsets = [0, 0], sizes = [2, 128], strides = [1, 1]} : vector<2x512xf32> to vector<2x128xf32>
    %606 = arith.negf %605 : vector<2x128xf32>
    %607 = math.exp %606 : vector<2x128xf32>
    %cst_153 = arith.constant 1.000000e+00 : f32
    %608 = vector.broadcast %cst_153 : f32 to vector<2x128xf32>
    %609 = arith.addf %608, %607 : vector<2x128xf32>
    %610 = arith.divf %608, %609 : vector<2x128xf32>
    %611 = vector.extract_strided_slice %604 {offsets = [0, 128], sizes = [2, 128], strides = [1, 1]} : vector<2x512xf32> to vector<2x128xf32>
    %612 = arith.negf %611 : vector<2x128xf32>
    %613 = math.exp %612 : vector<2x128xf32>
    %cst_154 = arith.constant 1.000000e+00 : f32
    %614 = vector.broadcast %cst_154 : f32 to vector<2x128xf32>
    %615 = arith.addf %614, %613 : vector<2x128xf32>
    %616 = arith.divf %614, %615 : vector<2x128xf32>
    %617 = vector.extract_strided_slice %604 {offsets = [0, 256], sizes = [2, 128], strides = [1, 1]} : vector<2x512xf32> to vector<2x128xf32>
    %618 = math.tanh %617 : vector<2x128xf32>
    %619 = vector.extract_strided_slice %604 {offsets = [0, 384], sizes = [2, 128], strides = [1, 1]} : vector<2x512xf32> to vector<2x128xf32>
    %620 = arith.negf %619 : vector<2x128xf32>
    %621 = math.exp %620 : vector<2x128xf32>
    %cst_155 = arith.constant 1.000000e+00 : f32
    %622 = vector.broadcast %cst_155 : f32 to vector<2x128xf32>
    %623 = arith.addf %622, %621 : vector<2x128xf32>
    %624 = arith.divf %622, %623 : vector<2x128xf32>
    %625 = arith.mulf %616, %568 : vector<2x128xf32>
    %626 = arith.mulf %610, %618 : vector<2x128xf32>
    %627 = arith.addf %625, %626 : vector<2x128xf32>
    %628 = math.tanh %627 : vector<2x128xf32>
    %629 = arith.mulf %624, %628 : vector<2x128xf32>
    %630 = vector.extract_strided_slice %601 {offsets = [0, 512], sizes = [2, 512], strides = [1, 1]} : vector<2x1024xf32> to vector<2x512xf32>
    %631 = vector.broadcast %89 : vector<1x512xf32> to vector<2x512xf32>
    %632 = arith.addf %630, %631 : vector<2x512xf32>
    %633 = vector.extract_strided_slice %632 {offsets = [0, 0], sizes = [2, 128], strides = [1, 1]} : vector<2x512xf32> to vector<2x128xf32>
    %634 = arith.negf %633 : vector<2x128xf32>
    %635 = math.exp %634 : vector<2x128xf32>
    %cst_156 = arith.constant 1.000000e+00 : f32
    %636 = vector.broadcast %cst_156 : f32 to vector<2x128xf32>
    %637 = arith.addf %636, %635 : vector<2x128xf32>
    %638 = arith.divf %636, %637 : vector<2x128xf32>
    %639 = vector.extract_strided_slice %632 {offsets = [0, 128], sizes = [2, 128], strides = [1, 1]} : vector<2x512xf32> to vector<2x128xf32>
    %640 = arith.negf %639 : vector<2x128xf32>
    %641 = math.exp %640 : vector<2x128xf32>
    %cst_157 = arith.constant 1.000000e+00 : f32
    %642 = vector.broadcast %cst_157 : f32 to vector<2x128xf32>
    %643 = arith.addf %642, %641 : vector<2x128xf32>
    %644 = arith.divf %642, %643 : vector<2x128xf32>
    %645 = vector.extract_strided_slice %632 {offsets = [0, 256], sizes = [2, 128], strides = [1, 1]} : vector<2x512xf32> to vector<2x128xf32>
    %646 = math.tanh %645 : vector<2x128xf32>
    %647 = vector.extract_strided_slice %632 {offsets = [0, 384], sizes = [2, 128], strides = [1, 1]} : vector<2x512xf32> to vector<2x128xf32>
    %648 = arith.negf %647 : vector<2x128xf32>
    %649 = math.exp %648 : vector<2x128xf32>
    %cst_158 = arith.constant 1.000000e+00 : f32
    %650 = vector.broadcast %cst_158 : f32 to vector<2x128xf32>
    %651 = arith.addf %650, %649 : vector<2x128xf32>
    %652 = arith.divf %650, %651 : vector<2x128xf32>
    %653 = arith.mulf %644, %596 : vector<2x128xf32>
    %654 = arith.mulf %638, %646 : vector<2x128xf32>
    %655 = arith.addf %653, %654 : vector<2x128xf32>
    %656 = math.tanh %655 : vector<2x128xf32>
    %657 = arith.mulf %652, %656 : vector<2x128xf32>
    %c16_159 = arith.constant 16 : index
    %c0_160 = arith.constant 0 : index
    %658 = vector.load %arg10[%c16_159, %c0_160] : memref<32x128xf32, #tpu.memory_space<vmem>>, vector<2x128xf32>
    tpu.vector_store %arg10[%c16_159, %c0_160], %657 {strides = array<i32>} : memref<32x128xf32, #tpu.memory_space<vmem>>, vector<2x128xf32>,
    %659 = tpu.concatenate %629, %657 in 1 : vector<2x128xf32>, vector<2x128xf32> -> vector<2x256xf32>
    %cst_161 = arith.constant dense<0.000000e+00> : vector<2x1024xf32>
    %660 = tpu.matmul %659, %88, %cst_161 {dimension_numbers = #tpu.dot_dimension_numbers<[1], [0], [0], [1], [0, 0, 1, 1], [], []>} : vector<2x256xf32>, vector<256x1024xf32>, vector<2x1024xf32> -> vector<2x1024xf32>
    %661 = vector.extract_strided_slice %660 {offsets = [0, 0], sizes = [2, 512], strides = [1, 1]} : vector<2x1024xf32> to vector<2x512xf32>
    %c20_162 = arith.constant 20 : index
    %c0_163 = arith.constant 0 : index
    %662 = vector.load %arg9[%c20_162, %c0_163] : memref<32x512xf32, #tpu.memory_space<vmem>>, vector<2x512xf32>
    %663 = arith.addf %661, %662 : vector<2x512xf32>
    %664 = vector.extract_strided_slice %663 {offsets = [0, 0], sizes = [2, 128], strides = [1, 1]} : vector<2x512xf32> to vector<2x128xf32>
    %665 = arith.negf %664 : vector<2x128xf32>
    %666 = math.exp %665 : vector<2x128xf32>
    %cst_164 = arith.constant 1.000000e+00 : f32
    %667 = vector.broadcast %cst_164 : f32 to vector<2x128xf32>
    %668 = arith.addf %667, %666 : vector<2x128xf32>
    %669 = arith.divf %667, %668 : vector<2x128xf32>
    %670 = vector.extract_strided_slice %663 {offsets = [0, 128], sizes = [2, 128], strides = [1, 1]} : vector<2x512xf32> to vector<2x128xf32>
    %671 = arith.negf %670 : vector<2x128xf32>
    %672 = math.exp %671 : vector<2x128xf32>
    %cst_165 = arith.constant 1.000000e+00 : f32
    %673 = vector.broadcast %cst_165 : f32 to vector<2x128xf32>
    %674 = arith.addf %673, %672 : vector<2x128xf32>
    %675 = arith.divf %673, %674 : vector<2x128xf32>
    %676 = vector.extract_strided_slice %663 {offsets = [0, 256], sizes = [2, 128], strides = [1, 1]} : vector<2x512xf32> to vector<2x128xf32>
    %677 = math.tanh %676 : vector<2x128xf32>
    %678 = vector.extract_strided_slice %663 {offsets = [0, 384], sizes = [2, 128], strides = [1, 1]} : vector<2x512xf32> to vector<2x128xf32>
    %679 = arith.negf %678 : vector<2x128xf32>
    %680 = math.exp %679 : vector<2x128xf32>
    %cst_166 = arith.constant 1.000000e+00 : f32
    %681 = vector.broadcast %cst_166 : f32 to vector<2x128xf32>
    %682 = arith.addf %681, %680 : vector<2x128xf32>
    %683 = arith.divf %681, %682 : vector<2x128xf32>
    %684 = arith.mulf %675, %627 : vector<2x128xf32>
    %685 = arith.mulf %669, %677 : vector<2x128xf32>
    %686 = arith.addf %684, %685 : vector<2x128xf32>
    %687 = math.tanh %686 : vector<2x128xf32>
    %688 = arith.mulf %683, %687 : vector<2x128xf32>
    %689 = vector.extract_strided_slice %660 {offsets = [0, 512], sizes = [2, 512], strides = [1, 1]} : vector<2x1024xf32> to vector<2x512xf32>
    %690 = vector.broadcast %89 : vector<1x512xf32> to vector<2x512xf32>
    %691 = arith.addf %689, %690 : vector<2x512xf32>
    %692 = vector.extract_strided_slice %691 {offsets = [0, 0], sizes = [2, 128], strides = [1, 1]} : vector<2x512xf32> to vector<2x128xf32>
    %693 = arith.negf %692 : vector<2x128xf32>
    %694 = math.exp %693 : vector<2x128xf32>
    %cst_167 = arith.constant 1.000000e+00 : f32
    %695 = vector.broadcast %cst_167 : f32 to vector<2x128xf32>
    %696 = arith.addf %695, %694 : vector<2x128xf32>
    %697 = arith.divf %695, %696 : vector<2x128xf32>
    %698 = vector.extract_strided_slice %691 {offsets = [0, 128], sizes = [2, 128], strides = [1, 1]} : vector<2x512xf32> to vector<2x128xf32>
    %699 = arith.negf %698 : vector<2x128xf32>
    %700 = math.exp %699 : vector<2x128xf32>
    %cst_168 = arith.constant 1.000000e+00 : f32
    %701 = vector.broadcast %cst_168 : f32 to vector<2x128xf32>
    %702 = arith.addf %701, %700 : vector<2x128xf32>
    %703 = arith.divf %701, %702 : vector<2x128xf32>
    %704 = vector.extract_strided_slice %691 {offsets = [0, 256], sizes = [2, 128], strides = [1, 1]} : vector<2x512xf32> to vector<2x128xf32>
    %705 = math.tanh %704 : vector<2x128xf32>
    %706 = vector.extract_strided_slice %691 {offsets = [0, 384], sizes = [2, 128], strides = [1, 1]} : vector<2x512xf32> to vector<2x128xf32>
    %707 = arith.negf %706 : vector<2x128xf32>
    %708 = math.exp %707 : vector<2x128xf32>
    %cst_169 = arith.constant 1.000000e+00 : f32
    %709 = vector.broadcast %cst_169 : f32 to vector<2x128xf32>
    %710 = arith.addf %709, %708 : vector<2x128xf32>
    %711 = arith.divf %709, %710 : vector<2x128xf32>
    %712 = arith.mulf %703, %655 : vector<2x128xf32>
    %713 = arith.mulf %697, %705 : vector<2x128xf32>
    %714 = arith.addf %712, %713 : vector<2x128xf32>
    %715 = math.tanh %714 : vector<2x128xf32>
    %716 = arith.mulf %711, %715 : vector<2x128xf32>
    %c18_170 = arith.constant 18 : index
    %c0_171 = arith.constant 0 : index
    %717 = vector.load %arg10[%c18_170, %c0_171] : memref<32x128xf32, #tpu.memory_space<vmem>>, vector<2x128xf32>
    tpu.vector_store %arg10[%c18_170, %c0_171], %716 {strides = array<i32>} : memref<32x128xf32, #tpu.memory_space<vmem>>, vector<2x128xf32>,
    %718 = tpu.concatenate %688, %716 in 1 : vector<2x128xf32>, vector<2x128xf32> -> vector<2x256xf32>
    %cst_172 = arith.constant dense<0.000000e+00> : vector<2x1024xf32>
    %719 = tpu.matmul %718, %88, %cst_172 {dimension_numbers = #tpu.dot_dimension_numbers<[1], [0], [0], [1], [0, 0, 1, 1], [], []>} : vector<2x256xf32>, vector<256x1024xf32>, vector<2x1024xf32> -> vector<2x1024xf32>
    %720 = vector.extract_strided_slice %719 {offsets = [0, 0], sizes = [2, 512], strides = [1, 1]} : vector<2x1024xf32> to vector<2x512xf32>
    %c22_173 = arith.constant 22 : index
    %c0_174 = arith.constant 0 : index
    %721 = vector.load %arg9[%c22_173, %c0_174] : memref<32x512xf32, #tpu.memory_space<vmem>>, vector<2x512xf32>
    %722 = arith.addf %720, %721 : vector<2x512xf32>
    %723 = vector.extract_strided_slice %722 {offsets = [0, 0], sizes = [2, 128], strides = [1, 1]} : vector<2x512xf32> to vector<2x128xf32>
    %724 = arith.negf %723 : vector<2x128xf32>
    %725 = math.exp %724 : vector<2x128xf32>
    %cst_175 = arith.constant 1.000000e+00 : f32
    %726 = vector.broadcast %cst_175 : f32 to vector<2x128xf32>
    %727 = arith.addf %726, %725 : vector<2x128xf32>
    %728 = arith.divf %726, %727 : vector<2x128xf32>
    %729 = vector.extract_strided_slice %722 {offsets = [0, 128], sizes = [2, 128], strides = [1, 1]} : vector<2x512xf32> to vector<2x128xf32>
    %730 = arith.negf %729 : vector<2x128xf32>
    %731 = math.exp %730 : vector<2x128xf32>
    %cst_176 = arith.constant 1.000000e+00 : f32
    %732 = vector.broadcast %cst_176 : f32 to vector<2x128xf32>
    %733 = arith.addf %732, %731 : vector<2x128xf32>
    %734 = arith.divf %732, %733 : vector<2x128xf32>
    %735 = vector.extract_strided_slice %722 {offsets = [0, 256], sizes = [2, 128], strides = [1, 1]} : vector<2x512xf32> to vector<2x128xf32>
    %736 = math.tanh %735 : vector<2x128xf32>
    %737 = vector.extract_strided_slice %722 {offsets = [0, 384], sizes = [2, 128], strides = [1, 1]} : vector<2x512xf32> to vector<2x128xf32>
    %738 = arith.negf %737 : vector<2x128xf32>
    %739 = math.exp %738 : vector<2x128xf32>
    %cst_177 = arith.constant 1.000000e+00 : f32
    %740 = vector.broadcast %cst_177 : f32 to vector<2x128xf32>
    %741 = arith.addf %740, %739 : vector<2x128xf32>
    %742 = arith.divf %740, %741 : vector<2x128xf32>
    %743 = arith.mulf %734, %686 : vector<2x128xf32>
    %744 = arith.mulf %728, %736 : vector<2x128xf32>
    %745 = arith.addf %743, %744 : vector<2x128xf32>
    %746 = math.tanh %745 : vector<2x128xf32>
    %747 = arith.mulf %742, %746 : vector<2x128xf32>
    %748 = vector.extract_strided_slice %719 {offsets = [0, 512], sizes = [2, 512], strides = [1, 1]} : vector<2x1024xf32> to vector<2x512xf32>
    %749 = vector.broadcast %89 : vector<1x512xf32> to vector<2x512xf32>
    %750 = arith.addf %748, %749 : vector<2x512xf32>
    %751 = vector.extract_strided_slice %750 {offsets = [0, 0], sizes = [2, 128], strides = [1, 1]} : vector<2x512xf32> to vector<2x128xf32>
    %752 = arith.negf %751 : vector<2x128xf32>
    %753 = math.exp %752 : vector<2x128xf32>
    %cst_178 = arith.constant 1.000000e+00 : f32
    %754 = vector.broadcast %cst_178 : f32 to vector<2x128xf32>
    %755 = arith.addf %754, %753 : vector<2x128xf32>
    %756 = arith.divf %754, %755 : vector<2x128xf32>
    %757 = vector.extract_strided_slice %750 {offsets = [0, 128], sizes = [2, 128], strides = [1, 1]} : vector<2x512xf32> to vector<2x128xf32>
    %758 = arith.negf %757 : vector<2x128xf32>
    %759 = math.exp %758 : vector<2x128xf32>
    %cst_179 = arith.constant 1.000000e+00 : f32
    %760 = vector.broadcast %cst_179 : f32 to vector<2x128xf32>
    %761 = arith.addf %760, %759 : vector<2x128xf32>
    %762 = arith.divf %760, %761 : vector<2x128xf32>
    %763 = vector.extract_strided_slice %750 {offsets = [0, 256], sizes = [2, 128], strides = [1, 1]} : vector<2x512xf32> to vector<2x128xf32>
    %764 = math.tanh %763 : vector<2x128xf32>
    %765 = vector.extract_strided_slice %750 {offsets = [0, 384], sizes = [2, 128], strides = [1, 1]} : vector<2x512xf32> to vector<2x128xf32>
    %766 = arith.negf %765 : vector<2x128xf32>
    %767 = math.exp %766 : vector<2x128xf32>
    %cst_180 = arith.constant 1.000000e+00 : f32
    %768 = vector.broadcast %cst_180 : f32 to vector<2x128xf32>
    %769 = arith.addf %768, %767 : vector<2x128xf32>
    %770 = arith.divf %768, %769 : vector<2x128xf32>
    %771 = arith.mulf %762, %714 : vector<2x128xf32>
    %772 = arith.mulf %756, %764 : vector<2x128xf32>
    %773 = arith.addf %771, %772 : vector<2x128xf32>
    %774 = math.tanh %773 : vector<2x128xf32>
    %775 = arith.mulf %770, %774 : vector<2x128xf32>
    %c20_181 = arith.constant 20 : index
    %c0_182 = arith.constant 0 : index
    %776 = vector.load %arg10[%c20_181, %c0_182] : memref<32x128xf32, #tpu.memory_space<vmem>>, vector<2x128xf32>
    tpu.vector_store %arg10[%c20_181, %c0_182], %775 {strides = array<i32>} : memref<32x128xf32, #tpu.memory_space<vmem>>, vector<2x128xf32>,
    %777 = tpu.concatenate %747, %775 in 1 : vector<2x128xf32>, vector<2x128xf32> -> vector<2x256xf32>
    %cst_183 = arith.constant dense<0.000000e+00> : vector<2x1024xf32>
    %778 = tpu.matmul %777, %88, %cst_183 {dimension_numbers = #tpu.dot_dimension_numbers<[1], [0], [0], [1], [0, 0, 1, 1], [], []>} : vector<2x256xf32>, vector<256x1024xf32>, vector<2x1024xf32> -> vector<2x1024xf32>
    %779 = vector.extract_strided_slice %778 {offsets = [0, 0], sizes = [2, 512], strides = [1, 1]} : vector<2x1024xf32> to vector<2x512xf32>
    %c24_184 = arith.constant 24 : index
    %c0_185 = arith.constant 0 : index
    %780 = vector.load %arg9[%c24_184, %c0_185] : memref<32x512xf32, #tpu.memory_space<vmem>>, vector<2x512xf32>
    %781 = arith.addf %779, %780 : vector<2x512xf32>
    %782 = vector.extract_strided_slice %781 {offsets = [0, 0], sizes = [2, 128], strides = [1, 1]} : vector<2x512xf32> to vector<2x128xf32>
    %783 = arith.negf %782 : vector<2x128xf32>
    %784 = math.exp %783 : vector<2x128xf32>
    %cst_186 = arith.constant 1.000000e+00 : f32
    %785 = vector.broadcast %cst_186 : f32 to vector<2x128xf32>
    %786 = arith.addf %785, %784 : vector<2x128xf32>
    %787 = arith.divf %785, %786 : vector<2x128xf32>
    %788 = vector.extract_strided_slice %781 {offsets = [0, 128], sizes = [2, 128], strides = [1, 1]} : vector<2x512xf32> to vector<2x128xf32>
    %789 = arith.negf %788 : vector<2x128xf32>
    %790 = math.exp %789 : vector<2x128xf32>
    %cst_187 = arith.constant 1.000000e+00 : f32
    %791 = vector.broadcast %cst_187 : f32 to vector<2x128xf32>
    %792 = arith.addf %791, %790 : vector<2x128xf32>
    %793 = arith.divf %791, %792 : vector<2x128xf32>
    %794 = vector.extract_strided_slice %781 {offsets = [0, 256], sizes = [2, 128], strides = [1, 1]} : vector<2x512xf32> to vector<2x128xf32>
    %795 = math.tanh %794 : vector<2x128xf32>
    %796 = vector.extract_strided_slice %781 {offsets = [0, 384], sizes = [2, 128], strides = [1, 1]} : vector<2x512xf32> to vector<2x128xf32>
    %797 = arith.negf %796 : vector<2x128xf32>
    %798 = math.exp %797 : vector<2x128xf32>
    %cst_188 = arith.constant 1.000000e+00 : f32
    %799 = vector.broadcast %cst_188 : f32 to vector<2x128xf32>
    %800 = arith.addf %799, %798 : vector<2x128xf32>
    %801 = arith.divf %799, %800 : vector<2x128xf32>
    %802 = arith.mulf %793, %745 : vector<2x128xf32>
    %803 = arith.mulf %787, %795 : vector<2x128xf32>
    %804 = arith.addf %802, %803 : vector<2x128xf32>
    %805 = math.tanh %804 : vector<2x128xf32>
    %806 = arith.mulf %801, %805 : vector<2x128xf32>
    %807 = vector.extract_strided_slice %778 {offsets = [0, 512], sizes = [2, 512], strides = [1, 1]} : vector<2x1024xf32> to vector<2x512xf32>
    %808 = vector.broadcast %89 : vector<1x512xf32> to vector<2x512xf32>
    %809 = arith.addf %807, %808 : vector<2x512xf32>
    %810 = vector.extract_strided_slice %809 {offsets = [0, 0], sizes = [2, 128], strides = [1, 1]} : vector<2x512xf32> to vector<2x128xf32>
    %811 = arith.negf %810 : vector<2x128xf32>
    %812 = math.exp %811 : vector<2x128xf32>
    %cst_189 = arith.constant 1.000000e+00 : f32
    %813 = vector.broadcast %cst_189 : f32 to vector<2x128xf32>
    %814 = arith.addf %813, %812 : vector<2x128xf32>
    %815 = arith.divf %813, %814 : vector<2x128xf32>
    %816 = vector.extract_strided_slice %809 {offsets = [0, 128], sizes = [2, 128], strides = [1, 1]} : vector<2x512xf32> to vector<2x128xf32>
    %817 = arith.negf %816 : vector<2x128xf32>
    %818 = math.exp %817 : vector<2x128xf32>
    %cst_190 = arith.constant 1.000000e+00 : f32
    %819 = vector.broadcast %cst_190 : f32 to vector<2x128xf32>
    %820 = arith.addf %819, %818 : vector<2x128xf32>
    %821 = arith.divf %819, %820 : vector<2x128xf32>
    %822 = vector.extract_strided_slice %809 {offsets = [0, 256], sizes = [2, 128], strides = [1, 1]} : vector<2x512xf32> to vector<2x128xf32>
    %823 = math.tanh %822 : vector<2x128xf32>
    %824 = vector.extract_strided_slice %809 {offsets = [0, 384], sizes = [2, 128], strides = [1, 1]} : vector<2x512xf32> to vector<2x128xf32>
    %825 = arith.negf %824 : vector<2x128xf32>
    %826 = math.exp %825 : vector<2x128xf32>
    %cst_191 = arith.constant 1.000000e+00 : f32
    %827 = vector.broadcast %cst_191 : f32 to vector<2x128xf32>
    %828 = arith.addf %827, %826 : vector<2x128xf32>
    %829 = arith.divf %827, %828 : vector<2x128xf32>
    %830 = arith.mulf %821, %773 : vector<2x128xf32>
    %831 = arith.mulf %815, %823 : vector<2x128xf32>
    %832 = arith.addf %830, %831 : vector<2x128xf32>
    %833 = math.tanh %832 : vector<2x128xf32>
    %834 = arith.mulf %829, %833 : vector<2x128xf32>
    %c22_192 = arith.constant 22 : index
    %c0_193 = arith.constant 0 : index
    %835 = vector.load %arg10[%c22_192, %c0_193] : memref<32x128xf32, #tpu.memory_space<vmem>>, vector<2x128xf32>
    tpu.vector_store %arg10[%c22_192, %c0_193], %834 {strides = array<i32>} : memref<32x128xf32, #tpu.memory_space<vmem>>, vector<2x128xf32>,
    %836 = tpu.concatenate %806, %834 in 1 : vector<2x128xf32>, vector<2x128xf32> -> vector<2x256xf32>
    %cst_194 = arith.constant dense<0.000000e+00> : vector<2x1024xf32>
    %837 = tpu.matmul %836, %88, %cst_194 {dimension_numbers = #tpu.dot_dimension_numbers<[1], [0], [0], [1], [0, 0, 1, 1], [], []>} : vector<2x256xf32>, vector<256x1024xf32>, vector<2x1024xf32> -> vector<2x1024xf32>
    %838 = vector.extract_strided_slice %837 {offsets = [0, 0], sizes = [2, 512], strides = [1, 1]} : vector<2x1024xf32> to vector<2x512xf32>
    %c26_195 = arith.constant 26 : index
    %c0_196 = arith.constant 0 : index
    %839 = vector.load %arg9[%c26_195, %c0_196] : memref<32x512xf32, #tpu.memory_space<vmem>>, vector<2x512xf32>
    %840 = arith.addf %838, %839 : vector<2x512xf32>
    %841 = vector.extract_strided_slice %840 {offsets = [0, 0], sizes = [2, 128], strides = [1, 1]} : vector<2x512xf32> to vector<2x128xf32>
    %842 = arith.negf %841 : vector<2x128xf32>
    %843 = math.exp %842 : vector<2x128xf32>
    %cst_197 = arith.constant 1.000000e+00 : f32
    %844 = vector.broadcast %cst_197 : f32 to vector<2x128xf32>
    %845 = arith.addf %844, %843 : vector<2x128xf32>
    %846 = arith.divf %844, %845 : vector<2x128xf32>
    %847 = vector.extract_strided_slice %840 {offsets = [0, 128], sizes = [2, 128], strides = [1, 1]} : vector<2x512xf32> to vector<2x128xf32>
    %848 = arith.negf %847 : vector<2x128xf32>
    %849 = math.exp %848 : vector<2x128xf32>
    %cst_198 = arith.constant 1.000000e+00 : f32
    %850 = vector.broadcast %cst_198 : f32 to vector<2x128xf32>
    %851 = arith.addf %850, %849 : vector<2x128xf32>
    %852 = arith.divf %850, %851 : vector<2x128xf32>
    %853 = vector.extract_strided_slice %840 {offsets = [0, 256], sizes = [2, 128], strides = [1, 1]} : vector<2x512xf32> to vector<2x128xf32>
    %854 = math.tanh %853 : vector<2x128xf32>
    %855 = vector.extract_strided_slice %840 {offsets = [0, 384], sizes = [2, 128], strides = [1, 1]} : vector<2x512xf32> to vector<2x128xf32>
    %856 = arith.negf %855 : vector<2x128xf32>
    %857 = math.exp %856 : vector<2x128xf32>
    %cst_199 = arith.constant 1.000000e+00 : f32
    %858 = vector.broadcast %cst_199 : f32 to vector<2x128xf32>
    %859 = arith.addf %858, %857 : vector<2x128xf32>
    %860 = arith.divf %858, %859 : vector<2x128xf32>
    %861 = arith.mulf %852, %804 : vector<2x128xf32>
    %862 = arith.mulf %846, %854 : vector<2x128xf32>
    %863 = arith.addf %861, %862 : vector<2x128xf32>
    %864 = math.tanh %863 : vector<2x128xf32>
    %865 = arith.mulf %860, %864 : vector<2x128xf32>
    %866 = vector.extract_strided_slice %837 {offsets = [0, 512], sizes = [2, 512], strides = [1, 1]} : vector<2x1024xf32> to vector<2x512xf32>
    %867 = vector.broadcast %89 : vector<1x512xf32> to vector<2x512xf32>
    %868 = arith.addf %866, %867 : vector<2x512xf32>
    %869 = vector.extract_strided_slice %868 {offsets = [0, 0], sizes = [2, 128], strides = [1, 1]} : vector<2x512xf32> to vector<2x128xf32>
    %870 = arith.negf %869 : vector<2x128xf32>
    %871 = math.exp %870 : vector<2x128xf32>
    %cst_200 = arith.constant 1.000000e+00 : f32
    %872 = vector.broadcast %cst_200 : f32 to vector<2x128xf32>
    %873 = arith.addf %872, %871 : vector<2x128xf32>
    %874 = arith.divf %872, %873 : vector<2x128xf32>
    %875 = vector.extract_strided_slice %868 {offsets = [0, 128], sizes = [2, 128], strides = [1, 1]} : vector<2x512xf32> to vector<2x128xf32>
    %876 = arith.negf %875 : vector<2x128xf32>
    %877 = math.exp %876 : vector<2x128xf32>
    %cst_201 = arith.constant 1.000000e+00 : f32
    %878 = vector.broadcast %cst_201 : f32 to vector<2x128xf32>
    %879 = arith.addf %878, %877 : vector<2x128xf32>
    %880 = arith.divf %878, %879 : vector<2x128xf32>
    %881 = vector.extract_strided_slice %868 {offsets = [0, 256], sizes = [2, 128], strides = [1, 1]} : vector<2x512xf32> to vector<2x128xf32>
    %882 = math.tanh %881 : vector<2x128xf32>
    %883 = vector.extract_strided_slice %868 {offsets = [0, 384], sizes = [2, 128], strides = [1, 1]} : vector<2x512xf32> to vector<2x128xf32>
    %884 = arith.negf %883 : vector<2x128xf32>
    %885 = math.exp %884 : vector<2x128xf32>
    %cst_202 = arith.constant 1.000000e+00 : f32
    %886 = vector.broadcast %cst_202 : f32 to vector<2x128xf32>
    %887 = arith.addf %886, %885 : vector<2x128xf32>
    %888 = arith.divf %886, %887 : vector<2x128xf32>
    %889 = arith.mulf %880, %832 : vector<2x128xf32>
    %890 = arith.mulf %874, %882 : vector<2x128xf32>
    %891 = arith.addf %889, %890 : vector<2x128xf32>
    %892 = math.tanh %891 : vector<2x128xf32>
    %893 = arith.mulf %888, %892 : vector<2x128xf32>
    %c24_203 = arith.constant 24 : index
    %c0_204 = arith.constant 0 : index
    %894 = vector.load %arg10[%c24_203, %c0_204] : memref<32x128xf32, #tpu.memory_space<vmem>>, vector<2x128xf32>
    tpu.vector_store %arg10[%c24_203, %c0_204], %893 {strides = array<i32>} : memref<32x128xf32, #tpu.memory_space<vmem>>, vector<2x128xf32>,
    %895 = tpu.concatenate %865, %893 in 1 : vector<2x128xf32>, vector<2x128xf32> -> vector<2x256xf32>
    %cst_205 = arith.constant dense<0.000000e+00> : vector<2x1024xf32>
    %896 = tpu.matmul %895, %88, %cst_205 {dimension_numbers = #tpu.dot_dimension_numbers<[1], [0], [0], [1], [0, 0, 1, 1], [], []>} : vector<2x256xf32>, vector<256x1024xf32>, vector<2x1024xf32> -> vector<2x1024xf32>
    %897 = vector.extract_strided_slice %896 {offsets = [0, 0], sizes = [2, 512], strides = [1, 1]} : vector<2x1024xf32> to vector<2x512xf32>
    %c28_206 = arith.constant 28 : index
    %c0_207 = arith.constant 0 : index
    %898 = vector.load %arg9[%c28_206, %c0_207] : memref<32x512xf32, #tpu.memory_space<vmem>>, vector<2x512xf32>
    %899 = arith.addf %897, %898 : vector<2x512xf32>
    %900 = vector.extract_strided_slice %899 {offsets = [0, 0], sizes = [2, 128], strides = [1, 1]} : vector<2x512xf32> to vector<2x128xf32>
    %901 = arith.negf %900 : vector<2x128xf32>
    %902 = math.exp %901 : vector<2x128xf32>
    %cst_208 = arith.constant 1.000000e+00 : f32
    %903 = vector.broadcast %cst_208 : f32 to vector<2x128xf32>
    %904 = arith.addf %903, %902 : vector<2x128xf32>
    %905 = arith.divf %903, %904 : vector<2x128xf32>
    %906 = vector.extract_strided_slice %899 {offsets = [0, 128], sizes = [2, 128], strides = [1, 1]} : vector<2x512xf32> to vector<2x128xf32>
    %907 = arith.negf %906 : vector<2x128xf32>
    %908 = math.exp %907 : vector<2x128xf32>
    %cst_209 = arith.constant 1.000000e+00 : f32
    %909 = vector.broadcast %cst_209 : f32 to vector<2x128xf32>
    %910 = arith.addf %909, %908 : vector<2x128xf32>
    %911 = arith.divf %909, %910 : vector<2x128xf32>
    %912 = vector.extract_strided_slice %899 {offsets = [0, 256], sizes = [2, 128], strides = [1, 1]} : vector<2x512xf32> to vector<2x128xf32>
    %913 = math.tanh %912 : vector<2x128xf32>
    %914 = vector.extract_strided_slice %899 {offsets = [0, 384], sizes = [2, 128], strides = [1, 1]} : vector<2x512xf32> to vector<2x128xf32>
    %915 = arith.negf %914 : vector<2x128xf32>
    %916 = math.exp %915 : vector<2x128xf32>
    %cst_210 = arith.constant 1.000000e+00 : f32
    %917 = vector.broadcast %cst_210 : f32 to vector<2x128xf32>
    %918 = arith.addf %917, %916 : vector<2x128xf32>
    %919 = arith.divf %917, %918 : vector<2x128xf32>
    %920 = arith.mulf %911, %863 : vector<2x128xf32>
    %921 = arith.mulf %905, %913 : vector<2x128xf32>
    %922 = arith.addf %920, %921 : vector<2x128xf32>
    %923 = math.tanh %922 : vector<2x128xf32>
    %924 = arith.mulf %919, %923 : vector<2x128xf32>
    %925 = vector.extract_strided_slice %896 {offsets = [0, 512], sizes = [2, 512], strides = [1, 1]} : vector<2x1024xf32> to vector<2x512xf32>
    %926 = vector.broadcast %89 : vector<1x512xf32> to vector<2x512xf32>
    %927 = arith.addf %925, %926 : vector<2x512xf32>
    %928 = vector.extract_strided_slice %927 {offsets = [0, 0], sizes = [2, 128], strides = [1, 1]} : vector<2x512xf32> to vector<2x128xf32>
    %929 = arith.negf %928 : vector<2x128xf32>
    %930 = math.exp %929 : vector<2x128xf32>
    %cst_211 = arith.constant 1.000000e+00 : f32
    %931 = vector.broadcast %cst_211 : f32 to vector<2x128xf32>
    %932 = arith.addf %931, %930 : vector<2x128xf32>
    %933 = arith.divf %931, %932 : vector<2x128xf32>
    %934 = vector.extract_strided_slice %927 {offsets = [0, 128], sizes = [2, 128], strides = [1, 1]} : vector<2x512xf32> to vector<2x128xf32>
    %935 = arith.negf %934 : vector<2x128xf32>
    %936 = math.exp %935 : vector<2x128xf32>
    %cst_212 = arith.constant 1.000000e+00 : f32
    %937 = vector.broadcast %cst_212 : f32 to vector<2x128xf32>
    %938 = arith.addf %937, %936 : vector<2x128xf32>
    %939 = arith.divf %937, %938 : vector<2x128xf32>
    %940 = vector.extract_strided_slice %927 {offsets = [0, 256], sizes = [2, 128], strides = [1, 1]} : vector<2x512xf32> to vector<2x128xf32>
    %941 = math.tanh %940 : vector<2x128xf32>
    %942 = vector.extract_strided_slice %927 {offsets = [0, 384], sizes = [2, 128], strides = [1, 1]} : vector<2x512xf32> to vector<2x128xf32>
    %943 = arith.negf %942 : vector<2x128xf32>
    %944 = math.exp %943 : vector<2x128xf32>
    %cst_213 = arith.constant 1.000000e+00 : f32
    %945 = vector.broadcast %cst_213 : f32 to vector<2x128xf32>
    %946 = arith.addf %945, %944 : vector<2x128xf32>
    %947 = arith.divf %945, %946 : vector<2x128xf32>
    %948 = arith.mulf %939, %891 : vector<2x128xf32>
    %949 = arith.mulf %933, %941 : vector<2x128xf32>
    %950 = arith.addf %948, %949 : vector<2x128xf32>
    %951 = math.tanh %950 : vector<2x128xf32>
    %952 = arith.mulf %947, %951 : vector<2x128xf32>
    %c26_214 = arith.constant 26 : index
    %c0_215 = arith.constant 0 : index
    %953 = vector.load %arg10[%c26_214, %c0_215] : memref<32x128xf32, #tpu.memory_space<vmem>>, vector<2x128xf32>
    tpu.vector_store %arg10[%c26_214, %c0_215], %952 {strides = array<i32>} : memref<32x128xf32, #tpu.memory_space<vmem>>, vector<2x128xf32>,
    %954 = tpu.concatenate %924, %952 in 1 : vector<2x128xf32>, vector<2x128xf32> -> vector<2x256xf32>
    %cst_216 = arith.constant dense<0.000000e+00> : vector<2x1024xf32>
    %955 = tpu.matmul %954, %88, %cst_216 {dimension_numbers = #tpu.dot_dimension_numbers<[1], [0], [0], [1], [0, 0, 1, 1], [], []>} : vector<2x256xf32>, vector<256x1024xf32>, vector<2x1024xf32> -> vector<2x1024xf32>
    %956 = vector.extract_strided_slice %955 {offsets = [0, 0], sizes = [2, 512], strides = [1, 1]} : vector<2x1024xf32> to vector<2x512xf32>
    %c30_217 = arith.constant 30 : index
    %c0_218 = arith.constant 0 : index
    %957 = vector.load %arg9[%c30_217, %c0_218] : memref<32x512xf32, #tpu.memory_space<vmem>>, vector<2x512xf32>
    %958 = arith.addf %956, %957 : vector<2x512xf32>
    %959 = vector.extract_strided_slice %958 {offsets = [0, 0], sizes = [2, 128], strides = [1, 1]} : vector<2x512xf32> to vector<2x128xf32>
    %960 = arith.negf %959 : vector<2x128xf32>
    %961 = math.exp %960 : vector<2x128xf32>
    %cst_219 = arith.constant 1.000000e+00 : f32
    %962 = vector.broadcast %cst_219 : f32 to vector<2x128xf32>
    %963 = arith.addf %962, %961 : vector<2x128xf32>
    %964 = arith.divf %962, %963 : vector<2x128xf32>
    %965 = vector.extract_strided_slice %958 {offsets = [0, 128], sizes = [2, 128], strides = [1, 1]} : vector<2x512xf32> to vector<2x128xf32>
    %966 = arith.negf %965 : vector<2x128xf32>
    %967 = math.exp %966 : vector<2x128xf32>
    %cst_220 = arith.constant 1.000000e+00 : f32
    %968 = vector.broadcast %cst_220 : f32 to vector<2x128xf32>
    %969 = arith.addf %968, %967 : vector<2x128xf32>
    %970 = arith.divf %968, %969 : vector<2x128xf32>
    %971 = vector.extract_strided_slice %958 {offsets = [0, 256], sizes = [2, 128], strides = [1, 1]} : vector<2x512xf32> to vector<2x128xf32>
    %972 = math.tanh %971 : vector<2x128xf32>
    %973 = vector.extract_strided_slice %958 {offsets = [0, 384], sizes = [2, 128], strides = [1, 1]} : vector<2x512xf32> to vector<2x128xf32>
    %974 = arith.negf %973 : vector<2x128xf32>
    %975 = math.exp %974 : vector<2x128xf32>
    %cst_221 = arith.constant 1.000000e+00 : f32
    %976 = vector.broadcast %cst_221 : f32 to vector<2x128xf32>
    %977 = arith.addf %976, %975 : vector<2x128xf32>
    %978 = arith.divf %976, %977 : vector<2x128xf32>
    %979 = arith.mulf %970, %922 : vector<2x128xf32>
    %980 = arith.mulf %964, %972 : vector<2x128xf32>
    %981 = arith.addf %979, %980 : vector<2x128xf32>
    %982 = math.tanh %981 : vector<2x128xf32>
    %983 = arith.mulf %978, %982 : vector<2x128xf32>
    %984 = vector.extract_strided_slice %955 {offsets = [0, 512], sizes = [2, 512], strides = [1, 1]} : vector<2x1024xf32> to vector<2x512xf32>
    %985 = vector.broadcast %89 : vector<1x512xf32> to vector<2x512xf32>
    %986 = arith.addf %984, %985 : vector<2x512xf32>
    %987 = vector.extract_strided_slice %986 {offsets = [0, 0], sizes = [2, 128], strides = [1, 1]} : vector<2x512xf32> to vector<2x128xf32>
    %988 = arith.negf %987 : vector<2x128xf32>
    %989 = math.exp %988 : vector<2x128xf32>
    %cst_222 = arith.constant 1.000000e+00 : f32
    %990 = vector.broadcast %cst_222 : f32 to vector<2x128xf32>
    %991 = arith.addf %990, %989 : vector<2x128xf32>
    %992 = arith.divf %990, %991 : vector<2x128xf32>
    %993 = vector.extract_strided_slice %986 {offsets = [0, 128], sizes = [2, 128], strides = [1, 1]} : vector<2x512xf32> to vector<2x128xf32>
    %994 = arith.negf %993 : vector<2x128xf32>
    %995 = math.exp %994 : vector<2x128xf32>
    %cst_223 = arith.constant 1.000000e+00 : f32
    %996 = vector.broadcast %cst_223 : f32 to vector<2x128xf32>
    %997 = arith.addf %996, %995 : vector<2x128xf32>
    %998 = arith.divf %996, %997 : vector<2x128xf32>
    %999 = vector.extract_strided_slice %986 {offsets = [0, 256], sizes = [2, 128], strides = [1, 1]} : vector<2x512xf32> to vector<2x128xf32>
    %1000 = math.tanh %999 : vector<2x128xf32>
    %1001 = vector.extract_strided_slice %986 {offsets = [0, 384], sizes = [2, 128], strides = [1, 1]} : vector<2x512xf32> to vector<2x128xf32>
    %1002 = arith.negf %1001 : vector<2x128xf32>
    %1003 = math.exp %1002 : vector<2x128xf32>
    %cst_224 = arith.constant 1.000000e+00 : f32
    %1004 = vector.broadcast %cst_224 : f32 to vector<2x128xf32>
    %1005 = arith.addf %1004, %1003 : vector<2x128xf32>
    %1006 = arith.divf %1004, %1005 : vector<2x128xf32>
    %1007 = arith.mulf %998, %950 : vector<2x128xf32>
    %1008 = arith.mulf %992, %1000 : vector<2x128xf32>
    %1009 = arith.addf %1007, %1008 : vector<2x128xf32>
    %1010 = math.tanh %1009 : vector<2x128xf32>
    %1011 = arith.mulf %1006, %1010 : vector<2x128xf32>
    %c28_225 = arith.constant 28 : index
    %c0_226 = arith.constant 0 : index
    %1012 = vector.load %arg10[%c28_225, %c0_226] : memref<32x128xf32, #tpu.memory_space<vmem>>, vector<2x128xf32>
    tpu.vector_store %arg10[%c28_225, %c0_226], %1011 {strides = array<i32>} : memref<32x128xf32, #tpu.memory_space<vmem>>, vector<2x128xf32>,
    %1013 = tpu.concatenate %983, %1011 in 1 : vector<2x128xf32>, vector<2x128xf32> -> vector<2x256xf32>
    %cst_227 = arith.constant dense<0.000000e+00> : vector<2x1024xf32>
    %1014 = tpu.matmul %1013, %88, %cst_227 {dimension_numbers = #tpu.dot_dimension_numbers<[1], [0], [0], [1], [0, 0, 1, 1], [], []>} : vector<2x256xf32>, vector<256x1024xf32>, vector<2x1024xf32> -> vector<2x1024xf32>
    %1015 = vector.extract_strided_slice %1014 {offsets = [0, 512], sizes = [2, 512], strides = [1, 1]} : vector<2x1024xf32> to vector<2x512xf32>
    %1016 = vector.broadcast %89 : vector<1x512xf32> to vector<2x512xf32>
    %1017 = arith.addf %1015, %1016 : vector<2x512xf32>
    %1018 = vector.extract_strided_slice %1017 {offsets = [0, 0], sizes = [2, 128], strides = [1, 1]} : vector<2x512xf32> to vector<2x128xf32>
    %1019 = arith.negf %1018 : vector<2x128xf32>
    %1020 = math.exp %1019 : vector<2x128xf32>
    %cst_228 = arith.constant 1.000000e+00 : f32
    %1021 = vector.broadcast %cst_228 : f32 to vector<2x128xf32>
    %1022 = arith.addf %1021, %1020 : vector<2x128xf32>
    %1023 = arith.divf %1021, %1022 : vector<2x128xf32>
    %1024 = vector.extract_strided_slice %1017 {offsets = [0, 128], sizes = [2, 128], strides = [1, 1]} : vector<2x512xf32> to vector<2x128xf32>
    %1025 = arith.negf %1024 : vector<2x128xf32>
    %1026 = math.exp %1025 : vector<2x128xf32>
    %cst_229 = arith.constant 1.000000e+00 : f32
    %1027 = vector.broadcast %cst_229 : f32 to vector<2x128xf32>
    %1028 = arith.addf %1027, %1026 : vector<2x128xf32>
    %1029 = arith.divf %1027, %1028 : vector<2x128xf32>
    %1030 = vector.extract_strided_slice %1017 {offsets = [0, 256], sizes = [2, 128], strides = [1, 1]} : vector<2x512xf32> to vector<2x128xf32>
    %1031 = math.tanh %1030 : vector<2x128xf32>
    %1032 = vector.extract_strided_slice %1017 {offsets = [0, 384], sizes = [2, 128], strides = [1, 1]} : vector<2x512xf32> to vector<2x128xf32>
    %1033 = arith.negf %1032 : vector<2x128xf32>
    %1034 = math.exp %1033 : vector<2x128xf32>
    %cst_230 = arith.constant 1.000000e+00 : f32
    %1035 = vector.broadcast %cst_230 : f32 to vector<2x128xf32>
    %1036 = arith.addf %1035, %1034 : vector<2x128xf32>
    %1037 = arith.divf %1035, %1036 : vector<2x128xf32>
    %1038 = arith.mulf %1029, %1009 : vector<2x128xf32>
    %1039 = arith.mulf %1023, %1031 : vector<2x128xf32>
    %1040 = arith.addf %1038, %1039 : vector<2x128xf32>
    %1041 = math.tanh %1040 : vector<2x128xf32>
    %1042 = arith.mulf %1037, %1041 : vector<2x128xf32>
    %c30_231 = arith.constant 30 : index
    %c0_232 = arith.constant 0 : index
    %1043 = vector.load %arg10[%c30_231, %c0_232] : memref<32x128xf32, #tpu.memory_space<vmem>>, vector<2x128xf32>
    tpu.vector_store %arg10[%c30_231, %c0_232], %1042 {strides = array<i32>} : memref<32x128xf32, #tpu.memory_space<vmem>>, vector<2x128xf32>,
    %c0_233 = arith.constant 0 : index
    %c0_234 = arith.constant 0 : index
    %1044 = vector.load %arg10[%c0_233, %c0_234] : memref<32x128xf32, #tpu.memory_space<vmem>>, vector<32x128xf32>
    %c0_235 = arith.constant 0 : index
    %c0_236 = arith.constant 0 : index
    %1045 = vector.load %arg5[%c0_235, %c0_236] : memref<129x8xf32, #tpu.memory_space<vmem>>, vector<128x8xf32>
    %cst_237 = arith.constant dense<0.000000e+00> : vector<32x8xf32>
    %1046 = tpu.matmul %1044, %1045, %cst_237 {dimension_numbers = #tpu.dot_dimension_numbers<[1], [0], [0], [1], [0, 0, 1, 1], [], []>} : vector<32x128xf32>, vector<128x8xf32>, vector<32x8xf32> -> vector<32x8xf32>
    %c128 = arith.constant 128 : index
    %c0_238 = arith.constant 0 : index
    %1047 = vector.load %arg5[%c128, %c0_238] : memref<129x8xf32, #tpu.memory_space<vmem>>, vector<1x8xf32>
    %1048 = vector.broadcast %1047 : vector<1x8xf32> to vector<32x8xf32>
    %1049 = arith.addf %1046, %1048 : vector<32x8xf32>
    %c0_239 = arith.constant 0 : index
    %c0_240 = arith.constant 0 : index
    %1050 = vector.load %arg8[%c0_239, %c0_240] : memref<32x8xf32, #tpu.memory_space<vmem>>, vector<32x8xf32>
    tpu.vector_store %arg8[%c0_239, %c0_240], %1049 {strides = array<i32>} : memref<32x8xf32, #tpu.memory_space<vmem>>, vector<32x8xf32>,
    return
  }
}

</mosaic_0001>

<llo_original>
// kernel: rbm_lstm_forward.1
$region0: #{rbm_lstm_forward.1}
  #allocation0 [shape = 'u32[]', space=smem, size = 0x4, offset = 0x4, fixed_abs, tag = 'smem constant byte address 0x4 - core index']
  #allocation1 [shape = 'u32[144,128]{1,0:T(1,128)}', space=vmem, size = 0x12000, scoped, tag = 'internal scratch']
  #allocation2 [shape = 'f32[32,512]{1,0:T(8,128)}', space=vmem, size = 0x10000, scoped, tag = 'scratch operand']
  #allocation3 [shape = 'f32[32,128]{1,0:T(8,128)}', space=vmem, size = 0x4000, scoped, tag = 'scratch operand']
  %s0 = inlined_call_operand.vmem [shape: f32[2,256], index: 0, kind: input, shape index: {}]
  %s1 = inlined_call_operand.hbm [shape: f32[257,256], index: 1, kind: input, shape index: {}]
  %s2 = inlined_call_operand.vmem [shape: f32[16,512], index: 2, kind: input, shape index: {}]
  %s3 = inlined_call_operand.vmem [shape: f32[2,512], index: 3, kind: input, shape index: {}]
  %s4 = inlined_call_operand.hbm [shape: f32[256,1024], index: 4, kind: input, shape index: {}]
  %s5 = inlined_call_operand.vmem [shape: f32[129,8], index: 5, kind: input, shape index: {}]
  %s6 = inlined_call_operand.vmem [shape: f32[2,2,128], index: 6, kind: input, shape index: {}]
  %s7 = inlined_call_operand.vmem [shape: f32[2,2,128], index: 7, kind: input, shape index: {}]
  %s8 = inlined_call_operand.vmem [shape: f32[32,8], index: 8, kind: output, shape index: {}]
  %s9 = sld [smem:[#allocation0]]
  $region50: #{rbm_lstm_forward.1} parent=0
    _
  %s11 = ssub.s32 1, %s9
  %s12 = scalar_select 0, %s11, %s9
  $region1: #{rbm_lstm_forward.1} parent=0
    #allocation4 [shape = 'u8[270336]{0}', space=vmem, size = 0x42000, scoped, tag = 'input window, operand 1, single buffered']
    #allocation5 [shape = 's32[1]{0}', space=sflag, size = 0x4, scoped, tag = 'scoped memory for rbm_lstm_forward.1']
    #allocation6 [shape = 'u8[1048576]{0}', space=vmem, size = 0x100000, scoped, tag = 'input window, operand 4, single buffered']
    #allocation7 [shape = 's32[1]{0}', space=sflag, size = 0x4, scoped, tag = 'scoped memory for rbm_lstm_forward.1']
    %13 = vsyncpa [#allocation5], 0
    %14 = vsyncpa [#allocation7], 0
    // Predicated region
    $region2: #{rbm_lstm_forward.1} parent=1 // pred_check
      _
    $region3: #{rbm_lstm_forward.1} parent=1 // pred_check_branch
      %16 = sbr.rel (0) target = $region5
    $region4: #{rbm_lstm_forward.1} parent=1 // pred_region
      _
    $region5: #{rbm_lstm_forward.1} parent=1 // pred_fallthru
      _
    // Predicated region
    $region6: #{rbm_lstm_forward.1} parent=1 // pred_check
      _
    $region7: #{rbm_lstm_forward.1} parent=1 // pred_check_branch
      %18 = sbr.rel (0) target = $region9
    $region8: #{rbm_lstm_forward.1} parent=1 // pred_region
      %s20 = ssub.s32 8448, 8448
      %21 = vsyncadd [#allocation5], %s20
      %s22 = sshll.u32 [#allocation4], 4
      %s23 = int_to_ptr.vmem [resolvable:$true] %s22
      %28 = dma.hbm_to_vmem [thread:$0]  %s1, 8448, %s23, [#allocation5], 256, 256, 16
    $region9: #{rbm_lstm_forward.1} parent=1 // pred_fallthru
      _
    // Predicated region
    $region10: #{rbm_lstm_forward.1} parent=1 // pred_check
      _
    $region11: #{rbm_lstm_forward.1} parent=1 // pred_check_branch
      %30 = sbr.rel (0) target = $region13
    $region12: #{rbm_lstm_forward.1} parent=1 // pred_region
      _
    $region13: #{rbm_lstm_forward.1} parent=1 // pred_fallthru
      _
    // Predicated region
    $region14: #{rbm_lstm_forward.1} parent=1 // pred_check
      _
    $region15: #{rbm_lstm_forward.1} parent=1 // pred_check_branch
      %32 = sbr.rel (0) target = $region17
    $region16: #{rbm_lstm_forward.1} parent=1 // pred_region
      _
    $region17: #{rbm_lstm_forward.1} parent=1 // pred_fallthru
      _
    // Predicated region
    $region18: #{rbm_lstm_forward.1} parent=1 // pred_check
      _
    $region19: #{rbm_lstm_forward.1} parent=1 // pred_check_branch
      %34 = sbr.rel (0) target = $region21
    $region20: #{rbm_lstm_forward.1} parent=1 // pred_region
      %s36 = ssub.s32 32768, 32768
      %37 = vsyncadd [#allocation7], %s36
      %s38 = sshll.u32 [#allocation6], 4
      %s39 = int_to_ptr.vmem [resolvable:$true] %s38
      %44 = dma.hbm_to_vmem [thread:$0]  %s4, 32768, %s39, [#allocation7], 1024, 1024, 64
    $region21: #{rbm_lstm_forward.1} parent=1 // pred_fallthru
      _
    // Predicated region
    $region22: #{rbm_lstm_forward.1} parent=1 // pred_check
      _
    $region23: #{rbm_lstm_forward.1} parent=1 // pred_check_branch
      %46 = sbr.rel (0) target = $region25
    $region24: #{rbm_lstm_forward.1} parent=1 // pred_region
      _
    $region25: #{rbm_lstm_forward.1} parent=1 // pred_fallthru
      _
    // Predicated region
    $region26: #{rbm_lstm_forward.1} parent=1 // pred_check
      _
    $region27: #{rbm_lstm_forward.1} parent=1 // pred_check_branch
      %48 = sbr.rel (0) target = $region29
    $region28: #{rbm_lstm_forward.1} parent=1 // pred_region
      _
    $region29: #{rbm_lstm_forward.1} parent=1 // pred_fallthru
      _
    // Predicated region
    $region30: #{rbm_lstm_forward.1} parent=1 // pred_check
      _
    $region31: #{rbm_lstm_forward.1} parent=1 // pred_check_branch
      %50 = sbr.rel (0) target = $region33
    $region32: #{rbm_lstm_forward.1} parent=1 // pred_region
      _
    $region33: #{rbm_lstm_forward.1} parent=1 // pred_fallthru
      _
    // Predicated region
    $region34: #{rbm_lstm_forward.1} parent=1 // pred_check
      _
    $region35: #{rbm_lstm_forward.1} parent=1 // pred_check_branch
      %52 = sbr.rel (0) target = $region37
    $region36: #{rbm_lstm_forward.1} parent=1 // pred_region
      %53 = dma.done [#allocation5], 8448
    $region37: #{rbm_lstm_forward.1} parent=1 // pred_fallthru
      _
    // Predicated region
    $region38: #{rbm_lstm_forward.1} parent=1 // pred_check
      _
    $region39: #{rbm_lstm_forward.1} parent=1 // pred_check_branch
      %55 = sbr.rel (0) target = $region41
    $region40: #{rbm_lstm_forward.1} parent=1 // pred_region
      %56 = dma.done [#allocation7], 32768
    $region41: #{rbm_lstm_forward.1} parent=1 // pred_fallthru
      _
    %v57 = vld [vmem:[%s0] sm:$0xf]
    %v58 = vld [vmem:[#allocation4] sm:$0xff]
    %v59 = vld [vmem:[#allocation4 + $0x8] sm:$0xff]
    %v60 = vld [vmem:[#allocation4 + $0x10] sm:$0xff]
    %v61 = vld [vmem:[#allocation4 + $0x18] sm:$0xff]
    %v62 = vld [vmem:[#allocation4 + $0x20] sm:$0xff]
    %v63 = vld [vmem:[#allocation4 + $0x28] sm:$0xff]
    %v64 = vld [vmem:[#allocation4 + $0x30] sm:$0xff]
    %v65 = vld [vmem:[#allocation4 + $0x38] sm:$0xff]
    %v66 = vld [vmem:[#allocation4 + $0x40] sm:$0xff]
    %v67 = vld [vmem:[#allocation4 + $0x48] sm:$0xff]
    %v68 = vld [vmem:[#allocation4 + $0x50] sm:$0xff]
    %v69 = vld [vmem:[#allocation4 + $0x58] sm:$0xff]
    %v70 = vld [vmem:[#allocation4 + $0x60] sm:$0xff]
    %v71 = vld [vmem:[#allocation4 + $0x68] sm:$0xff]
    %v72 = vld [vmem:[#allocation4 + $0x70] sm:$0xff]
    %v73 = vld [vmem:[#allocation4 + $0x78] sm:$0xff]
    %v74 = vld [vmem:[#allocation4 + $0x80] sm:$0xff]
    %v75 = vld [vmem:[#allocation4 + $0x88] sm:$0xff]
    %v76 = vld [vmem:[#allocation4 + $0x90] sm:$0xff]
    %v77 = vld [vmem:[#allocation4 + $0x98] sm:$0xff]
    %v78 = vld [vmem:[#allocation4 + $0xa0] sm:$0xff]
    %v79 = vld [vmem:[#allocation4 + $0xa8] sm:$0xff]
    %v80 = vld [vmem:[#allocation4 + $0xb0] sm:$0xff]
    %v81 = vld [vmem:[#allocation4 + $0xb8] sm:$0xff]
    %v82 = vld [vmem:[#allocation4 + $0xc0] sm:$0xff]
    %v83 = vld [vmem:[#allocation4 + $0xc8] sm:$0xff]
    %v84 = vld [vmem:[#allocation4 + $0xd0] sm:$0xff]
    %v85 = vld [vmem:[#allocation4 + $0xd8] sm:$0xff]
    %v86 = vld [vmem:[#allocation4 + $0xe0] sm:$0xff]
    %v87 = vld [vmem:[#allocation4 + $0xe8] sm:$0xff]
    %v88 = vld [vmem:[#allocation4 + $0xf0] sm:$0xff]
    %v89 = vld [vmem:[#allocation4 + $0xf8] sm:$0xff]
    %v90 = vld [vmem:[#allocation4 + $0x100] sm:$0xff]
    %v91 = vld [vmem:[#allocation4 + $0x108] sm:$0xff]
    %v92 = vld [vmem:[#allocation4 + $0x110] sm:$0xff]
    %v93 = vld [vmem:[#allocation4 + $0x118] sm:$0xff]
    %v94 = vld [vmem:[#allocation4 + $0x120] sm:$0xff]
    %v95 = vld [vmem:[#allocation4 + $0x128] sm:$0xff]
    %v96 = vld [vmem:[#allocation4 + $0x130] sm:$0xff]
    %v97 = vld [vmem:[#allocation4 + $0x138] sm:$0xff]
    %v98 = vld [vmem:[#allocation4 + $0x140] sm:$0xff]
    %v99 = vld [vmem:[#allocation4 + $0x148] sm:$0xff]
    %v100 = vld [vmem:[#allocation4 + $0x150] sm:$0xff]
    %v101 = vld [vmem:[#allocation4 + $0x158] sm:$0xff]
    %v102 = vld [vmem:[#allocation4 + $0x160] sm:$0xff]
    %v103 = vld [vmem:[#allocation4 + $0x168] sm:$0xff]
    %v104 = vld [vmem:[#allocation4 + $0x170] sm:$0xff]
    %v105 = vld [vmem:[#allocation4 + $0x178] sm:$0xff]
    %v106 = vld [vmem:[#allocation4 + $0x180] sm:$0xff]
    %v107 = vld [vmem:[#allocation4 + $0x188] sm:$0xff]
    %v108 = vld [vmem:[#allocation4 + $0x190] sm:$0xff]
    %v109 = vld [vmem:[#allocation4 + $0x198] sm:$0xff]
    %v110 = vld [vmem:[#allocation4 + $0x1a0] sm:$0xff]
    %v111 = vld [vmem:[#allocation4 + $0x1a8] sm:$0xff]
    %v112 = vld [vmem:[#allocation4 + $0x1b0] sm:$0xff]
    %v113 = vld [vmem:[#allocation4 + $0x1b8] sm:$0xff]
    %v114 = vld [vmem:[#allocation4 + $0x1c0] sm:$0xff]
    %v115 = vld [vmem:[#allocation4 + $0x1c8] sm:$0xff]
    %v116 = vld [vmem:[#allocation4 + $0x1d0] sm:$0xff]
    %v117 = vld [vmem:[#allocation4 + $0x1d8] sm:$0xff]
    %v118 = vld [vmem:[#allocation4 + $0x1e0] sm:$0xff]
    %v119 = vld [vmem:[#allocation4 + $0x1e8] sm:$0xff]
    %v120 = vld [vmem:[#allocation4 + $0x1f0] sm:$0xff]
    %v121 = vld [vmem:[#allocation4 + $0x1f8] sm:$0xff]
    %s122 = scalar_lea.vmem [#allocation4], 512
    %v123 = vld [vmem:[%s122] ss:$8 sm:$0x3]
    %v125 = vlaneseq
    %v126 = vshrl.u32 %v125, 7
    %v127 = vsub.s32 0, %v126
    %v128 = vrot.slane %v123, %v127
    %v129 = vlaneseq
    %v130 = vshrl.u32 %v129, 7
    %v131 = vsub.s32 1, %v130
    %v132 = vrot.slane %v123, %v131
    %v137 = vunpack.c.l.s4 1983009808
    %v138 = vunpack.c.0.s8 %v137
    %v139 = vlaneseq
    %v140 = vshrl.u32 %v139, 7
    %v141 = vsub.s32 %v138, %v140
    %v142 = vrot.slane %v57, %v141
    %v143 = vcombine.high %v142, %v142
    %146 = vmatprep.subr.mxu0 %v89
    %147 = vmatpush1.msra.mxu0 %v88
    %148 = vmatprep.subr.mxu0 %v87
    %149 = vmatpush1.msra.mxu0 %v86
    %150 = vmatprep.subr.mxu0 %v85
    %151 = vmatpush1.msra.mxu0 %v84
    %152 = vmatprep.subr.mxu0 %v83
    %153 = vmatpush1.msra.mxu0 %v82
    %154 = vmatprep.subr.mxu0 %v81
    %155 = vmatpush1.msra.mxu0 %v80
    %156 = vmatprep.subr.mxu0 %v79
    %157 = vmatpush1.msra.mxu0 %v78
    %158 = vmatprep.subr.mxu0 %v77
    %159 = vmatpush1.msra.mxu0 %v76
    %160 = vmatprep.subr.mxu0 %v75
    %161 = vmatpush1.msra.mxu0 %v74
    %162 = vmatprep.subr.mxu0 %v73
    %163 = vmatpush1.msra.mxu0 %v72
    %164 = vmatprep.subr.mxu0 %v71
    %165 = vmatpush1.msra.mxu0 %v70
    %166 = vmatprep.subr.mxu0 %v69
    %167 = vmatpush1.msra.mxu0 %v68
    %168 = vmatprep.subr.mxu0 %v67
    %169 = vmatpush1.msra.mxu0 %v66
    %170 = vmatprep.subr.mxu0 %v65
    %171 = vmatpush1.msra.mxu0 %v64
    %172 = vmatprep.subr.mxu0 %v63
    %173 = vmatpush1.msra.mxu0 %v62
    %174 = vmatprep.subr.mxu0 %v61
    %175 = vmatpush1.msra.mxu0 %v60
    %176 = vmatprep.subr.mxu0 %v59
    %177 = vmatpush1.msra.mxu0 %v58
    %178 = vmatprep.subr.mxu0 %v121
    %179 = vmatpush2.msra.mxu0 %v120
    %180 = vmatprep.subr.mxu0 %v119
    %181 = vmatpush2.msra.mxu0 %v118
    %182 = vmatprep.subr.mxu0 %v117
    %183 = vmatpush2.msra.mxu0 %v116
    %184 = vmatprep.subr.mxu0 %v115
    %185 = vmatpush2.msra.mxu0 %v114
    %186 = vmatprep.subr.mxu0 %v113
    %187 = vmatpush2.msra.mxu0 %v112
    %188 = vmatprep.subr.mxu0 %v111
    %189 = vmatpush2.msra.mxu0 %v110
    %190 = vmatprep.subr.mxu0 %v109
    %191 = vmatpush2.msra.mxu0 %v108
    %192 = vmatprep.subr.mxu0 %v107
    %193 = vmatpush2.msra.mxu0 %v106
    %194 = vmatprep.subr.mxu0 %v105
    %195 = vmatpush2.msra.mxu0 %v104
    %196 = vmatprep.subr.mxu0 %v103
    %197 = vmatpush2.msra.mxu0 %v102
    %198 = vmatprep.subr.mxu0 %v101
    %199 = vmatpush2.msra.mxu0 %v100
    %200 = vmatprep.subr.mxu0 %v99
    %201 = vmatpush2.msra.mxu0 %v98
    %202 = vmatprep.subr.mxu0 %v97
    %203 = vmatpush2.msra.mxu0 %v96
    %204 = vmatprep.subr.mxu0 %v95
    %205 = vmatpush2.msra.mxu0 %v94
    %206 = vmatprep.subr.mxu0 %v93
    %207 = vmatpush2.msra.mxu0 %v92
    %208 = vmatprep.subr.mxu0 %v91
    %209 = vmatpush2.msra.mxu0 %v90
    %210 = vmatprep.mubr.f32.mxu0 %v143
    %211 = vmatmul.mubr.f32.gmra.mxu0 %v142
    %v212 = vpop.f32.mrf.mxu0
    %v213 = vadd.f32 %v128, %v212
    %v214 = vpop.f32.mrf.mxu0
    %v215 = vadd.f32 %v132, %v214
    %216 = vdwg.mxu0
    %v217 = vld [vmem:[%s2] sm:$0xff]
    %v218 = vld [vmem:[%s2 + $0x8] sm:$0xff]
    %v219 = vld [vmem:[%s2 + $0x10] sm:$0xff]
    %v220 = vld [vmem:[%s2 + $0x18] sm:$0xff]
    %v221 = vld [vmem:[%s2 + $0x20] sm:$0xff]
    %v222 = vld [vmem:[%s2 + $0x28] sm:$0xff]
    %v223 = vld [vmem:[%s2 + $0x30] sm:$0xff]
    %v224 = vld [vmem:[%s2 + $0x38] sm:$0xff]
    %v225 = vld [vmem:[%s3] ss:$2 sm:$0xf]
    %v227 = vlaneseq
    %v228 = vshrl.u32 %v227, 7
    %v229 = vsub.s32 0, %v228
    %v230 = vrot.slane %v225, %v229
    %v231 = vlaneseq
    %v232 = vshrl.u32 %v231, 7
    %v233 = vsub.s32 1, %v232
    %v234 = vrot.slane %v225, %v233
    %v235 = vlaneseq
    %v236 = vshrl.u32 %v235, 7
    %v237 = vsub.s32 2, %v236
    %v238 = vrot.slane %v225, %v237
    %v239 = vlaneseq
    %v240 = vshrl.u32 %v239, 7
    %v241 = vsub.s32 3, %v240
    %v242 = vrot.slane %v225, %v241
    %vm247 = vcmask 130048
    %v249 = vsel %vm247, %v213, 0
    %251 = vmatprep.subr.mxu0 0.0
    %252 = vmatpush1.msra.mxu0 0.0
    %253 = vmatprep.subr.mxu0 0.0
    %254 = vmatpush1.msra.mxu0 0.0
    %255 = vmatprep.subr.mxu0 0.0
    %256 = vmatpush1.msra.mxu0 0.0
    %257 = vmatprep.subr.mxu0 0.0
    %258 = vmatpush1.msra.mxu0 0.0
    %259 = vmatprep.subr.mxu0 0.0
    %260 = vmatpush1.msra.mxu0 0.0
    %261 = vmatprep.subr.mxu0 0.0
    %262 = vmatpush1.msra.mxu0 0.0
    %263 = vmatprep.subr.mxu0 0.0
    %264 = vmatpush1.msra.mxu0 0.0
    %265 = vmatprep.subr.mxu0 0.0
    %266 = vmatpush1.msra.mxu0 0.0
    %267 = vmatprep.subr.mxu0 0.0
    %268 = vmatpush1.msra.mxu0 0.0
    %269 = vmatprep.subr.mxu0 0.0
    %270 = vmatpush1.msra.mxu0 0.0
    %271 = vmatprep.subr.mxu0 0.0
    %272 = vmatpush1.msra.mxu0 0.0
    %273 = vmatprep.subr.mxu0 0.0
    %274 = vmatpush1.msra.mxu0 0.0
    %275 = vmatprep.subr.mxu0 0.0
    %276 = vmatpush1.msra.mxu0 0.0
    %277 = vmatprep.subr.mxu0 0.0
    %278 = vmatpush1.msra.mxu0 0.0
    %279 = vmatprep.subr.mxu0 %v222
    %280 = vmatpush1.msra.mxu0 %v221
    %281 = vmatprep.subr.mxu0 %v218
    %282 = vmatpush1.msra.mxu0 %v217
    %283 = vmatprep.subr.mxu0 0.0
    %284 = vmatpush2.msra.mxu0 0.0
    %285 = vmatprep.subr.mxu0 0.0
    %286 = vmatpush2.msra.mxu0 0.0
    %287 = vmatprep.subr.mxu0 0.0
    %288 = vmatpush2.msra.mxu0 0.0
    %289 = vmatprep.subr.mxu0 0.0
    %290 = vmatpush2.msra.mxu0 0.0
    %291 = vmatprep.subr.mxu0 0.0
    %292 = vmatpush2.msra.mxu0 0.0
    %293 = vmatprep.subr.mxu0 0.0
    %294 = vmatpush2.msra.mxu0 0.0
    %295 = vmatprep.subr.mxu0 0.0
    %296 = vmatpush2.msra.mxu0 0.0
    %297 = vmatprep.subr.mxu0 0.0
    %298 = vmatpush2.msra.mxu0 0.0
    %299 = vmatprep.subr.mxu0 0.0
    %300 = vmatpush2.msra.mxu0 0.0
    %301 = vmatprep.subr.mxu0 0.0
    %302 = vmatpush2.msra.mxu0 0.0
    %303 = vmatprep.subr.mxu0 0.0
    %304 = vmatpush2.msra.mxu0 0.0
    %305 = vmatprep.subr.mxu0 0.0
    %306 = vmatpush2.msra.mxu0 0.0
    %307 = vmatprep.subr.mxu0 0.0
    %308 = vmatpush2.msra.mxu0 0.0
    %309 = vmatprep.subr.mxu0 0.0
    %310 = vmatpush2.msra.mxu0 0.0
    %311 = vmatprep.subr.mxu0 0.0
    %312 = vmatpush2.msra.mxu0 0.0
    %313 = vmatprep.subr.mxu0 0.0
    %314 = vmatpush2.msra.mxu0 0.0
    %315 = vmatprep.mubr.f32.mxu0 0.0
    %316 = vmatmul.mubr.f32.gmra.mxu0 %v249
    %v317 = vpop.f32.mrf.mxu0
    %v318 = vadd.f32 %v230, %v317
    %v319 = vpop.f32.mrf.mxu0
    %v320 = vadd.f32 %v234, %v319
    %321 = vdwg.mxu0
    %322 = vmatprep.subr.mxu0 0.0
    %323 = vmatpush1.msra.mxu0 0.0
    %324 = vmatprep.subr.mxu0 0.0
    %325 = vmatpush1.msra.mxu0 0.0
    %326 = vmatprep.subr.mxu0 0.0
    %327 = vmatpush1.msra.mxu0 0.0
    %328 = vmatprep.subr.mxu0 0.0
    %329 = vmatpush1.msra.mxu0 0.0
    %330 = vmatprep.subr.mxu0 0.0
    %331 = vmatpush1.msra.mxu0 0.0
    %332 = vmatprep.subr.mxu0 0.0
    %333 = vmatpush1.msra.mxu0 0.0
    %334 = vmatprep.subr.mxu0 0.0
    %335 = vmatpush1.msra.mxu0 0.0
    %336 = vmatprep.subr.mxu0 0.0
    %337 = vmatpush1.msra.mxu0 0.0
    %338 = vmatprep.subr.mxu0 0.0
    %339 = vmatpush1.msra.mxu0 0.0
    %340 = vmatprep.subr.mxu0 0.0
    %341 = vmatpush1.msra.mxu0 0.0
    %342 = vmatprep.subr.mxu0 0.0
    %343 = vmatpush1.msra.mxu0 0.0
    %344 = vmatprep.subr.mxu0 0.0
    %345 = vmatpush1.msra.mxu0 0.0
    %346 = vmatprep.subr.mxu0 0.0
    %347 = vmatpush1.msra.mxu0 0.0
    %348 = vmatprep.subr.mxu0 0.0
    %349 = vmatpush1.msra.mxu0 0.0
    %350 = vmatprep.subr.mxu0 %v224
    %351 = vmatpush1.msra.mxu0 %v223
    %352 = vmatprep.subr.mxu0 %v220
    %353 = vmatpush1.msra.mxu0 %v219
    %354 = vmatprep.subr.mxu0 0.0
    %355 = vmatpush2.msra.mxu0 0.0
    %356 = vmatprep.subr.mxu0 0.0
    %357 = vmatpush2.msra.mxu0 0.0
    %358 = vmatprep.subr.mxu0 0.0
    %359 = vmatpush2.msra.mxu0 0.0
    %360 = vmatprep.subr.mxu0 0.0
    %361 = vmatpush2.msra.mxu0 0.0
    %362 = vmatprep.subr.mxu0 0.0
    %363 = vmatpush2.msra.mxu0 0.0
    %364 = vmatprep.subr.mxu0 0.0
    %365 = vmatpush2.msra.mxu0 0.0
    %366 = vmatprep.subr.mxu0 0.0
    %367 = vmatpush2.msra.mxu0 0.0
    %368 = vmatprep.subr.mxu0 0.0
    %369 = vmatpush2.msra.mxu0 0.0
    %370 = vmatprep.subr.mxu0 0.0
    %371 = vmatpush2.msra.mxu0 0.0
    %372 = vmatprep.subr.mxu0 0.0
    %373 = vmatpush2.msra.mxu0 0.0
    %374 = vmatprep.subr.mxu0 0.0
    %375 = vmatpush2.msra.mxu0 0.0
    %376 = vmatprep.subr.mxu0 0.0
    %377 = vmatpush2.msra.mxu0 0.0
    %378 = vmatprep.subr.mxu0 0.0
    %379 = vmatpush2.msra.mxu0 0.0
    %380 = vmatprep.subr.mxu0 0.0
    %381 = vmatpush2.msra.mxu0 0.0
    %382 = vmatprep.subr.mxu0 0.0
    %383 = vmatpush2.msra.mxu0 0.0
    %384 = vmatprep.subr.mxu0 0.0
    %385 = vmatpush2.msra.mxu0 0.0
    %386 = vmatprep.mubr.f32.mxu0 0.0
    %387 = vmatmul.mubr.f32.gmra.mxu0 %v249
    %v388 = vpop.f32.mrf.mxu0
    %v389 = vadd.f32 %v238, %v388
    %v390 = vpop.f32.mrf.mxu0
    %v391 = vadd.f32 %v242, %v390
    %392 = vdwg.mxu0
    %393 = vst [vmem:[#allocation2] sm:$0x3] %v318
    %394 = vst [vmem:[#allocation2 + $0x8] sm:$0x3] %v320
    %395 = vst [vmem:[#allocation2 + $0x10] sm:$0x3] %v389
    %396 = vst [vmem:[#allocation2 + $0x18] sm:$0x3] %v391
    %397 = vrot.lane.b32.xlu0 %v213, 112
    %v398 = vpop.permute.xlu0 %397
    %v399 = vsel %vm247, %v398, 0
    %401 = vmatprep.subr.mxu0 0.0
    %402 = vmatpush1.msra.mxu0 0.0
    %403 = vmatprep.subr.mxu0 0.0
    %404 = vmatpush1.msra.mxu0 0.0
    %405 = vmatprep.subr.mxu0 0.0
    %406 = vmatpush1.msra.mxu0 0.0
    %407 = vmatprep.subr.mxu0 0.0
    %408 = vmatpush1.msra.mxu0 0.0
    %409 = vmatprep.subr.mxu0 0.0
    %410 = vmatpush1.msra.mxu0 0.0
    %411 = vmatprep.subr.mxu0 0.0
    %412 = vmatpush1.msra.mxu0 0.0
    %413 = vmatprep.subr.mxu0 0.0
    %414 = vmatpush1.msra.mxu0 0.0
    %415 = vmatprep.subr.mxu0 0.0
    %416 = vmatpush1.msra.mxu0 0.0
    %417 = vmatprep.subr.mxu0 0.0
    %418 = vmatpush1.msra.mxu0 0.0
    %419 = vmatprep.subr.mxu0 0.0
    %420 = vmatpush1.msra.mxu0 0.0
    %421 = vmatprep.subr.mxu0 0.0
    %422 = vmatpush1.msra.mxu0 0.0
    %423 = vmatprep.subr.mxu0 0.0
    %424 = vmatpush1.msra.mxu0 0.0
    %425 = vmatprep.subr.mxu0 0.0
    %426 = vmatpush1.msra.mxu0 0.0
    %427 = vmatprep.subr.mxu0 0.0
    %428 = vmatpush1.msra.mxu0 0.0
    %429 = vmatprep.subr.mxu0 %v222
    %430 = vmatpush1.msra.mxu0 %v221
    %431 = vmatprep.subr.mxu0 %v218
    %432 = vmatpush1.msra.mxu0 %v217
    %433 = vmatprep.subr.mxu0 0.0
    %434 = vmatpush2.msra.mxu0 0.0
    %435 = vmatprep.subr.mxu0 0.0
    %436 = vmatpush2.msra.mxu0 0.0
    %437 = vmatprep.subr.mxu0 0.0
    %438 = vmatpush2.msra.mxu0 0.0
    %439 = vmatprep.subr.mxu0 0.0
    %440 = vmatpush2.msra.mxu0 0.0
    %441 = vmatprep.subr.mxu0 0.0
    %442 = vmatpush2.msra.mxu0 0.0
    %443 = vmatprep.subr.mxu0 0.0
    %444 = vmatpush2.msra.mxu0 0.0
    %445 = vmatprep.subr.mxu0 0.0
    %446 = vmatpush2.msra.mxu0 0.0
    %447 = vmatprep.subr.mxu0 0.0
    %448 = vmatpush2.msra.mxu0 0.0
    %449 = vmatprep.subr.mxu0 0.0
    %450 = vmatpush2.msra.mxu0 0.0
    %451 = vmatprep.subr.mxu0 0.0
    %452 = vmatpush2.msra.mxu0 0.0
    %453 = vmatprep.subr.mxu0 0.0
    %454 = vmatpush2.msra.mxu0 0.0
    %455 = vmatprep.subr.mxu0 0.0
    %456 = vmatpush2.msra.mxu0 0.0
    %457 = vmatprep.subr.mxu0 0.0
    %458 = vmatpush2.msra.mxu0 0.0
    %459 = vmatprep.subr.mxu0 0.0
    %460 = vmatpush2.msra.mxu0 0.0
    %461 = vmatprep.subr.mxu0 0.0
    %462 = vmatpush2.msra.mxu0 0.0
    %463 = vmatprep.subr.mxu0 0.0
    %464 = vmatpush2.msra.mxu0 0.0
    %465 = vmatprep.mubr.f32.mxu0 0.0
    %466 = vmatmul.mubr.f32.gmra.mxu0 %v399
    %v467 = vpop.f32.mrf.mxu0
    %v468 = vadd.f32 %v230, %v467
    %v469 = vpop.f32.mrf.mxu0
    %v470 = vadd.f32 %v234, %v469
    %471 = vdwg.mxu0
    %472 = vmatprep.subr.mxu0 0.0
    %473 = vmatpush1.msra.mxu0 0.0
    %474 = vmatprep.subr.mxu0 0.0
    %475 = vmatpush1.msra.mxu0 0.0
    %476 = vmatprep.subr.mxu0 0.0
    %477 = vmatpush1.msra.mxu0 0.0
    %478 = vmatprep.subr.mxu0 0.0
    %479 = vmatpush1.msra.mxu0 0.0
    %480 = vmatprep.subr.mxu0 0.0
    %481 = vmatpush1.msra.mxu0 0.0
    %482 = vmatprep.subr.mxu0 0.0
    %483 = vmatpush1.msra.mxu0 0.0
    %484 = vmatprep.subr.mxu0 0.0
    %485 = vmatpush1.msra.mxu0 0.0
    %486 = vmatprep.subr.mxu0 0.0
    %487 = vmatpush1.msra.mxu0 0.0
    %488 = vmatprep.subr.mxu0 0.0
    %489 = vmatpush1.msra.mxu0 0.0
    %490 = vmatprep.subr.mxu0 0.0
    %491 = vmatpush1.msra.mxu0 0.0
    %492 = vmatprep.subr.mxu0 0.0
    %493 = vmatpush1.msra.mxu0 0.0
    %494 = vmatprep.subr.mxu0 0.0
    %495 = vmatpush1.msra.mxu0 0.0
    %496 = vmatprep.subr.mxu0 0.0
    %497 = vmatpush1.msra.mxu0 0.0
    %498 = vmatprep.subr.mxu0 0.0
    %499 = vmatpush1.msra.mxu0 0.0
    %500 = vmatprep.subr.mxu0 %v224
    %501 = vmatpush1.msra.mxu0 %v223
    %502 = vmatprep.subr.mxu0 %v220
    %503 = vmatpush1.msra.mxu0 %v219
    %504 = vmatprep.subr.mxu0 0.0
    %505 = vmatpush2.msra.mxu0 0.0
    %506 = vmatprep.subr.mxu0 0.0
    %507 = vmatpush2.msra.mxu0 0.0
    %508 = vmatprep.subr.mxu0 0.0
    %509 = vmatpush2.msra.mxu0 0.0
    %510 = vmatprep.subr.mxu0 0.0
    %511 = vmatpush2.msra.mxu0 0.0
    %512 = vmatprep.subr.mxu0 0.0
    %513 = vmatpush2.msra.mxu0 0.0
    %514 = vmatprep.subr.mxu0 0.0
    %515 = vmatpush2.msra.mxu0 0.0
    %516 = vmatprep.subr.mxu0 0.0
    %517 = vmatpush2.msra.mxu0 0.0
    %518 = vmatprep.subr.mxu0 0.0
    %519 = vmatpush2.msra.mxu0 0.0
    %520 = vmatprep.subr.mxu0 0.0
    %521 = vmatpush2.msra.mxu0 0.0
    %522 = vmatprep.subr.mxu0 0.0
    %523 = vmatpush2.msra.mxu0 0.0
    %524 = vmatprep.subr.mxu0 0.0
    %525 = vmatpush2.msra.mxu0 0.0
    %526 = vmatprep.subr.mxu0 0.0
    %527 = vmatpush2.msra.mxu0 0.0
    %528 = vmatprep.subr.mxu0 0.0
    %529 = vmatpush2.msra.mxu0 0.0
    %530 = vmatprep.subr.mxu0 0.0
    %531 = vmatpush2.msra.mxu0 0.0
    %532 = vmatprep.subr.mxu0 0.0
    %533 = vmatpush2.msra.mxu0 0.0
    %534 = vmatprep.subr.mxu0 0.0
    %535 = vmatpush2.msra.mxu0 0.0
    %536 = vmatprep.mubr.f32.mxu0 0.0
    %537 = vmatmul.mubr.f32.gmra.mxu0 %v399
    %v538 = vpop.f32.mrf.mxu0
    %v539 = vadd.f32 %v238, %v538
    %v540 = vpop.f32.mrf.mxu0
    %v541 = vadd.f32 %v242, %v540
    %542 = vdwg.mxu0
    %v547 = vrot.slane %v468, 6
    %v548 = vrot.slane %v470, 6
    %v549 = vrot.slane %v539, 6
    %v550 = vrot.slane %v541, 6
    %555 = vst [vmem:[#allocation2] sm:$0xc] %v547
    %556 = vst [vmem:[#allocation2 + $0x8] sm:$0xc] %v548
    %557 = vst [vmem:[#allocation2 + $0x10] sm:$0xc] %v549
    %558 = vst [vmem:[#allocation2 + $0x18] sm:$0xc] %v550
    %559 = vrot.lane.b32.xlu0 %v213, 96
    %v560 = vpop.permute.xlu0 %559
    %v561 = vsel %vm247, %v560, 0
    %563 = vmatprep.subr.mxu0 0.0
    %564 = vmatpush1.msra.mxu0 0.0
    %565 = vmatprep.subr.mxu0 0.0
    %566 = vmatpush1.msra.mxu0 0.0
    %567 = vmatprep.subr.mxu0 0.0
    %568 = vmatpush1.msra.mxu0 0.0
    %569 = vmatprep.subr.mxu0 0.0
    %570 = vmatpush1.msra.mxu0 0.0
    %571 = vmatprep.subr.mxu0 0.0
    %572 = vmatpush1.msra.mxu0 0.0
    %573 = vmatprep.subr.mxu0 0.0
    %574 = vmatpush1.msra.mxu0 0.0
    %575 = vmatprep.subr.mxu0 0.0
    %576 = vmatpush1.msra.mxu0 0.0
    %577 = vmatprep.subr.mxu0 0.0
    %578 = vmatpush1.msra.mxu0 0.0
    %579 = vmatprep.subr.mxu0 0.0
    %580 = vmatpush1.msra.mxu0 0.0
    %581 = vmatprep.subr.mxu0 0.0
    %582 = vmatpush1.msra.mxu0 0.0
    %583 = vmatprep.subr.mxu0 0.0
    %584 = vmatpush1.msra.mxu0 0.0
    %585 = vmatprep.subr.mxu0 0.0
    %586 = vmatpush1.msra.mxu0 0.0
    %587 = vmatprep.subr.mxu0 0.0
    %588 = vmatpush1.msra.mxu0 0.0
    %589 = vmatprep.subr.mxu0 0.0
    %590 = vmatpush1.msra.mxu0 0.0
    %591 = vmatprep.subr.mxu0 %v222
    %592 = vmatpush1.msra.mxu0 %v221
    %593 = vmatprep.subr.mxu0 %v218
    %594 = vmatpush1.msra.mxu0 %v217
    %595 = vmatprep.subr.mxu0 0.0
    %596 = vmatpush2.msra.mxu0 0.0
    %597 = vmatprep.subr.mxu0 0.0
    %598 = vmatpush2.msra.mxu0 0.0
    %599 = vmatprep.subr.mxu0 0.0
    %600 = vmatpush2.msra.mxu0 0.0
    %601 = vmatprep.subr.mxu0 0.0
    %602 = vmatpush2.msra.mxu0 0.0
    %603 = vmatprep.subr.mxu0 0.0
    %604 = vmatpush2.msra.mxu0 0.0
    %605 = vmatprep.subr.mxu0 0.0
    %606 = vmatpush2.msra.mxu0 0.0
    %607 = vmatprep.subr.mxu0 0.0
    %608 = vmatpush2.msra.mxu0 0.0
    %609 = vmatprep.subr.mxu0 0.0
    %610 = vmatpush2.msra.mxu0 0.0
    %611 = vmatprep.subr.mxu0 0.0
    %612 = vmatpush2.msra.mxu0 0.0
    %613 = vmatprep.subr.mxu0 0.0
    %614 = vmatpush2.msra.mxu0 0.0
    %615 = vmatprep.subr.mxu0 0.0
    %616 = vmatpush2.msra.mxu0 0.0
    %617 = vmatprep.subr.mxu0 0.0
    %618 = vmatpush2.msra.mxu0 0.0
    %619 = vmatprep.subr.mxu0 0.0
    %620 = vmatpush2.msra.mxu0 0.0
    %621 = vmatprep.subr.mxu0 0.0
    %622 = vmatpush2.msra.mxu0 0.0
    %623 = vmatprep.subr.mxu0 0.0
    %624 = vmatpush2.msra.mxu0 0.0
    %625 = vmatprep.subr.mxu0 0.0
    %626 = vmatpush2.msra.mxu0 0.0
    %627 = vmatprep.mubr.f32.mxu0 0.0
    %628 = vmatmul.mubr.f32.gmra.mxu0 %v561
    %v629 = vpop.f32.mrf.mxu0
    %v630 = vadd.f32 %v230, %v629
    %v631 = vpop.f32.mrf.mxu0
    %v632 = vadd.f32 %v234, %v631
    %633 = vdwg.mxu0
    %634 = vmatprep.subr.mxu0 0.0
    %635 = vmatpush1.msra.mxu0 0.0
    %636 = vmatprep.subr.mxu0 0.0
    %637 = vmatpush1.msra.mxu0 0.0
    %638 = vmatprep.subr.mxu0 0.0
    %639 = vmatpush1.msra.mxu0 0.0
    %640 = vmatprep.subr.mxu0 0.0
    %641 = vmatpush1.msra.mxu0 0.0
    %642 = vmatprep.subr.mxu0 0.0
    %643 = vmatpush1.msra.mxu0 0.0
    %644 = vmatprep.subr.mxu0 0.0
    %645 = vmatpush1.msra.mxu0 0.0
    %646 = vmatprep.subr.mxu0 0.0
    %647 = vmatpush1.msra.mxu0 0.0
    %648 = vmatprep.subr.mxu0 0.0
    %649 = vmatpush1.msra.mxu0 0.0
    %650 = vmatprep.subr.mxu0 0.0
    %651 = vmatpush1.msra.mxu0 0.0
    %652 = vmatprep.subr.mxu0 0.0
    %653 = vmatpush1.msra.mxu0 0.0
    %654 = vmatprep.subr.mxu0 0.0
    %655 = vmatpush1.msra.mxu0 0.0
    %656 = vmatprep.subr.mxu0 0.0
    %657 = vmatpush1.msra.mxu0 0.0
    %658 = vmatprep.subr.mxu0 0.0
    %659 = vmatpush1.msra.mxu0 0.0
    %660 = vmatprep.subr.mxu0 0.0
    %661 = vmatpush1.msra.mxu0 0.0
    %662 = vmatprep.subr.mxu0 %v224
    %663 = vmatpush1.msra.mxu0 %v223
    %664 = vmatprep.subr.mxu0 %v220
    %665 = vmatpush1.msra.mxu0 %v219
    %666 = vmatprep.subr.mxu0 0.0
    %667 = vmatpush2.msra.mxu0 0.0
    %668 = vmatprep.subr.mxu0 0.0
    %669 = vmatpush2.msra.mxu0 0.0
    %670 = vmatprep.subr.mxu0 0.0
    %671 = vmatpush2.msra.mxu0 0.0
    %672 = vmatprep.subr.mxu0 0.0
    %673 = vmatpush2.msra.mxu0 0.0
    %674 = vmatprep.subr.mxu0 0.0
    %675 = vmatpush2.msra.mxu0 0.0
    %676 = vmatprep.subr.mxu0 0.0
    %677 = vmatpush2.msra.mxu0 0.0
    %678 = vmatprep.subr.mxu0 0.0
    %679 = vmatpush2.msra.mxu0 0.0
    %680 = vmatprep.subr.mxu0 0.0
    %681 = vmatpush2.msra.mxu0 0.0
    %682 = vmatprep.subr.mxu0 0.0
    %683 = vmatpush2.msra.mxu0 0.0
    %684 = vmatprep.subr.mxu0 0.0
    %685 = vmatpush2.msra.mxu0 0.0
    %686 = vmatprep.subr.mxu0 0.0
    %687 = vmatpush2.msra.mxu0 0.0
    %688 = vmatprep.subr.mxu0 0.0
    %689 = vmatpush2.msra.mxu0 0.0
    %690 = vmatprep.subr.mxu0 0.0
    %691 = vmatpush2.msra.mxu0 0.0
    %692 = vmatprep.subr.mxu0 0.0
    %693 = vmatpush2.msra.mxu0 0.0
    %694 = vmatprep.subr.mxu0 0.0
    %695 = vmatpush2.msra.mxu0 0.0
    %696 = vmatprep.subr.mxu0 0.0
    %697 = vmatpush2.msra.mxu0 0.0
    %698 = vmatprep.mubr.f32.mxu0 0.0
    %699 = vmatmul.mubr.f32.gmra.mxu0 %v561
    %v700 = vpop.f32.mrf.mxu0
    %v701 = vadd.f32 %v238, %v700
    %v702 = vpop.f32.mrf.mxu0
    %v703 = vadd.f32 %v242, %v702
    %704 = vdwg.mxu0
    %v709 = vrot.slane %v630, 4
    %v710 = vrot.slane %v632, 4
    %v711 = vrot.slane %v701, 4
    %v712 = vrot.slane %v703, 4
    %717 = vst [vmem:[#allocation2] sm:$0x30] %v709
    %718 = vst [vmem:[#allocation2 + $0x8] sm:$0x30] %v710
    %719 = vst [vmem:[#allocation2 + $0x10] sm:$0x30] %v711
    %720 = vst [vmem:[#allocation2 + $0x18] sm:$0x30] %v712
    %721 = vrot.lane.b32.xlu0 %v213, 80
    %v722 = vpop.permute.xlu0 %721
    %v723 = vsel %vm247, %v722, 0
    %725 = vmatprep.subr.mxu0 0.0
    %726 = vmatpush1.msra.mxu0 0.0
    %727 = vmatprep.subr.mxu0 0.0
    %728 = vmatpush1.msra.mxu0 0.0
    %729 = vmatprep.subr.mxu0 0.0
    %730 = vmatpush1.msra.mxu0 0.0
    %731 = vmatprep.subr.mxu0 0.0
    %732 = vmatpush1.msra.mxu0 0.0
    %733 = vmatprep.subr.mxu0 0.0
    %734 = vmatpush1.msra.mxu0 0.0
    %735 = vmatprep.subr.mxu0 0.0
    %736 = vmatpush1.msra.mxu0 0.0
    %737 = vmatprep.subr.mxu0 0.0
    %738 = vmatpush1.msra.mxu0 0.0
    %739 = vmatprep.subr.mxu0 0.0
    %740 = vmatpush1.msra.mxu0 0.0
    %741 = vmatprep.subr.mxu0 0.0
    %742 = vmatpush1.msra.mxu0 0.0
    %743 = vmatprep.subr.mxu0 0.0
    %744 = vmatpush1.msra.mxu0 0.0
    %745 = vmatprep.subr.mxu0 0.0
    %746 = vmatpush1.msra.mxu0 0.0
    %747 = vmatprep.subr.mxu0 0.0
    %748 = vmatpush1.msra.mxu0 0.0
    %749 = vmatprep.subr.mxu0 0.0
    %750 = vmatpush1.msra.mxu0 0.0
    %751 = vmatprep.subr.mxu0 0.0
    %752 = vmatpush1.msra.mxu0 0.0
    %753 = vmatprep.subr.mxu0 %v222
    %754 = vmatpush1.msra.mxu0 %v221
    %755 = vmatprep.subr.mxu0 %v218
    %756 = vmatpush1.msra.mxu0 %v217
    %757 = vmatprep.subr.mxu0 0.0
    %758 = vmatpush2.msra.mxu0 0.0
    %759 = vmatprep.subr.mxu0 0.0
    %760 = vmatpush2.msra.mxu0 0.0
    %761 = vmatprep.subr.mxu0 0.0
    %762 = vmatpush2.msra.mxu0 0.0
    %763 = vmatprep.subr.mxu0 0.0
    %764 = vmatpush2.msra.mxu0 0.0
    %765 = vmatprep.subr.mxu0 0.0
    %766 = vmatpush2.msra.mxu0 0.0
    %767 = vmatprep.subr.mxu0 0.0
    %768 = vmatpush2.msra.mxu0 0.0
    %769 = vmatprep.subr.mxu0 0.0
    %770 = vmatpush2.msra.mxu0 0.0
    %771 = vmatprep.subr.mxu0 0.0
    %772 = vmatpush2.msra.mxu0 0.0
    %773 = vmatprep.subr.mxu0 0.0
    %774 = vmatpush2.msra.mxu0 0.0
    %775 = vmatprep.subr.mxu0 0.0
    %776 = vmatpush2.msra.mxu0 0.0
    %777 = vmatprep.subr.mxu0 0.0
    %778 = vmatpush2.msra.mxu0 0.0
    %779 = vmatprep.subr.mxu0 0.0
    %780 = vmatpush2.msra.mxu0 0.0
    %781 = vmatprep.subr.mxu0 0.0
    %782 = vmatpush2.msra.mxu0 0.0
    %783 = vmatprep.subr.mxu0 0.0
    %784 = vmatpush2.msra.mxu0 0.0
    %785 = vmatprep.subr.mxu0 0.0
    %786 = vmatpush2.msra.mxu0 0.0
    %787 = vmatprep.subr.mxu0 0.0
    %788 = vmatpush2.msra.mxu0 0.0
    %789 = vmatprep.mubr.f32.mxu0 0.0
    %790 = vmatmul.mubr.f32.gmra.mxu0 %v723
    %v791 = vpop.f32.mrf.mxu0
    %v792 = vadd.f32 %v230, %v791
    %v793 = vpop.f32.mrf.mxu0
    %v794 = vadd.f32 %v234, %v793
    %795 = vdwg.mxu0
    %796 = vmatprep.subr.mxu0 0.0
    %797 = vmatpush1.msra.mxu0 0.0
    %798 = vmatprep.subr.mxu0 0.0
    %799 = vmatpush1.msra.mxu0 0.0
    %800 = vmatprep.subr.mxu0 0.0
    %801 = vmatpush1.msra.mxu0 0.0
    %802 = vmatprep.subr.mxu0 0.0
    %803 = vmatpush1.msra.mxu0 0.0
    %804 = vmatprep.subr.mxu0 0.0
    %805 = vmatpush1.msra.mxu0 0.0
    %806 = vmatprep.subr.mxu0 0.0
    %807 = vmatpush1.msra.mxu0 0.0
    %808 = vmatprep.subr.mxu0 0.0
    %809 = vmatpush1.msra.mxu0 0.0
    %810 = vmatprep.subr.mxu0 0.0
    %811 = vmatpush1.msra.mxu0 0.0
    %812 = vmatprep.subr.mxu0 0.0
    %813 = vmatpush1.msra.mxu0 0.0
    %814 = vmatprep.subr.mxu0 0.0
    %815 = vmatpush1.msra.mxu0 0.0
    %816 = vmatprep.subr.mxu0 0.0
    %817 = vmatpush1.msra.mxu0 0.0
    %818 = vmatprep.subr.mxu0 0.0
    %819 = vmatpush1.msra.mxu0 0.0
    %820 = vmatprep.subr.mxu0 0.0
    %821 = vmatpush1.msra.mxu0 0.0
    %822 = vmatprep.subr.mxu0 0.0
    %823 = vmatpush1.msra.mxu0 0.0
    %824 = vmatprep.subr.mxu0 %v224
    %825 = vmatpush1.msra.mxu0 %v223
    %826 = vmatprep.subr.mxu0 %v220
    %827 = vmatpush1.msra.mxu0 %v219
    %828 = vmatprep.subr.mxu0 0.0
    %829 = vmatpush2.msra.mxu0 0.0
    %830 = vmatprep.subr.mxu0 0.0
    %831 = vmatpush2.msra.mxu0 0.0
    %832 = vmatprep.subr.mxu0 0.0
    %833 = vmatpush2.msra.mxu0 0.0
    %834 = vmatprep.subr.mxu0 0.0
    %835 = vmatpush2.msra.mxu0 0.0
    %836 = vmatprep.subr.mxu0 0.0
    %837 = vmatpush2.msra.mxu0 0.0
    %838 = vmatprep.subr.mxu0 0.0
    %839 = vmatpush2.msra.mxu0 0.0
    %840 = vmatprep.subr.mxu0 0.0
    %841 = vmatpush2.msra.mxu0 0.0
    %842 = vmatprep.subr.mxu0 0.0
    %843 = vmatpush2.msra.mxu0 0.0
    %844 = vmatprep.subr.mxu0 0.0
    %845 = vmatpush2.msra.mxu0 0.0
    %846 = vmatprep.subr.mxu0 0.0
    %847 = vmatpush2.msra.mxu0 0.0
    %848 = vmatprep.subr.mxu0 0.0
    %849 = vmatpush2.msra.mxu0 0.0
    %850 = vmatprep.subr.mxu0 0.0
    %851 = vmatpush2.msra.mxu0 0.0
    %852 = vmatprep.subr.mxu0 0.0
    %853 = vmatpush2.msra.mxu0 0.0
    %854 = vmatprep.subr.mxu0 0.0
    %855 = vmatpush2.msra.mxu0 0.0
    %856 = vmatprep.subr.mxu0 0.0
    %857 = vmatpush2.msra.mxu0 0.0
    %858 = vmatprep.subr.mxu0 0.0
    %859 = vmatpush2.msra.mxu0 0.0
    %860 = vmatprep.mubr.f32.mxu0 0.0
    %861 = vmatmul.mubr.f32.gmra.mxu0 %v723
    %v862 = vpop.f32.mrf.mxu0
    %v863 = vadd.f32 %v238, %v862
    %v864 = vpop.f32.mrf.mxu0
    %v865 = vadd.f32 %v242, %v864
    %866 = vdwg.mxu0
    %v871 = vrot.slane %v792, 2
    %v872 = vrot.slane %v794, 2
    %v873 = vrot.slane %v863, 2
    %v874 = vrot.slane %v865, 2
    %879 = vst [vmem:[#allocation2] sm:$0xc0] %v871
    %880 = vst [vmem:[#allocation2 + $0x8] sm:$0xc0] %v872
    %881 = vst [vmem:[#allocation2 + $0x10] sm:$0xc0] %v873
    %882 = vst [vmem:[#allocation2 + $0x18] sm:$0xc0] %v874
    %883 = vrot.lane.b32.xlu0 %v213, 64
    %v884 = vpop.permute.xlu0 %883
    %v885 = vsel %vm247, %v884, 0
    %887 = vmatprep.subr.mxu0 0.0
    %888 = vmatpush1.msra.mxu0 0.0
    %889 = vmatprep.subr.mxu0 0.0
    %890 = vmatpush1.msra.mxu0 0.0
    %891 = vmatprep.subr.mxu0 0.0
    %892 = vmatpush1.msra.mxu0 0.0
    %893 = vmatprep.subr.mxu0 0.0
    %894 = vmatpush1.msra.mxu0 0.0
    %895 = vmatprep.subr.mxu0 0.0
    %896 = vmatpush1.msra.mxu0 0.0
    %897 = vmatprep.subr.mxu0 0.0
    %898 = vmatpush1.msra.mxu0 0.0
    %899 = vmatprep.subr.mxu0 0.0
    %900 = vmatpush1.msra.mxu0 0.0
    %901 = vmatprep.subr.mxu0 0.0
    %902 = vmatpush1.msra.mxu0 0.0
    %903 = vmatprep.subr.mxu0 0.0
    %904 = vmatpush1.msra.mxu0 0.0
    %905 = vmatprep.subr.mxu0 0.0
    %906 = vmatpush1.msra.mxu0 0.0
    %907 = vmatprep.subr.mxu0 0.0
    %908 = vmatpush1.msra.mxu0 0.0
    %909 = vmatprep.subr.mxu0 0.0
    %910 = vmatpush1.msra.mxu0 0.0
    %911 = vmatprep.subr.mxu0 0.0
    %912 = vmatpush1.msra.mxu0 0.0
    %913 = vmatprep.subr.mxu0 0.0
    %914 = vmatpush1.msra.mxu0 0.0
    %915 = vmatprep.subr.mxu0 %v222
    %916 = vmatpush1.msra.mxu0 %v221
    %917 = vmatprep.subr.mxu0 %v218
    %918 = vmatpush1.msra.mxu0 %v217
    %919 = vmatprep.subr.mxu0 0.0
    %920 = vmatpush2.msra.mxu0 0.0
    %921 = vmatprep.subr.mxu0 0.0
    %922 = vmatpush2.msra.mxu0 0.0
    %923 = vmatprep.subr.mxu0 0.0
    %924 = vmatpush2.msra.mxu0 0.0
    %925 = vmatprep.subr.mxu0 0.0
    %926 = vmatpush2.msra.mxu0 0.0
    %927 = vmatprep.subr.mxu0 0.0
    %928 = vmatpush2.msra.mxu0 0.0
    %929 = vmatprep.subr.mxu0 0.0
    %930 = vmatpush2.msra.mxu0 0.0
    %931 = vmatprep.subr.mxu0 0.0
    %932 = vmatpush2.msra.mxu0 0.0
    %933 = vmatprep.subr.mxu0 0.0
    %934 = vmatpush2.msra.mxu0 0.0
    %935 = vmatprep.subr.mxu0 0.0
    %936 = vmatpush2.msra.mxu0 0.0
    %937 = vmatprep.subr.mxu0 0.0
    %938 = vmatpush2.msra.mxu0 0.0
    %939 = vmatprep.subr.mxu0 0.0
    %940 = vmatpush2.msra.mxu0 0.0
    %941 = vmatprep.subr.mxu0 0.0
    %942 = vmatpush2.msra.mxu0 0.0
    %943 = vmatprep.subr.mxu0 0.0
    %944 = vmatpush2.msra.mxu0 0.0
    %945 = vmatprep.subr.mxu0 0.0
    %946 = vmatpush2.msra.mxu0 0.0
    %947 = vmatprep.subr.mxu0 0.0
    %948 = vmatpush2.msra.mxu0 0.0
    %949 = vmatprep.subr.mxu0 0.0
    %950 = vmatpush2.msra.mxu0 0.0
    %951 = vmatprep.mubr.f32.mxu0 0.0
    %952 = vmatmul.mubr.f32.gmra.mxu0 %v885
    %v953 = vpop.f32.mrf.mxu0
    %v954 = vadd.f32 %v230, %v953
    %v955 = vpop.f32.mrf.mxu0
    %v956 = vadd.f32 %v234, %v955
    %957 = vdwg.mxu0
    %958 = vmatprep.subr.mxu0 0.0
    %959 = vmatpush1.msra.mxu0 0.0
    %960 = vmatprep.subr.mxu0 0.0
    %961 = vmatpush1.msra.mxu0 0.0
    %962 = vmatprep.subr.mxu0 0.0
    %963 = vmatpush1.msra.mxu0 0.0
    %964 = vmatprep.subr.mxu0 0.0
    %965 = vmatpush1.msra.mxu0 0.0
    %966 = vmatprep.subr.mxu0 0.0
    %967 = vmatpush1.msra.mxu0 0.0
    %968 = vmatprep.subr.mxu0 0.0
    %969 = vmatpush1.msra.mxu0 0.0
    %970 = vmatprep.subr.mxu0 0.0
    %971 = vmatpush1.msra.mxu0 0.0
    %972 = vmatprep.subr.mxu0 0.0
    %973 = vmatpush1.msra.mxu0 0.0
    %974 = vmatprep.subr.mxu0 0.0
    %975 = vmatpush1.msra.mxu0 0.0
    %976 = vmatprep.subr.mxu0 0.0
    %977 = vmatpush1.msra.mxu0 0.0
    %978 = vmatprep.subr.mxu0 0.0
    %979 = vmatpush1.msra.mxu0 0.0
    %980 = vmatprep.subr.mxu0 0.0
    %981 = vmatpush1.msra.mxu0 0.0
    %982 = vmatprep.subr.mxu0 0.0
    %983 = vmatpush1.msra.mxu0 0.0
    %984 = vmatprep.subr.mxu0 0.0
    %985 = vmatpush1.msra.mxu0 0.0
    %986 = vmatprep.subr.mxu0 %v224
    %987 = vmatpush1.msra.mxu0 %v223
    %988 = vmatprep.subr.mxu0 %v220
    %989 = vmatpush1.msra.mxu0 %v219
    %990 = vmatprep.subr.mxu0 0.0
    %991 = vmatpush2.msra.mxu0 0.0
    %992 = vmatprep.subr.mxu0 0.0
    %993 = vmatpush2.msra.mxu0 0.0
    %994 = vmatprep.subr.mxu0 0.0
    %995 = vmatpush2.msra.mxu0 0.0
    %996 = vmatprep.subr.mxu0 0.0
    %997 = vmatpush2.msra.mxu0 0.0
    %998 = vmatprep.subr.mxu0 0.0
    %999 = vmatpush2.msra.mxu0 0.0
    %1000 = vmatprep.subr.mxu0 0.0
    %1001 = vmatpush2.msra.mxu0 0.0
    %1002 = vmatprep.subr.mxu0 0.0
    %1003 = vmatpush2.msra.mxu0 0.0
    %1004 = vmatprep.subr.mxu0 0.0
    %1005 = vmatpush2.msra.mxu0 0.0
    %1006 = vmatprep.subr.mxu0 0.0
    %1007 = vmatpush2.msra.mxu0 0.0
    %1008 = vmatprep.subr.mxu0 0.0
    %1009 = vmatpush2.msra.mxu0 0.0
    %1010 = vmatprep.subr.mxu0 0.0
    %1011 = vmatpush2.msra.mxu0 0.0
    %1012 = vmatprep.subr.mxu0 0.0
    %1013 = vmatpush2.msra.mxu0 0.0
    %1014 = vmatprep.subr.mxu0 0.0
    %1015 = vmatpush2.msra.mxu0 0.0
    %1016 = vmatprep.subr.mxu0 0.0
    %1017 = vmatpush2.msra.mxu0 0.0
    %1018 = vmatprep.subr.mxu0 0.0
    %1019 = vmatpush2.msra.mxu0 0.0
    %1020 = vmatprep.subr.mxu0 0.0
    %1021 = vmatpush2.msra.mxu0 0.0
    %1022 = vmatprep.mubr.f32.mxu0 0.0
    %1023 = vmatmul.mubr.f32.gmra.mxu0 %v885
    %v1024 = vpop.f32.mrf.mxu0
    %v1025 = vadd.f32 %v238, %v1024
    %v1026 = vpop.f32.mrf.mxu0
    %v1027 = vadd.f32 %v242, %v1026
    %1028 = vdwg.mxu0
    %1029 = vst [vmem:[#allocation2 + $0x20] sm:$0x3] %v954
    %1030 = vst [vmem:[#allocation2 + $0x28] sm:$0x3] %v956
    %1031 = vst [vmem:[#allocation2 + $0x30] sm:$0x3] %v1025
    %1032 = vst [vmem:[#allocation2 + $0x38] sm:$0x3] %v1027
    %1033 = vrot.lane.b32.xlu0 %v213, 48
    %v1034 = vpop.permute.xlu0 %1033
    %v1035 = vsel %vm247, %v1034, 0
    %1037 = vmatprep.subr.mxu0 0.0
    %1038 = vmatpush1.msra.mxu0 0.0
    %1039 = vmatprep.subr.mxu0 0.0
    %1040 = vmatpush1.msra.mxu0 0.0
    %1041 = vmatprep.subr.mxu0 0.0
    %1042 = vmatpush1.msra.mxu0 0.0
    %1043 = vmatprep.subr.mxu0 0.0
    %1044 = vmatpush1.msra.mxu0 0.0
    %1045 = vmatprep.subr.mxu0 0.0
    %1046 = vmatpush1.msra.mxu0 0.0
    %1047 = vmatprep.subr.mxu0 0.0
    %1048 = vmatpush1.msra.mxu0 0.0
    %1049 = vmatprep.subr.mxu0 0.0
    %1050 = vmatpush1.msra.mxu0 0.0
    %1051 = vmatprep.subr.mxu0 0.0
    %1052 = vmatpush1.msra.mxu0 0.0
    %1053 = vmatprep.subr.mxu0 0.0
    %1054 = vmatpush1.msra.mxu0 0.0
    %1055 = vmatprep.subr.mxu0 0.0
    %1056 = vmatpush1.msra.mxu0 0.0
    %1057 = vmatprep.subr.mxu0 0.0
    %1058 = vmatpush1.msra.mxu0 0.0
    %1059 = vmatprep.subr.mxu0 0.0
    %1060 = vmatpush1.msra.mxu0 0.0
    %1061 = vmatprep.subr.mxu0 0.0
    %1062 = vmatpush1.msra.mxu0 0.0
    %1063 = vmatprep.subr.mxu0 0.0
    %1064 = vmatpush1.msra.mxu0 0.0
    %1065 = vmatprep.subr.mxu0 %v222
    %1066 = vmatpush1.msra.mxu0 %v221
    %1067 = vmatprep.subr.mxu0 %v218
    %1068 = vmatpush1.msra.mxu0 %v217
    %1069 = vmatprep.subr.mxu0 0.0
    %1070 = vmatpush2.msra.mxu0 0.0
    %1071 = vmatprep.subr.mxu0 0.0
    %1072 = vmatpush2.msra.mxu0 0.0
    %1073 = vmatprep.subr.mxu0 0.0
    %1074 = vmatpush2.msra.mxu0 0.0
    %1075 = vmatprep.subr.mxu0 0.0
    %1076 = vmatpush2.msra.mxu0 0.0
    %1077 = vmatprep.subr.mxu0 0.0
    %1078 = vmatpush2.msra.mxu0 0.0
    %1079 = vmatprep.subr.mxu0 0.0
    %1080 = vmatpush2.msra.mxu0 0.0
    %1081 = vmatprep.subr.mxu0 0.0
    %1082 = vmatpush2.msra.mxu0 0.0
    %1083 = vmatprep.subr.mxu0 0.0
    %1084 = vmatpush2.msra.mxu0 0.0
    %1085 = vmatprep.subr.mxu0 0.0
    %1086 = vmatpush2.msra.mxu0 0.0
    %1087 = vmatprep.subr.mxu0 0.0
    %1088 = vmatpush2.msra.mxu0 0.0
    %1089 = vmatprep.subr.mxu0 0.0
    %1090 = vmatpush2.msra.mxu0 0.0
    %1091 = vmatprep.subr.mxu0 0.0
    %1092 = vmatpush2.msra.mxu0 0.0
    %1093 = vmatprep.subr.mxu0 0.0
    %1094 = vmatpush2.msra.mxu0 0.0
    %1095 = vmatprep.subr.mxu0 0.0
    %1096 = vmatpush2.msra.mxu0 0.0
    %1097 = vmatprep.subr.mxu0 0.0
    %1098 = vmatpush2.msra.mxu0 0.0
    %1099 = vmatprep.subr.mxu0 0.0
    %1100 = vmatpush2.msra.mxu0 0.0
    %1101 = vmatprep.mubr.f32.mxu0 0.0
    %1102 = vmatmul.mubr.f32.gmra.mxu0 %v1035
    %v1103 = vpop.f32.mrf.mxu0
    %v1104 = vadd.f32 %v230, %v1103
    %v1105 = vpop.f32.mrf.mxu0
    %v1106 = vadd.f32 %v234, %v1105
    %1107 = vdwg.mxu0
    %1108 = vmatprep.subr.mxu0 0.0
    %1109 = vmatpush1.msra.mxu0 0.0
    %1110 = vmatprep.subr.mxu0 0.0
    %1111 = vmatpush1.msra.mxu0 0.0
    %1112 = vmatprep.subr.mxu0 0.0
    %1113 = vmatpush1.msra.mxu0 0.0
    %1114 = vmatprep.subr.mxu0 0.0
    %1115 = vmatpush1.msra.mxu0 0.0
    %1116 = vmatprep.subr.mxu0 0.0
    %1117 = vmatpush1.msra.mxu0 0.0
    %1118 = vmatprep.subr.mxu0 0.0
    %1119 = vmatpush1.msra.mxu0 0.0
    %1120 = vmatprep.subr.mxu0 0.0
    %1121 = vmatpush1.msra.mxu0 0.0
    %1122 = vmatprep.subr.mxu0 0.0
    %1123 = vmatpush1.msra.mxu0 0.0
    %1124 = vmatprep.subr.mxu0 0.0
    %1125 = vmatpush1.msra.mxu0 0.0
    %1126 = vmatprep.subr.mxu0 0.0
    %1127 = vmatpush1.msra.mxu0 0.0
    %1128 = vmatprep.subr.mxu0 0.0
    %1129 = vmatpush1.msra.mxu0 0.0
    %1130 = vmatprep.subr.mxu0 0.0
    %1131 = vmatpush1.msra.mxu0 0.0
    %1132 = vmatprep.subr.mxu0 0.0
    %1133 = vmatpush1.msra.mxu0 0.0
    %1134 = vmatprep.subr.mxu0 0.0
    %1135 = vmatpush1.msra.mxu0 0.0
    %1136 = vmatprep.subr.mxu0 %v224
    %1137 = vmatpush1.msra.mxu0 %v223
    %1138 = vmatprep.subr.mxu0 %v220
    %1139 = vmatpush1.msra.mxu0 %v219
    %1140 = vmatprep.subr.mxu0 0.0
    %1141 = vmatpush2.msra.mxu0 0.0
    %1142 = vmatprep.subr.mxu0 0.0
    %1143 = vmatpush2.msra.mxu0 0.0
    %1144 = vmatprep.subr.mxu0 0.0
    %1145 = vmatpush2.msra.mxu0 0.0
    %1146 = vmatprep.subr.mxu0 0.0
    %1147 = vmatpush2.msra.mxu0 0.0
    %1148 = vmatprep.subr.mxu0 0.0
    %1149 = vmatpush2.msra.mxu0 0.0
    %1150 = vmatprep.subr.mxu0 0.0
    %1151 = vmatpush2.msra.mxu0 0.0
    %1152 = vmatprep.subr.mxu0 0.0
    %1153 = vmatpush2.msra.mxu0 0.0
    %1154 = vmatprep.subr.mxu0 0.0
    %1155 = vmatpush2.msra.mxu0 0.0
    %1156 = vmatprep.subr.mxu0 0.0
    %1157 = vmatpush2.msra.mxu0 0.0
    %1158 = vmatprep.subr.mxu0 0.0
    %1159 = vmatpush2.msra.mxu0 0.0
    %1160 = vmatprep.subr.mxu0 0.0
    %1161 = vmatpush2.msra.mxu0 0.0
    %1162 = vmatprep.subr.mxu0 0.0
    %1163 = vmatpush2.msra.mxu0 0.0
    %1164 = vmatprep.subr.mxu0 0.0
    %1165 = vmatpush2.msra.mxu0 0.0
    %1166 = vmatprep.subr.mxu0 0.0
    %1167 = vmatpush2.msra.mxu0 0.0
    %1168 = vmatprep.subr.mxu0 0.0
    %1169 = vmatpush2.msra.mxu0 0.0
    %1170 = vmatprep.subr.mxu0 0.0
    %1171 = vmatpush2.msra.mxu0 0.0
    %1172 = vmatprep.mubr.f32.mxu0 0.0
    %1173 = vmatmul.mubr.f32.gmra.mxu0 %v1035
    %v1174 = vpop.f32.mrf.mxu0
    %v1175 = vadd.f32 %v238, %v1174
    %v1176 = vpop.f32.mrf.mxu0
    %v1177 = vadd.f32 %v242, %v1176
    %1178 = vdwg.mxu0
    %v1183 = vrot.slane %v1104, 6
    %v1184 = vrot.slane %v1106, 6
    %v1185 = vrot.slane %v1175, 6
    %v1186 = vrot.slane %v1177, 6
    %1191 = vst [vmem:[#allocation2 + $0x20] sm:$0xc] %v1183
    %1192 = vst [vmem:[#allocation2 + $0x28] sm:$0xc] %v1184
    %1193 = vst [vmem:[#allocation2 + $0x30] sm:$0xc] %v1185
    %1194 = vst [vmem:[#allocation2 + $0x38] sm:$0xc] %v1186
    %1195 = vrot.lane.b32.xlu0 %v213, 32
    %v1196 = vpop.permute.xlu0 %1195
    %v1197 = vsel %vm247, %v1196, 0
    %1199 = vmatprep.subr.mxu0 0.0
    %1200 = vmatpush1.msra.mxu0 0.0
    %1201 = vmatprep.subr.mxu0 0.0
    %1202 = vmatpush1.msra.mxu0 0.0
    %1203 = vmatprep.subr.mxu0 0.0
    %1204 = vmatpush1.msra.mxu0 0.0
    %1205 = vmatprep.subr.mxu0 0.0
    %1206 = vmatpush1.msra.mxu0 0.0
    %1207 = vmatprep.subr.mxu0 0.0
    %1208 = vmatpush1.msra.mxu0 0.0
    %1209 = vmatprep.subr.mxu0 0.0
    %1210 = vmatpush1.msra.mxu0 0.0
    %1211 = vmatprep.subr.mxu0 0.0
    %1212 = vmatpush1.msra.mxu0 0.0
    %1213 = vmatprep.subr.mxu0 0.0
    %1214 = vmatpush1.msra.mxu0 0.0
    %1215 = vmatprep.subr.mxu0 0.0
    %1216 = vmatpush1.msra.mxu0 0.0
    %1217 = vmatprep.subr.mxu0 0.0
    %1218 = vmatpush1.msra.mxu0 0.0
    %1219 = vmatprep.subr.mxu0 0.0
    %1220 = vmatpush1.msra.mxu0 0.0
    %1221 = vmatprep.subr.mxu0 0.0
    %1222 = vmatpush1.msra.mxu0 0.0
    %1223 = vmatprep.subr.mxu0 0.0
    %1224 = vmatpush1.msra.mxu0 0.0
    %1225 = vmatprep.subr.mxu0 0.0
    %1226 = vmatpush1.msra.mxu0 0.0
    %1227 = vmatprep.subr.mxu0 %v222
    %1228 = vmatpush1.msra.mxu0 %v221
    %1229 = vmatprep.subr.mxu0 %v218
    %1230 = vmatpush1.msra.mxu0 %v217
    %1231 = vmatprep.subr.mxu0 0.0
    %1232 = vmatpush2.msra.mxu0 0.0
    %1233 = vmatprep.subr.mxu0 0.0
    %1234 = vmatpush2.msra.mxu0 0.0
    %1235 = vmatprep.subr.mxu0 0.0
    %1236 = vmatpush2.msra.mxu0 0.0
    %1237 = vmatprep.subr.mxu0 0.0
    %1238 = vmatpush2.msra.mxu0 0.0
    %1239 = vmatprep.subr.mxu0 0.0
    %1240 = vmatpush2.msra.mxu0 0.0
    %1241 = vmatprep.subr.mxu0 0.0
    %1242 = vmatpush2.msra.mxu0 0.0
    %1243 = vmatprep.subr.mxu0 0.0
    %1244 = vmatpush2.msra.mxu0 0.0
    %1245 = vmatprep.subr.mxu0 0.0
    %1246 = vmatpush2.msra.mxu0 0.0
    %1247 = vmatprep.subr.mxu0 0.0
    %1248 = vmatpush2.msra.mxu0 0.0
    %1249 = vmatprep.subr.mxu0 0.0
    %1250 = vmatpush2.msra.mxu0 0.0
    %1251 = vmatprep.subr.mxu0 0.0
    %1252 = vmatpush2.msra.mxu0 0.0
    %1253 = vmatprep.subr.mxu0 0.0
    %1254 = vmatpush2.msra.mxu0 0.0
    %1255 = vmatprep.subr.mxu0 0.0
    %1256 = vmatpush2.msra.mxu0 0.0
    %1257 = vmatprep.subr.mxu0 0.0
    %1258 = vmatpush2.msra.mxu0 0.0
    %1259 = vmatprep.subr.mxu0 0.0
    %1260 = vmatpush2.msra.mxu0 0.0
    %1261 = vmatprep.subr.mxu0 0.0
    %1262 = vmatpush2.msra.mxu0 0.0
    %1263 = vmatprep.mubr.f32.mxu0 0.0
    %1264 = vmatmul.mubr.f32.gmra.mxu0 %v1197
    %v1265 = vpop.f32.mrf.mxu0
    %v1266 = vadd.f32 %v230, %v1265
    %v1267 = vpop.f32.mrf.mxu0
    %v1268 = vadd.f32 %v234, %v1267
    %1269 = vdwg.mxu0
    %1270 = vmatprep.subr.mxu0 0.0
    %1271 = vmatpush1.msra.mxu0 0.0
    %1272 = vmatprep.subr.mxu0 0.0
    %1273 = vmatpush1.msra.mxu0 0.0
    %1274 = vmatprep.subr.mxu0 0.0
    %1275 = vmatpush1.msra.mxu0 0.0
    %1276 = vmatprep.subr.mxu0 0.0
    %1277 = vmatpush1.msra.mxu0 0.0
    %1278 = vmatprep.subr.mxu0 0.0
    %1279 = vmatpush1.msra.mxu0 0.0
    %1280 = vmatprep.subr.mxu0 0.0
    %1281 = vmatpush1.msra.mxu0 0.0
    %1282 = vmatprep.subr.mxu0 0.0
    %1283 = vmatpush1.msra.mxu0 0.0
    %1284 = vmatprep.subr.mxu0 0.0
    %1285 = vmatpush1.msra.mxu0 0.0
    %1286 = vmatprep.subr.mxu0 0.0
    %1287 = vmatpush1.msra.mxu0 0.0
    %1288 = vmatprep.subr.mxu0 0.0
    %1289 = vmatpush1.msra.mxu0 0.0
    %1290 = vmatprep.subr.mxu0 0.0
    %1291 = vmatpush1.msra.mxu0 0.0
    %1292 = vmatprep.subr.mxu0 0.0
    %1293 = vmatpush1.msra.mxu0 0.0
    %1294 = vmatprep.subr.mxu0 0.0
    %1295 = vmatpush1.msra.mxu0 0.0
    %1296 = vmatprep.subr.mxu0 0.0
    %1297 = vmatpush1.msra.mxu0 0.0
    %1298 = vmatprep.subr.mxu0 %v224
    %1299 = vmatpush1.msra.mxu0 %v223
    %1300 = vmatprep.subr.mxu0 %v220
    %1301 = vmatpush1.msra.mxu0 %v219
    %1302 = vmatprep.subr.mxu0 0.0
    %1303 = vmatpush2.msra.mxu0 0.0
    %1304 = vmatprep.subr.mxu0 0.0
    %1305 = vmatpush2.msra.mxu0 0.0
    %1306 = vmatprep.subr.mxu0 0.0
    %1307 = vmatpush2.msra.mxu0 0.0
    %1308 = vmatprep.subr.mxu0 0.0
    %1309 = vmatpush2.msra.mxu0 0.0
    %1310 = vmatprep.subr.mxu0 0.0
    %1311 = vmatpush2.msra.mxu0 0.0
    %1312 = vmatprep.subr.mxu0 0.0
    %1313 = vmatpush2.msra.mxu0 0.0
    %1314 = vmatprep.subr.mxu0 0.0
    %1315 = vmatpush2.msra.mxu0 0.0
    %1316 = vmatprep.subr.mxu0 0.0
    %1317 = vmatpush2.msra.mxu0 0.0
    %1318 = vmatprep.subr.mxu0 0.0
    %1319 = vmatpush2.msra.mxu0 0.0
    %1320 = vmatprep.subr.mxu0 0.0
    %1321 = vmatpush2.msra.mxu0 0.0
    %1322 = vmatprep.subr.mxu0 0.0
    %1323 = vmatpush2.msra.mxu0 0.0
    %1324 = vmatprep.subr.mxu0 0.0
    %1325 = vmatpush2.msra.mxu0 0.0
    %1326 = vmatprep.subr.mxu0 0.0
    %1327 = vmatpush2.msra.mxu0 0.0
    %1328 = vmatprep.subr.mxu0 0.0
    %1329 = vmatpush2.msra.mxu0 0.0
    %1330 = vmatprep.subr.mxu0 0.0
    %1331 = vmatpush2.msra.mxu0 0.0
    %1332 = vmatprep.subr.mxu0 0.0
    %1333 = vmatpush2.msra.mxu0 0.0
    %1334 = vmatprep.mubr.f32.mxu0 0.0
    %1335 = vmatmul.mubr.f32.gmra.mxu0 %v1197
    %v1336 = vpop.f32.mrf.mxu0
    %v1337 = vadd.f32 %v238, %v1336
    %v1338 = vpop.f32.mrf.mxu0
    %v1339 = vadd.f32 %v242, %v1338
    %1340 = vdwg.mxu0
    %v1345 = vrot.slane %v1266, 4
    %v1346 = vrot.slane %v1268, 4
    %v1347 = vrot.slane %v1337, 4
    %v1348 = vrot.slane %v1339, 4
    %1353 = vst [vmem:[#allocation2 + $0x20] sm:$0x30] %v1345
    %1354 = vst [vmem:[#allocation2 + $0x28] sm:$0x30] %v1346
    %1355 = vst [vmem:[#allocation2 + $0x30] sm:$0x30] %v1347
    %1356 = vst [vmem:[#allocation2 + $0x38] sm:$0x30] %v1348
    %1357 = vrot.lane.b32.xlu0 %v213, 16
    %v1358 = vpop.permute.xlu0 %1357
    %v1359 = vsel %vm247, %v1358, 0
    %1361 = vmatprep.subr.mxu0 0.0
    %1362 = vmatpush1.msra.mxu0 0.0
    %1363 = vmatprep.subr.mxu0 0.0
    %1364 = vmatpush1.msra.mxu0 0.0
    %1365 = vmatprep.subr.mxu0 0.0
    %1366 = vmatpush1.msra.mxu0 0.0
    %1367 = vmatprep.subr.mxu0 0.0
    %1368 = vmatpush1.msra.mxu0 0.0
    %1369 = vmatprep.subr.mxu0 0.0
    %1370 = vmatpush1.msra.mxu0 0.0
    %1371 = vmatprep.subr.mxu0 0.0
    %1372 = vmatpush1.msra.mxu0 0.0
    %1373 = vmatprep.subr.mxu0 0.0
    %1374 = vmatpush1.msra.mxu0 0.0
    %1375 = vmatprep.subr.mxu0 0.0
    %1376 = vmatpush1.msra.mxu0 0.0
    %1377 = vmatprep.subr.mxu0 0.0
    %1378 = vmatpush1.msra.mxu0 0.0
    %1379 = vmatprep.subr.mxu0 0.0
    %1380 = vmatpush1.msra.mxu0 0.0
    %1381 = vmatprep.subr.mxu0 0.0
    %1382 = vmatpush1.msra.mxu0 0.0
    %1383 = vmatprep.subr.mxu0 0.0
    %1384 = vmatpush1.msra.mxu0 0.0
    %1385 = vmatprep.subr.mxu0 0.0
    %1386 = vmatpush1.msra.mxu0 0.0
    %1387 = vmatprep.subr.mxu0 0.0
    %1388 = vmatpush1.msra.mxu0 0.0
    %1389 = vmatprep.subr.mxu0 %v222
    %1390 = vmatpush1.msra.mxu0 %v221
    %1391 = vmatprep.subr.mxu0 %v218
    %1392 = vmatpush1.msra.mxu0 %v217
    %1393 = vmatprep.subr.mxu0 0.0
    %1394 = vmatpush2.msra.mxu0 0.0
    %1395 = vmatprep.subr.mxu0 0.0
    %1396 = vmatpush2.msra.mxu0 0.0
    %1397 = vmatprep.subr.mxu0 0.0
    %1398 = vmatpush2.msra.mxu0 0.0
    %1399 = vmatprep.subr.mxu0 0.0
    %1400 = vmatpush2.msra.mxu0 0.0
    %1401 = vmatprep.subr.mxu0 0.0
    %1402 = vmatpush2.msra.mxu0 0.0
    %1403 = vmatprep.subr.mxu0 0.0
    %1404 = vmatpush2.msra.mxu0 0.0
    %1405 = vmatprep.subr.mxu0 0.0
    %1406 = vmatpush2.msra.mxu0 0.0
    %1407 = vmatprep.subr.mxu0 0.0
    %1408 = vmatpush2.msra.mxu0 0.0
    %1409 = vmatprep.subr.mxu0 0.0
    %1410 = vmatpush2.msra.mxu0 0.0
    %1411 = vmatprep.subr.mxu0 0.0
    %1412 = vmatpush2.msra.mxu0 0.0
    %1413 = vmatprep.subr.mxu0 0.0
    %1414 = vmatpush2.msra.mxu0 0.0
    %1415 = vmatprep.subr.mxu0 0.0
    %1416 = vmatpush2.msra.mxu0 0.0
    %1417 = vmatprep.subr.mxu0 0.0
    %1418 = vmatpush2.msra.mxu0 0.0
    %1419 = vmatprep.subr.mxu0 0.0
    %1420 = vmatpush2.msra.mxu0 0.0
    %1421 = vmatprep.subr.mxu0 0.0
    %1422 = vmatpush2.msra.mxu0 0.0
    %1423 = vmatprep.subr.mxu0 0.0
    %1424 = vmatpush2.msra.mxu0 0.0
    %1425 = vmatprep.mubr.f32.mxu0 0.0
    %1426 = vmatmul.mubr.f32.gmra.mxu0 %v1359
    %v1427 = vpop.f32.mrf.mxu0
    %v1428 = vadd.f32 %v230, %v1427
    %v1429 = vpop.f32.mrf.mxu0
    %v1430 = vadd.f32 %v234, %v1429
    %1431 = vdwg.mxu0
    %1432 = vmatprep.subr.mxu0 0.0
    %1433 = vmatpush1.msra.mxu0 0.0
    %1434 = vmatprep.subr.mxu0 0.0
    %1435 = vmatpush1.msra.mxu0 0.0
    %1436 = vmatprep.subr.mxu0 0.0
    %1437 = vmatpush1.msra.mxu0 0.0
    %1438 = vmatprep.subr.mxu0 0.0
    %1439 = vmatpush1.msra.mxu0 0.0
    %1440 = vmatprep.subr.mxu0 0.0
    %1441 = vmatpush1.msra.mxu0 0.0
    %1442 = vmatprep.subr.mxu0 0.0
    %1443 = vmatpush1.msra.mxu0 0.0
    %1444 = vmatprep.subr.mxu0 0.0
    %1445 = vmatpush1.msra.mxu0 0.0
    %1446 = vmatprep.subr.mxu0 0.0
    %1447 = vmatpush1.msra.mxu0 0.0
    %1448 = vmatprep.subr.mxu0 0.0
    %1449 = vmatpush1.msra.mxu0 0.0
    %1450 = vmatprep.subr.mxu0 0.0
    %1451 = vmatpush1.msra.mxu0 0.0
    %1452 = vmatprep.subr.mxu0 0.0
    %1453 = vmatpush1.msra.mxu0 0.0
    %1454 = vmatprep.subr.mxu0 0.0
    %1455 = vmatpush1.msra.mxu0 0.0
    %1456 = vmatprep.subr.mxu0 0.0
    %1457 = vmatpush1.msra.mxu0 0.0
    %1458 = vmatprep.subr.mxu0 0.0
    %1459 = vmatpush1.msra.mxu0 0.0
    %1460 = vmatprep.subr.mxu0 %v224
    %1461 = vmatpush1.msra.mxu0 %v223
    %1462 = vmatprep.subr.mxu0 %v220
    %1463 = vmatpush1.msra.mxu0 %v219
    %1464 = vmatprep.subr.mxu0 0.0
    %1465 = vmatpush2.msra.mxu0 0.0
    %1466 = vmatprep.subr.mxu0 0.0
    %1467 = vmatpush2.msra.mxu0 0.0
    %1468 = vmatprep.subr.mxu0 0.0
    %1469 = vmatpush2.msra.mxu0 0.0
    %1470 = vmatprep.subr.mxu0 0.0
    %1471 = vmatpush2.msra.mxu0 0.0
    %1472 = vmatprep.subr.mxu0 0.0
    %1473 = vmatpush2.msra.mxu0 0.0
    %1474 = vmatprep.subr.mxu0 0.0
    %1475 = vmatpush2.msra.mxu0 0.0
    %1476 = vmatprep.subr.mxu0 0.0
    %1477 = vmatpush2.msra.mxu0 0.0
    %1478 = vmatprep.subr.mxu0 0.0
    %1479 = vmatpush2.msra.mxu0 0.0
    %1480 = vmatprep.subr.mxu0 0.0
    %1481 = vmatpush2.msra.mxu0 0.0
    %1482 = vmatprep.subr.mxu0 0.0
    %1483 = vmatpush2.msra.mxu0 0.0
    %1484 = vmatprep.subr.mxu0 0.0
    %1485 = vmatpush2.msra.mxu0 0.0
    %1486 = vmatprep.subr.mxu0 0.0
    %1487 = vmatpush2.msra.mxu0 0.0
    %1488 = vmatprep.subr.mxu0 0.0
    %1489 = vmatpush2.msra.mxu0 0.0
    %1490 = vmatprep.subr.mxu0 0.0
    %1491 = vmatpush2.msra.mxu0 0.0
    %1492 = vmatprep.subr.mxu0 0.0
    %1493 = vmatpush2.msra.mxu0 0.0
    %1494 = vmatprep.subr.mxu0 0.0
    %1495 = vmatpush2.msra.mxu0 0.0
    %1496 = vmatprep.mubr.f32.mxu0 0.0
    %1497 = vmatmul.mubr.f32.gmra.mxu0 %v1359
    %v1498 = vpop.f32.mrf.mxu0
    %v1499 = vadd.f32 %v238, %v1498
    %v1500 = vpop.f32.mrf.mxu0
    %v1501 = vadd.f32 %v242, %v1500
    %1502 = vdwg.mxu0
    %v1507 = vrot.slane %v1428, 2
    %v1508 = vrot.slane %v1430, 2
    %v1509 = vrot.slane %v1499, 2
    %v1510 = vrot.slane %v1501, 2
    %1515 = vst [vmem:[#allocation2 + $0x20] sm:$0xc0] %v1507
    %1516 = vst [vmem:[#allocation2 + $0x28] sm:$0xc0] %v1508
    %1517 = vst [vmem:[#allocation2 + $0x30] sm:$0xc0] %v1509
    %1518 = vst [vmem:[#allocation2 + $0x38] sm:$0xc0] %v1510
    %v1520 = vsel %vm247, %v215, 0
    %1522 = vmatprep.subr.mxu0 0.0
    %1523 = vmatpush1.msra.mxu0 0.0
    %1524 = vmatprep.subr.mxu0 0.0
    %1525 = vmatpush1.msra.mxu0 0.0
    %1526 = vmatprep.subr.mxu0 0.0
    %1527 = vmatpush1.msra.mxu0 0.0
    %1528 = vmatprep.subr.mxu0 0.0
    %1529 = vmatpush1.msra.mxu0 0.0
    %1530 = vmatprep.subr.mxu0 0.0
    %1531 = vmatpush1.msra.mxu0 0.0
    %1532 = vmatprep.subr.mxu0 0.0
    %1533 = vmatpush1.msra.mxu0 0.0
    %1534 = vmatprep.subr.mxu0 0.0
    %1535 = vmatpush1.msra.mxu0 0.0
    %1536 = vmatprep.subr.mxu0 0.0
    %1537 = vmatpush1.msra.mxu0 0.0
    %1538 = vmatprep.subr.mxu0 0.0
    %1539 = vmatpush1.msra.mxu0 0.0
    %1540 = vmatprep.subr.mxu0 0.0
    %1541 = vmatpush1.msra.mxu0 0.0
    %1542 = vmatprep.subr.mxu0 0.0
    %1543 = vmatpush1.msra.mxu0 0.0
    %1544 = vmatprep.subr.mxu0 0.0
    %1545 = vmatpush1.msra.mxu0 0.0
    %1546 = vmatprep.subr.mxu0 0.0
    %1547 = vmatpush1.msra.mxu0 0.0
    %1548 = vmatprep.subr.mxu0 0.0
    %1549 = vmatpush1.msra.mxu0 0.0
    %1550 = vmatprep.subr.mxu0 %v222
    %1551 = vmatpush1.msra.mxu0 %v221
    %1552 = vmatprep.subr.mxu0 %v218
    %1553 = vmatpush1.msra.mxu0 %v217
    %1554 = vmatprep.subr.mxu0 0.0
    %1555 = vmatpush2.msra.mxu0 0.0
    %1556 = vmatprep.subr.mxu0 0.0
    %1557 = vmatpush2.msra.mxu0 0.0
    %1558 = vmatprep.subr.mxu0 0.0
    %1559 = vmatpush2.msra.mxu0 0.0
    %1560 = vmatprep.subr.mxu0 0.0
    %1561 = vmatpush2.msra.mxu0 0.0
    %1562 = vmatprep.subr.mxu0 0.0
    %1563 = vmatpush2.msra.mxu0 0.0
    %1564 = vmatprep.subr.mxu0 0.0
    %1565 = vmatpush2.msra.mxu0 0.0
    %1566 = vmatprep.subr.mxu0 0.0
    %1567 = vmatpush2.msra.mxu0 0.0
    %1568 = vmatprep.subr.mxu0 0.0
    %1569 = vmatpush2.msra.mxu0 0.0
    %1570 = vmatprep.subr.mxu0 0.0
    %1571 = vmatpush2.msra.mxu0 0.0
    %1572 = vmatprep.subr.mxu0 0.0
    %1573 = vmatpush2.msra.mxu0 0.0
    %1574 = vmatprep.subr.mxu0 0.0
    %1575 = vmatpush2.msra.mxu0 0.0
    %1576 = vmatprep.subr.mxu0 0.0
    %1577 = vmatpush2.msra.mxu0 0.0
    %1578 = vmatprep.subr.mxu0 0.0
    %1579 = vmatpush2.msra.mxu0 0.0
    %1580 = vmatprep.subr.mxu0 0.0
    %1581 = vmatpush2.msra.mxu0 0.0
    %1582 = vmatprep.subr.mxu0 0.0
    %1583 = vmatpush2.msra.mxu0 0.0
    %1584 = vmatprep.subr.mxu0 0.0
    %1585 = vmatpush2.msra.mxu0 0.0
    %1586 = vmatprep.mubr.f32.mxu0 0.0
    %1587 = vmatmul.mubr.f32.gmra.mxu0 %v1520
    %v1588 = vpop.f32.mrf.mxu0
    %v1589 = vadd.f32 %v230, %v1588
    %v1590 = vpop.f32.mrf.mxu0
    %v1591 = vadd.f32 %v234, %v1590
    %1592 = vdwg.mxu0
    %1593 = vmatprep.subr.mxu0 0.0
    %1594 = vmatpush1.msra.mxu0 0.0
    %1595 = vmatprep.subr.mxu0 0.0
    %1596 = vmatpush1.msra.mxu0 0.0
    %1597 = vmatprep.subr.mxu0 0.0
    %1598 = vmatpush1.msra.mxu0 0.0
    %1599 = vmatprep.subr.mxu0 0.0
    %1600 = vmatpush1.msra.mxu0 0.0
    %1601 = vmatprep.subr.mxu0 0.0
    %1602 = vmatpush1.msra.mxu0 0.0
    %1603 = vmatprep.subr.mxu0 0.0
    %1604 = vmatpush1.msra.mxu0 0.0
    %1605 = vmatprep.subr.mxu0 0.0
    %1606 = vmatpush1.msra.mxu0 0.0
    %1607 = vmatprep.subr.mxu0 0.0
    %1608 = vmatpush1.msra.mxu0 0.0
    %1609 = vmatprep.subr.mxu0 0.0
    %1610 = vmatpush1.msra.mxu0 0.0
    %1611 = vmatprep.subr.mxu0 0.0
    %1612 = vmatpush1.msra.mxu0 0.0
    %1613 = vmatprep.subr.mxu0 0.0
    %1614 = vmatpush1.msra.mxu0 0.0
    %1615 = vmatprep.subr.mxu0 0.0
    %1616 = vmatpush1.msra.mxu0 0.0
    %1617 = vmatprep.subr.mxu0 0.0
    %1618 = vmatpush1.msra.mxu0 0.0
    %1619 = vmatprep.subr.mxu0 0.0
    %1620 = vmatpush1.msra.mxu0 0.0
    %1621 = vmatprep.subr.mxu0 %v224
    %1622 = vmatpush1.msra.mxu0 %v223
    %1623 = vmatprep.subr.mxu0 %v220
    %1624 = vmatpush1.msra.mxu0 %v219
    %1625 = vmatprep.subr.mxu0 0.0
    %1626 = vmatpush2.msra.mxu0 0.0
    %1627 = vmatprep.subr.mxu0 0.0
    %1628 = vmatpush2.msra.mxu0 0.0
    %1629 = vmatprep.subr.mxu0 0.0
    %1630 = vmatpush2.msra.mxu0 0.0
    %1631 = vmatprep.subr.mxu0 0.0
    %1632 = vmatpush2.msra.mxu0 0.0
    %1633 = vmatprep.subr.mxu0 0.0
    %1634 = vmatpush2.msra.mxu0 0.0
    %1635 = vmatprep.subr.mxu0 0.0
    %1636 = vmatpush2.msra.mxu0 0.0
    %1637 = vmatprep.subr.mxu0 0.0
    %1638 = vmatpush2.msra.mxu0 0.0
    %1639 = vmatprep.subr.mxu0 0.0
    %1640 = vmatpush2.msra.mxu0 0.0
    %1641 = vmatprep.subr.mxu0 0.0
    %1642 = vmatpush2.msra.mxu0 0.0
    %1643 = vmatprep.subr.mxu0 0.0
    %1644 = vmatpush2.msra.mxu0 0.0
    %1645 = vmatprep.subr.mxu0 0.0
    %1646 = vmatpush2.msra.mxu0 0.0
    %1647 = vmatprep.subr.mxu0 0.0
    %1648 = vmatpush2.msra.mxu0 0.0
    %1649 = vmatprep.subr.mxu0 0.0
    %1650 = vmatpush2.msra.mxu0 0.0
    %1651 = vmatprep.subr.mxu0 0.0
    %1652 = vmatpush2.msra.mxu0 0.0
    %1653 = vmatprep.subr.mxu0 0.0
    %1654 = vmatpush2.msra.mxu0 0.0
    %1655 = vmatprep.subr.mxu0 0.0
    %1656 = vmatpush2.msra.mxu0 0.0
    %1657 = vmatprep.mubr.f32.mxu0 0.0
    %1658 = vmatmul.mubr.f32.gmra.mxu0 %v1520
    %v1659 = vpop.f32.mrf.mxu0
    %v1660 = vadd.f32 %v238, %v1659
    %v1661 = vpop.f32.mrf.mxu0
    %v1662 = vadd.f32 %v242, %v1661
    %1663 = vdwg.mxu0
    %1664 = vst [vmem:[#allocation2 + $0x40] sm:$0x3] %v1589
    %1665 = vst [vmem:[#allocation2 + $0x48] sm:$0x3] %v1591
    %1666 = vst [vmem:[#allocation2 + $0x50] sm:$0x3] %v1660
    %1667 = vst [vmem:[#allocation2 + $0x58] sm:$0x3] %v1662
    %1668 = vrot.lane.b32.xlu0 %v215, 112
    %v1669 = vpop.permute.xlu0 %1668
    %v1670 = vsel %vm247, %v1669, 0
    %1672 = vmatprep.subr.mxu0 0.0
    %1673 = vmatpush1.msra.mxu0 0.0
    %1674 = vmatprep.subr.mxu0 0.0
    %1675 = vmatpush1.msra.mxu0 0.0
    %1676 = vmatprep.subr.mxu0 0.0
    %1677 = vmatpush1.msra.mxu0 0.0
    %1678 = vmatprep.subr.mxu0 0.0
    %1679 = vmatpush1.msra.mxu0 0.0
    %1680 = vmatprep.subr.mxu0 0.0
    %1681 = vmatpush1.msra.mxu0 0.0
    %1682 = vmatprep.subr.mxu0 0.0
    %1683 = vmatpush1.msra.mxu0 0.0
    %1684 = vmatprep.subr.mxu0 0.0
    %1685 = vmatpush1.msra.mxu0 0.0
    %1686 = vmatprep.subr.mxu0 0.0
    %1687 = vmatpush1.msra.mxu0 0.0
    %1688 = vmatprep.subr.mxu0 0.0
    %1689 = vmatpush1.msra.mxu0 0.0
    %1690 = vmatprep.subr.mxu0 0.0
    %1691 = vmatpush1.msra.mxu0 0.0
    %1692 = vmatprep.subr.mxu0 0.0
    %1693 = vmatpush1.msra.mxu0 0.0
    %1694 = vmatprep.subr.mxu0 0.0
    %1695 = vmatpush1.msra.mxu0 0.0
    %1696 = vmatprep.subr.mxu0 0.0
    %1697 = vmatpush1.msra.mxu0 0.0
    %1698 = vmatprep.subr.mxu0 0.0
    %1699 = vmatpush1.msra.mxu0 0.0
    %1700 = vmatprep.subr.mxu0 %v222
    %1701 = vmatpush1.msra.mxu0 %v221
    %1702 = vmatprep.subr.mxu0 %v218
    %1703 = vmatpush1.msra.mxu0 %v217
    %1704 = vmatprep.subr.mxu0 0.0
    %1705 = vmatpush2.msra.mxu0 0.0
    %1706 = vmatprep.subr.mxu0 0.0
    %1707 = vmatpush2.msra.mxu0 0.0
    %1708 = vmatprep.subr.mxu0 0.0
    %1709 = vmatpush2.msra.mxu0 0.0
    %1710 = vmatprep.subr.mxu0 0.0
    %1711 = vmatpush2.msra.mxu0 0.0
    %1712 = vmatprep.subr.mxu0 0.0
    %1713 = vmatpush2.msra.mxu0 0.0
    %1714 = vmatprep.subr.mxu0 0.0
    %1715 = vmatpush2.msra.mxu0 0.0
    %1716 = vmatprep.subr.mxu0 0.0
    %1717 = vmatpush2.msra.mxu0 0.0
    %1718 = vmatprep.subr.mxu0 0.0
    %1719 = vmatpush2.msra.mxu0 0.0
    %1720 = vmatprep.subr.mxu0 0.0
    %1721 = vmatpush2.msra.mxu0 0.0
    %1722 = vmatprep.subr.mxu0 0.0
    %1723 = vmatpush2.msra.mxu0 0.0
    %1724 = vmatprep.subr.mxu0 0.0
    %1725 = vmatpush2.msra.mxu0 0.0
    %1726 = vmatprep.subr.mxu0 0.0
    %1727 = vmatpush2.msra.mxu0 0.0
    %1728 = vmatprep.subr.mxu0 0.0
    %1729 = vmatpush2.msra.mxu0 0.0
    %1730 = vmatprep.subr.mxu0 0.0
    %1731 = vmatpush2.msra.mxu0 0.0
    %1732 = vmatprep.subr.mxu0 0.0
    %1733 = vmatpush2.msra.mxu0 0.0
    %1734 = vmatprep.subr.mxu0 0.0
    %1735 = vmatpush2.msra.mxu0 0.0
    %1736 = vmatprep.mubr.f32.mxu0 0.0
    %1737 = vmatmul.mubr.f32.gmra.mxu0 %v1670
    %v1738 = vpop.f32.mrf.mxu0
    %v1739 = vadd.f32 %v230, %v1738
    %v1740 = vpop.f32.mrf.mxu0
    %v1741 = vadd.f32 %v234, %v1740
    %1742 = vdwg.mxu0
    %1743 = vmatprep.subr.mxu0 0.0
    %1744 = vmatpush1.msra.mxu0 0.0
    %1745 = vmatprep.subr.mxu0 0.0
    %1746 = vmatpush1.msra.mxu0 0.0
    %1747 = vmatprep.subr.mxu0 0.0
    %1748 = vmatpush1.msra.mxu0 0.0
    %1749 = vmatprep.subr.mxu0 0.0
    %1750 = vmatpush1.msra.mxu0 0.0
    %1751 = vmatprep.subr.mxu0 0.0
    %1752 = vmatpush1.msra.mxu0 0.0
    %1753 = vmatprep.subr.mxu0 0.0
    %1754 = vmatpush1.msra.mxu0 0.0
    %1755 = vmatprep.subr.mxu0 0.0
    %1756 = vmatpush1.msra.mxu0 0.0
    %1757 = vmatprep.subr.mxu0 0.0
    %1758 = vmatpush1.msra.mxu0 0.0
    %1759 = vmatprep.subr.mxu0 0.0
    %1760 = vmatpush1.msra.mxu0 0.0
    %1761 = vmatprep.subr.mxu0 0.0
    %1762 = vmatpush1.msra.mxu0 0.0
    %1763 = vmatprep.subr.mxu0 0.0
    %1764 = vmatpush1.msra.mxu0 0.0
    %1765 = vmatprep.subr.mxu0 0.0
    %1766 = vmatpush1.msra.mxu0 0.0
    %1767 = vmatprep.subr.mxu0 0.0
    %1768 = vmatpush1.msra.mxu0 0.0
    %1769 = vmatprep.subr.mxu0 0.0
    %1770 = vmatpush1.msra.mxu0 0.0
    %1771 = vmatprep.subr.mxu0 %v224
    %1772 = vmatpush1.msra.mxu0 %v223
    %1773 = vmatprep.subr.mxu0 %v220
    %1774 = vmatpush1.msra.mxu0 %v219
    %1775 = vmatprep.subr.mxu0 0.0
    %1776 = vmatpush2.msra.mxu0 0.0
    %1777 = vmatprep.subr.mxu0 0.0
    %1778 = vmatpush2.msra.mxu0 0.0
    %1779 = vmatprep.subr.mxu0 0.0
    %1780 = vmatpush2.msra.mxu0 0.0
    %1781 = vmatprep.subr.mxu0 0.0
    %1782 = vmatpush2.msra.mxu0 0.0
    %1783 = vmatprep.subr.mxu0 0.0
    %1784 = vmatpush2.msra.mxu0 0.0
    %1785 = vmatprep.subr.mxu0 0.0
    %1786 = vmatpush2.msra.mxu0 0.0
    %1787 = vmatprep.subr.mxu0 0.0
    %1788 = vmatpush2.msra.mxu0 0.0
    %1789 = vmatprep.subr.mxu0 0.0
    %1790 = vmatpush2.msra.mxu0 0.0
    %1791 = vmatprep.subr.mxu0 0.0
    %1792 = vmatpush2.msra.mxu0 0.0
    %1793 = vmatprep.subr.mxu0 0.0
    %1794 = vmatpush2.msra.mxu0 0.0
    %1795 = vmatprep.subr.mxu0 0.0
    %1796 = vmatpush2.msra.mxu0 0.0
    %1797 = vmatprep.subr.mxu0 0.0
    %1798 = vmatpush2.msra.mxu0 0.0
    %1799 = vmatprep.subr.mxu0 0.0
    %1800 = vmatpush2.msra.mxu0 0.0
    %1801 = vmatprep.subr.mxu0 0.0
    %1802 = vmatpush2.msra.mxu0 0.0
    %1803 = vmatprep.subr.mxu0 0.0
    %1804 = vmatpush2.msra.mxu0 0.0
    %1805 = vmatprep.subr.mxu0 0.0
    %1806 = vmatpush2.msra.mxu0 0.0
    %1807 = vmatprep.mubr.f32.mxu0 0.0
    %1808 = vmatmul.mubr.f32.gmra.mxu0 %v1670
    %v1809 = vpop.f32.mrf.mxu0
    %v1810 = vadd.f32 %v238, %v1809
    %v1811 = vpop.f32.mrf.mxu0
    %v1812 = vadd.f32 %v242, %v1811
    %1813 = vdwg.mxu0
    %v1818 = vrot.slane %v1739, 6
    %v1819 = vrot.slane %v1741, 6
    %v1820 = vrot.slane %v1810, 6
    %v1821 = vrot.slane %v1812, 6
    %1826 = vst [vmem:[#allocation2 + $0x40] sm:$0xc] %v1818
    %1827 = vst [vmem:[#allocation2 + $0x48] sm:$0xc] %v1819
    %1828 = vst [vmem:[#allocation2 + $0x50] sm:$0xc] %v1820
    %1829 = vst [vmem:[#allocation2 + $0x58] sm:$0xc] %v1821
    %1830 = vrot.lane.b32.xlu0 %v215, 96
    %v1831 = vpop.permute.xlu0 %1830
    %v1832 = vsel %vm247, %v1831, 0
    %1834 = vmatprep.subr.mxu0 0.0
    %1835 = vmatpush1.msra.mxu0 0.0
    %1836 = vmatprep.subr.mxu0 0.0
    %1837 = vmatpush1.msra.mxu0 0.0
    %1838 = vmatprep.subr.mxu0 0.0
    %1839 = vmatpush1.msra.mxu0 0.0
    %1840 = vmatprep.subr.mxu0 0.0
    %1841 = vmatpush1.msra.mxu0 0.0
    %1842 = vmatprep.subr.mxu0 0.0
    %1843 = vmatpush1.msra.mxu0 0.0
    %1844 = vmatprep.subr.mxu0 0.0
    %1845 = vmatpush1.msra.mxu0 0.0
    %1846 = vmatprep.subr.mxu0 0.0
    %1847 = vmatpush1.msra.mxu0 0.0
    %1848 = vmatprep.subr.mxu0 0.0
    %1849 = vmatpush1.msra.mxu0 0.0
    %1850 = vmatprep.subr.mxu0 0.0
    %1851 = vmatpush1.msra.mxu0 0.0
    %1852 = vmatprep.subr.mxu0 0.0
    %1853 = vmatpush1.msra.mxu0 0.0
    %1854 = vmatprep.subr.mxu0 0.0
    %1855 = vmatpush1.msra.mxu0 0.0
    %1856 = vmatprep.subr.mxu0 0.0
    %1857 = vmatpush1.msra.mxu0 0.0
    %1858 = vmatprep.subr.mxu0 0.0
    %1859 = vmatpush1.msra.mxu0 0.0
    %1860 = vmatprep.subr.mxu0 0.0
    %1861 = vmatpush1.msra.mxu0 0.0
    %1862 = vmatprep.subr.mxu0 %v222
    %1863 = vmatpush1.msra.mxu0 %v221
    %1864 = vmatprep.subr.mxu0 %v218
    %1865 = vmatpush1.msra.mxu0 %v217
    %1866 = vmatprep.subr.mxu0 0.0
    %1867 = vmatpush2.msra.mxu0 0.0
    %1868 = vmatprep.subr.mxu0 0.0
    %1869 = vmatpush2.msra.mxu0 0.0
    %1870 = vmatprep.subr.mxu0 0.0
    %1871 = vmatpush2.msra.mxu0 0.0
    %1872 = vmatprep.subr.mxu0 0.0
    %1873 = vmatpush2.msra.mxu0 0.0
    %1874 = vmatprep.subr.mxu0 0.0
    %1875 = vmatpush2.msra.mxu0 0.0
    %1876 = vmatprep.subr.mxu0 0.0
    %1877 = vmatpush2.msra.mxu0 0.0
    %1878 = vmatprep.subr.mxu0 0.0
    %1879 = vmatpush2.msra.mxu0 0.0
    %1880 = vmatprep.subr.mxu0 0.0
    %1881 = vmatpush2.msra.mxu0 0.0
    %1882 = vmatprep.subr.mxu0 0.0
    %1883 = vmatpush2.msra.mxu0 0.0
    %1884 = vmatprep.subr.mxu0 0.0
    %1885 = vmatpush2.msra.mxu0 0.0
    %1886 = vmatprep.subr.mxu0 0.0
    %1887 = vmatpush2.msra.mxu0 0.0
    %1888 = vmatprep.subr.mxu0 0.0
    %1889 = vmatpush2.msra.mxu0 0.0
    %1890 = vmatprep.subr.mxu0 0.0
    %1891 = vmatpush2.msra.mxu0 0.0
    %1892 = vmatprep.subr.mxu0 0.0
    %1893 = vmatpush2.msra.mxu0 0.0
    %1894 = vmatprep.subr.mxu0 0.0
    %1895 = vmatpush2.msra.mxu0 0.0
    %1896 = vmatprep.subr.mxu0 0.0
    %1897 = vmatpush2.msra.mxu0 0.0
    %1898 = vmatprep.mubr.f32.mxu0 0.0
    %1899 = vmatmul.mubr.f32.gmra.mxu0 %v1832
    %v1900 = vpop.f32.mrf.mxu0
    %v1901 = vadd.f32 %v230, %v1900
    %v1902 = vpop.f32.mrf.mxu0
    %v1903 = vadd.f32 %v234, %v1902
    %1904 = vdwg.mxu0
    %1905 = vmatprep.subr.mxu0 0.0
    %1906 = vmatpush1.msra.mxu0 0.0
    %1907 = vmatprep.subr.mxu0 0.0
    %1908 = vmatpush1.msra.mxu0 0.0
    %1909 = vmatprep.subr.mxu0 0.0
    %1910 = vmatpush1.msra.mxu0 0.0
    %1911 = vmatprep.subr.mxu0 0.0
    %1912 = vmatpush1.msra.mxu0 0.0
    %1913 = vmatprep.subr.mxu0 0.0
    %1914 = vmatpush1.msra.mxu0 0.0
    %1915 = vmatprep.subr.mxu0 0.0
    %1916 = vmatpush1.msra.mxu0 0.0
    %1917 = vmatprep.subr.mxu0 0.0
    %1918 = vmatpush1.msra.mxu0 0.0
    %1919 = vmatprep.subr.mxu0 0.0
    %1920 = vmatpush1.msra.mxu0 0.0
    %1921 = vmatprep.subr.mxu0 0.0
    %1922 = vmatpush1.msra.mxu0 0.0
    %1923 = vmatprep.subr.mxu0 0.0
    %1924 = vmatpush1.msra.mxu0 0.0
    %1925 = vmatprep.subr.mxu0 0.0
    %1926 = vmatpush1.msra.mxu0 0.0
    %1927 = vmatprep.subr.mxu0 0.0
    %1928 = vmatpush1.msra.mxu0 0.0
    %1929 = vmatprep.subr.mxu0 0.0
    %1930 = vmatpush1.msra.mxu0 0.0
    %1931 = vmatprep.subr.mxu0 0.0
    %1932 = vmatpush1.msra.mxu0 0.0
    %1933 = vmatprep.subr.mxu0 %v224
    %1934 = vmatpush1.msra.mxu0 %v223
    %1935 = vmatprep.subr.mxu0 %v220
    %1936 = vmatpush1.msra.mxu0 %v219
    %1937 = vmatprep.subr.mxu0 0.0
    %1938 = vmatpush2.msra.mxu0 0.0
    %1939 = vmatprep.subr.mxu0 0.0
    %1940 = vmatpush2.msra.mxu0 0.0
    %1941 = vmatprep.subr.mxu0 0.0
    %1942 = vmatpush2.msra.mxu0 0.0
    %1943 = vmatprep.subr.mxu0 0.0
    %1944 = vmatpush2.msra.mxu0 0.0
    %1945 = vmatprep.subr.mxu0 0.0
    %1946 = vmatpush2.msra.mxu0 0.0
    %1947 = vmatprep.subr.mxu0 0.0
    %1948 = vmatpush2.msra.mxu0 0.0
    %1949 = vmatprep.subr.mxu0 0.0
    %1950 = vmatpush2.msra.mxu0 0.0
    %1951 = vmatprep.subr.mxu0 0.0
    %1952 = vmatpush2.msra.mxu0 0.0
    %1953 = vmatprep.subr.mxu0 0.0
    %1954 = vmatpush2.msra.mxu0 0.0
    %1955 = vmatprep.subr.mxu0 0.0
    %1956 = vmatpush2.msra.mxu0 0.0
    %1957 = vmatprep.subr.mxu0 0.0
    %1958 = vmatpush2.msra.mxu0 0.0
    %1959 = vmatprep.subr.mxu0 0.0
    %1960 = vmatpush2.msra.mxu0 0.0
    %1961 = vmatprep.subr.mxu0 0.0
    %1962 = vmatpush2.msra.mxu0 0.0
    %1963 = vmatprep.subr.mxu0 0.0
    %1964 = vmatpush2.msra.mxu0 0.0
    %1965 = vmatprep.subr.mxu0 0.0
    %1966 = vmatpush2.msra.mxu0 0.0
    %1967 = vmatprep.subr.mxu0 0.0
    %1968 = vmatpush2.msra.mxu0 0.0
    %1969 = vmatprep.mubr.f32.mxu0 0.0
    %1970 = vmatmul.mubr.f32.gmra.mxu0 %v1832
    %v1971 = vpop.f32.mrf.mxu0
    %v1972 = vadd.f32 %v238, %v1971
    %v1973 = vpop.f32.mrf.mxu0
    %v1974 = vadd.f32 %v242, %v1973
    %1975 = vdwg.mxu0
    %v1980 = vrot.slane %v1901, 4
    %v1981 = vrot.slane %v1903, 4
    %v1982 = vrot.slane %v1972, 4
    %v1983 = vrot.slane %v1974, 4
    %1988 = vst [vmem:[#allocation2 + $0x40] sm:$0x30] %v1980
    %1989 = vst [vmem:[#allocation2 + $0x48] sm:$0x30] %v1981
    %1990 = vst [vmem:[#allocation2 + $0x50] sm:$0x30] %v1982
    %1991 = vst [vmem:[#allocation2 + $0x58] sm:$0x30] %v1983
    %1992 = vrot.lane.b32.xlu0 %v215, 80
    %v1993 = vpop.permute.xlu0 %1992
    %v1994 = vsel %vm247, %v1993, 0
    %1996 = vmatprep.subr.mxu0 0.0
    %1997 = vmatpush1.msra.mxu0 0.0
    %1998 = vmatprep.subr.mxu0 0.0
    %1999 = vmatpush1.msra.mxu0 0.0
    %2000 = vmatprep.subr.mxu0 0.0
    %2001 = vmatpush1.msra.mxu0 0.0
    %2002 = vmatprep.subr.mxu0 0.0
    %2003 = vmatpush1.msra.mxu0 0.0
    %2004 = vmatprep.subr.mxu0 0.0
    %2005 = vmatpush1.msra.mxu0 0.0
    %2006 = vmatprep.subr.mxu0 0.0
    %2007 = vmatpush1.msra.mxu0 0.0
    %2008 = vmatprep.subr.mxu0 0.0
    %2009 = vmatpush1.msra.mxu0 0.0
    %2010 = vmatprep.subr.mxu0 0.0
    %2011 = vmatpush1.msra.mxu0 0.0
    %2012 = vmatprep.subr.mxu0 0.0
    %2013 = vmatpush1.msra.mxu0 0.0
    %2014 = vmatprep.subr.mxu0 0.0
    %2015 = vmatpush1.msra.mxu0 0.0
    %2016 = vmatprep.subr.mxu0 0.0
    %2017 = vmatpush1.msra.mxu0 0.0
    %2018 = vmatprep.subr.mxu0 0.0
    %2019 = vmatpush1.msra.mxu0 0.0
    %2020 = vmatprep.subr.mxu0 0.0
    %2021 = vmatpush1.msra.mxu0 0.0
    %2022 = vmatprep.subr.mxu0 0.0
    %2023 = vmatpush1.msra.mxu0 0.0
    %2024 = vmatprep.subr.mxu0 %v222
    %2025 = vmatpush1.msra.mxu0 %v221
    %2026 = vmatprep.subr.mxu0 %v218
    %2027 = vmatpush1.msra.mxu0 %v217
    %2028 = vmatprep.subr.mxu0 0.0
    %2029 = vmatpush2.msra.mxu0 0.0
    %2030 = vmatprep.subr.mxu0 0.0
    %2031 = vmatpush2.msra.mxu0 0.0
    %2032 = vmatprep.subr.mxu0 0.0
    %2033 = vmatpush2.msra.mxu0 0.0
    %2034 = vmatprep.subr.mxu0 0.0
    %2035 = vmatpush2.msra.mxu0 0.0
    %2036 = vmatprep.subr.mxu0 0.0
    %2037 = vmatpush2.msra.mxu0 0.0
    %2038 = vmatprep.subr.mxu0 0.0
    %2039 = vmatpush2.msra.mxu0 0.0
    %2040 = vmatprep.subr.mxu0 0.0
    %2041 = vmatpush2.msra.mxu0 0.0
    %2042 = vmatprep.subr.mxu0 0.0
    %2043 = vmatpush2.msra.mxu0 0.0
    %2044 = vmatprep.subr.mxu0 0.0
    %2045 = vmatpush2.msra.mxu0 0.0
    %2046 = vmatprep.subr.mxu0 0.0
    %2047 = vmatpush2.msra.mxu0 0.0
    %2048 = vmatprep.subr.mxu0 0.0
    %2049 = vmatpush2.msra.mxu0 0.0
    %2050 = vmatprep.subr.mxu0 0.0
    %2051 = vmatpush2.msra.mxu0 0.0
    %2052 = vmatprep.subr.mxu0 0.0
    %2053 = vmatpush2.msra.mxu0 0.0
    %2054 = vmatprep.subr.mxu0 0.0
    %2055 = vmatpush2.msra.mxu0 0.0
    %2056 = vmatprep.subr.mxu0 0.0
    %2057 = vmatpush2.msra.mxu0 0.0
    %2058 = vmatprep.subr.mxu0 0.0
    %2059 = vmatpush2.msra.mxu0 0.0
    %2060 = vmatprep.mubr.f32.mxu0 0.0
    %2061 = vmatmul.mubr.f32.gmra.mxu0 %v1994
    %v2062 = vpop.f32.mrf.mxu0
    %v2063 = vadd.f32 %v230, %v2062
    %v2064 = vpop.f32.mrf.mxu0
    %v2065 = vadd.f32 %v234, %v2064
    %2066 = vdwg.mxu0
    %2067 = vmatprep.subr.mxu0 0.0
    %2068 = vmatpush1.msra.mxu0 0.0
    %2069 = vmatprep.subr.mxu0 0.0
    %2070 = vmatpush1.msra.mxu0 0.0
    %2071 = vmatprep.subr.mxu0 0.0
    %2072 = vmatpush1.msra.mxu0 0.0
    %2073 = vmatprep.subr.mxu0 0.0
    %2074 = vmatpush1.msra.mxu0 0.0
    %2075 = vmatprep.subr.mxu0 0.0
    %2076 = vmatpush1.msra.mxu0 0.0
    %2077 = vmatprep.subr.mxu0 0.0
    %2078 = vmatpush1.msra.mxu0 0.0
    %2079 = vmatprep.subr.mxu0 0.0
    %2080 = vmatpush1.msra.mxu0 0.0
    %2081 = vmatprep.subr.mxu0 0.0
    %2082 = vmatpush1.msra.mxu0 0.0
    %2083 = vmatprep.subr.mxu0 0.0
    %2084 = vmatpush1.msra.mxu0 0.0
    %2085 = vmatprep.subr.mxu0 0.0
    %2086 = vmatpush1.msra.mxu0 0.0
    %2087 = vmatprep.subr.mxu0 0.0
    %2088 = vmatpush1.msra.mxu0 0.0
    %2089 = vmatprep.subr.mxu0 0.0
    %2090 = vmatpush1.msra.mxu0 0.0
    %2091 = vmatprep.subr.mxu0 0.0
    %2092 = vmatpush1.msra.mxu0 0.0
    %2093 = vmatprep.subr.mxu0 0.0
    %2094 = vmatpush1.msra.mxu0 0.0
    %2095 = vmatprep.subr.mxu0 %v224
    %2096 = vmatpush1.msra.mxu0 %v223
    %2097 = vmatprep.subr.mxu0 %v220
    %2098 = vmatpush1.msra.mxu0 %v219
    %2099 = vmatprep.subr.mxu0 0.0
    %2100 = vmatpush2.msra.mxu0 0.0
    %2101 = vmatprep.subr.mxu0 0.0
    %2102 = vmatpush2.msra.mxu0 0.0
    %2103 = vmatprep.subr.mxu0 0.0
    %2104 = vmatpush2.msra.mxu0 0.0
    %2105 = vmatprep.subr.mxu0 0.0
    %2106 = vmatpush2.msra.mxu0 0.0
    %2107 = vmatprep.subr.mxu0 0.0
    %2108 = vmatpush2.msra.mxu0 0.0
    %2109 = vmatprep.subr.mxu0 0.0
    %2110 = vmatpush2.msra.mxu0 0.0
    %2111 = vmatprep.subr.mxu0 0.0
    %2112 = vmatpush2.msra.mxu0 0.0
    %2113 = vmatprep.subr.mxu0 0.0
    %2114 = vmatpush2.msra.mxu0 0.0
    %2115 = vmatprep.subr.mxu0 0.0
    %2116 = vmatpush2.msra.mxu0 0.0
    %2117 = vmatprep.subr.mxu0 0.0
    %2118 = vmatpush2.msra.mxu0 0.0
    %2119 = vmatprep.subr.mxu0 0.0
    %2120 = vmatpush2.msra.mxu0 0.0
    %2121 = vmatprep.subr.mxu0 0.0
    %2122 = vmatpush2.msra.mxu0 0.0
    %2123 = vmatprep.subr.mxu0 0.0
    %2124 = vmatpush2.msra.mxu0 0.0
    %2125 = vmatprep.subr.mxu0 0.0
    %2126 = vmatpush2.msra.mxu0 0.0
    %2127 = vmatprep.subr.mxu0 0.0
    %2128 = vmatpush2.msra.mxu0 0.0
    %2129 = vmatprep.subr.mxu0 0.0
    %2130 = vmatpush2.msra.mxu0 0.0
    %2131 = vmatprep.mubr.f32.mxu0 0.0
    %2132 = vmatmul.mubr.f32.gmra.mxu0 %v1994
    %v2133 = vpop.f32.mrf.mxu0
    %v2134 = vadd.f32 %v238, %v2133
    %v2135 = vpop.f32.mrf.mxu0
    %v2136 = vadd.f32 %v242, %v2135
    %2137 = vdwg.mxu0
    %v2142 = vrot.slane %v2063, 2
    %v2143 = vrot.slane %v2065, 2
    %v2144 = vrot.slane %v2134, 2
    %v2145 = vrot.slane %v2136, 2
    %2150 = vst [vmem:[#allocation2 + $0x40] sm:$0xc0] %v2142
    %2151 = vst [vmem:[#allocation2 + $0x48] sm:$0xc0] %v2143
    %2152 = vst [vmem:[#allocation2 + $0x50] sm:$0xc0] %v2144
    %2153 = vst [vmem:[#allocation2 + $0x58] sm:$0xc0] %v2145
    %2154 = vrot.lane.b32.xlu0 %v215, 64
    %v2155 = vpop.permute.xlu0 %2154
    %v2156 = vsel %vm247, %v2155, 0
    %2158 = vmatprep.subr.mxu0 0.0
    %2159 = vmatpush1.msra.mxu0 0.0
    %2160 = vmatprep.subr.mxu0 0.0
    %2161 = vmatpush1.msra.mxu0 0.0
    %2162 = vmatprep.subr.mxu0 0.0
    %2163 = vmatpush1.msra.mxu0 0.0
    %2164 = vmatprep.subr.mxu0 0.0
    %2165 = vmatpush1.msra.mxu0 0.0
    %2166 = vmatprep.subr.mxu0 0.0
    %2167 = vmatpush1.msra.mxu0 0.0
    %2168 = vmatprep.subr.mxu0 0.0
    %2169 = vmatpush1.msra.mxu0 0.0
    %2170 = vmatprep.subr.mxu0 0.0
    %2171 = vmatpush1.msra.mxu0 0.0
    %2172 = vmatprep.subr.mxu0 0.0
    %2173 = vmatpush1.msra.mxu0 0.0
    %2174 = vmatprep.subr.mxu0 0.0
    %2175 = vmatpush1.msra.mxu0 0.0
    %2176 = vmatprep.subr.mxu0 0.0
    %2177 = vmatpush1.msra.mxu0 0.0
    %2178 = vmatprep.subr.mxu0 0.0
    %2179 = vmatpush1.msra.mxu0 0.0
    %2180 = vmatprep.subr.mxu0 0.0
    %2181 = vmatpush1.msra.mxu0 0.0
    %2182 = vmatprep.subr.mxu0 0.0
    %2183 = vmatpush1.msra.mxu0 0.0
    %2184 = vmatprep.subr.mxu0 0.0
    %2185 = vmatpush1.msra.mxu0 0.0
    %2186 = vmatprep.subr.mxu0 %v222
    %2187 = vmatpush1.msra.mxu0 %v221
    %2188 = vmatprep.subr.mxu0 %v218
    %2189 = vmatpush1.msra.mxu0 %v217
    %2190 = vmatprep.subr.mxu0 0.0
    %2191 = vmatpush2.msra.mxu0 0.0
    %2192 = vmatprep.subr.mxu0 0.0
    %2193 = vmatpush2.msra.mxu0 0.0
    %2194 = vmatprep.subr.mxu0 0.0
    %2195 = vmatpush2.msra.mxu0 0.0
    %2196 = vmatprep.subr.mxu0 0.0
    %2197 = vmatpush2.msra.mxu0 0.0
    %2198 = vmatprep.subr.mxu0 0.0
    %2199 = vmatpush2.msra.mxu0 0.0
    %2200 = vmatprep.subr.mxu0 0.0
    %2201 = vmatpush2.msra.mxu0 0.0
    %2202 = vmatprep.subr.mxu0 0.0
    %2203 = vmatpush2.msra.mxu0 0.0
    %2204 = vmatprep.subr.mxu0 0.0
    %2205 = vmatpush2.msra.mxu0 0.0
    %2206 = vmatprep.subr.mxu0 0.0
    %2207 = vmatpush2.msra.mxu0 0.0
    %2208 = vmatprep.subr.mxu0 0.0
    %2209 = vmatpush2.msra.mxu0 0.0
    %2210 = vmatprep.subr.mxu0 0.0
    %2211 = vmatpush2.msra.mxu0 0.0
    %2212 = vmatprep.subr.mxu0 0.0
    %2213 = vmatpush2.msra.mxu0 0.0
    %2214 = vmatprep.subr.mxu0 0.0
    %2215 = vmatpush2.msra.mxu0 0.0
    %2216 = vmatprep.subr.mxu0 0.0
    %2217 = vmatpush2.msra.mxu0 0.0
    %2218 = vmatprep.subr.mxu0 0.0
    %2219 = vmatpush2.msra.mxu0 0.0
    %2220 = vmatprep.subr.mxu0 0.0
    %2221 = vmatpush2.msra.mxu0 0.0
    %2222 = vmatprep.mubr.f32.mxu0 0.0
    %2223 = vmatmul.mubr.f32.gmra.mxu0 %v2156
    %v2224 = vpop.f32.mrf.mxu0
    %v2225 = vadd.f32 %v230, %v2224
    %v2226 = vpop.f32.mrf.mxu0
    %v2227 = vadd.f32 %v234, %v2226
    %2228 = vdwg.mxu0
    %2229 = vmatprep.subr.mxu0 0.0
    %2230 = vmatpush1.msra.mxu0 0.0
    %2231 = vmatprep.subr.mxu0 0.0
    %2232 = vmatpush1.msra.mxu0 0.0
    %2233 = vmatprep.subr.mxu0 0.0
    %2234 = vmatpush1.msra.mxu0 0.0
    %2235 = vmatprep.subr.mxu0 0.0
    %2236 = vmatpush1.msra.mxu0 0.0
    %2237 = vmatprep.subr.mxu0 0.0
    %2238 = vmatpush1.msra.mxu0 0.0
    %2239 = vmatprep.subr.mxu0 0.0
    %2240 = vmatpush1.msra.mxu0 0.0
    %2241 = vmatprep.subr.mxu0 0.0
    %2242 = vmatpush1.msra.mxu0 0.0
    %2243 = vmatprep.subr.mxu0 0.0
    %2244 = vmatpush1.msra.mxu0 0.0
    %2245 = vmatprep.subr.mxu0 0.0
    %2246 = vmatpush1.msra.mxu0 0.0
    %2247 = vmatprep.subr.mxu0 0.0
    %2248 = vmatpush1.msra.mxu0 0.0
    %2249 = vmatprep.subr.mxu0 0.0
    %2250 = vmatpush1.msra.mxu0 0.0
    %2251 = vmatprep.subr.mxu0 0.0
    %2252 = vmatpush1.msra.mxu0 0.0
    %2253 = vmatprep.subr.mxu0 0.0
    %2254 = vmatpush1.msra.mxu0 0.0
    %2255 = vmatprep.subr.mxu0 0.0
    %2256 = vmatpush1.msra.mxu0 0.0
    %2257 = vmatprep.subr.mxu0 %v224
    %2258 = vmatpush1.msra.mxu0 %v223
    %2259 = vmatprep.subr.mxu0 %v220
    %2260 = vmatpush1.msra.mxu0 %v219
    %2261 = vmatprep.subr.mxu0 0.0
    %2262 = vmatpush2.msra.mxu0 0.0
    %2263 = vmatprep.subr.mxu0 0.0
    %2264 = vmatpush2.msra.mxu0 0.0
    %2265 = vmatprep.subr.mxu0 0.0
    %2266 = vmatpush2.msra.mxu0 0.0
    %2267 = vmatprep.subr.mxu0 0.0
    %2268 = vmatpush2.msra.mxu0 0.0
    %2269 = vmatprep.subr.mxu0 0.0
    %2270 = vmatpush2.msra.mxu0 0.0
    %2271 = vmatprep.subr.mxu0 0.0
    %2272 = vmatpush2.msra.mxu0 0.0
    %2273 = vmatprep.subr.mxu0 0.0
    %2274 = vmatpush2.msra.mxu0 0.0
    %2275 = vmatprep.subr.mxu0 0.0
    %2276 = vmatpush2.msra.mxu0 0.0
    %2277 = vmatprep.subr.mxu0 0.0
    %2278 = vmatpush2.msra.mxu0 0.0
    %2279 = vmatprep.subr.mxu0 0.0
    %2280 = vmatpush2.msra.mxu0 0.0
    %2281 = vmatprep.subr.mxu0 0.0
    %2282 = vmatpush2.msra.mxu0 0.0
    %2283 = vmatprep.subr.mxu0 0.0
    %2284 = vmatpush2.msra.mxu0 0.0
    %2285 = vmatprep.subr.mxu0 0.0
    %2286 = vmatpush2.msra.mxu0 0.0
    %2287 = vmatprep.subr.mxu0 0.0
    %2288 = vmatpush2.msra.mxu0 0.0
    %2289 = vmatprep.subr.mxu0 0.0
    %2290 = vmatpush2.msra.mxu0 0.0
    %2291 = vmatprep.subr.mxu0 0.0
    %2292 = vmatpush2.msra.mxu0 0.0
    %2293 = vmatprep.mubr.f32.mxu0 0.0
    %2294 = vmatmul.mubr.f32.gmra.mxu0 %v2156
    %v2295 = vpop.f32.mrf.mxu0
    %v2296 = vadd.f32 %v238, %v2295
    %v2297 = vpop.f32.mrf.mxu0
    %v2298 = vadd.f32 %v242, %v2297
    %2299 = vdwg.mxu0
    %2300 = vst [vmem:[#allocation2 + $0x60] sm:$0x3] %v2225
    %2301 = vst [vmem:[#allocation2 + $0x68] sm:$0x3] %v2227
    %2302 = vst [vmem:[#allocation2 + $0x70] sm:$0x3] %v2296
    %2303 = vst [vmem:[#allocation2 + $0x78] sm:$0x3] %v2298
    %2304 = vrot.lane.b32.xlu0 %v215, 48
    %v2305 = vpop.permute.xlu0 %2304
    %v2306 = vsel %vm247, %v2305, 0
    %2308 = vmatprep.subr.mxu0 0.0
    %2309 = vmatpush1.msra.mxu0 0.0
    %2310 = vmatprep.subr.mxu0 0.0
    %2311 = vmatpush1.msra.mxu0 0.0
    %2312 = vmatprep.subr.mxu0 0.0
    %2313 = vmatpush1.msra.mxu0 0.0
    %2314 = vmatprep.subr.mxu0 0.0
    %2315 = vmatpush1.msra.mxu0 0.0
    %2316 = vmatprep.subr.mxu0 0.0
    %2317 = vmatpush1.msra.mxu0 0.0
    %2318 = vmatprep.subr.mxu0 0.0
    %2319 = vmatpush1.msra.mxu0 0.0
    %2320 = vmatprep.subr.mxu0 0.0
    %2321 = vmatpush1.msra.mxu0 0.0
    %2322 = vmatprep.subr.mxu0 0.0
    %2323 = vmatpush1.msra.mxu0 0.0
    %2324 = vmatprep.subr.mxu0 0.0
    %2325 = vmatpush1.msra.mxu0 0.0
    %2326 = vmatprep.subr.mxu0 0.0
    %2327 = vmatpush1.msra.mxu0 0.0
    %2328 = vmatprep.subr.mxu0 0.0
    %2329 = vmatpush1.msra.mxu0 0.0
    %2330 = vmatprep.subr.mxu0 0.0
    %2331 = vmatpush1.msra.mxu0 0.0
    %2332 = vmatprep.subr.mxu0 0.0
    %2333 = vmatpush1.msra.mxu0 0.0
    %2334 = vmatprep.subr.mxu0 0.0
    %2335 = vmatpush1.msra.mxu0 0.0
    %2336 = vmatprep.subr.mxu0 %v222
    %2337 = vmatpush1.msra.mxu0 %v221
    %2338 = vmatprep.subr.mxu0 %v218
    %2339 = vmatpush1.msra.mxu0 %v217
    %2340 = vmatprep.subr.mxu0 0.0
    %2341 = vmatpush2.msra.mxu0 0.0
    %2342 = vmatprep.subr.mxu0 0.0
    %2343 = vmatpush2.msra.mxu0 0.0
    %2344 = vmatprep.subr.mxu0 0.0
    %2345 = vmatpush2.msra.mxu0 0.0
    %2346 = vmatprep.subr.mxu0 0.0
    %2347 = vmatpush2.msra.mxu0 0.0
    %2348 = vmatprep.subr.mxu0 0.0
    %2349 = vmatpush2.msra.mxu0 0.0
    %2350 = vmatprep.subr.mxu0 0.0
    %2351 = vmatpush2.msra.mxu0 0.0
    %2352 = vmatprep.subr.mxu0 0.0
    %2353 = vmatpush2.msra.mxu0 0.0
    %2354 = vmatprep.subr.mxu0 0.0
    %2355 = vmatpush2.msra.mxu0 0.0
    %2356 = vmatprep.subr.mxu0 0.0
    %2357 = vmatpush2.msra.mxu0 0.0
    %2358 = vmatprep.subr.mxu0 0.0
    %2359 = vmatpush2.msra.mxu0 0.0
    %2360 = vmatprep.subr.mxu0 0.0
    %2361 = vmatpush2.msra.mxu0 0.0
    %2362 = vmatprep.subr.mxu0 0.0
    %2363 = vmatpush2.msra.mxu0 0.0
    %2364 = vmatprep.subr.mxu0 0.0
    %2365 = vmatpush2.msra.mxu0 0.0
    %2366 = vmatprep.subr.mxu0 0.0
    %2367 = vmatpush2.msra.mxu0 0.0
    %2368 = vmatprep.subr.mxu0 0.0
    %2369 = vmatpush2.msra.mxu0 0.0
    %2370 = vmatprep.subr.mxu0 0.0
    %2371 = vmatpush2.msra.mxu0 0.0
    %2372 = vmatprep.mubr.f32.mxu0 0.0
    %2373 = vmatmul.mubr.f32.gmra.mxu0 %v2306
    %v2374 = vpop.f32.mrf.mxu0
    %v2375 = vadd.f32 %v230, %v2374
    %v2376 = vpop.f32.mrf.mxu0
    %v2377 = vadd.f32 %v234, %v2376
    %2378 = vdwg.mxu0
    %2379 = vmatprep.subr.mxu0 0.0
    %2380 = vmatpush1.msra.mxu0 0.0
    %2381 = vmatprep.subr.mxu0 0.0
    %2382 = vmatpush1.msra.mxu0 0.0
    %2383 = vmatprep.subr.mxu0 0.0
    %2384 = vmatpush1.msra.mxu0 0.0
    %2385 = vmatprep.subr.mxu0 0.0
    %2386 = vmatpush1.msra.mxu0 0.0
    %2387 = vmatprep.subr.mxu0 0.0
    %2388 = vmatpush1.msra.mxu0 0.0
    %2389 = vmatprep.subr.mxu0 0.0
    %2390 = vmatpush1.msra.mxu0 0.0
    %2391 = vmatprep.subr.mxu0 0.0
    %2392 = vmatpush1.msra.mxu0 0.0
    %2393 = vmatprep.subr.mxu0 0.0
    %2394 = vmatpush1.msra.mxu0 0.0
    %2395 = vmatprep.subr.mxu0 0.0
    %2396 = vmatpush1.msra.mxu0 0.0
    %2397 = vmatprep.subr.mxu0 0.0
    %2398 = vmatpush1.msra.mxu0 0.0
    %2399 = vmatprep.subr.mxu0 0.0
    %2400 = vmatpush1.msra.mxu0 0.0
    %2401 = vmatprep.subr.mxu0 0.0
    %2402 = vmatpush1.msra.mxu0 0.0
    %2403 = vmatprep.subr.mxu0 0.0
    %2404 = vmatpush1.msra.mxu0 0.0
    %2405 = vmatprep.subr.mxu0 0.0
    %2406 = vmatpush1.msra.mxu0 0.0
    %2407 = vmatprep.subr.mxu0 %v224
    %2408 = vmatpush1.msra.mxu0 %v223
    %2409 = vmatprep.subr.mxu0 %v220
    %2410 = vmatpush1.msra.mxu0 %v219
    %2411 = vmatprep.subr.mxu0 0.0
    %2412 = vmatpush2.msra.mxu0 0.0
    %2413 = vmatprep.subr.mxu0 0.0
    %2414 = vmatpush2.msra.mxu0 0.0
    %2415 = vmatprep.subr.mxu0 0.0
    %2416 = vmatpush2.msra.mxu0 0.0
    %2417 = vmatprep.subr.mxu0 0.0
    %2418 = vmatpush2.msra.mxu0 0.0
    %2419 = vmatprep.subr.mxu0 0.0
    %2420 = vmatpush2.msra.mxu0 0.0
    %2421 = vmatprep.subr.mxu0 0.0
    %2422 = vmatpush2.msra.mxu0 0.0
    %2423 = vmatprep.subr.mxu0 0.0
    %2424 = vmatpush2.msra.mxu0 0.0
    %2425 = vmatprep.subr.mxu0 0.0
    %2426 = vmatpush2.msra.mxu0 0.0
    %2427 = vmatprep.subr.mxu0 0.0
    %2428 = vmatpush2.msra.mxu0 0.0
    %2429 = vmatprep.subr.mxu0 0.0
    %2430 = vmatpush2.msra.mxu0 0.0
    %2431 = vmatprep.subr.mxu0 0.0
    %2432 = vmatpush2.msra.mxu0 0.0
    %2433 = vmatprep.subr.mxu0 0.0
    %2434 = vmatpush2.msra.mxu0 0.0
    %2435 = vmatprep.subr.mxu0 0.0
    %2436 = vmatpush2.msra.mxu0 0.0
    %2437 = vmatprep.subr.mxu0 0.0
    %2438 = vmatpush2.msra.mxu0 0.0
    %2439 = vmatprep.subr.mxu0 0.0
    %2440 = vmatpush2.msra.mxu0 0.0
    %2441 = vmatprep.subr.mxu0 0.0
    %2442 = vmatpush2.msra.mxu0 0.0
    %2443 = vmatprep.mubr.f32.mxu0 0.0
    %2444 = vmatmul.mubr.f32.gmra.mxu0 %v2306
    %v2445 = vpop.f32.mrf.mxu0
    %v2446 = vadd.f32 %v238, %v2445
    %v2447 = vpop.f32.mrf.mxu0
    %v2448 = vadd.f32 %v242, %v2447
    %2449 = vdwg.mxu0
    %v2454 = vrot.slane %v2375, 6
    %v2455 = vrot.slane %v2377, 6
    %v2456 = vrot.slane %v2446, 6
    %v2457 = vrot.slane %v2448, 6
    %2462 = vst [vmem:[#allocation2 + $0x60] sm:$0xc] %v2454
    %2463 = vst [vmem:[#allocation2 + $0x68] sm:$0xc] %v2455
    %2464 = vst [vmem:[#allocation2 + $0x70] sm:$0xc] %v2456
    %2465 = vst [vmem:[#allocation2 + $0x78] sm:$0xc] %v2457
    %2466 = vrot.lane.b32.xlu0 %v215, 32
    %v2467 = vpop.permute.xlu0 %2466
    %v2468 = vsel %vm247, %v2467, 0
    %2470 = vmatprep.subr.mxu0 0.0
    %2471 = vmatpush1.msra.mxu0 0.0
    %2472 = vmatprep.subr.mxu0 0.0
    %2473 = vmatpush1.msra.mxu0 0.0
    %2474 = vmatprep.subr.mxu0 0.0
    %2475 = vmatpush1.msra.mxu0 0.0
    %2476 = vmatprep.subr.mxu0 0.0
    %2477 = vmatpush1.msra.mxu0 0.0
    %2478 = vmatprep.subr.mxu0 0.0
    %2479 = vmatpush1.msra.mxu0 0.0
    %2480 = vmatprep.subr.mxu0 0.0
    %2481 = vmatpush1.msra.mxu0 0.0
    %2482 = vmatprep.subr.mxu0 0.0
    %2483 = vmatpush1.msra.mxu0 0.0
    %2484 = vmatprep.subr.mxu0 0.0
    %2485 = vmatpush1.msra.mxu0 0.0
    %2486 = vmatprep.subr.mxu0 0.0
    %2487 = vmatpush1.msra.mxu0 0.0
    %2488 = vmatprep.subr.mxu0 0.0
    %2489 = vmatpush1.msra.mxu0 0.0
    %2490 = vmatprep.subr.mxu0 0.0
    %2491 = vmatpush1.msra.mxu0 0.0
    %2492 = vmatprep.subr.mxu0 0.0
    %2493 = vmatpush1.msra.mxu0 0.0
    %2494 = vmatprep.subr.mxu0 0.0
    %2495 = vmatpush1.msra.mxu0 0.0
    %2496 = vmatprep.subr.mxu0 0.0
    %2497 = vmatpush1.msra.mxu0 0.0
    %2498 = vmatprep.subr.mxu0 %v222
    %2499 = vmatpush1.msra.mxu0 %v221
    %2500 = vmatprep.subr.mxu0 %v218
    %2501 = vmatpush1.msra.mxu0 %v217
    %2502 = vmatprep.subr.mxu0 0.0
    %2503 = vmatpush2.msra.mxu0 0.0
    %2504 = vmatprep.subr.mxu0 0.0
    %2505 = vmatpush2.msra.mxu0 0.0
    %2506 = vmatprep.subr.mxu0 0.0
    %2507 = vmatpush2.msra.mxu0 0.0
    %2508 = vmatprep.subr.mxu0 0.0
    %2509 = vmatpush2.msra.mxu0 0.0
    %2510 = vmatprep.subr.mxu0 0.0
    %2511 = vmatpush2.msra.mxu0 0.0
    %2512 = vmatprep.subr.mxu0 0.0
    %2513 = vmatpush2.msra.mxu0 0.0
    %2514 = vmatprep.subr.mxu0 0.0
    %2515 = vmatpush2.msra.mxu0 0.0
    %2516 = vmatprep.subr.mxu0 0.0
    %2517 = vmatpush2.msra.mxu0 0.0
    %2518 = vmatprep.subr.mxu0 0.0
    %2519 = vmatpush2.msra.mxu0 0.0
    %2520 = vmatprep.subr.mxu0 0.0
    %2521 = vmatpush2.msra.mxu0 0.0
    %2522 = vmatprep.subr.mxu0 0.0
    %2523 = vmatpush2.msra.mxu0 0.0
    %2524 = vmatprep.subr.mxu0 0.0
    %2525 = vmatpush2.msra.mxu0 0.0
    %2526 = vmatprep.subr.mxu0 0.0
    %2527 = vmatpush2.msra.mxu0 0.0
    %2528 = vmatprep.subr.mxu0 0.0
    %2529 = vmatpush2.msra.mxu0 0.0
    %2530 = vmatprep.subr.mxu0 0.0
    %2531 = vmatpush2.msra.mxu0 0.0
    %2532 = vmatprep.subr.mxu0 0.0
    %2533 = vmatpush2.msra.mxu0 0.0
    %2534 = vmatprep.mubr.f32.mxu0 0.0
    %2535 = vmatmul.mubr.f32.gmra.mxu0 %v2468
    %v2536 = vpop.f32.mrf.mxu0
    %v2537 = vadd.f32 %v230, %v2536
    %v2538 = vpop.f32.mrf.mxu0
    %v2539 = vadd.f32 %v234, %v2538
    %2540 = vdwg.mxu0
    %2541 = vmatprep.subr.mxu0 0.0
    %2542 = vmatpush1.msra.mxu0 0.0
    %2543 = vmatprep.subr.mxu0 0.0
    %2544 = vmatpush1.msra.mxu0 0.0
    %2545 = vmatprep.subr.mxu0 0.0
    %2546 = vmatpush1.msra.mxu0 0.0
    %2547 = vmatprep.subr.mxu0 0.0
    %2548 = vmatpush1.msra.mxu0 0.0
    %2549 = vmatprep.subr.mxu0 0.0
    %2550 = vmatpush1.msra.mxu0 0.0
    %2551 = vmatprep.subr.mxu0 0.0
    %2552 = vmatpush1.msra.mxu0 0.0
    %2553 = vmatprep.subr.mxu0 0.0
    %2554 = vmatpush1.msra.mxu0 0.0
    %2555 = vmatprep.subr.mxu0 0.0
    %2556 = vmatpush1.msra.mxu0 0.0
    %2557 = vmatprep.subr.mxu0 0.0
    %2558 = vmatpush1.msra.mxu0 0.0
    %2559 = vmatprep.subr.mxu0 0.0
    %2560 = vmatpush1.msra.mxu0 0.0
    %2561 = vmatprep.subr.mxu0 0.0
    %2562 = vmatpush1.msra.mxu0 0.0
    %2563 = vmatprep.subr.mxu0 0.0
    %2564 = vmatpush1.msra.mxu0 0.0
    %2565 = vmatprep.subr.mxu0 0.0
    %2566 = vmatpush1.msra.mxu0 0.0
    %2567 = vmatprep.subr.mxu0 0.0
    %2568 = vmatpush1.msra.mxu0 0.0
    %2569 = vmatprep.subr.mxu0 %v224
    %2570 = vmatpush1.msra.mxu0 %v223
    %2571 = vmatprep.subr.mxu0 %v220
    %2572 = vmatpush1.msra.mxu0 %v219
    %2573 = vmatprep.subr.mxu0 0.0
    %2574 = vmatpush2.msra.mxu0 0.0
    %2575 = vmatprep.subr.mxu0 0.0
    %2576 = vmatpush2.msra.mxu0 0.0
    %2577 = vmatprep.subr.mxu0 0.0
    %2578 = vmatpush2.msra.mxu0 0.0
    %2579 = vmatprep.subr.mxu0 0.0
    %2580 = vmatpush2.msra.mxu0 0.0
    %2581 = vmatprep.subr.mxu0 0.0
    %2582 = vmatpush2.msra.mxu0 0.0
    %2583 = vmatprep.subr.mxu0 0.0
    %2584 = vmatpush2.msra.mxu0 0.0
    %2585 = vmatprep.subr.mxu0 0.0
    %2586 = vmatpush2.msra.mxu0 0.0
    %2587 = vmatprep.subr.mxu0 0.0
    %2588 = vmatpush2.msra.mxu0 0.0
    %2589 = vmatprep.subr.mxu0 0.0
    %2590 = vmatpush2.msra.mxu0 0.0
    %2591 = vmatprep.subr.mxu0 0.0
    %2592 = vmatpush2.msra.mxu0 0.0
    %2593 = vmatprep.subr.mxu0 0.0
    %2594 = vmatpush2.msra.mxu0 0.0
    %2595 = vmatprep.subr.mxu0 0.0
    %2596 = vmatpush2.msra.mxu0 0.0
    %2597 = vmatprep.subr.mxu0 0.0
    %2598 = vmatpush2.msra.mxu0 0.0
    %2599 = vmatprep.subr.mxu0 0.0
    %2600 = vmatpush2.msra.mxu0 0.0
    %2601 = vmatprep.subr.mxu0 0.0
    %2602 = vmatpush2.msra.mxu0 0.0
    %2603 = vmatprep.subr.mxu0 0.0
    %2604 = vmatpush2.msra.mxu0 0.0
    %2605 = vmatprep.mubr.f32.mxu0 0.0
    %2606 = vmatmul.mubr.f32.gmra.mxu0 %v2468
    %v2607 = vpop.f32.mrf.mxu0
    %v2608 = vadd.f32 %v238, %v2607
    %v2609 = vpop.f32.mrf.mxu0
    %v2610 = vadd.f32 %v242, %v2609
    %2611 = vdwg.mxu0
    %v2616 = vrot.slane %v2537, 4
    %v2617 = vrot.slane %v2539, 4
    %v2618 = vrot.slane %v2608, 4
    %v2619 = vrot.slane %v2610, 4
    %2624 = vst [vmem:[#allocation2 + $0x60] sm:$0x30] %v2616
    %2625 = vst [vmem:[#allocation2 + $0x68] sm:$0x30] %v2617
    %2626 = vst [vmem:[#allocation2 + $0x70] sm:$0x30] %v2618
    %2627 = vst [vmem:[#allocation2 + $0x78] sm:$0x30] %v2619
    %2628 = vrot.lane.b32.xlu0 %v215, 16
    %v2629 = vpop.permute.xlu0 %2628
    %v2630 = vsel %vm247, %v2629, 0
    %2632 = vmatprep.subr.mxu0 0.0
    %2633 = vmatpush1.msra.mxu0 0.0
    %2634 = vmatprep.subr.mxu0 0.0
    %2635 = vmatpush1.msra.mxu0 0.0
    %2636 = vmatprep.subr.mxu0 0.0
    %2637 = vmatpush1.msra.mxu0 0.0
    %2638 = vmatprep.subr.mxu0 0.0
    %2639 = vmatpush1.msra.mxu0 0.0
    %2640 = vmatprep.subr.mxu0 0.0
    %2641 = vmatpush1.msra.mxu0 0.0
    %2642 = vmatprep.subr.mxu0 0.0
    %2643 = vmatpush1.msra.mxu0 0.0
    %2644 = vmatprep.subr.mxu0 0.0
    %2645 = vmatpush1.msra.mxu0 0.0
    %2646 = vmatprep.subr.mxu0 0.0
    %2647 = vmatpush1.msra.mxu0 0.0
    %2648 = vmatprep.subr.mxu0 0.0
    %2649 = vmatpush1.msra.mxu0 0.0
    %2650 = vmatprep.subr.mxu0 0.0
    %2651 = vmatpush1.msra.mxu0 0.0
    %2652 = vmatprep.subr.mxu0 0.0
    %2653 = vmatpush1.msra.mxu0 0.0
    %2654 = vmatprep.subr.mxu0 0.0
    %2655 = vmatpush1.msra.mxu0 0.0
    %2656 = vmatprep.subr.mxu0 0.0
    %2657 = vmatpush1.msra.mxu0 0.0
    %2658 = vmatprep.subr.mxu0 0.0
    %2659 = vmatpush1.msra.mxu0 0.0
    %2660 = vmatprep.subr.mxu0 %v222
    %2661 = vmatpush1.msra.mxu0 %v221
    %2662 = vmatprep.subr.mxu0 %v218
    %2663 = vmatpush1.msra.mxu0 %v217
    %2664 = vmatprep.subr.mxu0 0.0
    %2665 = vmatpush2.msra.mxu0 0.0
    %2666 = vmatprep.subr.mxu0 0.0
    %2667 = vmatpush2.msra.mxu0 0.0
    %2668 = vmatprep.subr.mxu0 0.0
    %2669 = vmatpush2.msra.mxu0 0.0
    %2670 = vmatprep.subr.mxu0 0.0
    %2671 = vmatpush2.msra.mxu0 0.0
    %2672 = vmatprep.subr.mxu0 0.0
    %2673 = vmatpush2.msra.mxu0 0.0
    %2674 = vmatprep.subr.mxu0 0.0
    %2675 = vmatpush2.msra.mxu0 0.0
    %2676 = vmatprep.subr.mxu0 0.0
    %2677 = vmatpush2.msra.mxu0 0.0
    %2678 = vmatprep.subr.mxu0 0.0
    %2679 = vmatpush2.msra.mxu0 0.0
    %2680 = vmatprep.subr.mxu0 0.0
    %2681 = vmatpush2.msra.mxu0 0.0
    %2682 = vmatprep.subr.mxu0 0.0
    %2683 = vmatpush2.msra.mxu0 0.0
    %2684 = vmatprep.subr.mxu0 0.0
    %2685 = vmatpush2.msra.mxu0 0.0
    %2686 = vmatprep.subr.mxu0 0.0
    %2687 = vmatpush2.msra.mxu0 0.0
    %2688 = vmatprep.subr.mxu0 0.0
    %2689 = vmatpush2.msra.mxu0 0.0
    %2690 = vmatprep.subr.mxu0 0.0
    %2691 = vmatpush2.msra.mxu0 0.0
    %2692 = vmatprep.subr.mxu0 0.0
    %2693 = vmatpush2.msra.mxu0 0.0
    %2694 = vmatprep.subr.mxu0 0.0
    %2695 = vmatpush2.msra.mxu0 0.0
    %2696 = vmatprep.mubr.f32.mxu0 0.0
    %2697 = vmatmul.mubr.f32.gmra.mxu0 %v2630
    %v2698 = vpop.f32.mrf.mxu0
    %v2699 = vadd.f32 %v230, %v2698
    %v2700 = vpop.f32.mrf.mxu0
    %v2701 = vadd.f32 %v234, %v2700
    %2702 = vdwg.mxu0
    %2703 = vmatprep.subr.mxu0 0.0
    %2704 = vmatpush1.msra.mxu0 0.0
    %2705 = vmatprep.subr.mxu0 0.0
    %2706 = vmatpush1.msra.mxu0 0.0
    %2707 = vmatprep.subr.mxu0 0.0
    %2708 = vmatpush1.msra.mxu0 0.0
    %2709 = vmatprep.subr.mxu0 0.0
    %2710 = vmatpush1.msra.mxu0 0.0
    %2711 = vmatprep.subr.mxu0 0.0
    %2712 = vmatpush1.msra.mxu0 0.0
    %2713 = vmatprep.subr.mxu0 0.0
    %2714 = vmatpush1.msra.mxu0 0.0
    %2715 = vmatprep.subr.mxu0 0.0
    %2716 = vmatpush1.msra.mxu0 0.0
    %2717 = vmatprep.subr.mxu0 0.0
    %2718 = vmatpush1.msra.mxu0 0.0
    %2719 = vmatprep.subr.mxu0 0.0
    %2720 = vmatpush1.msra.mxu0 0.0
    %2721 = vmatprep.subr.mxu0 0.0
    %2722 = vmatpush1.msra.mxu0 0.0
    %2723 = vmatprep.subr.mxu0 0.0
    %2724 = vmatpush1.msra.mxu0 0.0
    %2725 = vmatprep.subr.mxu0 0.0
    %2726 = vmatpush1.msra.mxu0 0.0
    %2727 = vmatprep.subr.mxu0 0.0
    %2728 = vmatpush1.msra.mxu0 0.0
    %2729 = vmatprep.subr.mxu0 0.0
    %2730 = vmatpush1.msra.mxu0 0.0
    %2731 = vmatprep.subr.mxu0 %v224
    %2732 = vmatpush1.msra.mxu0 %v223
    %2733 = vmatprep.subr.mxu0 %v220
    %2734 = vmatpush1.msra.mxu0 %v219
    %2735 = vmatprep.subr.mxu0 0.0
    %2736 = vmatpush2.msra.mxu0 0.0
    %2737 = vmatprep.subr.mxu0 0.0
    %2738 = vmatpush2.msra.mxu0 0.0
    %2739 = vmatprep.subr.mxu0 0.0
    %2740 = vmatpush2.msra.mxu0 0.0
    %2741 = vmatprep.subr.mxu0 0.0
    %2742 = vmatpush2.msra.mxu0 0.0
    %2743 = vmatprep.subr.mxu0 0.0
    %2744 = vmatpush2.msra.mxu0 0.0
    %2745 = vmatprep.subr.mxu0 0.0
    %2746 = vmatpush2.msra.mxu0 0.0
    %2747 = vmatprep.subr.mxu0 0.0
    %2748 = vmatpush2.msra.mxu0 0.0
    %2749 = vmatprep.subr.mxu0 0.0
    %2750 = vmatpush2.msra.mxu0 0.0
    %2751 = vmatprep.subr.mxu0 0.0
    %2752 = vmatpush2.msra.mxu0 0.0
    %2753 = vmatprep.subr.mxu0 0.0
    %2754 = vmatpush2.msra.mxu0 0.0
    %2755 = vmatprep.subr.mxu0 0.0
    %2756 = vmatpush2.msra.mxu0 0.0
    %2757 = vmatprep.subr.mxu0 0.0
    %2758 = vmatpush2.msra.mxu0 0.0
    %2759 = vmatprep.subr.mxu0 0.0
    %2760 = vmatpush2.msra.mxu0 0.0
    %2761 = vmatprep.subr.mxu0 0.0
    %2762 = vmatpush2.msra.mxu0 0.0
    %2763 = vmatprep.subr.mxu0 0.0
    %2764 = vmatpush2.msra.mxu0 0.0
    %2765 = vmatprep.subr.mxu0 0.0
    %2766 = vmatpush2.msra.mxu0 0.0
    %2767 = vmatprep.mubr.f32.mxu0 0.0
    %2768 = vmatmul.mubr.f32.gmra.mxu0 %v2630
    %v2769 = vpop.f32.mrf.mxu0
    %v2770 = vadd.f32 %v238, %v2769
    %v2771 = vpop.f32.mrf.mxu0
    %v2772 = vadd.f32 %v242, %v2771
    %2773 = vdwg.mxu0
    %v2778 = vrot.slane %v2699, 2
    %v2779 = vrot.slane %v2701, 2
    %v2780 = vrot.slane %v2770, 2
    %v2781 = vrot.slane %v2772, 2
    %2786 = vst [vmem:[#allocation2 + $0x60] sm:$0xc0] %v2778
    %2787 = vst [vmem:[#allocation2 + $0x68] sm:$0xc0] %v2779
    %2788 = vst [vmem:[#allocation2 + $0x70] sm:$0xc0] %v2780
    %2789 = vst [vmem:[#allocation2 + $0x78] sm:$0xc0] %v2781
    %v2790 = vld [vmem:[#allocation6] sm:$0xff]
    %v2791 = vld [vmem:[#allocation6 + $0x8] sm:$0xff]
    %v2792 = vld [vmem:[#allocation6 + $0x10] sm:$0xff]
    %v2793 = vld [vmem:[#allocation6 + $0x18] sm:$0xff]
    %v2794 = vld [vmem:[#allocation6 + $0x20] sm:$0xff]
    %v2795 = vld [vmem:[#allocation6 + $0x28] sm:$0xff]
    %v2796 = vld [vmem:[#allocation6 + $0x30] sm:$0xff]
    %v2797 = vld [vmem:[#allocation6 + $0x38] sm:$0xff]
    %v2798 = vld [vmem:[#allocation6 + $0x40] sm:$0xff]
    %v2799 = vld [vmem:[#allocation6 + $0x48] sm:$0xff]
    %v2800 = vld [vmem:[#allocation6 + $0x50] sm:$0xff]
    %v2801 = vld [vmem:[#allocation6 + $0x58] sm:$0xff]
    %v2802 = vld [vmem:[#allocation6 + $0x60] sm:$0xff]
    %v2803 = vld [vmem:[#allocation6 + $0x68] sm:$0xff]
    %v2804 = vld [vmem:[#allocation6 + $0x70] sm:$0xff]
    %v2805 = vld [vmem:[#allocation6 + $0x78] sm:$0xff]
    %v2806 = vld [vmem:[#allocation6 + $0x80] sm:$0xff]
    %v2807 = vld [vmem:[#allocation6 + $0x88] sm:$0xff]
    %v2808 = vld [vmem:[#allocation6 + $0x90] sm:$0xff]
    %v2809 = vld [vmem:[#allocation6 + $0x98] sm:$0xff]
    %v2810 = vld [vmem:[#allocation6 + $0xa0] sm:$0xff]
    %v2811 = vld [vmem:[#allocation6 + $0xa8] sm:$0xff]
    %v2812 = vld [vmem:[#allocation6 + $0xb0] sm:$0xff]
    %v2813 = vld [vmem:[#allocation6 + $0xb8] sm:$0xff]
    %v2814 = vld [vmem:[#allocation6 + $0xc0] sm:$0xff]
    %v2815 = vld [vmem:[#allocation6 + $0xc8] sm:$0xff]
    %v2816 = vld [vmem:[#allocation6 + $0xd0] sm:$0xff]
    %v2817 = vld [vmem:[#allocation6 + $0xd8] sm:$0xff]
    %v2818 = vld [vmem:[#allocation6 + $0xe0] sm:$0xff]
    %v2819 = vld [vmem:[#allocation6 + $0xe8] sm:$0xff]
    %v2820 = vld [vmem:[#allocation6 + $0xf0] sm:$0xff]
    %v2821 = vld [vmem:[#allocation6 + $0xf8] sm:$0xff]
    %v2822 = vld [vmem:[#allocation6 + $0x100] sm:$0xff]
    %v2823 = vld [vmem:[#allocation6 + $0x108] sm:$0xff]
    %v2824 = vld [vmem:[#allocation6 + $0x110] sm:$0xff]
    %v2825 = vld [vmem:[#allocation6 + $0x118] sm:$0xff]
    %v2826 = vld [vmem:[#allocation6 + $0x120] sm:$0xff]
    %v2827 = vld [vmem:[#allocation6 + $0x128] sm:$0xff]
    %v2828 = vld [vmem:[#allocation6 + $0x130] sm:$0xff]
    %v2829 = vld [vmem:[#allocation6 + $0x138] sm:$0xff]
    %v2830 = vld [vmem:[#allocation6 + $0x140] sm:$0xff]
    %v2831 = vld [vmem:[#allocation6 + $0x148] sm:$0xff]
    %v2832 = vld [vmem:[#allocation6 + $0x150] sm:$0xff]
    %v2833 = vld [vmem:[#allocation6 + $0x158] sm:$0xff]
    %v2834 = vld [vmem:[#allocation6 + $0x160] sm:$0xff]
    %v2835 = vld [vmem:[#allocation6 + $0x168] sm:$0xff]
    %v2836 = vld [vmem:[#allocation6 + $0x170] sm:$0xff]
    %v2837 = vld [vmem:[#allocation6 + $0x178] sm:$0xff]
    %v2838 = vld [vmem:[#allocation6 + $0x180] sm:$0xff]
    %v2839 = vld [vmem:[#allocation6 + $0x188] sm:$0xff]
    %v2840 = vld [vmem:[#allocation6 + $0x190] sm:$0xff]
    %v2841 = vld [vmem:[#allocation6 + $0x198] sm:$0xff]
    %v2842 = vld [vmem:[#allocation6 + $0x1a0] sm:$0xff]
    %v2843 = vld [vmem:[#allocation6 + $0x1a8] sm:$0xff]
    %v2844 = vld [vmem:[#allocation6 + $0x1b0] sm:$0xff]
    %v2845 = vld [vmem:[#allocation6 + $0x1b8] sm:$0xff]
    %v2846 = vld [vmem:[#allocation6 + $0x1c0] sm:$0xff]
    %v2847 = vld [vmem:[#allocation6 + $0x1c8] sm:$0xff]
    %v2848 = vld [vmem:[#allocation6 + $0x1d0] sm:$0xff]
    %v2849 = vld [vmem:[#allocation6 + $0x1d8] sm:$0xff]
    %v2850 = vld [vmem:[#allocation6 + $0x1e0] sm:$0xff]
    %v2851 = vld [vmem:[#allocation6 + $0x1e8] sm:$0xff]
    %v2852 = vld [vmem:[#allocation6 + $0x1f0] sm:$0xff]
    %v2853 = vld [vmem:[#allocation6 + $0x1f8] sm:$0xff]
    %v2854 = vld [vmem:[#allocation6 + $0x200] sm:$0xff]
    %v2855 = vld [vmem:[#allocation6 + $0x208] sm:$0xff]
    %v2856 = vld [vmem:[#allocation6 + $0x210] sm:$0xff]
    %v2857 = vld [vmem:[#allocation6 + $0x218] sm:$0xff]
    %v2858 = vld [vmem:[#allocation6 + $0x220] sm:$0xff]
    %v2859 = vld [vmem:[#allocation6 + $0x228] sm:$0xff]
    %v2860 = vld [vmem:[#allocation6 + $0x230] sm:$0xff]
    %v2861 = vld [vmem:[#allocation6 + $0x238] sm:$0xff]
    %v2862 = vld [vmem:[#allocation6 + $0x240] sm:$0xff]
    %v2863 = vld [vmem:[#allocation6 + $0x248] sm:$0xff]
    %v2864 = vld [vmem:[#allocation6 + $0x250] sm:$0xff]
    %v2865 = vld [vmem:[#allocation6 + $0x258] sm:$0xff]
    %v2866 = vld [vmem:[#allocation6 + $0x260] sm:$0xff]
    %v2867 = vld [vmem:[#allocation6 + $0x268] sm:$0xff]
    %v2868 = vld [vmem:[#allocation6 + $0x270] sm:$0xff]
    %v2869 = vld [vmem:[#allocation6 + $0x278] sm:$0xff]
    %v2870 = vld [vmem:[#allocation6 + $0x280] sm:$0xff]
    %v2871 = vld [vmem:[#allocation6 + $0x288] sm:$0xff]
    %v2872 = vld [vmem:[#allocation6 + $0x290] sm:$0xff]
    %v2873 = vld [vmem:[#allocation6 + $0x298] sm:$0xff]
    %v2874 = vld [vmem:[#allocation6 + $0x2a0] sm:$0xff]
    %v2875 = vld [vmem:[#allocation6 + $0x2a8] sm:$0xff]
    %v2876 = vld [vmem:[#allocation6 + $0x2b0] sm:$0xff]
    %v2877 = vld [vmem:[#allocation6 + $0x2b8] sm:$0xff]
    %v2878 = vld [vmem:[#allocation6 + $0x2c0] sm:$0xff]
    %v2879 = vld [vmem:[#allocation6 + $0x2c8] sm:$0xff]
    %v2880 = vld [vmem:[#allocation6 + $0x2d0] sm:$0xff]
    %v2881 = vld [vmem:[#allocation6 + $0x2d8] sm:$0xff]
    %v2882 = vld [vmem:[#allocation6 + $0x2e0] sm:$0xff]
    %v2883 = vld [vmem:[#allocation6 + $0x2e8] sm:$0xff]
    %v2884 = vld [vmem:[#allocation6 + $0x2f0] sm:$0xff]
    %v2885 = vld [vmem:[#allocation6 + $0x2f8] sm:$0xff]
    %v2886 = vld [vmem:[#allocation6 + $0x300] sm:$0xff]
    %v2887 = vld [vmem:[#allocation6 + $0x308] sm:$0xff]
    %v2888 = vld [vmem:[#allocation6 + $0x310] sm:$0xff]
    %v2889 = vld [vmem:[#allocation6 + $0x318] sm:$0xff]
    %v2890 = vld [vmem:[#allocation6 + $0x320] sm:$0xff]
    %v2891 = vld [vmem:[#allocation6 + $0x328] sm:$0xff]
    %v2892 = vld [vmem:[#allocation6 + $0x330] sm:$0xff]
    %v2893 = vld [vmem:[#allocation6 + $0x338] sm:$0xff]
    %v2894 = vld [vmem:[#allocation6 + $0x340] sm:$0xff]
    %v2895 = vld [vmem:[#allocation6 + $0x348] sm:$0xff]
    %v2896 = vld [vmem:[#allocation6 + $0x350] sm:$0xff]
    %v2897 = vld [vmem:[#allocation6 + $0x358] sm:$0xff]
    %v2898 = vld [vmem:[#allocation6 + $0x360] sm:$0xff]
    %v2899 = vld [vmem:[#allocation6 + $0x368] sm:$0xff]
    %v2900 = vld [vmem:[#allocation6 + $0x370] sm:$0xff]
    %v2901 = vld [vmem:[#allocation6 + $0x378] sm:$0xff]
    %v2902 = vld [vmem:[#allocation6 + $0x380] sm:$0xff]
    %v2903 = vld [vmem:[#allocation6 + $0x388] sm:$0xff]
    %v2904 = vld [vmem:[#allocation6 + $0x390] sm:$0xff]
    %v2905 = vld [vmem:[#allocation6 + $0x398] sm:$0xff]
    %v2906 = vld [vmem:[#allocation6 + $0x3a0] sm:$0xff]
    %v2907 = vld [vmem:[#allocation6 + $0x3a8] sm:$0xff]
    %v2908 = vld [vmem:[#allocation6 + $0x3b0] sm:$0xff]
    %v2909 = vld [vmem:[#allocation6 + $0x3b8] sm:$0xff]
    %v2910 = vld [vmem:[#allocation6 + $0x3c0] sm:$0xff]
    %v2911 = vld [vmem:[#allocation6 + $0x3c8] sm:$0xff]
    %v2912 = vld [vmem:[#allocation6 + $0x3d0] sm:$0xff]
    %v2913 = vld [vmem:[#allocation6 + $0x3d8] sm:$0xff]
    %v2914 = vld [vmem:[#allocation6 + $0x3e0] sm:$0xff]
    %v2915 = vld [vmem:[#allocation6 + $0x3e8] sm:$0xff]
    %v2916 = vld [vmem:[#allocation6 + $0x3f0] sm:$0xff]
    %v2917 = vld [vmem:[#allocation6 + $0x3f8] sm:$0xff]
    %v2918 = vld [vmem:[#allocation6 + $0x400] sm:$0xff]
    %v2919 = vld [vmem:[#allocation6 + $0x408] sm:$0xff]
    %v2920 = vld [vmem:[#allocation6 + $0x410] sm:$0xff]
    %v2921 = vld [vmem:[#allocation6 + $0x418] sm:$0xff]
    %v2922 = vld [vmem:[#allocation6 + $0x420] sm:$0xff]
    %v2923 = vld [vmem:[#allocation6 + $0x428] sm:$0xff]
    %v2924 = vld [vmem:[#allocation6 + $0x430] sm:$0xff]
    %v2925 = vld [vmem:[#allocation6 + $0x438] sm:$0xff]
    %v2926 = vld [vmem:[#allocation6 + $0x440] sm:$0xff]
    %v2927 = vld [vmem:[#allocation6 + $0x448] sm:$0xff]
    %v2928 = vld [vmem:[#allocation6 + $0x450] sm:$0xff]
    %v2929 = vld [vmem:[#allocation6 + $0x458] sm:$0xff]
    %v2930 = vld [vmem:[#allocation6 + $0x460] sm:$0xff]
    %v2931 = vld [vmem:[#allocation6 + $0x468] sm:$0xff]
    %v2932 = vld [vmem:[#allocation6 + $0x470] sm:$0xff]
    %v2933 = vld [vmem:[#allocation6 + $0x478] sm:$0xff]
    %v2934 = vld [vmem:[#allocation6 + $0x480] sm:$0xff]
    %v2935 = vld [vmem:[#allocation6 + $0x488] sm:$0xff]
    %v2936 = vld [vmem:[#allocation6 + $0x490] sm:$0xff]
    %v2937 = vld [vmem:[#allocation6 + $0x498] sm:$0xff]
    %v2938 = vld [vmem:[#allocation6 + $0x4a0] sm:$0xff]
    %v2939 = vld [vmem:[#allocation6 + $0x4a8] sm:$0xff]
    %v2940 = vld [vmem:[#allocation6 + $0x4b0] sm:$0xff]
    %v2941 = vld [vmem:[#allocation6 + $0x4b8] sm:$0xff]
    %v2942 = vld [vmem:[#allocation6 + $0x4c0] sm:$0xff]
    %v2943 = vld [vmem:[#allocation6 + $0x4c8] sm:$0xff]
    %v2944 = vld [vmem:[#allocation6 + $0x4d0] sm:$0xff]
    %v2945 = vld [vmem:[#allocation6 + $0x4d8] sm:$0xff]
    %v2946 = vld [vmem:[#allocation6 + $0x4e0] sm:$0xff]
    %v2947 = vld [vmem:[#allocation6 + $0x4e8] sm:$0xff]
    %v2948 = vld [vmem:[#allocation6 + $0x4f0] sm:$0xff]
    %v2949 = vld [vmem:[#allocation6 + $0x4f8] sm:$0xff]
    %v2950 = vld [vmem:[#allocation6 + $0x500] sm:$0xff]
    %v2951 = vld [vmem:[#allocation6 + $0x508] sm:$0xff]
    %v2952 = vld [vmem:[#allocation6 + $0x510] sm:$0xff]
    %v2953 = vld [vmem:[#allocation6 + $0x518] sm:$0xff]
    %v2954 = vld [vmem:[#allocation6 + $0x520] sm:$0xff]
    %v2955 = vld [vmem:[#allocation6 + $0x528] sm:$0xff]
    %v2956 = vld [vmem:[#allocation6 + $0x530] sm:$0xff]
    %v2957 = vld [vmem:[#allocation6 + $0x538] sm:$0xff]
    %v2958 = vld [vmem:[#allocation6 + $0x540] sm:$0xff]
    %v2959 = vld [vmem:[#allocation6 + $0x548] sm:$0xff]
    %v2960 = vld [vmem:[#allocation6 + $0x550] sm:$0xff]
    %v2961 = vld [vmem:[#allocation6 + $0x558] sm:$0xff]
    %v2962 = vld [vmem:[#allocation6 + $0x560] sm:$0xff]
    %v2963 = vld [vmem:[#allocation6 + $0x568] sm:$0xff]
    %v2964 = vld [vmem:[#allocation6 + $0x570] sm:$0xff]
    %v2965 = vld [vmem:[#allocation6 + $0x578] sm:$0xff]
    %v2966 = vld [vmem:[#allocation6 + $0x580] sm:$0xff]
    %v2967 = vld [vmem:[#allocation6 + $0x588] sm:$0xff]
    %v2968 = vld [vmem:[#allocation6 + $0x590] sm:$0xff]
    %v2969 = vld [vmem:[#allocation6 + $0x598] sm:$0xff]
    %v2970 = vld [vmem:[#allocation6 + $0x5a0] sm:$0xff]
    %v2971 = vld [vmem:[#allocation6 + $0x5a8] sm:$0xff]
    %v2972 = vld [vmem:[#allocation6 + $0x5b0] sm:$0xff]
    %v2973 = vld [vmem:[#allocation6 + $0x5b8] sm:$0xff]
    %v2974 = vld [vmem:[#allocation6 + $0x5c0] sm:$0xff]
    %v2975 = vld [vmem:[#allocation6 + $0x5c8] sm:$0xff]
    %v2976 = vld [vmem:[#allocation6 + $0x5d0] sm:$0xff]
    %v2977 = vld [vmem:[#allocation6 + $0x5d8] sm:$0xff]
    %v2978 = vld [vmem:[#allocation6 + $0x5e0] sm:$0xff]
    %v2979 = vld [vmem:[#allocation6 + $0x5e8] sm:$0xff]
    %v2980 = vld [vmem:[#allocation6 + $0x5f0] sm:$0xff]
    %v2981 = vld [vmem:[#allocation6 + $0x5f8] sm:$0xff]
    %v2982 = vld [vmem:[#allocation6 + $0x600] sm:$0xff]
    %v2983 = vld [vmem:[#allocation6 + $0x608] sm:$0xff]
    %v2984 = vld [vmem:[#allocation6 + $0x610] sm:$0xff]
    %v2985 = vld [vmem:[#allocation6 + $0x618] sm:$0xff]
    %v2986 = vld [vmem:[#allocation6 + $0x620] sm:$0xff]
    %v2987 = vld [vmem:[#allocation6 + $0x628] sm:$0xff]
    %v2988 = vld [vmem:[#allocation6 + $0x630] sm:$0xff]
    %v2989 = vld [vmem:[#allocation6 + $0x638] sm:$0xff]
    %v2990 = vld [vmem:[#allocation6 + $0x640] sm:$0xff]
    %v2991 = vld [vmem:[#allocation6 + $0x648] sm:$0xff]
    %v2992 = vld [vmem:[#allocation6 + $0x650] sm:$0xff]
    %v2993 = vld [vmem:[#allocation6 + $0x658] sm:$0xff]
    %v2994 = vld [vmem:[#allocation6 + $0x660] sm:$0xff]
    %v2995 = vld [vmem:[#allocation6 + $0x668] sm:$0xff]
    %v2996 = vld [vmem:[#allocation6 + $0x670] sm:$0xff]
    %v2997 = vld [vmem:[#allocation6 + $0x678] sm:$0xff]
    %v2998 = vld [vmem:[#allocation6 + $0x680] sm:$0xff]
    %v2999 = vld [vmem:[#allocation6 + $0x688] sm:$0xff]
    %v3000 = vld [vmem:[#allocation6 + $0x690] sm:$0xff]
    %v3001 = vld [vmem:[#allocation6 + $0x698] sm:$0xff]
    %v3002 = vld [vmem:[#allocation6 + $0x6a0] sm:$0xff]
    %v3003 = vld [vmem:[#allocation6 + $0x6a8] sm:$0xff]
    %v3004 = vld [vmem:[#allocation6 + $0x6b0] sm:$0xff]
    %v3005 = vld [vmem:[#allocation6 + $0x6b8] sm:$0xff]
    %v3006 = vld [vmem:[#allocation6 + $0x6c0] sm:$0xff]
    %v3007 = vld [vmem:[#allocation6 + $0x6c8] sm:$0xff]
    %v3008 = vld [vmem:[#allocation6 + $0x6d0] sm:$0xff]
    %v3009 = vld [vmem:[#allocation6 + $0x6d8] sm:$0xff]
    %v3010 = vld [vmem:[#allocation6 + $0x6e0] sm:$0xff]
    %v3011 = vld [vmem:[#allocation6 + $0x6e8] sm:$0xff]
    %v3012 = vld [vmem:[#allocation6 + $0x6f0] sm:$0xff]
    %v3013 = vld [vmem:[#allocation6 + $0x6f8] sm:$0xff]
    %v3014 = vld [vmem:[#allocation6 + $0x700] sm:$0xff]
    %v3015 = vld [vmem:[#allocation6 + $0x708] sm:$0xff]
    %v3016 = vld [vmem:[#allocation6 + $0x710] sm:$0xff]
    %v3017 = vld [vmem:[#allocation6 + $0x718] sm:$0xff]
    %v3018 = vld [vmem:[#allocation6 + $0x720] sm:$0xff]
    %v3019 = vld [vmem:[#allocation6 + $0x728] sm:$0xff]
    %v3020 = vld [vmem:[#allocation6 + $0x730] sm:$0xff]
    %v3021 = vld [vmem:[#allocation6 + $0x738] sm:$0xff]
    %v3022 = vld [vmem:[#allocation6 + $0x740] sm:$0xff]
    %v3023 = vld [vmem:[#allocation6 + $0x748] sm:$0xff]
    %v3024 = vld [vmem:[#allocation6 + $0x750] sm:$0xff]
    %v3025 = vld [vmem:[#allocation6 + $0x758] sm:$0xff]
    %v3026 = vld [vmem:[#allocation6 + $0x760] sm:$0xff]
    %v3027 = vld [vmem:[#allocation6 + $0x768] sm:$0xff]
    %v3028 = vld [vmem:[#allocation6 + $0x770] sm:$0xff]
    %v3029 = vld [vmem:[#allocation6 + $0x778] sm:$0xff]
    %v3030 = vld [vmem:[#allocation6 + $0x780] sm:$0xff]
    %v3031 = vld [vmem:[#allocation6 + $0x788] sm:$0xff]
    %v3032 = vld [vmem:[#allocation6 + $0x790] sm:$0xff]
    %v3033 = vld [vmem:[#allocation6 + $0x798] sm:$0xff]
    %v3034 = vld [vmem:[#allocation6 + $0x7a0] sm:$0xff]
    %v3035 = vld [vmem:[#allocation6 + $0x7a8] sm:$0xff]
    %v3036 = vld [vmem:[#allocation6 + $0x7b0] sm:$0xff]
    %v3037 = vld [vmem:[#allocation6 + $0x7b8] sm:$0xff]
    %v3038 = vld [vmem:[#allocation6 + $0x7c0] sm:$0xff]
    %v3039 = vld [vmem:[#allocation6 + $0x7c8] sm:$0xff]
    %v3040 = vld [vmem:[#allocation6 + $0x7d0] sm:$0xff]
    %v3041 = vld [vmem:[#allocation6 + $0x7d8] sm:$0xff]
    %v3042 = vld [vmem:[#allocation6 + $0x7e0] sm:$0xff]
    %v3043 = vld [vmem:[#allocation6 + $0x7e8] sm:$0xff]
    %v3044 = vld [vmem:[#allocation6 + $0x7f0] sm:$0xff]
    %v3045 = vld [vmem:[#allocation6 + $0x7f8] sm:$0xff]
    %s3046 = scalar_lea.vmem %s3, 1
    %v3047 = vld [vmem:[%s3046] ss:$2 sm:$0xf]
    %v3048 = vld [vmem:[%s6] sm:$0x3]
    %s3049 = scalar_lea.vmem %s6, 2
    %v3050 = vld [vmem:[%s3049] sm:$0x3]
    %v3051 = vld [vmem:[%s7] sm:$0x3]
    %s3052 = scalar_lea.vmem %s7, 2
    %v3053 = vld [vmem:[%s3052] sm:$0x3]
    %3054 = vmatprep.subr.mxu0 %v2911
    %3055 = vmatpush1.msra.mxu0 %v2910
    %3056 = vmatprep.subr.mxu0 %v2903
    %3057 = vmatpush1.msra.mxu0 %v2902
    %3058 = vmatprep.subr.mxu0 %v2895
    %3059 = vmatpush1.msra.mxu0 %v2894
    %3060 = vmatprep.subr.mxu0 %v2887
    %3061 = vmatpush1.msra.mxu0 %v2886
    %3062 = vmatprep.subr.mxu0 %v2879
    %3063 = vmatpush1.msra.mxu0 %v2878
    %3064 = vmatprep.subr.mxu0 %v2871
    %3065 = vmatpush1.msra.mxu0 %v2870
    %3066 = vmatprep.subr.mxu0 %v2863
    %3067 = vmatpush1.msra.mxu0 %v2862
    %3068 = vmatprep.subr.mxu0 %v2855
    %3069 = vmatpush1.msra.mxu0 %v2854
    %3070 = vmatprep.subr.mxu0 %v2847
    %3071 = vmatpush1.msra.mxu0 %v2846
    %3072 = vmatprep.subr.mxu0 %v2839
    %3073 = vmatpush1.msra.mxu0 %v2838
    %3074 = vmatprep.subr.mxu0 %v2831
    %3075 = vmatpush1.msra.mxu0 %v2830
    %3076 = vmatprep.subr.mxu0 %v2823
    %3077 = vmatpush1.msra.mxu0 %v2822
    %3078 = vmatprep.subr.mxu0 %v2815
    %3079 = vmatpush1.msra.mxu0 %v2814
    %3080 = vmatprep.subr.mxu0 %v2807
    %3081 = vmatpush1.msra.mxu0 %v2806
    %3082 = vmatprep.subr.mxu0 %v2799
    %3083 = vmatpush1.msra.mxu0 %v2798
    %3084 = vmatprep.subr.mxu0 %v2791
    %3085 = vmatpush1.msra.mxu0 %v2790
    %3086 = vmatprep.subr.mxu0 %v3039
    %3087 = vmatpush2.msra.mxu0 %v3038
    %3088 = vmatprep.subr.mxu0 %v3031
    %3089 = vmatpush2.msra.mxu0 %v3030
    %3090 = vmatprep.subr.mxu0 %v3023
    %3091 = vmatpush2.msra.mxu0 %v3022
    %3092 = vmatprep.subr.mxu0 %v3015
    %3093 = vmatpush2.msra.mxu0 %v3014
    %3094 = vmatprep.subr.mxu0 %v3007
    %3095 = vmatpush2.msra.mxu0 %v3006
    %3096 = vmatprep.subr.mxu0 %v2999
    %3097 = vmatpush2.msra.mxu0 %v2998
    %3098 = vmatprep.subr.mxu0 %v2991
    %3099 = vmatpush2.msra.mxu0 %v2990
    %3100 = vmatprep.subr.mxu0 %v2983
    %3101 = vmatpush2.msra.mxu0 %v2982
    %3102 = vmatprep.subr.mxu0 %v2975
    %3103 = vmatpush2.msra.mxu0 %v2974
    %3104 = vmatprep.subr.mxu0 %v2967
    %3105 = vmatpush2.msra.mxu0 %v2966
    %3106 = vmatprep.subr.mxu0 %v2959
    %3107 = vmatpush2.msra.mxu0 %v2958
    %3108 = vmatprep.subr.mxu0 %v2951
    %3109 = vmatpush2.msra.mxu0 %v2950
    %3110 = vmatprep.subr.mxu0 %v2943
    %3111 = vmatpush2.msra.mxu0 %v2942
    %3112 = vmatprep.subr.mxu0 %v2935
    %3113 = vmatpush2.msra.mxu0 %v2934
    %3114 = vmatprep.subr.mxu0 %v2927
    %3115 = vmatpush2.msra.mxu0 %v2926
    %3116 = vmatprep.subr.mxu0 %v2919
    %3117 = vmatpush2.msra.mxu0 %v2918
    %3118 = vmatprep.mubr.f32.mxu0 %v3050
    %3119 = vmatmul.mubr.f32.gmra.mxu0 %v3048
    %v3120 = vpop.f32.mrf.mxu0
    %v3121 = vadd.f32 0.0, %v3120
    %v3122 = vpop.f32.mrf.mxu0
    %v3123 = vadd.f32 0.0, %v3122
    %3124 = vdwg.mxu0
    %3125 = vmatprep.subr.mxu0 %v2913
    %3126 = vmatpush1.msra.mxu0 %v2912
    %3127 = vmatprep.subr.mxu0 %v2905
    %3128 = vmatpush1.msra.mxu0 %v2904
    %3129 = vmatprep.subr.mxu0 %v2897
    %3130 = vmatpush1.msra.mxu0 %v2896
    %3131 = vmatprep.subr.mxu0 %v2889
    %3132 = vmatpush1.msra.mxu0 %v2888
    %3133 = vmatprep.subr.mxu0 %v2881
    %3134 = vmatpush1.msra.mxu0 %v2880
    %3135 = vmatprep.subr.mxu0 %v2873
    %3136 = vmatpush1.msra.mxu0 %v2872
    %3137 = vmatprep.subr.mxu0 %v2865
    %3138 = vmatpush1.msra.mxu0 %v2864
    %3139 = vmatprep.subr.mxu0 %v2857
    %3140 = vmatpush1.msra.mxu0 %v2856
    %3141 = vmatprep.subr.mxu0 %v2849
    %3142 = vmatpush1.msra.mxu0 %v2848
    %3143 = vmatprep.subr.mxu0 %v2841
    %3144 = vmatpush1.msra.mxu0 %v2840
    %3145 = vmatprep.subr.mxu0 %v2833
    %3146 = vmatpush1.msra.mxu0 %v2832
    %3147 = vmatprep.subr.mxu0 %v2825
    %3148 = vmatpush1.msra.mxu0 %v2824
    %3149 = vmatprep.subr.mxu0 %v2817
    %3150 = vmatpush1.msra.mxu0 %v2816
    %3151 = vmatprep.subr.mxu0 %v2809
    %3152 = vmatpush1.msra.mxu0 %v2808
    %3153 = vmatprep.subr.mxu0 %v2801
    %3154 = vmatpush1.msra.mxu0 %v2800
    %3155 = vmatprep.subr.mxu0 %v2793
    %3156 = vmatpush1.msra.mxu0 %v2792
    %3157 = vmatprep.subr.mxu0 %v3041
    %3158 = vmatpush2.msra.mxu0 %v3040
    %3159 = vmatprep.subr.mxu0 %v3033
    %3160 = vmatpush2.msra.mxu0 %v3032
    %3161 = vmatprep.subr.mxu0 %v3025
    %3162 = vmatpush2.msra.mxu0 %v3024
    %3163 = vmatprep.subr.mxu0 %v3017
    %3164 = vmatpush2.msra.mxu0 %v3016
    %3165 = vmatprep.subr.mxu0 %v3009
    %3166 = vmatpush2.msra.mxu0 %v3008
    %3167 = vmatprep.subr.mxu0 %v3001
    %3168 = vmatpush2.msra.mxu0 %v3000
    %3169 = vmatprep.subr.mxu0 %v2993
    %3170 = vmatpush2.msra.mxu0 %v2992
    %3171 = vmatprep.subr.mxu0 %v2985
    %3172 = vmatpush2.msra.mxu0 %v2984
    %3173 = vmatprep.subr.mxu0 %v2977
    %3174 = vmatpush2.msra.mxu0 %v2976
    %3175 = vmatprep.subr.mxu0 %v2969
    %3176 = vmatpush2.msra.mxu0 %v2968
    %3177 = vmatprep.subr.mxu0 %v2961
    %3178 = vmatpush2.msra.mxu0 %v2960
    %3179 = vmatprep.subr.mxu0 %v2953
    %3180 = vmatpush2.msra.mxu0 %v2952
    %3181 = vmatprep.subr.mxu0 %v2945
    %3182 = vmatpush2.msra.mxu0 %v2944
    %3183 = vmatprep.subr.mxu0 %v2937
    %3184 = vmatpush2.msra.mxu0 %v2936
    %3185 = vmatprep.subr.mxu0 %v2929
    %3186 = vmatpush2.msra.mxu0 %v2928
    %3187 = vmatprep.subr.mxu0 %v2921
    %3188 = vmatpush2.msra.mxu0 %v2920
    %3189 = vmatprep.mubr.f32.mxu0 %v3050
    %3190 = vmatmul.mubr.f32.gmra.mxu0 %v3048
    %v3191 = vpop.f32.mrf.mxu0
    %v3192 = vadd.f32 0.0, %v3191
    %v3193 = vpop.f32.mrf.mxu0
    %v3194 = vadd.f32 0.0, %v3193
    %3195 = vdwg.mxu0
    %v3196 = vld [vmem:[#allocation2] sm:$0x3]
    %v3197 = vld [vmem:[#allocation2 + $0x8] sm:$0x3]
    %v3198 = vld [vmem:[#allocation2 + $0x10] sm:$0x3]
    %v3199 = vld [vmem:[#allocation2 + $0x18] sm:$0x3]
    %v3200 = vadd.f32 %v3121, %v3196
    %v3201 = vadd.f32 %v3123, %v3197
    %v3202 = vadd.f32 %v3192, %v3198
    %v3203 = vadd.f32 %v3194, %v3199
    %v3204 = vxor.u32 %v3200, 2147483648
    %v3205 = vmul.f32 %v3204, 1.442695
    %v3206 = vpow.pop %v3205
    %v3207 = vadd.f32 %v3206, 1.0
    %v3208 = vrcp.pop %v3207
    %v3209 = vmul.f32 1.0, %v3208
    %v3210 = vxor.u32 %v3201, 2147483648
    %v3211 = vmul.f32 %v3210, 1.442695
    %v3212 = vpow.pop %v3211
    %v3213 = vadd.f32 %v3212, 1.0
    %v3214 = vrcp.pop %v3213
    %v3215 = vmul.f32 1.0, %v3214
    %v3216 = vtanh.pop %v3202
    %v3217 = vxor.u32 %v3203, 2147483648
    %v3218 = vmul.f32 %v3217, 1.442695
    %v3219 = vpow.pop %v3218
    %v3220 = vadd.f32 %v3219, 1.0
    %v3221 = vrcp.pop %v3220
    %v3222 = vmul.f32 1.0, %v3221
    %v3223 = vmul.f32 %v3215, %v3051
    %v3224 = vmul.f32 %v3209, %v3216
    %v3225 = vadd.f32 %v3223, %v3224
    %v3226 = vtanh.pop %v3225
    %v3227 = vmul.f32 %v3222, %v3226
    %3228 = vmatprep.subr.mxu0 %v2911
    %3229 = vmatpush1.msra.mxu0 %v2910
    %3230 = vmatprep.subr.mxu0 %v2903
    %3231 = vmatpush1.msra.mxu0 %v2902
    %3232 = vmatprep.subr.mxu0 %v2895
    %3233 = vmatpush1.msra.mxu0 %v2894
    %3234 = vmatprep.subr.mxu0 %v2887
    %3235 = vmatpush1.msra.mxu0 %v2886
    %3236 = vmatprep.subr.mxu0 %v2879
    %3237 = vmatpush1.msra.mxu0 %v2878
    %3238 = vmatprep.subr.mxu0 %v2871
    %3239 = vmatpush1.msra.mxu0 %v2870
    %3240 = vmatprep.subr.mxu0 %v2863
    %3241 = vmatpush1.msra.mxu0 %v2862
    %3242 = vmatprep.subr.mxu0 %v2855
    %3243 = vmatpush1.msra.mxu0 %v2854
    %3244 = vmatprep.subr.mxu0 %v2847
    %3245 = vmatpush1.msra.mxu0 %v2846
    %3246 = vmatprep.subr.mxu0 %v2839
    %3247 = vmatpush1.msra.mxu0 %v2838
    %3248 = vmatprep.subr.mxu0 %v2831
    %3249 = vmatpush1.msra.mxu0 %v2830
    %3250 = vmatprep.subr.mxu0 %v2823
    %3251 = vmatpush1.msra.mxu0 %v2822
    %3252 = vmatprep.subr.mxu0 %v2815
    %3253 = vmatpush1.msra.mxu0 %v2814
    %3254 = vmatprep.subr.mxu0 %v2807
    %3255 = vmatpush1.msra.mxu0 %v2806
    %3256 = vmatprep.subr.mxu0 %v2799
    %3257 = vmatpush1.msra.mxu0 %v2798
    %3258 = vmatprep.subr.mxu0 %v2791
    %3259 = vmatpush1.msra.mxu0 %v2790
    %3260 = vmatprep.subr.mxu0 %v3039
    %3261 = vmatpush2.msra.mxu0 %v3038
    %3262 = vmatprep.subr.mxu0 %v3031
    %3263 = vmatpush2.msra.mxu0 %v3030
    %3264 = vmatprep.subr.mxu0 %v3023
    %3265 = vmatpush2.msra.mxu0 %v3022
    %3266 = vmatprep.subr.mxu0 %v3015
    %3267 = vmatpush2.msra.mxu0 %v3014
    %3268 = vmatprep.subr.mxu0 %v3007
    %3269 = vmatpush2.msra.mxu0 %v3006
    %3270 = vmatprep.subr.mxu0 %v2999
    %3271 = vmatpush2.msra.mxu0 %v2998
    %3272 = vmatprep.subr.mxu0 %v2991
    %3273 = vmatpush2.msra.mxu0 %v2990
    %3274 = vmatprep.subr.mxu0 %v2983
    %3275 = vmatpush2.msra.mxu0 %v2982
    %3276 = vmatprep.subr.mxu0 %v2975
    %3277 = vmatpush2.msra.mxu0 %v2974
    %3278 = vmatprep.subr.mxu0 %v2967
    %3279 = vmatpush2.msra.mxu0 %v2966
    %3280 = vmatprep.subr.mxu0 %v2959
    %3281 = vmatpush2.msra.mxu0 %v2958
    %3282 = vmatprep.subr.mxu0 %v2951
    %3283 = vmatpush2.msra.mxu0 %v2950
    %3284 = vmatprep.subr.mxu0 %v2943
    %3285 = vmatpush2.msra.mxu0 %v2942
    %3286 = vmatprep.subr.mxu0 %v2935
    %3287 = vmatpush2.msra.mxu0 %v2934
    %3288 = vmatprep.subr.mxu0 %v2927
    %3289 = vmatpush2.msra.mxu0 %v2926
    %3290 = vmatprep.subr.mxu0 %v2919
    %3291 = vmatpush2.msra.mxu0 %v2918
    %3292 = vmatprep.mubr.f32.mxu0 %v3050
    %3293 = vmatmul.mubr.f32.gmra.mxu0 %v3227
    %v3294 = vpop.f32.mrf.mxu0
    %v3295 = vadd.f32 0.0, %v3294
    %v3296 = vpop.f32.mrf.mxu0
    %v3297 = vadd.f32 0.0, %v3296
    %3298 = vdwg.mxu0
    %3299 = vmatprep.subr.mxu0 %v2913
    %3300 = vmatpush1.msra.mxu0 %v2912
    %3301 = vmatprep.subr.mxu0 %v2905
    %3302 = vmatpush1.msra.mxu0 %v2904
    %3303 = vmatprep.subr.mxu0 %v2897
    %3304 = vmatpush1.msra.mxu0 %v2896
    %3305 = vmatprep.subr.mxu0 %v2889
    %3306 = vmatpush1.msra.mxu0 %v2888
    %3307 = vmatprep.subr.mxu0 %v2881
    %3308 = vmatpush1.msra.mxu0 %v2880
    %3309 = vmatprep.subr.mxu0 %v2873
    %3310 = vmatpush1.msra.mxu0 %v2872
    %3311 = vmatprep.subr.mxu0 %v2865
    %3312 = vmatpush1.msra.mxu0 %v2864
    %3313 = vmatprep.subr.mxu0 %v2857
    %3314 = vmatpush1.msra.mxu0 %v2856
    %3315 = vmatprep.subr.mxu0 %v2849
    %3316 = vmatpush1.msra.mxu0 %v2848
    %3317 = vmatprep.subr.mxu0 %v2841
    %3318 = vmatpush1.msra.mxu0 %v2840
    %3319 = vmatprep.subr.mxu0 %v2833
    %3320 = vmatpush1.msra.mxu0 %v2832
    %3321 = vmatprep.subr.mxu0 %v2825
    %3322 = vmatpush1.msra.mxu0 %v2824
    %3323 = vmatprep.subr.mxu0 %v2817
    %3324 = vmatpush1.msra.mxu0 %v2816
    %3325 = vmatprep.subr.mxu0 %v2809
    %3326 = vmatpush1.msra.mxu0 %v2808
    %3327 = vmatprep.subr.mxu0 %v2801
    %3328 = vmatpush1.msra.mxu0 %v2800
    %3329 = vmatprep.subr.mxu0 %v2793
    %3330 = vmatpush1.msra.mxu0 %v2792
    %3331 = vmatprep.subr.mxu0 %v3041
    %3332 = vmatpush2.msra.mxu0 %v3040
    %3333 = vmatprep.subr.mxu0 %v3033
    %3334 = vmatpush2.msra.mxu0 %v3032
    %3335 = vmatprep.subr.mxu0 %v3025
    %3336 = vmatpush2.msra.mxu0 %v3024
    %3337 = vmatprep.subr.mxu0 %v3017
    %3338 = vmatpush2.msra.mxu0 %v3016
    %3339 = vmatprep.subr.mxu0 %v3009
    %3340 = vmatpush2.msra.mxu0 %v3008
    %3341 = vmatprep.subr.mxu0 %v3001
    %3342 = vmatpush2.msra.mxu0 %v3000
    %3343 = vmatprep.subr.mxu0 %v2993
    %3344 = vmatpush2.msra.mxu0 %v2992
    %3345 = vmatprep.subr.mxu0 %v2985
    %3346 = vmatpush2.msra.mxu0 %v2984
    %3347 = vmatprep.subr.mxu0 %v2977
    %3348 = vmatpush2.msra.mxu0 %v2976
    %3349 = vmatprep.subr.mxu0 %v2969
    %3350 = vmatpush2.msra.mxu0 %v2968
    %3351 = vmatprep.subr.mxu0 %v2961
    %3352 = vmatpush2.msra.mxu0 %v2960
    %3353 = vmatprep.subr.mxu0 %v2953
    %3354 = vmatpush2.msra.mxu0 %v2952
    %3355 = vmatprep.subr.mxu0 %v2945
    %3356 = vmatpush2.msra.mxu0 %v2944
    %3357 = vmatprep.subr.mxu0 %v2937
    %3358 = vmatpush2.msra.mxu0 %v2936
    %3359 = vmatprep.subr.mxu0 %v2929
    %3360 = vmatpush2.msra.mxu0 %v2928
    %3361 = vmatprep.subr.mxu0 %v2921
    %3362 = vmatpush2.msra.mxu0 %v2920
    %3363 = vmatprep.mubr.f32.mxu0 %v3050
    %3364 = vmatmul.mubr.f32.gmra.mxu0 %v3227
    %v3365 = vpop.f32.mrf.mxu0
    %v3366 = vadd.f32 0.0, %v3365
    %v3367 = vpop.f32.mrf.mxu0
    %v3368 = vadd.f32 0.0, %v3367
    %3369 = vdwg.mxu0
    %3370 = vmatprep.subr.mxu0 %v2915
    %3371 = vmatpush1.msra.mxu0 %v2914
    %3372 = vmatprep.subr.mxu0 %v2907
    %3373 = vmatpush1.msra.mxu0 %v2906
    %3374 = vmatprep.subr.mxu0 %v2899
    %3375 = vmatpush1.msra.mxu0 %v2898
    %3376 = vmatprep.subr.mxu0 %v2891
    %3377 = vmatpush1.msra.mxu0 %v2890
    %3378 = vmatprep.subr.mxu0 %v2883
    %3379 = vmatpush1.msra.mxu0 %v2882
    %3380 = vmatprep.subr.mxu0 %v2875
    %3381 = vmatpush1.msra.mxu0 %v2874
    %3382 = vmatprep.subr.mxu0 %v2867
    %3383 = vmatpush1.msra.mxu0 %v2866
    %3384 = vmatprep.subr.mxu0 %v2859
    %3385 = vmatpush1.msra.mxu0 %v2858
    %3386 = vmatprep.subr.mxu0 %v2851
    %3387 = vmatpush1.msra.mxu0 %v2850
    %3388 = vmatprep.subr.mxu0 %v2843
    %3389 = vmatpush1.msra.mxu0 %v2842
    %3390 = vmatprep.subr.mxu0 %v2835
    %3391 = vmatpush1.msra.mxu0 %v2834
    %3392 = vmatprep.subr.mxu0 %v2827
    %3393 = vmatpush1.msra.mxu0 %v2826
    %3394 = vmatprep.subr.mxu0 %v2819
    %3395 = vmatpush1.msra.mxu0 %v2818
    %3396 = vmatprep.subr.mxu0 %v2811
    %3397 = vmatpush1.msra.mxu0 %v2810
    %3398 = vmatprep.subr.mxu0 %v2803
    %3399 = vmatpush1.msra.mxu0 %v2802
    %3400 = vmatprep.subr.mxu0 %v2795
    %3401 = vmatpush1.msra.mxu0 %v2794
    %3402 = vmatprep.subr.mxu0 %v3043
    %3403 = vmatpush2.msra.mxu0 %v3042
    %3404 = vmatprep.subr.mxu0 %v3035
    %3405 = vmatpush2.msra.mxu0 %v3034
    %3406 = vmatprep.subr.mxu0 %v3027
    %3407 = vmatpush2.msra.mxu0 %v3026
    %3408 = vmatprep.subr.mxu0 %v3019
    %3409 = vmatpush2.msra.mxu0 %v3018
    %3410 = vmatprep.subr.mxu0 %v3011
    %3411 = vmatpush2.msra.mxu0 %v3010
    %3412 = vmatprep.subr.mxu0 %v3003
    %3413 = vmatpush2.msra.mxu0 %v3002
    %3414 = vmatprep.subr.mxu0 %v2995
    %3415 = vmatpush2.msra.mxu0 %v2994
    %3416 = vmatprep.subr.mxu0 %v2987
    %3417 = vmatpush2.msra.mxu0 %v2986
    %3418 = vmatprep.subr.mxu0 %v2979
    %3419 = vmatpush2.msra.mxu0 %v2978
    %3420 = vmatprep.subr.mxu0 %v2971
    %3421 = vmatpush2.msra.mxu0 %v2970
    %3422 = vmatprep.subr.mxu0 %v2963
    %3423 = vmatpush2.msra.mxu0 %v2962
    %3424 = vmatprep.subr.mxu0 %v2955
    %3425 = vmatpush2.msra.mxu0 %v2954
    %3426 = vmatprep.subr.mxu0 %v2947
    %3427 = vmatpush2.msra.mxu0 %v2946
    %3428 = vmatprep.subr.mxu0 %v2939
    %3429 = vmatpush2.msra.mxu0 %v2938
    %3430 = vmatprep.subr.mxu0 %v2931
    %3431 = vmatpush2.msra.mxu0 %v2930
    %3432 = vmatprep.subr.mxu0 %v2923
    %3433 = vmatpush2.msra.mxu0 %v2922
    %3434 = vmatprep.mubr.f32.mxu0 %v3050
    %3435 = vmatmul.mubr.f32.gmra.mxu0 %v3227
    %v3436 = vpop.f32.mrf.mxu0
    %v3437 = vadd.f32 0.0, %v3436
    %v3438 = vpop.f32.mrf.mxu0
    %v3439 = vadd.f32 0.0, %v3438
    %3440 = vdwg.mxu0
    %3441 = vmatprep.subr.mxu0 %v2917
    %3442 = vmatpush1.msra.mxu0 %v2916
    %3443 = vmatprep.subr.mxu0 %v2909
    %3444 = vmatpush1.msra.mxu0 %v2908
    %3445 = vmatprep.subr.mxu0 %v2901
    %3446 = vmatpush1.msra.mxu0 %v2900
    %3447 = vmatprep.subr.mxu0 %v2893
    %3448 = vmatpush1.msra.mxu0 %v2892
    %3449 = vmatprep.subr.mxu0 %v2885
    %3450 = vmatpush1.msra.mxu0 %v2884
    %3451 = vmatprep.subr.mxu0 %v2877
    %3452 = vmatpush1.msra.mxu0 %v2876
    %3453 = vmatprep.subr.mxu0 %v2869
    %3454 = vmatpush1.msra.mxu0 %v2868
    %3455 = vmatprep.subr.mxu0 %v2861
    %3456 = vmatpush1.msra.mxu0 %v2860
    %3457 = vmatprep.subr.mxu0 %v2853
    %3458 = vmatpush1.msra.mxu0 %v2852
    %3459 = vmatprep.subr.mxu0 %v2845
    %3460 = vmatpush1.msra.mxu0 %v2844
    %3461 = vmatprep.subr.mxu0 %v2837
    %3462 = vmatpush1.msra.mxu0 %v2836
    %3463 = vmatprep.subr.mxu0 %v2829
    %3464 = vmatpush1.msra.mxu0 %v2828
    %3465 = vmatprep.subr.mxu0 %v2821
    %3466 = vmatpush1.msra.mxu0 %v2820
    %3467 = vmatprep.subr.mxu0 %v2813
    %3468 = vmatpush1.msra.mxu0 %v2812
    %3469 = vmatprep.subr.mxu0 %v2805
    %3470 = vmatpush1.msra.mxu0 %v2804
    %3471 = vmatprep.subr.mxu0 %v2797
    %3472 = vmatpush1.msra.mxu0 %v2796
    %3473 = vmatprep.subr.mxu0 %v3045
    %3474 = vmatpush2.msra.mxu0 %v3044
    %3475 = vmatprep.subr.mxu0 %v3037
    %3476 = vmatpush2.msra.mxu0 %v3036
    %3477 = vmatprep.subr.mxu0 %v3029
    %3478 = vmatpush2.msra.mxu0 %v3028
    %3479 = vmatprep.subr.mxu0 %v3021
    %3480 = vmatpush2.msra.mxu0 %v3020
    %3481 = vmatprep.subr.mxu0 %v3013
    %3482 = vmatpush2.msra.mxu0 %v3012
    %3483 = vmatprep.subr.mxu0 %v3005
    %3484 = vmatpush2.msra.mxu0 %v3004
    %3485 = vmatprep.subr.mxu0 %v2997
    %3486 = vmatpush2.msra.mxu0 %v2996
    %3487 = vmatprep.subr.mxu0 %v2989
    %3488 = vmatpush2.msra.mxu0 %v2988
    %3489 = vmatprep.subr.mxu0 %v2981
    %3490 = vmatpush2.msra.mxu0 %v2980
    %3491 = vmatprep.subr.mxu0 %v2973
    %3492 = vmatpush2.msra.mxu0 %v2972
    %3493 = vmatprep.subr.mxu0 %v2965
    %3494 = vmatpush2.msra.mxu0 %v2964
    %3495 = vmatprep.subr.mxu0 %v2957
    %3496 = vmatpush2.msra.mxu0 %v2956
    %3497 = vmatprep.subr.mxu0 %v2949
    %3498 = vmatpush2.msra.mxu0 %v2948
    %3499 = vmatprep.subr.mxu0 %v2941
    %3500 = vmatpush2.msra.mxu0 %v2940
    %3501 = vmatprep.subr.mxu0 %v2933
    %3502 = vmatpush2.msra.mxu0 %v2932
    %3503 = vmatprep.subr.mxu0 %v2925
    %3504 = vmatpush2.msra.mxu0 %v2924
    %3505 = vmatprep.mubr.f32.mxu0 %v3050
    %3506 = vmatmul.mubr.f32.gmra.mxu0 %v3227
    %v3507 = vpop.f32.mrf.mxu0
    %v3508 = vadd.f32 0.0, %v3507
    %v3509 = vpop.f32.mrf.mxu0
    %v3510 = vadd.f32 0.0, %v3509
    %3511 = vdwg.mxu0
    %v3512 = vld [vmem:[#allocation2] sm:$0xc]
    %v3513 = vld [vmem:[#allocation2 + $0x8] sm:$0xc]
    %v3514 = vld [vmem:[#allocation2 + $0x10] sm:$0xc]
    %v3515 = vld [vmem:[#allocation2 + $0x18] sm:$0xc]
    %v3520 = vrot.slane %v3512, 2
    %v3521 = vrot.slane %v3513, 2
    %v3522 = vrot.slane %v3514, 2
    %v3523 = vrot.slane %v3515, 2
    %v3528 = vadd.f32 %v3295, %v3520
    %v3529 = vadd.f32 %v3297, %v3521
    %v3530 = vadd.f32 %v3366, %v3522
    %v3531 = vadd.f32 %v3368, %v3523
    %v3532 = vxor.u32 %v3528, 2147483648
    %v3533 = vmul.f32 %v3532, 1.442695
    %v3534 = vpow.pop %v3533
    %v3535 = vadd.f32 %v3534, 1.0
    %v3536 = vrcp.pop %v3535
    %v3537 = vmul.f32 1.0, %v3536
    %v3538 = vxor.u32 %v3529, 2147483648
    %v3539 = vmul.f32 %v3538, 1.442695
    %v3540 = vpow.pop %v3539
    %v3541 = vadd.f32 %v3540, 1.0
    %v3542 = vrcp.pop %v3541
    %v3543 = vmul.f32 1.0, %v3542
    %v3544 = vtanh.pop %v3530
    %v3545 = vxor.u32 %v3531, 2147483648
    %v3546 = vmul.f32 %v3545, 1.442695
    %v3547 = vpow.pop %v3546
    %v3548 = vadd.f32 %v3547, 1.0
    %v3549 = vrcp.pop %v3548
    %v3550 = vmul.f32 1.0, %v3549
    %v3551 = vmul.f32 %v3543, %v3225
    %v3552 = vmul.f32 %v3537, %v3544
    %v3553 = vadd.f32 %v3551, %v3552
    %v3554 = vtanh.pop %v3553
    %v3555 = vmul.f32 %v3550, %v3554
    %v3557 = vlaneseq
    %v3558 = vshrl.u32 %v3557, 7
    %v3559 = vsub.s32 0, %v3558
    %v3560 = vrot.slane %v3047, %v3559
    %v3561 = vlaneseq
    %v3562 = vshrl.u32 %v3561, 7
    %v3563 = vsub.s32 1, %v3562
    %v3564 = vrot.slane %v3047, %v3563
    %v3565 = vlaneseq
    %v3566 = vshrl.u32 %v3565, 7
    %v3567 = vsub.s32 2, %v3566
    %v3568 = vrot.slane %v3047, %v3567
    %v3569 = vlaneseq
    %v3570 = vshrl.u32 %v3569, 7
    %v3571 = vsub.s32 3, %v3570
    %v3572 = vrot.slane %v3047, %v3571
    %v3577 = vadd.f32 %v3437, %v3560
    %v3578 = vadd.f32 %v3439, %v3564
    %v3579 = vadd.f32 %v3508, %v3568
    %v3580 = vadd.f32 %v3510, %v3572
    %v3581 = vxor.u32 %v3577, 2147483648
    %v3582 = vmul.f32 %v3581, 1.442695
    %v3583 = vpow.pop %v3582
    %v3584 = vadd.f32 %v3583, 1.0
    %v3585 = vrcp.pop %v3584
    %v3586 = vmul.f32 1.0, %v3585
    %v3587 = vxor.u32 %v3578, 2147483648
    %v3588 = vmul.f32 %v3587, 1.442695
    %v3589 = vpow.pop %v3588
    %v3590 = vadd.f32 %v3589, 1.0
    %v3591 = vrcp.pop %v3590
    %v3592 = vmul.f32 1.0, %v3591
    %v3593 = vtanh.pop %v3579
    %v3594 = vxor.u32 %v3580, 2147483648
    %v3595 = vmul.f32 %v3594, 1.442695
    %v3596 = vpow.pop %v3595
    %v3597 = vadd.f32 %v3596, 1.0
    %v3598 = vrcp.pop %v3597
    %v3599 = vmul.f32 1.0, %v3598
    %v3600 = vmul.f32 %v3592, %v3053
    %v3601 = vmul.f32 %v3586, %v3593
    %v3602 = vadd.f32 %v3600, %v3601
    %v3603 = vtanh.pop %v3602
    %v3604 = vmul.f32 %v3599, %v3603
    %3605 = vst [vmem:[#allocation3] sm:$0x3] %v3604
    %3606 = vmatprep.subr.mxu0 %v2911
    %3607 = vmatpush1.msra.mxu0 %v2910
    %3608 = vmatprep.subr.mxu0 %v2903
    %3609 = vmatpush1.msra.mxu0 %v2902
    %3610 = vmatprep.subr.mxu0 %v2895
    %3611 = vmatpush1.msra.mxu0 %v2894
    %3612 = vmatprep.subr.mxu0 %v2887
    %3613 = vmatpush1.msra.mxu0 %v2886
    %3614 = vmatprep.subr.mxu0 %v2879
    %3615 = vmatpush1.msra.mxu0 %v2878
    %3616 = vmatprep.subr.mxu0 %v2871
    %3617 = vmatpush1.msra.mxu0 %v2870
    %3618 = vmatprep.subr.mxu0 %v2863
    %3619 = vmatpush1.msra.mxu0 %v2862
    %3620 = vmatprep.subr.mxu0 %v2855
    %3621 = vmatpush1.msra.mxu0 %v2854
    %3622 = vmatprep.subr.mxu0 %v2847
    %3623 = vmatpush1.msra.mxu0 %v2846
    %3624 = vmatprep.subr.mxu0 %v2839
    %3625 = vmatpush1.msra.mxu0 %v2838
    %3626 = vmatprep.subr.mxu0 %v2831
    %3627 = vmatpush1.msra.mxu0 %v2830
    %3628 = vmatprep.subr.mxu0 %v2823
    %3629 = vmatpush1.msra.mxu0 %v2822
    %3630 = vmatprep.subr.mxu0 %v2815
    %3631 = vmatpush1.msra.mxu0 %v2814
    %3632 = vmatprep.subr.mxu0 %v2807
    %3633 = vmatpush1.msra.mxu0 %v2806
    %3634 = vmatprep.subr.mxu0 %v2799
    %3635 = vmatpush1.msra.mxu0 %v2798
    %3636 = vmatprep.subr.mxu0 %v2791
    %3637 = vmatpush1.msra.mxu0 %v2790
    %3638 = vmatprep.subr.mxu0 %v3039
    %3639 = vmatpush2.msra.mxu0 %v3038
    %3640 = vmatprep.subr.mxu0 %v3031
    %3641 = vmatpush2.msra.mxu0 %v3030
    %3642 = vmatprep.subr.mxu0 %v3023
    %3643 = vmatpush2.msra.mxu0 %v3022
    %3644 = vmatprep.subr.mxu0 %v3015
    %3645 = vmatpush2.msra.mxu0 %v3014
    %3646 = vmatprep.subr.mxu0 %v3007
    %3647 = vmatpush2.msra.mxu0 %v3006
    %3648 = vmatprep.subr.mxu0 %v2999
    %3649 = vmatpush2.msra.mxu0 %v2998
    %3650 = vmatprep.subr.mxu0 %v2991
    %3651 = vmatpush2.msra.mxu0 %v2990
    %3652 = vmatprep.subr.mxu0 %v2983
    %3653 = vmatpush2.msra.mxu0 %v2982
    %3654 = vmatprep.subr.mxu0 %v2975
    %3655 = vmatpush2.msra.mxu0 %v2974
    %3656 = vmatprep.subr.mxu0 %v2967
    %3657 = vmatpush2.msra.mxu0 %v2966
    %3658 = vmatprep.subr.mxu0 %v2959
    %3659 = vmatpush2.msra.mxu0 %v2958
    %3660 = vmatprep.subr.mxu0 %v2951
    %3661 = vmatpush2.msra.mxu0 %v2950
    %3662 = vmatprep.subr.mxu0 %v2943
    %3663 = vmatpush2.msra.mxu0 %v2942
    %3664 = vmatprep.subr.mxu0 %v2935
    %3665 = vmatpush2.msra.mxu0 %v2934
    %3666 = vmatprep.subr.mxu0 %v2927
    %3667 = vmatpush2.msra.mxu0 %v2926
    %3668 = vmatprep.subr.mxu0 %v2919
    %3669 = vmatpush2.msra.mxu0 %v2918
    %3670 = vmatprep.mubr.f32.mxu0 %v3604
    %3671 = vmatmul.mubr.f32.gmra.mxu0 %v3555
    %v3672 = vpop.f32.mrf.mxu0
    %v3673 = vadd.f32 0.0, %v3672
    %v3674 = vpop.f32.mrf.mxu0
    %v3675 = vadd.f32 0.0, %v3674
    %3676 = vdwg.mxu0
    %3677 = vmatprep.subr.mxu0 %v2913
    %3678 = vmatpush1.msra.mxu0 %v2912
    %3679 = vmatprep.subr.mxu0 %v2905
    %3680 = vmatpush1.msra.mxu0 %v2904
    %3681 = vmatprep.subr.mxu0 %v2897
    %3682 = vmatpush1.msra.mxu0 %v2896
    %3683 = vmatprep.subr.mxu0 %v2889
    %3684 = vmatpush1.msra.mxu0 %v2888
    %3685 = vmatprep.subr.mxu0 %v2881
    %3686 = vmatpush1.msra.mxu0 %v2880
    %3687 = vmatprep.subr.mxu0 %v2873
    %3688 = vmatpush1.msra.mxu0 %v2872
    %3689 = vmatprep.subr.mxu0 %v2865
    %3690 = vmatpush1.msra.mxu0 %v2864
    %3691 = vmatprep.subr.mxu0 %v2857
    %3692 = vmatpush1.msra.mxu0 %v2856
    %3693 = vmatprep.subr.mxu0 %v2849
    %3694 = vmatpush1.msra.mxu0 %v2848
    %3695 = vmatprep.subr.mxu0 %v2841
    %3696 = vmatpush1.msra.mxu0 %v2840
    %3697 = vmatprep.subr.mxu0 %v2833
    %3698 = vmatpush1.msra.mxu0 %v2832
    %3699 = vmatprep.subr.mxu0 %v2825
    %3700 = vmatpush1.msra.mxu0 %v2824
    %3701 = vmatprep.subr.mxu0 %v2817
    %3702 = vmatpush1.msra.mxu0 %v2816
    %3703 = vmatprep.subr.mxu0 %v2809
    %3704 = vmatpush1.msra.mxu0 %v2808
    %3705 = vmatprep.subr.mxu0 %v2801
    %3706 = vmatpush1.msra.mxu0 %v2800
    %3707 = vmatprep.subr.mxu0 %v2793
    %3708 = vmatpush1.msra.mxu0 %v2792
    %3709 = vmatprep.subr.mxu0 %v3041
    %3710 = vmatpush2.msra.mxu0 %v3040
    %3711 = vmatprep.subr.mxu0 %v3033
    %3712 = vmatpush2.msra.mxu0 %v3032
    %3713 = vmatprep.subr.mxu0 %v3025
    %3714 = vmatpush2.msra.mxu0 %v3024
    %3715 = vmatprep.subr.mxu0 %v3017
    %3716 = vmatpush2.msra.mxu0 %v3016
    %3717 = vmatprep.subr.mxu0 %v3009
    %3718 = vmatpush2.msra.mxu0 %v3008
    %3719 = vmatprep.subr.mxu0 %v3001
    %3720 = vmatpush2.msra.mxu0 %v3000
    %3721 = vmatprep.subr.mxu0 %v2993
    %3722 = vmatpush2.msra.mxu0 %v2992
    %3723 = vmatprep.subr.mxu0 %v2985
    %3724 = vmatpush2.msra.mxu0 %v2984
    %3725 = vmatprep.subr.mxu0 %v2977
    %3726 = vmatpush2.msra.mxu0 %v2976
    %3727 = vmatprep.subr.mxu0 %v2969
    %3728 = vmatpush2.msra.mxu0 %v2968
    %3729 = vmatprep.subr.mxu0 %v2961
    %3730 = vmatpush2.msra.mxu0 %v2960
    %3731 = vmatprep.subr.mxu0 %v2953
    %3732 = vmatpush2.msra.mxu0 %v2952
    %3733 = vmatprep.subr.mxu0 %v2945
    %3734 = vmatpush2.msra.mxu0 %v2944
    %3735 = vmatprep.subr.mxu0 %v2937
    %3736 = vmatpush2.msra.mxu0 %v2936
    %3737 = vmatprep.subr.mxu0 %v2929
    %3738 = vmatpush2.msra.mxu0 %v2928
    %3739 = vmatprep.subr.mxu0 %v2921
    %3740 = vmatpush2.msra.mxu0 %v2920
    %3741 = vmatprep.mubr.f32.mxu0 %v3604
    %3742 = vmatmul.mubr.f32.gmra.mxu0 %v3555
    %v3743 = vpop.f32.mrf.mxu0
    %v3744 = vadd.f32 0.0, %v3743
    %v3745 = vpop.f32.mrf.mxu0
    %v3746 = vadd.f32 0.0, %v3745
    %3747 = vdwg.mxu0
    %3748 = vmatprep.subr.mxu0 %v2915
    %3749 = vmatpush1.msra.mxu0 %v2914
    %3750 = vmatprep.subr.mxu0 %v2907
    %3751 = vmatpush1.msra.mxu0 %v2906
    %3752 = vmatprep.subr.mxu0 %v2899
    %3753 = vmatpush1.msra.mxu0 %v2898
    %3754 = vmatprep.subr.mxu0 %v2891
    %3755 = vmatpush1.msra.mxu0 %v2890
    %3756 = vmatprep.subr.mxu0 %v2883
    %3757 = vmatpush1.msra.mxu0 %v2882
    %3758 = vmatprep.subr.mxu0 %v2875
    %3759 = vmatpush1.msra.mxu0 %v2874
    %3760 = vmatprep.subr.mxu0 %v2867
    %3761 = vmatpush1.msra.mxu0 %v2866
    %3762 = vmatprep.subr.mxu0 %v2859
    %3763 = vmatpush1.msra.mxu0 %v2858
    %3764 = vmatprep.subr.mxu0 %v2851
    %3765 = vmatpush1.msra.mxu0 %v2850
    %3766 = vmatprep.subr.mxu0 %v2843
    %3767 = vmatpush1.msra.mxu0 %v2842
    %3768 = vmatprep.subr.mxu0 %v2835
    %3769 = vmatpush1.msra.mxu0 %v2834
    %3770 = vmatprep.subr.mxu0 %v2827
    %3771 = vmatpush1.msra.mxu0 %v2826
    %3772 = vmatprep.subr.mxu0 %v2819
    %3773 = vmatpush1.msra.mxu0 %v2818
    %3774 = vmatprep.subr.mxu0 %v2811
    %3775 = vmatpush1.msra.mxu0 %v2810
    %3776 = vmatprep.subr.mxu0 %v2803
    %3777 = vmatpush1.msra.mxu0 %v2802
    %3778 = vmatprep.subr.mxu0 %v2795
    %3779 = vmatpush1.msra.mxu0 %v2794
    %3780 = vmatprep.subr.mxu0 %v3043
    %3781 = vmatpush2.msra.mxu0 %v3042
    %3782 = vmatprep.subr.mxu0 %v3035
    %3783 = vmatpush2.msra.mxu0 %v3034
    %3784 = vmatprep.subr.mxu0 %v3027
    %3785 = vmatpush2.msra.mxu0 %v3026
    %3786 = vmatprep.subr.mxu0 %v3019
    %3787 = vmatpush2.msra.mxu0 %v3018
    %3788 = vmatprep.subr.mxu0 %v3011
    %3789 = vmatpush2.msra.mxu0 %v3010
    %3790 = vmatprep.subr.mxu0 %v3003
    %3791 = vmatpush2.msra.mxu0 %v3002
    %3792 = vmatprep.subr.mxu0 %v2995
    %3793 = vmatpush2.msra.mxu0 %v2994
    %3794 = vmatprep.subr.mxu0 %v2987
    %3795 = vmatpush2.msra.mxu0 %v2986
    %3796 = vmatprep.subr.mxu0 %v2979
    %3797 = vmatpush2.msra.mxu0 %v2978
    %3798 = vmatprep.subr.mxu0 %v2971
    %3799 = vmatpush2.msra.mxu0 %v2970
    %3800 = vmatprep.subr.mxu0 %v2963
    %3801 = vmatpush2.msra.mxu0 %v2962
    %3802 = vmatprep.subr.mxu0 %v2955
    %3803 = vmatpush2.msra.mxu0 %v2954
    %3804 = vmatprep.subr.mxu0 %v2947
    %3805 = vmatpush2.msra.mxu0 %v2946
    %3806 = vmatprep.subr.mxu0 %v2939
    %3807 = vmatpush2.msra.mxu0 %v2938
    %3808 = vmatprep.subr.mxu0 %v2931
    %3809 = vmatpush2.msra.mxu0 %v2930
    %3810 = vmatprep.subr.mxu0 %v2923
    %3811 = vmatpush2.msra.mxu0 %v2922
    %3812 = vmatprep.mubr.f32.mxu0 %v3604
    %3813 = vmatmul.mubr.f32.gmra.mxu0 %v3555
    %v3814 = vpop.f32.mrf.mxu0
    %v3815 = vadd.f32 0.0, %v3814
    %v3816 = vpop.f32.mrf.mxu0
    %v3817 = vadd.f32 0.0, %v3816
    %3818 = vdwg.mxu0
    %3819 = vmatprep.subr.mxu0 %v2917
    %3820 = vmatpush1.msra.mxu0 %v2916
    %3821 = vmatprep.subr.mxu0 %v2909
    %3822 = vmatpush1.msra.mxu0 %v2908
    %3823 = vmatprep.subr.mxu0 %v2901
    %3824 = vmatpush1.msra.mxu0 %v2900
    %3825 = vmatprep.subr.mxu0 %v2893
    %3826 = vmatpush1.msra.mxu0 %v2892
    %3827 = vmatprep.subr.mxu0 %v2885
    %3828 = vmatpush1.msra.mxu0 %v2884
    %3829 = vmatprep.subr.mxu0 %v2877
    %3830 = vmatpush1.msra.mxu0 %v2876
    %3831 = vmatprep.subr.mxu0 %v2869
    %3832 = vmatpush1.msra.mxu0 %v2868
    %3833 = vmatprep.subr.mxu0 %v2861
    %3834 = vmatpush1.msra.mxu0 %v2860
    %3835 = vmatprep.subr.mxu0 %v2853
    %3836 = vmatpush1.msra.mxu0 %v2852
    %3837 = vmatprep.subr.mxu0 %v2845
    %3838 = vmatpush1.msra.mxu0 %v2844
    %3839 = vmatprep.subr.mxu0 %v2837
    %3840 = vmatpush1.msra.mxu0 %v2836
    %3841 = vmatprep.subr.mxu0 %v2829
    %3842 = vmatpush1.msra.mxu0 %v2828
    %3843 = vmatprep.subr.mxu0 %v2821
    %3844 = vmatpush1.msra.mxu0 %v2820
    %3845 = vmatprep.subr.mxu0 %v2813
    %3846 = vmatpush1.msra.mxu0 %v2812
    %3847 = vmatprep.subr.mxu0 %v2805
    %3848 = vmatpush1.msra.mxu0 %v2804
    %3849 = vmatprep.subr.mxu0 %v2797
    %3850 = vmatpush1.msra.mxu0 %v2796
    %3851 = vmatprep.subr.mxu0 %v3045
    %3852 = vmatpush2.msra.mxu0 %v3044
    %3853 = vmatprep.subr.mxu0 %v3037
    %3854 = vmatpush2.msra.mxu0 %v3036
    %3855 = vmatprep.subr.mxu0 %v3029
    %3856 = vmatpush2.msra.mxu0 %v3028
    %3857 = vmatprep.subr.mxu0 %v3021
    %3858 = vmatpush2.msra.mxu0 %v3020
    %3859 = vmatprep.subr.mxu0 %v3013
    %3860 = vmatpush2.msra.mxu0 %v3012
    %3861 = vmatprep.subr.mxu0 %v3005
    %3862 = vmatpush2.msra.mxu0 %v3004
    %3863 = vmatprep.subr.mxu0 %v2997
    %3864 = vmatpush2.msra.mxu0 %v2996
    %3865 = vmatprep.subr.mxu0 %v2989
    %3866 = vmatpush2.msra.mxu0 %v2988
    %3867 = vmatprep.subr.mxu0 %v2981
    %3868 = vmatpush2.msra.mxu0 %v2980
    %3869 = vmatprep.subr.mxu0 %v2973
    %3870 = vmatpush2.msra.mxu0 %v2972
    %3871 = vmatprep.subr.mxu0 %v2965
    %3872 = vmatpush2.msra.mxu0 %v2964
    %3873 = vmatprep.subr.mxu0 %v2957
    %3874 = vmatpush2.msra.mxu0 %v2956
    %3875 = vmatprep.subr.mxu0 %v2949
    %3876 = vmatpush2.msra.mxu0 %v2948
    %3877 = vmatprep.subr.mxu0 %v2941
    %3878 = vmatpush2.msra.mxu0 %v2940
    %3879 = vmatprep.subr.mxu0 %v2933
    %3880 = vmatpush2.msra.mxu0 %v2932
    %3881 = vmatprep.subr.mxu0 %v2925
    %3882 = vmatpush2.msra.mxu0 %v2924
    %3883 = vmatprep.mubr.f32.mxu0 %v3604
    %3884 = vmatmul.mubr.f32.gmra.mxu0 %v3555
    %v3885 = vpop.f32.mrf.mxu0
    %v3886 = vadd.f32 0.0, %v3885
    %v3887 = vpop.f32.mrf.mxu0
    %v3888 = vadd.f32 0.0, %v3887
    %3889 = vdwg.mxu0
    %v3890 = vld [vmem:[#allocation2] sm:$0x30]
    %v3891 = vld [vmem:[#allocation2 + $0x8] sm:$0x30]
    %v3892 = vld [vmem:[#allocation2 + $0x10] sm:$0x30]
    %v3893 = vld [vmem:[#allocation2 + $0x18] sm:$0x30]
    %v3898 = vrot.slane %v3890, 4
    %v3899 = vrot.slane %v3891, 4
    %v3900 = vrot.slane %v3892, 4
    %v3901 = vrot.slane %v3893, 4
    %v3906 = vadd.f32 %v3673, %v3898
    %v3907 = vadd.f32 %v3675, %v3899
    %v3908 = vadd.f32 %v3744, %v3900
    %v3909 = vadd.f32 %v3746, %v3901
    %v3910 = vxor.u32 %v3906, 2147483648
    %v3911 = vmul.f32 %v3910, 1.442695
    %v3912 = vpow.pop %v3911
    %v3913 = vadd.f32 %v3912, 1.0
    %v3914 = vrcp.pop %v3913
    %v3915 = vmul.f32 1.0, %v3914
    %v3916 = vxor.u32 %v3907, 2147483648
    %v3917 = vmul.f32 %v3916, 1.442695
    %v3918 = vpow.pop %v3917
    %v3919 = vadd.f32 %v3918, 1.0
    %v3920 = vrcp.pop %v3919
    %v3921 = vmul.f32 1.0, %v3920
    %v3922 = vtanh.pop %v3908
    %v3923 = vxor.u32 %v3909, 2147483648
    %v3924 = vmul.f32 %v3923, 1.442695
    %v3925 = vpow.pop %v3924
    %v3926 = vadd.f32 %v3925, 1.0
    %v3927 = vrcp.pop %v3926
    %v3928 = vmul.f32 1.0, %v3927
    %v3929 = vmul.f32 %v3921, %v3553
    %v3930 = vmul.f32 %v3915, %v3922
    %v3931 = vadd.f32 %v3929, %v3930
    %v3932 = vtanh.pop %v3931
    %v3933 = vmul.f32 %v3928, %v3932
    %v3934 = vadd.f32 %v3815, %v3560
    %v3935 = vadd.f32 %v3817, %v3564
    %v3936 = vadd.f32 %v3886, %v3568
    %v3937 = vadd.f32 %v3888, %v3572
    %v3938 = vxor.u32 %v3934, 2147483648
    %v3939 = vmul.f32 %v3938, 1.442695
    %v3940 = vpow.pop %v3939
    %v3941 = vadd.f32 %v3940, 1.0
    %v3942 = vrcp.pop %v3941
    %v3943 = vmul.f32 1.0, %v3942
    %v3944 = vxor.u32 %v3935, 2147483648
    %v3945 = vmul.f32 %v3944, 1.442695
    %v3946 = vpow.pop %v3945
    %v3947 = vadd.f32 %v3946, 1.0
    %v3948 = vrcp.pop %v3947
    %v3949 = vmul.f32 1.0, %v3948
    %v3950 = vtanh.pop %v3936
    %v3951 = vxor.u32 %v3937, 2147483648
    %v3952 = vmul.f32 %v3951, 1.442695
    %v3953 = vpow.pop %v3952
    %v3954 = vadd.f32 %v3953, 1.0
    %v3955 = vrcp.pop %v3954
    %v3956 = vmul.f32 1.0, %v3955
    %v3957 = vmul.f32 %v3949, %v3602
    %v3958 = vmul.f32 %v3943, %v3950
    %v3959 = vadd.f32 %v3957, %v3958
    %v3960 = vtanh.pop %v3959
    %v3961 = vmul.f32 %v3956, %v3960
    %3962 = vst [vmem:[#allocation3 + $0x2] sm:$0x3] %v3961
    %3963 = vmatprep.subr.mxu0 %v2911
    %3964 = vmatpush1.msra.mxu0 %v2910
    %3965 = vmatprep.subr.mxu0 %v2903
    %3966 = vmatpush1.msra.mxu0 %v2902
    %3967 = vmatprep.subr.mxu0 %v2895
    %3968 = vmatpush1.msra.mxu0 %v2894
    %3969 = vmatprep.subr.mxu0 %v2887
    %3970 = vmatpush1.msra.mxu0 %v2886
    %3971 = vmatprep.subr.mxu0 %v2879
    %3972 = vmatpush1.msra.mxu0 %v2878
    %3973 = vmatprep.subr.mxu0 %v2871
    %3974 = vmatpush1.msra.mxu0 %v2870
    %3975 = vmatprep.subr.mxu0 %v2863
    %3976 = vmatpush1.msra.mxu0 %v2862
    %3977 = vmatprep.subr.mxu0 %v2855
    %3978 = vmatpush1.msra.mxu0 %v2854
    %3979 = vmatprep.subr.mxu0 %v2847
    %3980 = vmatpush1.msra.mxu0 %v2846
    %3981 = vmatprep.subr.mxu0 %v2839
    %3982 = vmatpush1.msra.mxu0 %v2838
    %3983 = vmatprep.subr.mxu0 %v2831
    %3984 = vmatpush1.msra.mxu0 %v2830
    %3985 = vmatprep.subr.mxu0 %v2823
    %3986 = vmatpush1.msra.mxu0 %v2822
    %3987 = vmatprep.subr.mxu0 %v2815
    %3988 = vmatpush1.msra.mxu0 %v2814
    %3989 = vmatprep.subr.mxu0 %v2807
    %3990 = vmatpush1.msra.mxu0 %v2806
    %3991 = vmatprep.subr.mxu0 %v2799
    %3992 = vmatpush1.msra.mxu0 %v2798
    %3993 = vmatprep.subr.mxu0 %v2791
    %3994 = vmatpush1.msra.mxu0 %v2790
    %3995 = vmatprep.subr.mxu0 %v3039
    %3996 = vmatpush2.msra.mxu0 %v3038
    %3997 = vmatprep.subr.mxu0 %v3031
    %3998 = vmatpush2.msra.mxu0 %v3030
    %3999 = vmatprep.subr.mxu0 %v3023
    %4000 = vmatpush2.msra.mxu0 %v3022
    %4001 = vmatprep.subr.mxu0 %v3015
    %4002 = vmatpush2.msra.mxu0 %v3014
    %4003 = vmatprep.subr.mxu0 %v3007
    %4004 = vmatpush2.msra.mxu0 %v3006
    %4005 = vmatprep.subr.mxu0 %v2999
    %4006 = vmatpush2.msra.mxu0 %v2998
    %4007 = vmatprep.subr.mxu0 %v2991
    %4008 = vmatpush2.msra.mxu0 %v2990
    %4009 = vmatprep.subr.mxu0 %v2983
    %4010 = vmatpush2.msra.mxu0 %v2982
    %4011 = vmatprep.subr.mxu0 %v2975
    %4012 = vmatpush2.msra.mxu0 %v2974
    %4013 = vmatprep.subr.mxu0 %v2967
    %4014 = vmatpush2.msra.mxu0 %v2966
    %4015 = vmatprep.subr.mxu0 %v2959
    %4016 = vmatpush2.msra.mxu0 %v2958
    %4017 = vmatprep.subr.mxu0 %v2951
    %4018 = vmatpush2.msra.mxu0 %v2950
    %4019 = vmatprep.subr.mxu0 %v2943
    %4020 = vmatpush2.msra.mxu0 %v2942
    %4021 = vmatprep.subr.mxu0 %v2935
    %4022 = vmatpush2.msra.mxu0 %v2934
    %4023 = vmatprep.subr.mxu0 %v2927
    %4024 = vmatpush2.msra.mxu0 %v2926
    %4025 = vmatprep.subr.mxu0 %v2919
    %4026 = vmatpush2.msra.mxu0 %v2918
    %4027 = vmatprep.mubr.f32.mxu0 %v3961
    %4028 = vmatmul.mubr.f32.gmra.mxu0 %v3933
    %v4029 = vpop.f32.mrf.mxu0
    %v4030 = vadd.f32 0.0, %v4029
    %v4031 = vpop.f32.mrf.mxu0
    %v4032 = vadd.f32 0.0, %v4031
    %4033 = vdwg.mxu0
    %4034 = vmatprep.subr.mxu0 %v2913
    %4035 = vmatpush1.msra.mxu0 %v2912
    %4036 = vmatprep.subr.mxu0 %v2905
    %4037 = vmatpush1.msra.mxu0 %v2904
    %4038 = vmatprep.subr.mxu0 %v2897
    %4039 = vmatpush1.msra.mxu0 %v2896
    %4040 = vmatprep.subr.mxu0 %v2889
    %4041 = vmatpush1.msra.mxu0 %v2888
    %4042 = vmatprep.subr.mxu0 %v2881
    %4043 = vmatpush1.msra.mxu0 %v2880
    %4044 = vmatprep.subr.mxu0 %v2873
    %4045 = vmatpush1.msra.mxu0 %v2872
    %4046 = vmatprep.subr.mxu0 %v2865
    %4047 = vmatpush1.msra.mxu0 %v2864
    %4048 = vmatprep.subr.mxu0 %v2857
    %4049 = vmatpush1.msra.mxu0 %v2856
    %4050 = vmatprep.subr.mxu0 %v2849
    %4051 = vmatpush1.msra.mxu0 %v2848
    %4052 = vmatprep.subr.mxu0 %v2841
    %4053 = vmatpush1.msra.mxu0 %v2840
    %4054 = vmatprep.subr.mxu0 %v2833
    %4055 = vmatpush1.msra.mxu0 %v2832
    %4056 = vmatprep.subr.mxu0 %v2825
    %4057 = vmatpush1.msra.mxu0 %v2824
    %4058 = vmatprep.subr.mxu0 %v2817
    %4059 = vmatpush1.msra.mxu0 %v2816
    %4060 = vmatprep.subr.mxu0 %v2809
    %4061 = vmatpush1.msra.mxu0 %v2808
    %4062 = vmatprep.subr.mxu0 %v2801
    %4063 = vmatpush1.msra.mxu0 %v2800
    %4064 = vmatprep.subr.mxu0 %v2793
    %4065 = vmatpush1.msra.mxu0 %v2792
    %4066 = vmatprep.subr.mxu0 %v3041
    %4067 = vmatpush2.msra.mxu0 %v3040
    %4068 = vmatprep.subr.mxu0 %v3033
    %4069 = vmatpush2.msra.mxu0 %v3032
    %4070 = vmatprep.subr.mxu0 %v3025
    %4071 = vmatpush2.msra.mxu0 %v3024
    %4072 = vmatprep.subr.mxu0 %v3017
    %4073 = vmatpush2.msra.mxu0 %v3016
    %4074 = vmatprep.subr.mxu0 %v3009
    %4075 = vmatpush2.msra.mxu0 %v3008
    %4076 = vmatprep.subr.mxu0 %v3001
    %4077 = vmatpush2.msra.mxu0 %v3000
    %4078 = vmatprep.subr.mxu0 %v2993
    %4079 = vmatpush2.msra.mxu0 %v2992
    %4080 = vmatprep.subr.mxu0 %v2985
    %4081 = vmatpush2.msra.mxu0 %v2984
    %4082 = vmatprep.subr.mxu0 %v2977
    %4083 = vmatpush2.msra.mxu0 %v2976
    %4084 = vmatprep.subr.mxu0 %v2969
    %4085 = vmatpush2.msra.mxu0 %v2968
    %4086 = vmatprep.subr.mxu0 %v2961
    %4087 = vmatpush2.msra.mxu0 %v2960
    %4088 = vmatprep.subr.mxu0 %v2953
    %4089 = vmatpush2.msra.mxu0 %v2952
    %4090 = vmatprep.subr.mxu0 %v2945
    %4091 = vmatpush2.msra.mxu0 %v2944
    %4092 = vmatprep.subr.mxu0 %v2937
    %4093 = vmatpush2.msra.mxu0 %v2936
    %4094 = vmatprep.subr.mxu0 %v2929
    %4095 = vmatpush2.msra.mxu0 %v2928
    %4096 = vmatprep.subr.mxu0 %v2921
    %4097 = vmatpush2.msra.mxu0 %v2920
    %4098 = vmatprep.mubr.f32.mxu0 %v3961
    %4099 = vmatmul.mubr.f32.gmra.mxu0 %v3933
    %v4100 = vpop.f32.mrf.mxu0
    %v4101 = vadd.f32 0.0, %v4100
    %v4102 = vpop.f32.mrf.mxu0
    %v4103 = vadd.f32 0.0, %v4102
    %4104 = vdwg.mxu0
    %4105 = vmatprep.subr.mxu0 %v2915
    %4106 = vmatpush1.msra.mxu0 %v2914
    %4107 = vmatprep.subr.mxu0 %v2907
    %4108 = vmatpush1.msra.mxu0 %v2906
    %4109 = vmatprep.subr.mxu0 %v2899
    %4110 = vmatpush1.msra.mxu0 %v2898
    %4111 = vmatprep.subr.mxu0 %v2891
    %4112 = vmatpush1.msra.mxu0 %v2890
    %4113 = vmatprep.subr.mxu0 %v2883
    %4114 = vmatpush1.msra.mxu0 %v2882
    %4115 = vmatprep.subr.mxu0 %v2875
    %4116 = vmatpush1.msra.mxu0 %v2874
    %4117 = vmatprep.subr.mxu0 %v2867
    %4118 = vmatpush1.msra.mxu0 %v2866
    %4119 = vmatprep.subr.mxu0 %v2859
    %4120 = vmatpush1.msra.mxu0 %v2858
    %4121 = vmatprep.subr.mxu0 %v2851
    %4122 = vmatpush1.msra.mxu0 %v2850
    %4123 = vmatprep.subr.mxu0 %v2843
    %4124 = vmatpush1.msra.mxu0 %v2842
    %4125 = vmatprep.subr.mxu0 %v2835
    %4126 = vmatpush1.msra.mxu0 %v2834
    %4127 = vmatprep.subr.mxu0 %v2827
    %4128 = vmatpush1.msra.mxu0 %v2826
    %4129 = vmatprep.subr.mxu0 %v2819
    %4130 = vmatpush1.msra.mxu0 %v2818
    %4131 = vmatprep.subr.mxu0 %v2811
    %4132 = vmatpush1.msra.mxu0 %v2810
    %4133 = vmatprep.subr.mxu0 %v2803
    %4134 = vmatpush1.msra.mxu0 %v2802
    %4135 = vmatprep.subr.mxu0 %v2795
    %4136 = vmatpush1.msra.mxu0 %v2794
    %4137 = vmatprep.subr.mxu0 %v3043
    %4138 = vmatpush2.msra.mxu0 %v3042
    %4139 = vmatprep.subr.mxu0 %v3035
    %4140 = vmatpush2.msra.mxu0 %v3034
    %4141 = vmatprep.subr.mxu0 %v3027
    %4142 = vmatpush2.msra.mxu0 %v3026
    %4143 = vmatprep.subr.mxu0 %v3019
    %4144 = vmatpush2.msra.mxu0 %v3018
    %4145 = vmatprep.subr.mxu0 %v3011
    %4146 = vmatpush2.msra.mxu0 %v3010
    %4147 = vmatprep.subr.mxu0 %v3003
    %4148 = vmatpush2.msra.mxu0 %v3002
    %4149 = vmatprep.subr.mxu0 %v2995
    %4150 = vmatpush2.msra.mxu0 %v2994
    %4151 = vmatprep.subr.mxu0 %v2987
    %4152 = vmatpush2.msra.mxu0 %v2986
    %4153 = vmatprep.subr.mxu0 %v2979
    %4154 = vmatpush2.msra.mxu0 %v2978
    %4155 = vmatprep.subr.mxu0 %v2971
    %4156 = vmatpush2.msra.mxu0 %v2970
    %4157 = vmatprep.subr.mxu0 %v2963
    %4158 = vmatpush2.msra.mxu0 %v2962
    %4159 = vmatprep.subr.mxu0 %v2955
    %4160 = vmatpush2.msra.mxu0 %v2954
    %4161 = vmatprep.subr.mxu0 %v2947
    %4162 = vmatpush2.msra.mxu0 %v2946
    %4163 = vmatprep.subr.mxu0 %v2939
    %4164 = vmatpush2.msra.mxu0 %v2938
    %4165 = vmatprep.subr.mxu0 %v2931
    %4166 = vmatpush2.msra.mxu0 %v2930
    %4167 = vmatprep.subr.mxu0 %v2923
    %4168 = vmatpush2.msra.mxu0 %v2922
    %4169 = vmatprep.mubr.f32.mxu0 %v3961
    %4170 = vmatmul.mubr.f32.gmra.mxu0 %v3933
    %v4171 = vpop.f32.mrf.mxu0
    %v4172 = vadd.f32 0.0, %v4171
    %v4173 = vpop.f32.mrf.mxu0
    %v4174 = vadd.f32 0.0, %v4173
    %4175 = vdwg.mxu0
    %4176 = vmatprep.subr.mxu0 %v2917
    %4177 = vmatpush1.msra.mxu0 %v2916
    %4178 = vmatprep.subr.mxu0 %v2909
    %4179 = vmatpush1.msra.mxu0 %v2908
    %4180 = vmatprep.subr.mxu0 %v2901
    %4181 = vmatpush1.msra.mxu0 %v2900
    %4182 = vmatprep.subr.mxu0 %v2893
    %4183 = vmatpush1.msra.mxu0 %v2892
    %4184 = vmatprep.subr.mxu0 %v2885
    %4185 = vmatpush1.msra.mxu0 %v2884
    %4186 = vmatprep.subr.mxu0 %v2877
    %4187 = vmatpush1.msra.mxu0 %v2876
    %4188 = vmatprep.subr.mxu0 %v2869
    %4189 = vmatpush1.msra.mxu0 %v2868
    %4190 = vmatprep.subr.mxu0 %v2861
    %4191 = vmatpush1.msra.mxu0 %v2860
    %4192 = vmatprep.subr.mxu0 %v2853
    %4193 = vmatpush1.msra.mxu0 %v2852
    %4194 = vmatprep.subr.mxu0 %v2845
    %4195 = vmatpush1.msra.mxu0 %v2844
    %4196 = vmatprep.subr.mxu0 %v2837
    %4197 = vmatpush1.msra.mxu0 %v2836
    %4198 = vmatprep.subr.mxu0 %v2829
    %4199 = vmatpush1.msra.mxu0 %v2828
    %4200 = vmatprep.subr.mxu0 %v2821
    %4201 = vmatpush1.msra.mxu0 %v2820
    %4202 = vmatprep.subr.mxu0 %v2813
    %4203 = vmatpush1.msra.mxu0 %v2812
    %4204 = vmatprep.subr.mxu0 %v2805
    %4205 = vmatpush1.msra.mxu0 %v2804
    %4206 = vmatprep.subr.mxu0 %v2797
    %4207 = vmatpush1.msra.mxu0 %v2796
    %4208 = vmatprep.subr.mxu0 %v3045
    %4209 = vmatpush2.msra.mxu0 %v3044
    %4210 = vmatprep.subr.mxu0 %v3037
    %4211 = vmatpush2.msra.mxu0 %v3036
    %4212 = vmatprep.subr.mxu0 %v3029
    %4213 = vmatpush2.msra.mxu0 %v3028
    %4214 = vmatprep.subr.mxu0 %v3021
    %4215 = vmatpush2.msra.mxu0 %v3020
    %4216 = vmatprep.subr.mxu0 %v3013
    %4217 = vmatpush2.msra.mxu0 %v3012
    %4218 = vmatprep.subr.mxu0 %v3005
    %4219 = vmatpush2.msra.mxu0 %v3004
    %4220 = vmatprep.subr.mxu0 %v2997
    %4221 = vmatpush2.msra.mxu0 %v2996
    %4222 = vmatprep.subr.mxu0 %v2989
    %4223 = vmatpush2.msra.mxu0 %v2988
    %4224 = vmatprep.subr.mxu0 %v2981
    %4225 = vmatpush2.msra.mxu0 %v2980
    %4226 = vmatprep.subr.mxu0 %v2973
    %4227 = vmatpush2.msra.mxu0 %v2972
    %4228 = vmatprep.subr.mxu0 %v2965
    %4229 = vmatpush2.msra.mxu0 %v2964
    %4230 = vmatprep.subr.mxu0 %v2957
    %4231 = vmatpush2.msra.mxu0 %v2956
    %4232 = vmatprep.subr.mxu0 %v2949
    %4233 = vmatpush2.msra.mxu0 %v2948
    %4234 = vmatprep.subr.mxu0 %v2941
    %4235 = vmatpush2.msra.mxu0 %v2940
    %4236 = vmatprep.subr.mxu0 %v2933
    %4237 = vmatpush2.msra.mxu0 %v2932
    %4238 = vmatprep.subr.mxu0 %v2925
    %4239 = vmatpush2.msra.mxu0 %v2924
    %4240 = vmatprep.mubr.f32.mxu0 %v3961
    %4241 = vmatmul.mubr.f32.gmra.mxu0 %v3933
    %v4242 = vpop.f32.mrf.mxu0
    %v4243 = vadd.f32 0.0, %v4242
    %v4244 = vpop.f32.mrf.mxu0
    %v4245 = vadd.f32 0.0, %v4244
    %4246 = vdwg.mxu0
    %v4247 = vld [vmem:[#allocation2] sm:$0xc0]
    %v4248 = vld [vmem:[#allocation2 + $0x8] sm:$0xc0]
    %v4249 = vld [vmem:[#allocation2 + $0x10] sm:$0xc0]
    %v4250 = vld [vmem:[#allocation2 + $0x18] sm:$0xc0]
    %v4255 = vrot.slane %v4247, 6
    %v4256 = vrot.slane %v4248, 6
    %v4257 = vrot.slane %v4249, 6
    %v4258 = vrot.slane %v4250, 6
    %v4263 = vadd.f32 %v4030, %v4255
    %v4264 = vadd.f32 %v4032, %v4256
    %v4265 = vadd.f32 %v4101, %v4257
    %v4266 = vadd.f32 %v4103, %v4258
    %v4267 = vxor.u32 %v4263, 2147483648
    %v4268 = vmul.f32 %v4267, 1.442695
    %v4269 = vpow.pop %v4268
    %v4270 = vadd.f32 %v4269, 1.0
    %v4271 = vrcp.pop %v4270
    %v4272 = vmul.f32 1.0, %v4271
    %v4273 = vxor.u32 %v4264, 2147483648
    %v4274 = vmul.f32 %v4273, 1.442695
    %v4275 = vpow.pop %v4274
    %v4276 = vadd.f32 %v4275, 1.0
    %v4277 = vrcp.pop %v4276
    %v4278 = vmul.f32 1.0, %v4277
    %v4279 = vtanh.pop %v4265
    %v4280 = vxor.u32 %v4266, 2147483648
    %v4281 = vmul.f32 %v4280, 1.442695
    %v4282 = vpow.pop %v4281
    %v4283 = vadd.f32 %v4282, 1.0
    %v4284 = vrcp.pop %v4283
    %v4285 = vmul.f32 1.0, %v4284
    %v4286 = vmul.f32 %v4278, %v3931
    %v4287 = vmul.f32 %v4272, %v4279
    %v4288 = vadd.f32 %v4286, %v4287
    %v4289 = vtanh.pop %v4288
    %v4290 = vmul.f32 %v4285, %v4289
    %v4291 = vadd.f32 %v4172, %v3560
    %v4292 = vadd.f32 %v4174, %v3564
    %v4293 = vadd.f32 %v4243, %v3568
    %v4294 = vadd.f32 %v4245, %v3572
    %v4295 = vxor.u32 %v4291, 2147483648
    %v4296 = vmul.f32 %v4295, 1.442695
    %v4297 = vpow.pop %v4296
    %v4298 = vadd.f32 %v4297, 1.0
    %v4299 = vrcp.pop %v4298
    %v4300 = vmul.f32 1.0, %v4299
    %v4301 = vxor.u32 %v4292, 2147483648
    %v4302 = vmul.f32 %v4301, 1.442695
    %v4303 = vpow.pop %v4302
    %v4304 = vadd.f32 %v4303, 1.0
    %v4305 = vrcp.pop %v4304
    %v4306 = vmul.f32 1.0, %v4305
    %v4307 = vtanh.pop %v4293
    %v4308 = vxor.u32 %v4294, 2147483648
    %v4309 = vmul.f32 %v4308, 1.442695
    %v4310 = vpow.pop %v4309
    %v4311 = vadd.f32 %v4310, 1.0
    %v4312 = vrcp.pop %v4311
    %v4313 = vmul.f32 1.0, %v4312
    %v4314 = vmul.f32 %v4306, %v3959
    %v4315 = vmul.f32 %v4300, %v4307
    %v4316 = vadd.f32 %v4314, %v4315
    %v4317 = vtanh.pop %v4316
    %v4318 = vmul.f32 %v4313, %v4317
    %4319 = vst [vmem:[#allocation3 + $0x4] sm:$0x3] %v4318
    %4320 = vmatprep.subr.mxu0 %v2911
    %4321 = vmatpush1.msra.mxu0 %v2910
    %4322 = vmatprep.subr.mxu0 %v2903
    %4323 = vmatpush1.msra.mxu0 %v2902
    %4324 = vmatprep.subr.mxu0 %v2895
    %4325 = vmatpush1.msra.mxu0 %v2894
    %4326 = vmatprep.subr.mxu0 %v2887
    %4327 = vmatpush1.msra.mxu0 %v2886
    %4328 = vmatprep.subr.mxu0 %v2879
    %4329 = vmatpush1.msra.mxu0 %v2878
    %4330 = vmatprep.subr.mxu0 %v2871
    %4331 = vmatpush1.msra.mxu0 %v2870
    %4332 = vmatprep.subr.mxu0 %v2863
    %4333 = vmatpush1.msra.mxu0 %v2862
    %4334 = vmatprep.subr.mxu0 %v2855
    %4335 = vmatpush1.msra.mxu0 %v2854
    %4336 = vmatprep.subr.mxu0 %v2847
    %4337 = vmatpush1.msra.mxu0 %v2846
    %4338 = vmatprep.subr.mxu0 %v2839
    %4339 = vmatpush1.msra.mxu0 %v2838
    %4340 = vmatprep.subr.mxu0 %v2831
    %4341 = vmatpush1.msra.mxu0 %v2830
    %4342 = vmatprep.subr.mxu0 %v2823
    %4343 = vmatpush1.msra.mxu0 %v2822
    %4344 = vmatprep.subr.mxu0 %v2815
    %4345 = vmatpush1.msra.mxu0 %v2814
    %4346 = vmatprep.subr.mxu0 %v2807
    %4347 = vmatpush1.msra.mxu0 %v2806
    %4348 = vmatprep.subr.mxu0 %v2799
    %4349 = vmatpush1.msra.mxu0 %v2798
    %4350 = vmatprep.subr.mxu0 %v2791
    %4351 = vmatpush1.msra.mxu0 %v2790
    %4352 = vmatprep.subr.mxu0 %v3039
    %4353 = vmatpush2.msra.mxu0 %v3038
    %4354 = vmatprep.subr.mxu0 %v3031
    %4355 = vmatpush2.msra.mxu0 %v3030
    %4356 = vmatprep.subr.mxu0 %v3023
    %4357 = vmatpush2.msra.mxu0 %v3022
    %4358 = vmatprep.subr.mxu0 %v3015
    %4359 = vmatpush2.msra.mxu0 %v3014
    %4360 = vmatprep.subr.mxu0 %v3007
    %4361 = vmatpush2.msra.mxu0 %v3006
    %4362 = vmatprep.subr.mxu0 %v2999
    %4363 = vmatpush2.msra.mxu0 %v2998
    %4364 = vmatprep.subr.mxu0 %v2991
    %4365 = vmatpush2.msra.mxu0 %v2990
    %4366 = vmatprep.subr.mxu0 %v2983
    %4367 = vmatpush2.msra.mxu0 %v2982
    %4368 = vmatprep.subr.mxu0 %v2975
    %4369 = vmatpush2.msra.mxu0 %v2974
    %4370 = vmatprep.subr.mxu0 %v2967
    %4371 = vmatpush2.msra.mxu0 %v2966
    %4372 = vmatprep.subr.mxu0 %v2959
    %4373 = vmatpush2.msra.mxu0 %v2958
    %4374 = vmatprep.subr.mxu0 %v2951
    %4375 = vmatpush2.msra.mxu0 %v2950
    %4376 = vmatprep.subr.mxu0 %v2943
    %4377 = vmatpush2.msra.mxu0 %v2942
    %4378 = vmatprep.subr.mxu0 %v2935
    %4379 = vmatpush2.msra.mxu0 %v2934
    %4380 = vmatprep.subr.mxu0 %v2927
    %4381 = vmatpush2.msra.mxu0 %v2926
    %4382 = vmatprep.subr.mxu0 %v2919
    %4383 = vmatpush2.msra.mxu0 %v2918
    %4384 = vmatprep.mubr.f32.mxu0 %v4318
    %4385 = vmatmul.mubr.f32.gmra.mxu0 %v4290
    %v4386 = vpop.f32.mrf.mxu0
    %v4387 = vadd.f32 0.0, %v4386
    %v4388 = vpop.f32.mrf.mxu0
    %v4389 = vadd.f32 0.0, %v4388
    %4390 = vdwg.mxu0
    %4391 = vmatprep.subr.mxu0 %v2913
    %4392 = vmatpush1.msra.mxu0 %v2912
    %4393 = vmatprep.subr.mxu0 %v2905
    %4394 = vmatpush1.msra.mxu0 %v2904
    %4395 = vmatprep.subr.mxu0 %v2897
    %4396 = vmatpush1.msra.mxu0 %v2896
    %4397 = vmatprep.subr.mxu0 %v2889
    %4398 = vmatpush1.msra.mxu0 %v2888
    %4399 = vmatprep.subr.mxu0 %v2881
    %4400 = vmatpush1.msra.mxu0 %v2880
    %4401 = vmatprep.subr.mxu0 %v2873
    %4402 = vmatpush1.msra.mxu0 %v2872
    %4403 = vmatprep.subr.mxu0 %v2865
    %4404 = vmatpush1.msra.mxu0 %v2864
    %4405 = vmatprep.subr.mxu0 %v2857
    %4406 = vmatpush1.msra.mxu0 %v2856
    %4407 = vmatprep.subr.mxu0 %v2849
    %4408 = vmatpush1.msra.mxu0 %v2848
    %4409 = vmatprep.subr.mxu0 %v2841
    %4410 = vmatpush1.msra.mxu0 %v2840
    %4411 = vmatprep.subr.mxu0 %v2833
    %4412 = vmatpush1.msra.mxu0 %v2832
    %4413 = vmatprep.subr.mxu0 %v2825
    %4414 = vmatpush1.msra.mxu0 %v2824
    %4415 = vmatprep.subr.mxu0 %v2817
    %4416 = vmatpush1.msra.mxu0 %v2816
    %4417 = vmatprep.subr.mxu0 %v2809
    %4418 = vmatpush1.msra.mxu0 %v2808
    %4419 = vmatprep.subr.mxu0 %v2801
    %4420 = vmatpush1.msra.mxu0 %v2800
    %4421 = vmatprep.subr.mxu0 %v2793
    %4422 = vmatpush1.msra.mxu0 %v2792
    %4423 = vmatprep.subr.mxu0 %v3041
    %4424 = vmatpush2.msra.mxu0 %v3040
    %4425 = vmatprep.subr.mxu0 %v3033
    %4426 = vmatpush2.msra.mxu0 %v3032
    %4427 = vmatprep.subr.mxu0 %v3025
    %4428 = vmatpush2.msra.mxu0 %v3024
    %4429 = vmatprep.subr.mxu0 %v3017
    %4430 = vmatpush2.msra.mxu0 %v3016
    %4431 = vmatprep.subr.mxu0 %v3009
    %4432 = vmatpush2.msra.mxu0 %v3008
    %4433 = vmatprep.subr.mxu0 %v3001
    %4434 = vmatpush2.msra.mxu0 %v3000
    %4435 = vmatprep.subr.mxu0 %v2993
    %4436 = vmatpush2.msra.mxu0 %v2992
    %4437 = vmatprep.subr.mxu0 %v2985
    %4438 = vmatpush2.msra.mxu0 %v2984
    %4439 = vmatprep.subr.mxu0 %v2977
    %4440 = vmatpush2.msra.mxu0 %v2976
    %4441 = vmatprep.subr.mxu0 %v2969
    %4442 = vmatpush2.msra.mxu0 %v2968
    %4443 = vmatprep.subr.mxu0 %v2961
    %4444 = vmatpush2.msra.mxu0 %v2960
    %4445 = vmatprep.subr.mxu0 %v2953
    %4446 = vmatpush2.msra.mxu0 %v2952
    %4447 = vmatprep.subr.mxu0 %v2945
    %4448 = vmatpush2.msra.mxu0 %v2944
    %4449 = vmatprep.subr.mxu0 %v2937
    %4450 = vmatpush2.msra.mxu0 %v2936
    %4451 = vmatprep.subr.mxu0 %v2929
    %4452 = vmatpush2.msra.mxu0 %v2928
    %4453 = vmatprep.subr.mxu0 %v2921
    %4454 = vmatpush2.msra.mxu0 %v2920
    %4455 = vmatprep.mubr.f32.mxu0 %v4318
    %4456 = vmatmul.mubr.f32.gmra.mxu0 %v4290
    %v4457 = vpop.f32.mrf.mxu0
    %v4458 = vadd.f32 0.0, %v4457
    %v4459 = vpop.f32.mrf.mxu0
    %v4460 = vadd.f32 0.0, %v4459
    %4461 = vdwg.mxu0
    %4462 = vmatprep.subr.mxu0 %v2915
    %4463 = vmatpush1.msra.mxu0 %v2914
    %4464 = vmatprep.subr.mxu0 %v2907
    %4465 = vmatpush1.msra.mxu0 %v2906
    %4466 = vmatprep.subr.mxu0 %v2899
    %4467 = vmatpush1.msra.mxu0 %v2898
    %4468 = vmatprep.subr.mxu0 %v2891
    %4469 = vmatpush1.msra.mxu0 %v2890
    %4470 = vmatprep.subr.mxu0 %v2883
    %4471 = vmatpush1.msra.mxu0 %v2882
    %4472 = vmatprep.subr.mxu0 %v2875
    %4473 = vmatpush1.msra.mxu0 %v2874
    %4474 = vmatprep.subr.mxu0 %v2867
    %4475 = vmatpush1.msra.mxu0 %v2866
    %4476 = vmatprep.subr.mxu0 %v2859
    %4477 = vmatpush1.msra.mxu0 %v2858
    %4478 = vmatprep.subr.mxu0 %v2851
    %4479 = vmatpush1.msra.mxu0 %v2850
    %4480 = vmatprep.subr.mxu0 %v2843
    %4481 = vmatpush1.msra.mxu0 %v2842
    %4482 = vmatprep.subr.mxu0 %v2835
    %4483 = vmatpush1.msra.mxu0 %v2834
    %4484 = vmatprep.subr.mxu0 %v2827
    %4485 = vmatpush1.msra.mxu0 %v2826
    %4486 = vmatprep.subr.mxu0 %v2819
    %4487 = vmatpush1.msra.mxu0 %v2818
    %4488 = vmatprep.subr.mxu0 %v2811
    %4489 = vmatpush1.msra.mxu0 %v2810
    %4490 = vmatprep.subr.mxu0 %v2803
    %4491 = vmatpush1.msra.mxu0 %v2802
    %4492 = vmatprep.subr.mxu0 %v2795
    %4493 = vmatpush1.msra.mxu0 %v2794
    %4494 = vmatprep.subr.mxu0 %v3043
    %4495 = vmatpush2.msra.mxu0 %v3042
    %4496 = vmatprep.subr.mxu0 %v3035
    %4497 = vmatpush2.msra.mxu0 %v3034
    %4498 = vmatprep.subr.mxu0 %v3027
    %4499 = vmatpush2.msra.mxu0 %v3026
    %4500 = vmatprep.subr.mxu0 %v3019
    %4501 = vmatpush2.msra.mxu0 %v3018
    %4502 = vmatprep.subr.mxu0 %v3011
    %4503 = vmatpush2.msra.mxu0 %v3010
    %4504 = vmatprep.subr.mxu0 %v3003
    %4505 = vmatpush2.msra.mxu0 %v3002
    %4506 = vmatprep.subr.mxu0 %v2995
    %4507 = vmatpush2.msra.mxu0 %v2994
    %4508 = vmatprep.subr.mxu0 %v2987
    %4509 = vmatpush2.msra.mxu0 %v2986
    %4510 = vmatprep.subr.mxu0 %v2979
    %4511 = vmatpush2.msra.mxu0 %v2978
    %4512 = vmatprep.subr.mxu0 %v2971
    %4513 = vmatpush2.msra.mxu0 %v2970
    %4514 = vmatprep.subr.mxu0 %v2963
    %4515 = vmatpush2.msra.mxu0 %v2962
    %4516 = vmatprep.subr.mxu0 %v2955
    %4517 = vmatpush2.msra.mxu0 %v2954
    %4518 = vmatprep.subr.mxu0 %v2947
    %4519 = vmatpush2.msra.mxu0 %v2946
    %4520 = vmatprep.subr.mxu0 %v2939
    %4521 = vmatpush2.msra.mxu0 %v2938
    %4522 = vmatprep.subr.mxu0 %v2931
    %4523 = vmatpush2.msra.mxu0 %v2930
    %4524 = vmatprep.subr.mxu0 %v2923
    %4525 = vmatpush2.msra.mxu0 %v2922
    %4526 = vmatprep.mubr.f32.mxu0 %v4318
    %4527 = vmatmul.mubr.f32.gmra.mxu0 %v4290
    %v4528 = vpop.f32.mrf.mxu0
    %v4529 = vadd.f32 0.0, %v4528
    %v4530 = vpop.f32.mrf.mxu0
    %v4531 = vadd.f32 0.0, %v4530
    %4532 = vdwg.mxu0
    %4533 = vmatprep.subr.mxu0 %v2917
    %4534 = vmatpush1.msra.mxu0 %v2916
    %4535 = vmatprep.subr.mxu0 %v2909
    %4536 = vmatpush1.msra.mxu0 %v2908
    %4537 = vmatprep.subr.mxu0 %v2901
    %4538 = vmatpush1.msra.mxu0 %v2900
    %4539 = vmatprep.subr.mxu0 %v2893
    %4540 = vmatpush1.msra.mxu0 %v2892
    %4541 = vmatprep.subr.mxu0 %v2885
    %4542 = vmatpush1.msra.mxu0 %v2884
    %4543 = vmatprep.subr.mxu0 %v2877
    %4544 = vmatpush1.msra.mxu0 %v2876
    %4545 = vmatprep.subr.mxu0 %v2869
    %4546 = vmatpush1.msra.mxu0 %v2868
    %4547 = vmatprep.subr.mxu0 %v2861
    %4548 = vmatpush1.msra.mxu0 %v2860
    %4549 = vmatprep.subr.mxu0 %v2853
    %4550 = vmatpush1.msra.mxu0 %v2852
    %4551 = vmatprep.subr.mxu0 %v2845
    %4552 = vmatpush1.msra.mxu0 %v2844
    %4553 = vmatprep.subr.mxu0 %v2837
    %4554 = vmatpush1.msra.mxu0 %v2836
    %4555 = vmatprep.subr.mxu0 %v2829
    %4556 = vmatpush1.msra.mxu0 %v2828
    %4557 = vmatprep.subr.mxu0 %v2821
    %4558 = vmatpush1.msra.mxu0 %v2820
    %4559 = vmatprep.subr.mxu0 %v2813
    %4560 = vmatpush1.msra.mxu0 %v2812
    %4561 = vmatprep.subr.mxu0 %v2805
    %4562 = vmatpush1.msra.mxu0 %v2804
    %4563 = vmatprep.subr.mxu0 %v2797
    %4564 = vmatpush1.msra.mxu0 %v2796
    %4565 = vmatprep.subr.mxu0 %v3045
    %4566 = vmatpush2.msra.mxu0 %v3044
    %4567 = vmatprep.subr.mxu0 %v3037
    %4568 = vmatpush2.msra.mxu0 %v3036
    %4569 = vmatprep.subr.mxu0 %v3029
    %4570 = vmatpush2.msra.mxu0 %v3028
    %4571 = vmatprep.subr.mxu0 %v3021
    %4572 = vmatpush2.msra.mxu0 %v3020
    %4573 = vmatprep.subr.mxu0 %v3013
    %4574 = vmatpush2.msra.mxu0 %v3012
    %4575 = vmatprep.subr.mxu0 %v3005
    %4576 = vmatpush2.msra.mxu0 %v3004
    %4577 = vmatprep.subr.mxu0 %v2997
    %4578 = vmatpush2.msra.mxu0 %v2996
    %4579 = vmatprep.subr.mxu0 %v2989
    %4580 = vmatpush2.msra.mxu0 %v2988
    %4581 = vmatprep.subr.mxu0 %v2981
    %4582 = vmatpush2.msra.mxu0 %v2980
    %4583 = vmatprep.subr.mxu0 %v2973
    %4584 = vmatpush2.msra.mxu0 %v2972
    %4585 = vmatprep.subr.mxu0 %v2965
    %4586 = vmatpush2.msra.mxu0 %v2964
    %4587 = vmatprep.subr.mxu0 %v2957
    %4588 = vmatpush2.msra.mxu0 %v2956
    %4589 = vmatprep.subr.mxu0 %v2949
    %4590 = vmatpush2.msra.mxu0 %v2948
    %4591 = vmatprep.subr.mxu0 %v2941
    %4592 = vmatpush2.msra.mxu0 %v2940
    %4593 = vmatprep.subr.mxu0 %v2933
    %4594 = vmatpush2.msra.mxu0 %v2932
    %4595 = vmatprep.subr.mxu0 %v2925
    %4596 = vmatpush2.msra.mxu0 %v2924
    %4597 = vmatprep.mubr.f32.mxu0 %v4318
    %4598 = vmatmul.mubr.f32.gmra.mxu0 %v4290
    %v4599 = vpop.f32.mrf.mxu0
    %v4600 = vadd.f32 0.0, %v4599
    %v4601 = vpop.f32.mrf.mxu0
    %v4602 = vadd.f32 0.0, %v4601
    %4603 = vdwg.mxu0
    %v4604 = vld [vmem:[#allocation2 + $0x20] sm:$0x3]
    %v4605 = vld [vmem:[#allocation2 + $0x28] sm:$0x3]
    %v4606 = vld [vmem:[#allocation2 + $0x30] sm:$0x3]
    %v4607 = vld [vmem:[#allocation2 + $0x38] sm:$0x3]
    %v4608 = vadd.f32 %v4387, %v4604
    %v4609 = vadd.f32 %v4389, %v4605
    %v4610 = vadd.f32 %v4458, %v4606
    %v4611 = vadd.f32 %v4460, %v4607
    %v4612 = vxor.u32 %v4608, 2147483648
    %v4613 = vmul.f32 %v4612, 1.442695
    %v4614 = vpow.pop %v4613
    %v4615 = vadd.f32 %v4614, 1.0
    %v4616 = vrcp.pop %v4615
    %v4617 = vmul.f32 1.0, %v4616
    %v4618 = vxor.u32 %v4609, 2147483648
    %v4619 = vmul.f32 %v4618, 1.442695
    %v4620 = vpow.pop %v4619
    %v4621 = vadd.f32 %v4620, 1.0
    %v4622 = vrcp.pop %v4621
    %v4623 = vmul.f32 1.0, %v4622
    %v4624 = vtanh.pop %v4610
    %v4625 = vxor.u32 %v4611, 2147483648
    %v4626 = vmul.f32 %v4625, 1.442695
    %v4627 = vpow.pop %v4626
    %v4628 = vadd.f32 %v4627, 1.0
    %v4629 = vrcp.pop %v4628
    %v4630 = vmul.f32 1.0, %v4629
    %v4631 = vmul.f32 %v4623, %v4288
    %v4632 = vmul.f32 %v4617, %v4624
    %v4633 = vadd.f32 %v4631, %v4632
    %v4634 = vtanh.pop %v4633
    %v4635 = vmul.f32 %v4630, %v4634
    %v4636 = vadd.f32 %v4529, %v3560
    %v4637 = vadd.f32 %v4531, %v3564
    %v4638 = vadd.f32 %v4600, %v3568
    %v4639 = vadd.f32 %v4602, %v3572
    %v4640 = vxor.u32 %v4636, 2147483648
    %v4641 = vmul.f32 %v4640, 1.442695
    %v4642 = vpow.pop %v4641
    %v4643 = vadd.f32 %v4642, 1.0
    %v4644 = vrcp.pop %v4643
    %v4645 = vmul.f32 1.0, %v4644
    %v4646 = vxor.u32 %v4637, 2147483648
    %v4647 = vmul.f32 %v4646, 1.442695
    %v4648 = vpow.pop %v4647
    %v4649 = vadd.f32 %v4648, 1.0
    %v4650 = vrcp.pop %v4649
    %v4651 = vmul.f32 1.0, %v4650
    %v4652 = vtanh.pop %v4638
    %v4653 = vxor.u32 %v4639, 2147483648
    %v4654 = vmul.f32 %v4653, 1.442695
    %v4655 = vpow.pop %v4654
    %v4656 = vadd.f32 %v4655, 1.0
    %v4657 = vrcp.pop %v4656
    %v4658 = vmul.f32 1.0, %v4657
    %v4659 = vmul.f32 %v4651, %v4316
    %v4660 = vmul.f32 %v4645, %v4652
    %v4661 = vadd.f32 %v4659, %v4660
    %v4662 = vtanh.pop %v4661
    %v4663 = vmul.f32 %v4658, %v4662
    %4664 = vst [vmem:[#allocation3 + $0x6] sm:$0x3] %v4663
    %4665 = vmatprep.subr.mxu0 %v2911
    %4666 = vmatpush1.msra.mxu0 %v2910
    %4667 = vmatprep.subr.mxu0 %v2903
    %4668 = vmatpush1.msra.mxu0 %v2902
    %4669 = vmatprep.subr.mxu0 %v2895
    %4670 = vmatpush1.msra.mxu0 %v2894
    %4671 = vmatprep.subr.mxu0 %v2887
    %4672 = vmatpush1.msra.mxu0 %v2886
    %4673 = vmatprep.subr.mxu0 %v2879
    %4674 = vmatpush1.msra.mxu0 %v2878
    %4675 = vmatprep.subr.mxu0 %v2871
    %4676 = vmatpush1.msra.mxu0 %v2870
    %4677 = vmatprep.subr.mxu0 %v2863
    %4678 = vmatpush1.msra.mxu0 %v2862
    %4679 = vmatprep.subr.mxu0 %v2855
    %4680 = vmatpush1.msra.mxu0 %v2854
    %4681 = vmatprep.subr.mxu0 %v2847
    %4682 = vmatpush1.msra.mxu0 %v2846
    %4683 = vmatprep.subr.mxu0 %v2839
    %4684 = vmatpush1.msra.mxu0 %v2838
    %4685 = vmatprep.subr.mxu0 %v2831
    %4686 = vmatpush1.msra.mxu0 %v2830
    %4687 = vmatprep.subr.mxu0 %v2823
    %4688 = vmatpush1.msra.mxu0 %v2822
    %4689 = vmatprep.subr.mxu0 %v2815
    %4690 = vmatpush1.msra.mxu0 %v2814
    %4691 = vmatprep.subr.mxu0 %v2807
    %4692 = vmatpush1.msra.mxu0 %v2806
    %4693 = vmatprep.subr.mxu0 %v2799
    %4694 = vmatpush1.msra.mxu0 %v2798
    %4695 = vmatprep.subr.mxu0 %v2791
    %4696 = vmatpush1.msra.mxu0 %v2790
    %4697 = vmatprep.subr.mxu0 %v3039
    %4698 = vmatpush2.msra.mxu0 %v3038
    %4699 = vmatprep.subr.mxu0 %v3031
    %4700 = vmatpush2.msra.mxu0 %v3030
    %4701 = vmatprep.subr.mxu0 %v3023
    %4702 = vmatpush2.msra.mxu0 %v3022
    %4703 = vmatprep.subr.mxu0 %v3015
    %4704 = vmatpush2.msra.mxu0 %v3014
    %4705 = vmatprep.subr.mxu0 %v3007
    %4706 = vmatpush2.msra.mxu0 %v3006
    %4707 = vmatprep.subr.mxu0 %v2999
    %4708 = vmatpush2.msra.mxu0 %v2998
    %4709 = vmatprep.subr.mxu0 %v2991
    %4710 = vmatpush2.msra.mxu0 %v2990
    %4711 = vmatprep.subr.mxu0 %v2983
    %4712 = vmatpush2.msra.mxu0 %v2982
    %4713 = vmatprep.subr.mxu0 %v2975
    %4714 = vmatpush2.msra.mxu0 %v2974
    %4715 = vmatprep.subr.mxu0 %v2967
    %4716 = vmatpush2.msra.mxu0 %v2966
    %4717 = vmatprep.subr.mxu0 %v2959
    %4718 = vmatpush2.msra.mxu0 %v2958
    %4719 = vmatprep.subr.mxu0 %v2951
    %4720 = vmatpush2.msra.mxu0 %v2950
    %4721 = vmatprep.subr.mxu0 %v2943
    %4722 = vmatpush2.msra.mxu0 %v2942
    %4723 = vmatprep.subr.mxu0 %v2935
    %4724 = vmatpush2.msra.mxu0 %v2934
    %4725 = vmatprep.subr.mxu0 %v2927
    %4726 = vmatpush2.msra.mxu0 %v2926
    %4727 = vmatprep.subr.mxu0 %v2919
    %4728 = vmatpush2.msra.mxu0 %v2918
    %4729 = vmatprep.mubr.f32.mxu0 %v4663
    %4730 = vmatmul.mubr.f32.gmra.mxu0 %v4635
    %v4731 = vpop.f32.mrf.mxu0
    %v4732 = vadd.f32 0.0, %v4731
    %v4733 = vpop.f32.mrf.mxu0
    %v4734 = vadd.f32 0.0, %v4733
    %4735 = vdwg.mxu0
    %4736 = vmatprep.subr.mxu0 %v2913
    %4737 = vmatpush1.msra.mxu0 %v2912
    %4738 = vmatprep.subr.mxu0 %v2905
    %4739 = vmatpush1.msra.mxu0 %v2904
    %4740 = vmatprep.subr.mxu0 %v2897
    %4741 = vmatpush1.msra.mxu0 %v2896
    %4742 = vmatprep.subr.mxu0 %v2889
    %4743 = vmatpush1.msra.mxu0 %v2888
    %4744 = vmatprep.subr.mxu0 %v2881
    %4745 = vmatpush1.msra.mxu0 %v2880
    %4746 = vmatprep.subr.mxu0 %v2873
    %4747 = vmatpush1.msra.mxu0 %v2872
    %4748 = vmatprep.subr.mxu0 %v2865
    %4749 = vmatpush1.msra.mxu0 %v2864
    %4750 = vmatprep.subr.mxu0 %v2857
    %4751 = vmatpush1.msra.mxu0 %v2856
    %4752 = vmatprep.subr.mxu0 %v2849
    %4753 = vmatpush1.msra.mxu0 %v2848
    %4754 = vmatprep.subr.mxu0 %v2841
    %4755 = vmatpush1.msra.mxu0 %v2840
    %4756 = vmatprep.subr.mxu0 %v2833
    %4757 = vmatpush1.msra.mxu0 %v2832
    %4758 = vmatprep.subr.mxu0 %v2825
    %4759 = vmatpush1.msra.mxu0 %v2824
    %4760 = vmatprep.subr.mxu0 %v2817
    %4761 = vmatpush1.msra.mxu0 %v2816
    %4762 = vmatprep.subr.mxu0 %v2809
    %4763 = vmatpush1.msra.mxu0 %v2808
    %4764 = vmatprep.subr.mxu0 %v2801
    %4765 = vmatpush1.msra.mxu0 %v2800
    %4766 = vmatprep.subr.mxu0 %v2793
    %4767 = vmatpush1.msra.mxu0 %v2792
    %4768 = vmatprep.subr.mxu0 %v3041
    %4769 = vmatpush2.msra.mxu0 %v3040
    %4770 = vmatprep.subr.mxu0 %v3033
    %4771 = vmatpush2.msra.mxu0 %v3032
    %4772 = vmatprep.subr.mxu0 %v3025
    %4773 = vmatpush2.msra.mxu0 %v3024
    %4774 = vmatprep.subr.mxu0 %v3017
    %4775 = vmatpush2.msra.mxu0 %v3016
    %4776 = vmatprep.subr.mxu0 %v3009
    %4777 = vmatpush2.msra.mxu0 %v3008
    %4778 = vmatprep.subr.mxu0 %v3001
    %4779 = vmatpush2.msra.mxu0 %v3000
    %4780 = vmatprep.subr.mxu0 %v2993
    %4781 = vmatpush2.msra.mxu0 %v2992
    %4782 = vmatprep.subr.mxu0 %v2985
    %4783 = vmatpush2.msra.mxu0 %v2984
    %4784 = vmatprep.subr.mxu0 %v2977
    %4785 = vmatpush2.msra.mxu0 %v2976
    %4786 = vmatprep.subr.mxu0 %v2969
    %4787 = vmatpush2.msra.mxu0 %v2968
    %4788 = vmatprep.subr.mxu0 %v2961
    %4789 = vmatpush2.msra.mxu0 %v2960
    %4790 = vmatprep.subr.mxu0 %v2953
    %4791 = vmatpush2.msra.mxu0 %v2952
    %4792 = vmatprep.subr.mxu0 %v2945
    %4793 = vmatpush2.msra.mxu0 %v2944
    %4794 = vmatprep.subr.mxu0 %v2937
    %4795 = vmatpush2.msra.mxu0 %v2936
    %4796 = vmatprep.subr.mxu0 %v2929
    %4797 = vmatpush2.msra.mxu0 %v2928
    %4798 = vmatprep.subr.mxu0 %v2921
    %4799 = vmatpush2.msra.mxu0 %v2920
    %4800 = vmatprep.mubr.f32.mxu0 %v4663
    %4801 = vmatmul.mubr.f32.gmra.mxu0 %v4635
    %v4802 = vpop.f32.mrf.mxu0
    %v4803 = vadd.f32 0.0, %v4802
    %v4804 = vpop.f32.mrf.mxu0
    %v4805 = vadd.f32 0.0, %v4804
    %4806 = vdwg.mxu0
    %4807 = vmatprep.subr.mxu0 %v2915
    %4808 = vmatpush1.msra.mxu0 %v2914
    %4809 = vmatprep.subr.mxu0 %v2907
    %4810 = vmatpush1.msra.mxu0 %v2906
    %4811 = vmatprep.subr.mxu0 %v2899
    %4812 = vmatpush1.msra.mxu0 %v2898
    %4813 = vmatprep.subr.mxu0 %v2891
    %4814 = vmatpush1.msra.mxu0 %v2890
    %4815 = vmatprep.subr.mxu0 %v2883
    %4816 = vmatpush1.msra.mxu0 %v2882
    %4817 = vmatprep.subr.mxu0 %v2875
    %4818 = vmatpush1.msra.mxu0 %v2874
    %4819 = vmatprep.subr.mxu0 %v2867
    %4820 = vmatpush1.msra.mxu0 %v2866
    %4821 = vmatprep.subr.mxu0 %v2859
    %4822 = vmatpush1.msra.mxu0 %v2858
    %4823 = vmatprep.subr.mxu0 %v2851
    %4824 = vmatpush1.msra.mxu0 %v2850
    %4825 = vmatprep.subr.mxu0 %v2843
    %4826 = vmatpush1.msra.mxu0 %v2842
    %4827 = vmatprep.subr.mxu0 %v2835
    %4828 = vmatpush1.msra.mxu0 %v2834
    %4829 = vmatprep.subr.mxu0 %v2827
    %4830 = vmatpush1.msra.mxu0 %v2826
    %4831 = vmatprep.subr.mxu0 %v2819
    %4832 = vmatpush1.msra.mxu0 %v2818
    %4833 = vmatprep.subr.mxu0 %v2811
    %4834 = vmatpush1.msra.mxu0 %v2810
    %4835 = vmatprep.subr.mxu0 %v2803
    %4836 = vmatpush1.msra.mxu0 %v2802
    %4837 = vmatprep.subr.mxu0 %v2795
    %4838 = vmatpush1.msra.mxu0 %v2794
    %4839 = vmatprep.subr.mxu0 %v3043
    %4840 = vmatpush2.msra.mxu0 %v3042
    %4841 = vmatprep.subr.mxu0 %v3035
    %4842 = vmatpush2.msra.mxu0 %v3034
    %4843 = vmatprep.subr.mxu0 %v3027
    %4844 = vmatpush2.msra.mxu0 %v3026
    %4845 = vmatprep.subr.mxu0 %v3019
    %4846 = vmatpush2.msra.mxu0 %v3018
    %4847 = vmatprep.subr.mxu0 %v3011
    %4848 = vmatpush2.msra.mxu0 %v3010
    %4849 = vmatprep.subr.mxu0 %v3003
    %4850 = vmatpush2.msra.mxu0 %v3002
    %4851 = vmatprep.subr.mxu0 %v2995
    %4852 = vmatpush2.msra.mxu0 %v2994
    %4853 = vmatprep.subr.mxu0 %v2987
    %4854 = vmatpush2.msra.mxu0 %v2986
    %4855 = vmatprep.subr.mxu0 %v2979
    %4856 = vmatpush2.msra.mxu0 %v2978
    %4857 = vmatprep.subr.mxu0 %v2971
    %4858 = vmatpush2.msra.mxu0 %v2970
    %4859 = vmatprep.subr.mxu0 %v2963
    %4860 = vmatpush2.msra.mxu0 %v2962
    %4861 = vmatprep.subr.mxu0 %v2955
    %4862 = vmatpush2.msra.mxu0 %v2954
    %4863 = vmatprep.subr.mxu0 %v2947
    %4864 = vmatpush2.msra.mxu0 %v2946
    %4865 = vmatprep.subr.mxu0 %v2939
    %4866 = vmatpush2.msra.mxu0 %v2938
    %4867 = vmatprep.subr.mxu0 %v2931
    %4868 = vmatpush2.msra.mxu0 %v2930
    %4869 = vmatprep.subr.mxu0 %v2923
    %4870 = vmatpush2.msra.mxu0 %v2922
    %4871 = vmatprep.mubr.f32.mxu0 %v4663
    %4872 = vmatmul.mubr.f32.gmra.mxu0 %v4635
    %v4873 = vpop.f32.mrf.mxu0
    %v4874 = vadd.f32 0.0, %v4873
    %v4875 = vpop.f32.mrf.mxu0
    %v4876 = vadd.f32 0.0, %v4875
    %4877 = vdwg.mxu0
    %4878 = vmatprep.subr.mxu0 %v2917
    %4879 = vmatpush1.msra.mxu0 %v2916
    %4880 = vmatprep.subr.mxu0 %v2909
    %4881 = vmatpush1.msra.mxu0 %v2908
    %4882 = vmatprep.subr.mxu0 %v2901
    %4883 = vmatpush1.msra.mxu0 %v2900
    %4884 = vmatprep.subr.mxu0 %v2893
    %4885 = vmatpush1.msra.mxu0 %v2892
    %4886 = vmatprep.subr.mxu0 %v2885
    %4887 = vmatpush1.msra.mxu0 %v2884
    %4888 = vmatprep.subr.mxu0 %v2877
    %4889 = vmatpush1.msra.mxu0 %v2876
    %4890 = vmatprep.subr.mxu0 %v2869
    %4891 = vmatpush1.msra.mxu0 %v2868
    %4892 = vmatprep.subr.mxu0 %v2861
    %4893 = vmatpush1.msra.mxu0 %v2860
    %4894 = vmatprep.subr.mxu0 %v2853
    %4895 = vmatpush1.msra.mxu0 %v2852
    %4896 = vmatprep.subr.mxu0 %v2845
    %4897 = vmatpush1.msra.mxu0 %v2844
    %4898 = vmatprep.subr.mxu0 %v2837
    %4899 = vmatpush1.msra.mxu0 %v2836
    %4900 = vmatprep.subr.mxu0 %v2829
    %4901 = vmatpush1.msra.mxu0 %v2828
    %4902 = vmatprep.subr.mxu0 %v2821
    %4903 = vmatpush1.msra.mxu0 %v2820
    %4904 = vmatprep.subr.mxu0 %v2813
    %4905 = vmatpush1.msra.mxu0 %v2812
    %4906 = vmatprep.subr.mxu0 %v2805
    %4907 = vmatpush1.msra.mxu0 %v2804
    %4908 = vmatprep.subr.mxu0 %v2797
    %4909 = vmatpush1.msra.mxu0 %v2796
    %4910 = vmatprep.subr.mxu0 %v3045
    %4911 = vmatpush2.msra.mxu0 %v3044
    %4912 = vmatprep.subr.mxu0 %v3037
    %4913 = vmatpush2.msra.mxu0 %v3036
    %4914 = vmatprep.subr.mxu0 %v3029
    %4915 = vmatpush2.msra.mxu0 %v3028
    %4916 = vmatprep.subr.mxu0 %v3021
    %4917 = vmatpush2.msra.mxu0 %v3020
    %4918 = vmatprep.subr.mxu0 %v3013
    %4919 = vmatpush2.msra.mxu0 %v3012
    %4920 = vmatprep.subr.mxu0 %v3005
    %4921 = vmatpush2.msra.mxu0 %v3004
    %4922 = vmatprep.subr.mxu0 %v2997
    %4923 = vmatpush2.msra.mxu0 %v2996
    %4924 = vmatprep.subr.mxu0 %v2989
    %4925 = vmatpush2.msra.mxu0 %v2988
    %4926 = vmatprep.subr.mxu0 %v2981
    %4927 = vmatpush2.msra.mxu0 %v2980
    %4928 = vmatprep.subr.mxu0 %v2973
    %4929 = vmatpush2.msra.mxu0 %v2972
    %4930 = vmatprep.subr.mxu0 %v2965
    %4931 = vmatpush2.msra.mxu0 %v2964
    %4932 = vmatprep.subr.mxu0 %v2957
    %4933 = vmatpush2.msra.mxu0 %v2956
    %4934 = vmatprep.subr.mxu0 %v2949
    %4935 = vmatpush2.msra.mxu0 %v2948
    %4936 = vmatprep.subr.mxu0 %v2941
    %4937 = vmatpush2.msra.mxu0 %v2940
    %4938 = vmatprep.subr.mxu0 %v2933
    %4939 = vmatpush2.msra.mxu0 %v2932
    %4940 = vmatprep.subr.mxu0 %v2925
    %4941 = vmatpush2.msra.mxu0 %v2924
    %4942 = vmatprep.mubr.f32.mxu0 %v4663
    %4943 = vmatmul.mubr.f32.gmra.mxu0 %v4635
    %v4944 = vpop.f32.mrf.mxu0
    %v4945 = vadd.f32 0.0, %v4944
    %v4946 = vpop.f32.mrf.mxu0
    %v4947 = vadd.f32 0.0, %v4946
    %4948 = vdwg.mxu0
    %v4949 = vld [vmem:[#allocation2 + $0x20] sm:$0xc]
    %v4950 = vld [vmem:[#allocation2 + $0x28] sm:$0xc]
    %v4951 = vld [vmem:[#allocation2 + $0x30] sm:$0xc]
    %v4952 = vld [vmem:[#allocation2 + $0x38] sm:$0xc]
    %v4957 = vrot.slane %v4949, 2
    %v4958 = vrot.slane %v4950, 2
    %v4959 = vrot.slane %v4951, 2
    %v4960 = vrot.slane %v4952, 2
    %v4965 = vadd.f32 %v4732, %v4957
    %v4966 = vadd.f32 %v4734, %v4958
    %v4967 = vadd.f32 %v4803, %v4959
    %v4968 = vadd.f32 %v4805, %v4960
    %v4969 = vxor.u32 %v4965, 2147483648
    %v4970 = vmul.f32 %v4969, 1.442695
    %v4971 = vpow.pop %v4970
    %v4972 = vadd.f32 %v4971, 1.0
    %v4973 = vrcp.pop %v4972
    %v4974 = vmul.f32 1.0, %v4973
    %v4975 = vxor.u32 %v4966, 2147483648
    %v4976 = vmul.f32 %v4975, 1.442695
    %v4977 = vpow.pop %v4976
    %v4978 = vadd.f32 %v4977, 1.0
    %v4979 = vrcp.pop %v4978
    %v4980 = vmul.f32 1.0, %v4979
    %v4981 = vtanh.pop %v4967
    %v4982 = vxor.u32 %v4968, 2147483648
    %v4983 = vmul.f32 %v4982, 1.442695
    %v4984 = vpow.pop %v4983
    %v4985 = vadd.f32 %v4984, 1.0
    %v4986 = vrcp.pop %v4985
    %v4987 = vmul.f32 1.0, %v4986
    %v4988 = vmul.f32 %v4980, %v4633
    %v4989 = vmul.f32 %v4974, %v4981
    %v4990 = vadd.f32 %v4988, %v4989
    %v4991 = vtanh.pop %v4990
    %v4992 = vmul.f32 %v4987, %v4991
    %v4993 = vadd.f32 %v4874, %v3560
    %v4994 = vadd.f32 %v4876, %v3564
    %v4995 = vadd.f32 %v4945, %v3568
    %v4996 = vadd.f32 %v4947, %v3572
    %v4997 = vxor.u32 %v4993, 2147483648
    %v4998 = vmul.f32 %v4997, 1.442695
    %v4999 = vpow.pop %v4998
    %v5000 = vadd.f32 %v4999, 1.0
    %v5001 = vrcp.pop %v5000
    %v5002 = vmul.f32 1.0, %v5001
    %v5003 = vxor.u32 %v4994, 2147483648
    %v5004 = vmul.f32 %v5003, 1.442695
    %v5005 = vpow.pop %v5004
    %v5006 = vadd.f32 %v5005, 1.0
    %v5007 = vrcp.pop %v5006
    %v5008 = vmul.f32 1.0, %v5007
    %v5009 = vtanh.pop %v4995
    %v5010 = vxor.u32 %v4996, 2147483648
    %v5011 = vmul.f32 %v5010, 1.442695
    %v5012 = vpow.pop %v5011
    %v5013 = vadd.f32 %v5012, 1.0
    %v5014 = vrcp.pop %v5013
    %v5015 = vmul.f32 1.0, %v5014
    %v5016 = vmul.f32 %v5008, %v4661
    %v5017 = vmul.f32 %v5002, %v5009
    %v5018 = vadd.f32 %v5016, %v5017
    %v5019 = vtanh.pop %v5018
    %v5020 = vmul.f32 %v5015, %v5019
    %5021 = vst [vmem:[#allocation3 + $0x8] sm:$0x3] %v5020
    %5022 = vmatprep.subr.mxu0 %v2911
    %5023 = vmatpush1.msra.mxu0 %v2910
    %5024 = vmatprep.subr.mxu0 %v2903
    %5025 = vmatpush1.msra.mxu0 %v2902
    %5026 = vmatprep.subr.mxu0 %v2895
    %5027 = vmatpush1.msra.mxu0 %v2894
    %5028 = vmatprep.subr.mxu0 %v2887
    %5029 = vmatpush1.msra.mxu0 %v2886
    %5030 = vmatprep.subr.mxu0 %v2879
    %5031 = vmatpush1.msra.mxu0 %v2878
    %5032 = vmatprep.subr.mxu0 %v2871
    %5033 = vmatpush1.msra.mxu0 %v2870
    %5034 = vmatprep.subr.mxu0 %v2863
    %5035 = vmatpush1.msra.mxu0 %v2862
    %5036 = vmatprep.subr.mxu0 %v2855
    %5037 = vmatpush1.msra.mxu0 %v2854
    %5038 = vmatprep.subr.mxu0 %v2847
    %5039 = vmatpush1.msra.mxu0 %v2846
    %5040 = vmatprep.subr.mxu0 %v2839
    %5041 = vmatpush1.msra.mxu0 %v2838
    %5042 = vmatprep.subr.mxu0 %v2831
    %5043 = vmatpush1.msra.mxu0 %v2830
    %5044 = vmatprep.subr.mxu0 %v2823
    %5045 = vmatpush1.msra.mxu0 %v2822
    %5046 = vmatprep.subr.mxu0 %v2815
    %5047 = vmatpush1.msra.mxu0 %v2814
    %5048 = vmatprep.subr.mxu0 %v2807
    %5049 = vmatpush1.msra.mxu0 %v2806
    %5050 = vmatprep.subr.mxu0 %v2799
    %5051 = vmatpush1.msra.mxu0 %v2798
    %5052 = vmatprep.subr.mxu0 %v2791
    %5053 = vmatpush1.msra.mxu0 %v2790
    %5054 = vmatprep.subr.mxu0 %v3039
    %5055 = vmatpush2.msra.mxu0 %v3038
    %5056 = vmatprep.subr.mxu0 %v3031
    %5057 = vmatpush2.msra.mxu0 %v3030
    %5058 = vmatprep.subr.mxu0 %v3023
    %5059 = vmatpush2.msra.mxu0 %v3022
    %5060 = vmatprep.subr.mxu0 %v3015
    %5061 = vmatpush2.msra.mxu0 %v3014
    %5062 = vmatprep.subr.mxu0 %v3007
    %5063 = vmatpush2.msra.mxu0 %v3006
    %5064 = vmatprep.subr.mxu0 %v2999
    %5065 = vmatpush2.msra.mxu0 %v2998
    %5066 = vmatprep.subr.mxu0 %v2991
    %5067 = vmatpush2.msra.mxu0 %v2990
    %5068 = vmatprep.subr.mxu0 %v2983
    %5069 = vmatpush2.msra.mxu0 %v2982
    %5070 = vmatprep.subr.mxu0 %v2975
    %5071 = vmatpush2.msra.mxu0 %v2974
    %5072 = vmatprep.subr.mxu0 %v2967
    %5073 = vmatpush2.msra.mxu0 %v2966
    %5074 = vmatprep.subr.mxu0 %v2959
    %5075 = vmatpush2.msra.mxu0 %v2958
    %5076 = vmatprep.subr.mxu0 %v2951
    %5077 = vmatpush2.msra.mxu0 %v2950
    %5078 = vmatprep.subr.mxu0 %v2943
    %5079 = vmatpush2.msra.mxu0 %v2942
    %5080 = vmatprep.subr.mxu0 %v2935
    %5081 = vmatpush2.msra.mxu0 %v2934
    %5082 = vmatprep.subr.mxu0 %v2927
    %5083 = vmatpush2.msra.mxu0 %v2926
    %5084 = vmatprep.subr.mxu0 %v2919
    %5085 = vmatpush2.msra.mxu0 %v2918
    %5086 = vmatprep.mubr.f32.mxu0 %v5020
    %5087 = vmatmul.mubr.f32.gmra.mxu0 %v4992
    %v5088 = vpop.f32.mrf.mxu0
    %v5089 = vadd.f32 0.0, %v5088
    %v5090 = vpop.f32.mrf.mxu0
    %v5091 = vadd.f32 0.0, %v5090
    %5092 = vdwg.mxu0
    %5093 = vmatprep.subr.mxu0 %v2913
    %5094 = vmatpush1.msra.mxu0 %v2912
    %5095 = vmatprep.subr.mxu0 %v2905
    %5096 = vmatpush1.msra.mxu0 %v2904
    %5097 = vmatprep.subr.mxu0 %v2897
    %5098 = vmatpush1.msra.mxu0 %v2896
    %5099 = vmatprep.subr.mxu0 %v2889
    %5100 = vmatpush1.msra.mxu0 %v2888
    %5101 = vmatprep.subr.mxu0 %v2881
    %5102 = vmatpush1.msra.mxu0 %v2880
    %5103 = vmatprep.subr.mxu0 %v2873
    %5104 = vmatpush1.msra.mxu0 %v2872
    %5105 = vmatprep.subr.mxu0 %v2865
    %5106 = vmatpush1.msra.mxu0 %v2864
    %5107 = vmatprep.subr.mxu0 %v2857
    %5108 = vmatpush1.msra.mxu0 %v2856
    %5109 = vmatprep.subr.mxu0 %v2849
    %5110 = vmatpush1.msra.mxu0 %v2848
    %5111 = vmatprep.subr.mxu0 %v2841
    %5112 = vmatpush1.msra.mxu0 %v2840
    %5113 = vmatprep.subr.mxu0 %v2833
    %5114 = vmatpush1.msra.mxu0 %v2832
    %5115 = vmatprep.subr.mxu0 %v2825
    %5116 = vmatpush1.msra.mxu0 %v2824
    %5117 = vmatprep.subr.mxu0 %v2817
    %5118 = vmatpush1.msra.mxu0 %v2816
    %5119 = vmatprep.subr.mxu0 %v2809
    %5120 = vmatpush1.msra.mxu0 %v2808
    %5121 = vmatprep.subr.mxu0 %v2801
    %5122 = vmatpush1.msra.mxu0 %v2800
    %5123 = vmatprep.subr.mxu0 %v2793
    %5124 = vmatpush1.msra.mxu0 %v2792
    %5125 = vmatprep.subr.mxu0 %v3041
    %5126 = vmatpush2.msra.mxu0 %v3040
    %5127 = vmatprep.subr.mxu0 %v3033
    %5128 = vmatpush2.msra.mxu0 %v3032
    %5129 = vmatprep.subr.mxu0 %v3025
    %5130 = vmatpush2.msra.mxu0 %v3024
    %5131 = vmatprep.subr.mxu0 %v3017
    %5132 = vmatpush2.msra.mxu0 %v3016
    %5133 = vmatprep.subr.mxu0 %v3009
    %5134 = vmatpush2.msra.mxu0 %v3008
    %5135 = vmatprep.subr.mxu0 %v3001
    %5136 = vmatpush2.msra.mxu0 %v3000
    %5137 = vmatprep.subr.mxu0 %v2993
    %5138 = vmatpush2.msra.mxu0 %v2992
    %5139 = vmatprep.subr.mxu0 %v2985
    %5140 = vmatpush2.msra.mxu0 %v2984
    %5141 = vmatprep.subr.mxu0 %v2977
    %5142 = vmatpush2.msra.mxu0 %v2976
    %5143 = vmatprep.subr.mxu0 %v2969
    %5144 = vmatpush2.msra.mxu0 %v2968
    %5145 = vmatprep.subr.mxu0 %v2961
    %5146 = vmatpush2.msra.mxu0 %v2960
    %5147 = vmatprep.subr.mxu0 %v2953
    %5148 = vmatpush2.msra.mxu0 %v2952
    %5149 = vmatprep.subr.mxu0 %v2945
    %5150 = vmatpush2.msra.mxu0 %v2944
    %5151 = vmatprep.subr.mxu0 %v2937
    %5152 = vmatpush2.msra.mxu0 %v2936
    %5153 = vmatprep.subr.mxu0 %v2929
    %5154 = vmatpush2.msra.mxu0 %v2928
    %5155 = vmatprep.subr.mxu0 %v2921
    %5156 = vmatpush2.msra.mxu0 %v2920
    %5157 = vmatprep.mubr.f32.mxu0 %v5020
    %5158 = vmatmul.mubr.f32.gmra.mxu0 %v4992
    %v5159 = vpop.f32.mrf.mxu0
    %v5160 = vadd.f32 0.0, %v5159
    %v5161 = vpop.f32.mrf.mxu0
    %v5162 = vadd.f32 0.0, %v5161
    %5163 = vdwg.mxu0
    %5164 = vmatprep.subr.mxu0 %v2915
    %5165 = vmatpush1.msra.mxu0 %v2914
    %5166 = vmatprep.subr.mxu0 %v2907
    %5167 = vmatpush1.msra.mxu0 %v2906
    %5168 = vmatprep.subr.mxu0 %v2899
    %5169 = vmatpush1.msra.mxu0 %v2898
    %5170 = vmatprep.subr.mxu0 %v2891
    %5171 = vmatpush1.msra.mxu0 %v2890
    %5172 = vmatprep.subr.mxu0 %v2883
    %5173 = vmatpush1.msra.mxu0 %v2882
    %5174 = vmatprep.subr.mxu0 %v2875
    %5175 = vmatpush1.msra.mxu0 %v2874
    %5176 = vmatprep.subr.mxu0 %v2867
    %5177 = vmatpush1.msra.mxu0 %v2866
    %5178 = vmatprep.subr.mxu0 %v2859
    %5179 = vmatpush1.msra.mxu0 %v2858
    %5180 = vmatprep.subr.mxu0 %v2851
    %5181 = vmatpush1.msra.mxu0 %v2850
    %5182 = vmatprep.subr.mxu0 %v2843
    %5183 = vmatpush1.msra.mxu0 %v2842
    %5184 = vmatprep.subr.mxu0 %v2835
    %5185 = vmatpush1.msra.mxu0 %v2834
    %5186 = vmatprep.subr.mxu0 %v2827
    %5187 = vmatpush1.msra.mxu0 %v2826
    %5188 = vmatprep.subr.mxu0 %v2819
    %5189 = vmatpush1.msra.mxu0 %v2818
    %5190 = vmatprep.subr.mxu0 %v2811
    %5191 = vmatpush1.msra.mxu0 %v2810
    %5192 = vmatprep.subr.mxu0 %v2803
    %5193 = vmatpush1.msra.mxu0 %v2802
    %5194 = vmatprep.subr.mxu0 %v2795
    %5195 = vmatpush1.msra.mxu0 %v2794
    %5196 = vmatprep.subr.mxu0 %v3043
    %5197 = vmatpush2.msra.mxu0 %v3042
    %5198 = vmatprep.subr.mxu0 %v3035
    %5199 = vmatpush2.msra.mxu0 %v3034
    %5200 = vmatprep.subr.mxu0 %v3027
    %5201 = vmatpush2.msra.mxu0 %v3026
    %5202 = vmatprep.subr.mxu0 %v3019
    %5203 = vmatpush2.msra.mxu0 %v3018
    %5204 = vmatprep.subr.mxu0 %v3011
    %5205 = vmatpush2.msra.mxu0 %v3010
    %5206 = vmatprep.subr.mxu0 %v3003
    %5207 = vmatpush2.msra.mxu0 %v3002
    %5208 = vmatprep.subr.mxu0 %v2995
    %5209 = vmatpush2.msra.mxu0 %v2994
    %5210 = vmatprep.subr.mxu0 %v2987
    %5211 = vmatpush2.msra.mxu0 %v2986
    %5212 = vmatprep.subr.mxu0 %v2979
    %5213 = vmatpush2.msra.mxu0 %v2978
    %5214 = vmatprep.subr.mxu0 %v2971
    %5215 = vmatpush2.msra.mxu0 %v2970
    %5216 = vmatprep.subr.mxu0 %v2963
    %5217 = vmatpush2.msra.mxu0 %v2962
    %5218 = vmatprep.subr.mxu0 %v2955
    %5219 = vmatpush2.msra.mxu0 %v2954
    %5220 = vmatprep.subr.mxu0 %v2947
    %5221 = vmatpush2.msra.mxu0 %v2946
    %5222 = vmatprep.subr.mxu0 %v2939
    %5223 = vmatpush2.msra.mxu0 %v2938
    %5224 = vmatprep.subr.mxu0 %v2931
    %5225 = vmatpush2.msra.mxu0 %v2930
    %5226 = vmatprep.subr.mxu0 %v2923
    %5227 = vmatpush2.msra.mxu0 %v2922
    %5228 = vmatprep.mubr.f32.mxu0 %v5020
    %5229 = vmatmul.mubr.f32.gmra.mxu0 %v4992
    %v5230 = vpop.f32.mrf.mxu0
    %v5231 = vadd.f32 0.0, %v5230
    %v5232 = vpop.f32.mrf.mxu0
    %v5233 = vadd.f32 0.0, %v5232
    %5234 = vdwg.mxu0
    %5235 = vmatprep.subr.mxu0 %v2917
    %5236 = vmatpush1.msra.mxu0 %v2916
    %5237 = vmatprep.subr.mxu0 %v2909
    %5238 = vmatpush1.msra.mxu0 %v2908
    %5239 = vmatprep.subr.mxu0 %v2901
    %5240 = vmatpush1.msra.mxu0 %v2900
    %5241 = vmatprep.subr.mxu0 %v2893
    %5242 = vmatpush1.msra.mxu0 %v2892
    %5243 = vmatprep.subr.mxu0 %v2885
    %5244 = vmatpush1.msra.mxu0 %v2884
    %5245 = vmatprep.subr.mxu0 %v2877
    %5246 = vmatpush1.msra.mxu0 %v2876
    %5247 = vmatprep.subr.mxu0 %v2869
    %5248 = vmatpush1.msra.mxu0 %v2868
    %5249 = vmatprep.subr.mxu0 %v2861
    %5250 = vmatpush1.msra.mxu0 %v2860
    %5251 = vmatprep.subr.mxu0 %v2853
    %5252 = vmatpush1.msra.mxu0 %v2852
    %5253 = vmatprep.subr.mxu0 %v2845
    %5254 = vmatpush1.msra.mxu0 %v2844
    %5255 = vmatprep.subr.mxu0 %v2837
    %5256 = vmatpush1.msra.mxu0 %v2836
    %5257 = vmatprep.subr.mxu0 %v2829
    %5258 = vmatpush1.msra.mxu0 %v2828
    %5259 = vmatprep.subr.mxu0 %v2821
    %5260 = vmatpush1.msra.mxu0 %v2820
    %5261 = vmatprep.subr.mxu0 %v2813
    %5262 = vmatpush1.msra.mxu0 %v2812
    %5263 = vmatprep.subr.mxu0 %v2805
    %5264 = vmatpush1.msra.mxu0 %v2804
    %5265 = vmatprep.subr.mxu0 %v2797
    %5266 = vmatpush1.msra.mxu0 %v2796
    %5267 = vmatprep.subr.mxu0 %v3045
    %5268 = vmatpush2.msra.mxu0 %v3044
    %5269 = vmatprep.subr.mxu0 %v3037
    %5270 = vmatpush2.msra.mxu0 %v3036
    %5271 = vmatprep.subr.mxu0 %v3029
    %5272 = vmatpush2.msra.mxu0 %v3028
    %5273 = vmatprep.subr.mxu0 %v3021
    %5274 = vmatpush2.msra.mxu0 %v3020
    %5275 = vmatprep.subr.mxu0 %v3013
    %5276 = vmatpush2.msra.mxu0 %v3012
    %5277 = vmatprep.subr.mxu0 %v3005
    %5278 = vmatpush2.msra.mxu0 %v3004
    %5279 = vmatprep.subr.mxu0 %v2997
    %5280 = vmatpush2.msra.mxu0 %v2996
    %5281 = vmatprep.subr.mxu0 %v2989
    %5282 = vmatpush2.msra.mxu0 %v2988
    %5283 = vmatprep.subr.mxu0 %v2981
    %5284 = vmatpush2.msra.mxu0 %v2980
    %5285 = vmatprep.subr.mxu0 %v2973
    %5286 = vmatpush2.msra.mxu0 %v2972
    %5287 = vmatprep.subr.mxu0 %v2965
    %5288 = vmatpush2.msra.mxu0 %v2964
    %5289 = vmatprep.subr.mxu0 %v2957
    %5290 = vmatpush2.msra.mxu0 %v2956
    %5291 = vmatprep.subr.mxu0 %v2949
    %5292 = vmatpush2.msra.mxu0 %v2948
    %5293 = vmatprep.subr.mxu0 %v2941
    %5294 = vmatpush2.msra.mxu0 %v2940
    %5295 = vmatprep.subr.mxu0 %v2933
    %5296 = vmatpush2.msra.mxu0 %v2932
    %5297 = vmatprep.subr.mxu0 %v2925
    %5298 = vmatpush2.msra.mxu0 %v2924
    %5299 = vmatprep.mubr.f32.mxu0 %v5020
    %5300 = vmatmul.mubr.f32.gmra.mxu0 %v4992
    %v5301 = vpop.f32.mrf.mxu0
    %v5302 = vadd.f32 0.0, %v5301
    %v5303 = vpop.f32.mrf.mxu0
    %v5304 = vadd.f32 0.0, %v5303
    %5305 = vdwg.mxu0
    %v5306 = vld [vmem:[#allocation2 + $0x20] sm:$0x30]
    %v5307 = vld [vmem:[#allocation2 + $0x28] sm:$0x30]
    %v5308 = vld [vmem:[#allocation2 + $0x30] sm:$0x30]
    %v5309 = vld [vmem:[#allocation2 + $0x38] sm:$0x30]
    %v5314 = vrot.slane %v5306, 4
    %v5315 = vrot.slane %v5307, 4
    %v5316 = vrot.slane %v5308, 4
    %v5317 = vrot.slane %v5309, 4
    %v5322 = vadd.f32 %v5089, %v5314
    %v5323 = vadd.f32 %v5091, %v5315
    %v5324 = vadd.f32 %v5160, %v5316
    %v5325 = vadd.f32 %v5162, %v5317
    %v5326 = vxor.u32 %v5322, 2147483648
    %v5327 = vmul.f32 %v5326, 1.442695
    %v5328 = vpow.pop %v5327
    %v5329 = vadd.f32 %v5328, 1.0
    %v5330 = vrcp.pop %v5329
    %v5331 = vmul.f32 1.0, %v5330
    %v5332 = vxor.u32 %v5323, 2147483648
    %v5333 = vmul.f32 %v5332, 1.442695
    %v5334 = vpow.pop %v5333
    %v5335 = vadd.f32 %v5334, 1.0
    %v5336 = vrcp.pop %v5335
    %v5337 = vmul.f32 1.0, %v5336
    %v5338 = vtanh.pop %v5324
    %v5339 = vxor.u32 %v5325, 2147483648
    %v5340 = vmul.f32 %v5339, 1.442695
    %v5341 = vpow.pop %v5340
    %v5342 = vadd.f32 %v5341, 1.0
    %v5343 = vrcp.pop %v5342
    %v5344 = vmul.f32 1.0, %v5343
    %v5345 = vmul.f32 %v5337, %v4990
    %v5346 = vmul.f32 %v5331, %v5338
    %v5347 = vadd.f32 %v5345, %v5346
    %v5348 = vtanh.pop %v5347
    %v5349 = vmul.f32 %v5344, %v5348
    %v5350 = vadd.f32 %v5231, %v3560
    %v5351 = vadd.f32 %v5233, %v3564
    %v5352 = vadd.f32 %v5302, %v3568
    %v5353 = vadd.f32 %v5304, %v3572
    %v5354 = vxor.u32 %v5350, 2147483648
    %v5355 = vmul.f32 %v5354, 1.442695
    %v5356 = vpow.pop %v5355
    %v5357 = vadd.f32 %v5356, 1.0
    %v5358 = vrcp.pop %v5357
    %v5359 = vmul.f32 1.0, %v5358
    %v5360 = vxor.u32 %v5351, 2147483648
    %v5361 = vmul.f32 %v5360, 1.442695
    %v5362 = vpow.pop %v5361
    %v5363 = vadd.f32 %v5362, 1.0
    %v5364 = vrcp.pop %v5363
    %v5365 = vmul.f32 1.0, %v5364
    %v5366 = vtanh.pop %v5352
    %v5367 = vxor.u32 %v5353, 2147483648
    %v5368 = vmul.f32 %v5367, 1.442695
    %v5369 = vpow.pop %v5368
    %v5370 = vadd.f32 %v5369, 1.0
    %v5371 = vrcp.pop %v5370
    %v5372 = vmul.f32 1.0, %v5371
    %v5373 = vmul.f32 %v5365, %v5018
    %v5374 = vmul.f32 %v5359, %v5366
    %v5375 = vadd.f32 %v5373, %v5374
    %v5376 = vtanh.pop %v5375
    %v5377 = vmul.f32 %v5372, %v5376
    %5378 = vst [vmem:[#allocation3 + $0xa] sm:$0x3] %v5377
    %5379 = vmatprep.subr.mxu0 %v2911
    %5380 = vmatpush1.msra.mxu0 %v2910
    %5381 = vmatprep.subr.mxu0 %v2903
    %5382 = vmatpush1.msra.mxu0 %v2902
    %5383 = vmatprep.subr.mxu0 %v2895
    %5384 = vmatpush1.msra.mxu0 %v2894
    %5385 = vmatprep.subr.mxu0 %v2887
    %5386 = vmatpush1.msra.mxu0 %v2886
    %5387 = vmatprep.subr.mxu0 %v2879
    %5388 = vmatpush1.msra.mxu0 %v2878
    %5389 = vmatprep.subr.mxu0 %v2871
    %5390 = vmatpush1.msra.mxu0 %v2870
    %5391 = vmatprep.subr.mxu0 %v2863
    %5392 = vmatpush1.msra.mxu0 %v2862
    %5393 = vmatprep.subr.mxu0 %v2855
    %5394 = vmatpush1.msra.mxu0 %v2854
    %5395 = vmatprep.subr.mxu0 %v2847
    %5396 = vmatpush1.msra.mxu0 %v2846
    %5397 = vmatprep.subr.mxu0 %v2839
    %5398 = vmatpush1.msra.mxu0 %v2838
    %5399 = vmatprep.subr.mxu0 %v2831
    %5400 = vmatpush1.msra.mxu0 %v2830
    %5401 = vmatprep.subr.mxu0 %v2823
    %5402 = vmatpush1.msra.mxu0 %v2822
    %5403 = vmatprep.subr.mxu0 %v2815
    %5404 = vmatpush1.msra.mxu0 %v2814
    %5405 = vmatprep.subr.mxu0 %v2807
    %5406 = vmatpush1.msra.mxu0 %v2806
    %5407 = vmatprep.subr.mxu0 %v2799
    %5408 = vmatpush1.msra.mxu0 %v2798
    %5409 = vmatprep.subr.mxu0 %v2791
    %5410 = vmatpush1.msra.mxu0 %v2790
    %5411 = vmatprep.subr.mxu0 %v3039
    %5412 = vmatpush2.msra.mxu0 %v3038
    %5413 = vmatprep.subr.mxu0 %v3031
    %5414 = vmatpush2.msra.mxu0 %v3030
    %5415 = vmatprep.subr.mxu0 %v3023
    %5416 = vmatpush2.msra.mxu0 %v3022
    %5417 = vmatprep.subr.mxu0 %v3015
    %5418 = vmatpush2.msra.mxu0 %v3014
    %5419 = vmatprep.subr.mxu0 %v3007
    %5420 = vmatpush2.msra.mxu0 %v3006
    %5421 = vmatprep.subr.mxu0 %v2999
    %5422 = vmatpush2.msra.mxu0 %v2998
    %5423 = vmatprep.subr.mxu0 %v2991
    %5424 = vmatpush2.msra.mxu0 %v2990
    %5425 = vmatprep.subr.mxu0 %v2983
    %5426 = vmatpush2.msra.mxu0 %v2982
    %5427 = vmatprep.subr.mxu0 %v2975
    %5428 = vmatpush2.msra.mxu0 %v2974
    %5429 = vmatprep.subr.mxu0 %v2967
    %5430 = vmatpush2.msra.mxu0 %v2966
    %5431 = vmatprep.subr.mxu0 %v2959
    %5432 = vmatpush2.msra.mxu0 %v2958
    %5433 = vmatprep.subr.mxu0 %v2951
    %5434 = vmatpush2.msra.mxu0 %v2950
    %5435 = vmatprep.subr.mxu0 %v2943
    %5436 = vmatpush2.msra.mxu0 %v2942
    %5437 = vmatprep.subr.mxu0 %v2935
    %5438 = vmatpush2.msra.mxu0 %v2934
    %5439 = vmatprep.subr.mxu0 %v2927
    %5440 = vmatpush2.msra.mxu0 %v2926
    %5441 = vmatprep.subr.mxu0 %v2919
    %5442 = vmatpush2.msra.mxu0 %v2918
    %5443 = vmatprep.mubr.f32.mxu0 %v5377
    %5444 = vmatmul.mubr.f32.gmra.mxu0 %v5349
    %v5445 = vpop.f32.mrf.mxu0
    %v5446 = vadd.f32 0.0, %v5445
    %v5447 = vpop.f32.mrf.mxu0
    %v5448 = vadd.f32 0.0, %v5447
    %5449 = vdwg.mxu0
    %5450 = vmatprep.subr.mxu0 %v2913
    %5451 = vmatpush1.msra.mxu0 %v2912
    %5452 = vmatprep.subr.mxu0 %v2905
    %5453 = vmatpush1.msra.mxu0 %v2904
    %5454 = vmatprep.subr.mxu0 %v2897
    %5455 = vmatpush1.msra.mxu0 %v2896
    %5456 = vmatprep.subr.mxu0 %v2889
    %5457 = vmatpush1.msra.mxu0 %v2888
    %5458 = vmatprep.subr.mxu0 %v2881
    %5459 = vmatpush1.msra.mxu0 %v2880
    %5460 = vmatprep.subr.mxu0 %v2873
    %5461 = vmatpush1.msra.mxu0 %v2872
    %5462 = vmatprep.subr.mxu0 %v2865
    %5463 = vmatpush1.msra.mxu0 %v2864
    %5464 = vmatprep.subr.mxu0 %v2857
    %5465 = vmatpush1.msra.mxu0 %v2856
    %5466 = vmatprep.subr.mxu0 %v2849
    %5467 = vmatpush1.msra.mxu0 %v2848
    %5468 = vmatprep.subr.mxu0 %v2841
    %5469 = vmatpush1.msra.mxu0 %v2840
    %5470 = vmatprep.subr.mxu0 %v2833
    %5471 = vmatpush1.msra.mxu0 %v2832
    %5472 = vmatprep.subr.mxu0 %v2825
    %5473 = vmatpush1.msra.mxu0 %v2824
    %5474 = vmatprep.subr.mxu0 %v2817
    %5475 = vmatpush1.msra.mxu0 %v2816
    %5476 = vmatprep.subr.mxu0 %v2809
    %5477 = vmatpush1.msra.mxu0 %v2808
    %5478 = vmatprep.subr.mxu0 %v2801
    %5479 = vmatpush1.msra.mxu0 %v2800
    %5480 = vmatprep.subr.mxu0 %v2793
    %5481 = vmatpush1.msra.mxu0 %v2792
    %5482 = vmatprep.subr.mxu0 %v3041
    %5483 = vmatpush2.msra.mxu0 %v3040
    %5484 = vmatprep.subr.mxu0 %v3033
    %5485 = vmatpush2.msra.mxu0 %v3032
    %5486 = vmatprep.subr.mxu0 %v3025
    %5487 = vmatpush2.msra.mxu0 %v3024
    %5488 = vmatprep.subr.mxu0 %v3017
    %5489 = vmatpush2.msra.mxu0 %v3016
    %5490 = vmatprep.subr.mxu0 %v3009
    %5491 = vmatpush2.msra.mxu0 %v3008
    %5492 = vmatprep.subr.mxu0 %v3001
    %5493 = vmatpush2.msra.mxu0 %v3000
    %5494 = vmatprep.subr.mxu0 %v2993
    %5495 = vmatpush2.msra.mxu0 %v2992
    %5496 = vmatprep.subr.mxu0 %v2985
    %5497 = vmatpush2.msra.mxu0 %v2984
    %5498 = vmatprep.subr.mxu0 %v2977
    %5499 = vmatpush2.msra.mxu0 %v2976
    %5500 = vmatprep.subr.mxu0 %v2969
    %5501 = vmatpush2.msra.mxu0 %v2968
    %5502 = vmatprep.subr.mxu0 %v2961
    %5503 = vmatpush2.msra.mxu0 %v2960
    %5504 = vmatprep.subr.mxu0 %v2953
    %5505 = vmatpush2.msra.mxu0 %v2952
    %5506 = vmatprep.subr.mxu0 %v2945
    %5507 = vmatpush2.msra.mxu0 %v2944
    %5508 = vmatprep.subr.mxu0 %v2937
    %5509 = vmatpush2.msra.mxu0 %v2936
    %5510 = vmatprep.subr.mxu0 %v2929
    %5511 = vmatpush2.msra.mxu0 %v2928
    %5512 = vmatprep.subr.mxu0 %v2921
    %5513 = vmatpush2.msra.mxu0 %v2920
    %5514 = vmatprep.mubr.f32.mxu0 %v5377
    %5515 = vmatmul.mubr.f32.gmra.mxu0 %v5349
    %v5516 = vpop.f32.mrf.mxu0
    %v5517 = vadd.f32 0.0, %v5516
    %v5518 = vpop.f32.mrf.mxu0
    %v5519 = vadd.f32 0.0, %v5518
    %5520 = vdwg.mxu0
    %5521 = vmatprep.subr.mxu0 %v2915
    %5522 = vmatpush1.msra.mxu0 %v2914
    %5523 = vmatprep.subr.mxu0 %v2907
    %5524 = vmatpush1.msra.mxu0 %v2906
    %5525 = vmatprep.subr.mxu0 %v2899
    %5526 = vmatpush1.msra.mxu0 %v2898
    %5527 = vmatprep.subr.mxu0 %v2891
    %5528 = vmatpush1.msra.mxu0 %v2890
    %5529 = vmatprep.subr.mxu0 %v2883
    %5530 = vmatpush1.msra.mxu0 %v2882
    %5531 = vmatprep.subr.mxu0 %v2875
    %5532 = vmatpush1.msra.mxu0 %v2874
    %5533 = vmatprep.subr.mxu0 %v2867
    %5534 = vmatpush1.msra.mxu0 %v2866
    %5535 = vmatprep.subr.mxu0 %v2859
    %5536 = vmatpush1.msra.mxu0 %v2858
    %5537 = vmatprep.subr.mxu0 %v2851
    %5538 = vmatpush1.msra.mxu0 %v2850
    %5539 = vmatprep.subr.mxu0 %v2843
    %5540 = vmatpush1.msra.mxu0 %v2842
    %5541 = vmatprep.subr.mxu0 %v2835
    %5542 = vmatpush1.msra.mxu0 %v2834
    %5543 = vmatprep.subr.mxu0 %v2827
    %5544 = vmatpush1.msra.mxu0 %v2826
    %5545 = vmatprep.subr.mxu0 %v2819
    %5546 = vmatpush1.msra.mxu0 %v2818
    %5547 = vmatprep.subr.mxu0 %v2811
    %5548 = vmatpush1.msra.mxu0 %v2810
    %5549 = vmatprep.subr.mxu0 %v2803
    %5550 = vmatpush1.msra.mxu0 %v2802
    %5551 = vmatprep.subr.mxu0 %v2795
    %5552 = vmatpush1.msra.mxu0 %v2794
    %5553 = vmatprep.subr.mxu0 %v3043
    %5554 = vmatpush2.msra.mxu0 %v3042
    %5555 = vmatprep.subr.mxu0 %v3035
    %5556 = vmatpush2.msra.mxu0 %v3034
    %5557 = vmatprep.subr.mxu0 %v3027
    %5558 = vmatpush2.msra.mxu0 %v3026
    %5559 = vmatprep.subr.mxu0 %v3019
    %5560 = vmatpush2.msra.mxu0 %v3018
    %5561 = vmatprep.subr.mxu0 %v3011
    %5562 = vmatpush2.msra.mxu0 %v3010
    %5563 = vmatprep.subr.mxu0 %v3003
    %5564 = vmatpush2.msra.mxu0 %v3002
    %5565 = vmatprep.subr.mxu0 %v2995
    %5566 = vmatpush2.msra.mxu0 %v2994
    %5567 = vmatprep.subr.mxu0 %v2987
    %5568 = vmatpush2.msra.mxu0 %v2986
    %5569 = vmatprep.subr.mxu0 %v2979
    %5570 = vmatpush2.msra.mxu0 %v2978
    %5571 = vmatprep.subr.mxu0 %v2971
    %5572 = vmatpush2.msra.mxu0 %v2970
    %5573 = vmatprep.subr.mxu0 %v2963
    %5574 = vmatpush2.msra.mxu0 %v2962
    %5575 = vmatprep.subr.mxu0 %v2955
    %5576 = vmatpush2.msra.mxu0 %v2954
    %5577 = vmatprep.subr.mxu0 %v2947
    %5578 = vmatpush2.msra.mxu0 %v2946
    %5579 = vmatprep.subr.mxu0 %v2939
    %5580 = vmatpush2.msra.mxu0 %v2938
    %5581 = vmatprep.subr.mxu0 %v2931
    %5582 = vmatpush2.msra.mxu0 %v2930
    %5583 = vmatprep.subr.mxu0 %v2923
    %5584 = vmatpush2.msra.mxu0 %v2922
    %5585 = vmatprep.mubr.f32.mxu0 %v5377
    %5586 = vmatmul.mubr.f32.gmra.mxu0 %v5349
    %v5587 = vpop.f32.mrf.mxu0
    %v5588 = vadd.f32 0.0, %v5587
    %v5589 = vpop.f32.mrf.mxu0
    %v5590 = vadd.f32 0.0, %v5589
    %5591 = vdwg.mxu0
    %5592 = vmatprep.subr.mxu0 %v2917
    %5593 = vmatpush1.msra.mxu0 %v2916
    %5594 = vmatprep.subr.mxu0 %v2909
    %5595 = vmatpush1.msra.mxu0 %v2908
    %5596 = vmatprep.subr.mxu0 %v2901
    %5597 = vmatpush1.msra.mxu0 %v2900
    %5598 = vmatprep.subr.mxu0 %v2893
    %5599 = vmatpush1.msra.mxu0 %v2892
    %5600 = vmatprep.subr.mxu0 %v2885
    %5601 = vmatpush1.msra.mxu0 %v2884
    %5602 = vmatprep.subr.mxu0 %v2877
    %5603 = vmatpush1.msra.mxu0 %v2876
    %5604 = vmatprep.subr.mxu0 %v2869
    %5605 = vmatpush1.msra.mxu0 %v2868
    %5606 = vmatprep.subr.mxu0 %v2861
    %5607 = vmatpush1.msra.mxu0 %v2860
    %5608 = vmatprep.subr.mxu0 %v2853
    %5609 = vmatpush1.msra.mxu0 %v2852
    %5610 = vmatprep.subr.mxu0 %v2845
    %5611 = vmatpush1.msra.mxu0 %v2844
    %5612 = vmatprep.subr.mxu0 %v2837
    %5613 = vmatpush1.msra.mxu0 %v2836
    %5614 = vmatprep.subr.mxu0 %v2829
    %5615 = vmatpush1.msra.mxu0 %v2828
    %5616 = vmatprep.subr.mxu0 %v2821
    %5617 = vmatpush1.msra.mxu0 %v2820
    %5618 = vmatprep.subr.mxu0 %v2813
    %5619 = vmatpush1.msra.mxu0 %v2812
    %5620 = vmatprep.subr.mxu0 %v2805
    %5621 = vmatpush1.msra.mxu0 %v2804
    %5622 = vmatprep.subr.mxu0 %v2797
    %5623 = vmatpush1.msra.mxu0 %v2796
    %5624 = vmatprep.subr.mxu0 %v3045
    %5625 = vmatpush2.msra.mxu0 %v3044
    %5626 = vmatprep.subr.mxu0 %v3037
    %5627 = vmatpush2.msra.mxu0 %v3036
    %5628 = vmatprep.subr.mxu0 %v3029
    %5629 = vmatpush2.msra.mxu0 %v3028
    %5630 = vmatprep.subr.mxu0 %v3021
    %5631 = vmatpush2.msra.mxu0 %v3020
    %5632 = vmatprep.subr.mxu0 %v3013
    %5633 = vmatpush2.msra.mxu0 %v3012
    %5634 = vmatprep.subr.mxu0 %v3005
    %5635 = vmatpush2.msra.mxu0 %v3004
    %5636 = vmatprep.subr.mxu0 %v2997
    %5637 = vmatpush2.msra.mxu0 %v2996
    %5638 = vmatprep.subr.mxu0 %v2989
    %5639 = vmatpush2.msra.mxu0 %v2988
    %5640 = vmatprep.subr.mxu0 %v2981
    %5641 = vmatpush2.msra.mxu0 %v2980
    %5642 = vmatprep.subr.mxu0 %v2973
    %5643 = vmatpush2.msra.mxu0 %v2972
    %5644 = vmatprep.subr.mxu0 %v2965
    %5645 = vmatpush2.msra.mxu0 %v2964
    %5646 = vmatprep.subr.mxu0 %v2957
    %5647 = vmatpush2.msra.mxu0 %v2956
    %5648 = vmatprep.subr.mxu0 %v2949
    %5649 = vmatpush2.msra.mxu0 %v2948
    %5650 = vmatprep.subr.mxu0 %v2941
    %5651 = vmatpush2.msra.mxu0 %v2940
    %5652 = vmatprep.subr.mxu0 %v2933
    %5653 = vmatpush2.msra.mxu0 %v2932
    %5654 = vmatprep.subr.mxu0 %v2925
    %5655 = vmatpush2.msra.mxu0 %v2924
    %5656 = vmatprep.mubr.f32.mxu0 %v5377
    %5657 = vmatmul.mubr.f32.gmra.mxu0 %v5349
    %v5658 = vpop.f32.mrf.mxu0
    %v5659 = vadd.f32 0.0, %v5658
    %v5660 = vpop.f32.mrf.mxu0
    %v5661 = vadd.f32 0.0, %v5660
    %5662 = vdwg.mxu0
    %v5663 = vld [vmem:[#allocation2 + $0x20] sm:$0xc0]
    %v5664 = vld [vmem:[#allocation2 + $0x28] sm:$0xc0]
    %v5665 = vld [vmem:[#allocation2 + $0x30] sm:$0xc0]
    %v5666 = vld [vmem:[#allocation2 + $0x38] sm:$0xc0]
    %v5671 = vrot.slane %v5663, 6
    %v5672 = vrot.slane %v5664, 6
    %v5673 = vrot.slane %v5665, 6
    %v5674 = vrot.slane %v5666, 6
    %v5679 = vadd.f32 %v5446, %v5671
    %v5680 = vadd.f32 %v5448, %v5672
    %v5681 = vadd.f32 %v5517, %v5673
    %v5682 = vadd.f32 %v5519, %v5674
    %v5683 = vxor.u32 %v5679, 2147483648
    %v5684 = vmul.f32 %v5683, 1.442695
    %v5685 = vpow.pop %v5684
    %v5686 = vadd.f32 %v5685, 1.0
    %v5687 = vrcp.pop %v5686
    %v5688 = vmul.f32 1.0, %v5687
    %v5689 = vxor.u32 %v5680, 2147483648
    %v5690 = vmul.f32 %v5689, 1.442695
    %v5691 = vpow.pop %v5690
    %v5692 = vadd.f32 %v5691, 1.0
    %v5693 = vrcp.pop %v5692
    %v5694 = vmul.f32 1.0, %v5693
    %v5695 = vtanh.pop %v5681
    %v5696 = vxor.u32 %v5682, 2147483648
    %v5697 = vmul.f32 %v5696, 1.442695
    %v5698 = vpow.pop %v5697
    %v5699 = vadd.f32 %v5698, 1.0
    %v5700 = vrcp.pop %v5699
    %v5701 = vmul.f32 1.0, %v5700
    %v5702 = vmul.f32 %v5694, %v5347
    %v5703 = vmul.f32 %v5688, %v5695
    %v5704 = vadd.f32 %v5702, %v5703
    %v5705 = vtanh.pop %v5704
    %v5706 = vmul.f32 %v5701, %v5705
    %v5707 = vadd.f32 %v5588, %v3560
    %v5708 = vadd.f32 %v5590, %v3564
    %v5709 = vadd.f32 %v5659, %v3568
    %v5710 = vadd.f32 %v5661, %v3572
    %v5711 = vxor.u32 %v5707, 2147483648
    %v5712 = vmul.f32 %v5711, 1.442695
    %v5713 = vpow.pop %v5712
    %v5714 = vadd.f32 %v5713, 1.0
    %v5715 = vrcp.pop %v5714
    %v5716 = vmul.f32 1.0, %v5715
    %v5717 = vxor.u32 %v5708, 2147483648
    %v5718 = vmul.f32 %v5717, 1.442695
    %v5719 = vpow.pop %v5718
    %v5720 = vadd.f32 %v5719, 1.0
    %v5721 = vrcp.pop %v5720
    %v5722 = vmul.f32 1.0, %v5721
    %v5723 = vtanh.pop %v5709
    %v5724 = vxor.u32 %v5710, 2147483648
    %v5725 = vmul.f32 %v5724, 1.442695
    %v5726 = vpow.pop %v5725
    %v5727 = vadd.f32 %v5726, 1.0
    %v5728 = vrcp.pop %v5727
    %v5729 = vmul.f32 1.0, %v5728
    %v5730 = vmul.f32 %v5722, %v5375
    %v5731 = vmul.f32 %v5716, %v5723
    %v5732 = vadd.f32 %v5730, %v5731
    %v5733 = vtanh.pop %v5732
    %v5734 = vmul.f32 %v5729, %v5733
    %5735 = vst [vmem:[#allocation3 + $0xc] sm:$0x3] %v5734
    %5736 = vmatprep.subr.mxu0 %v2911
    %5737 = vmatpush1.msra.mxu0 %v2910
    %5738 = vmatprep.subr.mxu0 %v2903
    %5739 = vmatpush1.msra.mxu0 %v2902
    %5740 = vmatprep.subr.mxu0 %v2895
    %5741 = vmatpush1.msra.mxu0 %v2894
    %5742 = vmatprep.subr.mxu0 %v2887
    %5743 = vmatpush1.msra.mxu0 %v2886
    %5744 = vmatprep.subr.mxu0 %v2879
    %5745 = vmatpush1.msra.mxu0 %v2878
    %5746 = vmatprep.subr.mxu0 %v2871
    %5747 = vmatpush1.msra.mxu0 %v2870
    %5748 = vmatprep.subr.mxu0 %v2863
    %5749 = vmatpush1.msra.mxu0 %v2862
    %5750 = vmatprep.subr.mxu0 %v2855
    %5751 = vmatpush1.msra.mxu0 %v2854
    %5752 = vmatprep.subr.mxu0 %v2847
    %5753 = vmatpush1.msra.mxu0 %v2846
    %5754 = vmatprep.subr.mxu0 %v2839
    %5755 = vmatpush1.msra.mxu0 %v2838
    %5756 = vmatprep.subr.mxu0 %v2831
    %5757 = vmatpush1.msra.mxu0 %v2830
    %5758 = vmatprep.subr.mxu0 %v2823
    %5759 = vmatpush1.msra.mxu0 %v2822
    %5760 = vmatprep.subr.mxu0 %v2815
    %5761 = vmatpush1.msra.mxu0 %v2814
    %5762 = vmatprep.subr.mxu0 %v2807
    %5763 = vmatpush1.msra.mxu0 %v2806
    %5764 = vmatprep.subr.mxu0 %v2799
    %5765 = vmatpush1.msra.mxu0 %v2798
    %5766 = vmatprep.subr.mxu0 %v2791
    %5767 = vmatpush1.msra.mxu0 %v2790
    %5768 = vmatprep.subr.mxu0 %v3039
    %5769 = vmatpush2.msra.mxu0 %v3038
    %5770 = vmatprep.subr.mxu0 %v3031
    %5771 = vmatpush2.msra.mxu0 %v3030
    %5772 = vmatprep.subr.mxu0 %v3023
    %5773 = vmatpush2.msra.mxu0 %v3022
    %5774 = vmatprep.subr.mxu0 %v3015
    %5775 = vmatpush2.msra.mxu0 %v3014
    %5776 = vmatprep.subr.mxu0 %v3007
    %5777 = vmatpush2.msra.mxu0 %v3006
    %5778 = vmatprep.subr.mxu0 %v2999
    %5779 = vmatpush2.msra.mxu0 %v2998
    %5780 = vmatprep.subr.mxu0 %v2991
    %5781 = vmatpush2.msra.mxu0 %v2990
    %5782 = vmatprep.subr.mxu0 %v2983
    %5783 = vmatpush2.msra.mxu0 %v2982
    %5784 = vmatprep.subr.mxu0 %v2975
    %5785 = vmatpush2.msra.mxu0 %v2974
    %5786 = vmatprep.subr.mxu0 %v2967
    %5787 = vmatpush2.msra.mxu0 %v2966
    %5788 = vmatprep.subr.mxu0 %v2959
    %5789 = vmatpush2.msra.mxu0 %v2958
    %5790 = vmatprep.subr.mxu0 %v2951
    %5791 = vmatpush2.msra.mxu0 %v2950
    %5792 = vmatprep.subr.mxu0 %v2943
    %5793 = vmatpush2.msra.mxu0 %v2942
    %5794 = vmatprep.subr.mxu0 %v2935
    %5795 = vmatpush2.msra.mxu0 %v2934
    %5796 = vmatprep.subr.mxu0 %v2927
    %5797 = vmatpush2.msra.mxu0 %v2926
    %5798 = vmatprep.subr.mxu0 %v2919
    %5799 = vmatpush2.msra.mxu0 %v2918
    %5800 = vmatprep.mubr.f32.mxu0 %v5734
    %5801 = vmatmul.mubr.f32.gmra.mxu0 %v5706
    %v5802 = vpop.f32.mrf.mxu0
    %v5803 = vadd.f32 0.0, %v5802
    %v5804 = vpop.f32.mrf.mxu0
    %v5805 = vadd.f32 0.0, %v5804
    %5806 = vdwg.mxu0
    %5807 = vmatprep.subr.mxu0 %v2913
    %5808 = vmatpush1.msra.mxu0 %v2912
    %5809 = vmatprep.subr.mxu0 %v2905
    %5810 = vmatpush1.msra.mxu0 %v2904
    %5811 = vmatprep.subr.mxu0 %v2897
    %5812 = vmatpush1.msra.mxu0 %v2896
    %5813 = vmatprep.subr.mxu0 %v2889
    %5814 = vmatpush1.msra.mxu0 %v2888
    %5815 = vmatprep.subr.mxu0 %v2881
    %5816 = vmatpush1.msra.mxu0 %v2880
    %5817 = vmatprep.subr.mxu0 %v2873
    %5818 = vmatpush1.msra.mxu0 %v2872
    %5819 = vmatprep.subr.mxu0 %v2865
    %5820 = vmatpush1.msra.mxu0 %v2864
    %5821 = vmatprep.subr.mxu0 %v2857
    %5822 = vmatpush1.msra.mxu0 %v2856
    %5823 = vmatprep.subr.mxu0 %v2849
    %5824 = vmatpush1.msra.mxu0 %v2848
    %5825 = vmatprep.subr.mxu0 %v2841
    %5826 = vmatpush1.msra.mxu0 %v2840
    %5827 = vmatprep.subr.mxu0 %v2833
    %5828 = vmatpush1.msra.mxu0 %v2832
    %5829 = vmatprep.subr.mxu0 %v2825
    %5830 = vmatpush1.msra.mxu0 %v2824
    %5831 = vmatprep.subr.mxu0 %v2817
    %5832 = vmatpush1.msra.mxu0 %v2816
    %5833 = vmatprep.subr.mxu0 %v2809
    %5834 = vmatpush1.msra.mxu0 %v2808
    %5835 = vmatprep.subr.mxu0 %v2801
    %5836 = vmatpush1.msra.mxu0 %v2800
    %5837 = vmatprep.subr.mxu0 %v2793
    %5838 = vmatpush1.msra.mxu0 %v2792
    %5839 = vmatprep.subr.mxu0 %v3041
    %5840 = vmatpush2.msra.mxu0 %v3040
    %5841 = vmatprep.subr.mxu0 %v3033
    %5842 = vmatpush2.msra.mxu0 %v3032
    %5843 = vmatprep.subr.mxu0 %v3025
    %5844 = vmatpush2.msra.mxu0 %v3024
    %5845 = vmatprep.subr.mxu0 %v3017
    %5846 = vmatpush2.msra.mxu0 %v3016
    %5847 = vmatprep.subr.mxu0 %v3009
    %5848 = vmatpush2.msra.mxu0 %v3008
    %5849 = vmatprep.subr.mxu0 %v3001
    %5850 = vmatpush2.msra.mxu0 %v3000
    %5851 = vmatprep.subr.mxu0 %v2993
    %5852 = vmatpush2.msra.mxu0 %v2992
    %5853 = vmatprep.subr.mxu0 %v2985
    %5854 = vmatpush2.msra.mxu0 %v2984
    %5855 = vmatprep.subr.mxu0 %v2977
    %5856 = vmatpush2.msra.mxu0 %v2976
    %5857 = vmatprep.subr.mxu0 %v2969
    %5858 = vmatpush2.msra.mxu0 %v2968
    %5859 = vmatprep.subr.mxu0 %v2961
    %5860 = vmatpush2.msra.mxu0 %v2960
    %5861 = vmatprep.subr.mxu0 %v2953
    %5862 = vmatpush2.msra.mxu0 %v2952
    %5863 = vmatprep.subr.mxu0 %v2945
    %5864 = vmatpush2.msra.mxu0 %v2944
    %5865 = vmatprep.subr.mxu0 %v2937
    %5866 = vmatpush2.msra.mxu0 %v2936
    %5867 = vmatprep.subr.mxu0 %v2929
    %5868 = vmatpush2.msra.mxu0 %v2928
    %5869 = vmatprep.subr.mxu0 %v2921
    %5870 = vmatpush2.msra.mxu0 %v2920
    %5871 = vmatprep.mubr.f32.mxu0 %v5734
    %5872 = vmatmul.mubr.f32.gmra.mxu0 %v5706
    %v5873 = vpop.f32.mrf.mxu0
    %v5874 = vadd.f32 0.0, %v5873
    %v5875 = vpop.f32.mrf.mxu0
    %v5876 = vadd.f32 0.0, %v5875
    %5877 = vdwg.mxu0
    %5878 = vmatprep.subr.mxu0 %v2915
    %5879 = vmatpush1.msra.mxu0 %v2914
    %5880 = vmatprep.subr.mxu0 %v2907
    %5881 = vmatpush1.msra.mxu0 %v2906
    %5882 = vmatprep.subr.mxu0 %v2899
    %5883 = vmatpush1.msra.mxu0 %v2898
    %5884 = vmatprep.subr.mxu0 %v2891
    %5885 = vmatpush1.msra.mxu0 %v2890
    %5886 = vmatprep.subr.mxu0 %v2883
    %5887 = vmatpush1.msra.mxu0 %v2882
    %5888 = vmatprep.subr.mxu0 %v2875
    %5889 = vmatpush1.msra.mxu0 %v2874
    %5890 = vmatprep.subr.mxu0 %v2867
    %5891 = vmatpush1.msra.mxu0 %v2866
    %5892 = vmatprep.subr.mxu0 %v2859
    %5893 = vmatpush1.msra.mxu0 %v2858
    %5894 = vmatprep.subr.mxu0 %v2851
    %5895 = vmatpush1.msra.mxu0 %v2850
    %5896 = vmatprep.subr.mxu0 %v2843
    %5897 = vmatpush1.msra.mxu0 %v2842
    %5898 = vmatprep.subr.mxu0 %v2835
    %5899 = vmatpush1.msra.mxu0 %v2834
    %5900 = vmatprep.subr.mxu0 %v2827
    %5901 = vmatpush1.msra.mxu0 %v2826
    %5902 = vmatprep.subr.mxu0 %v2819
    %5903 = vmatpush1.msra.mxu0 %v2818
    %5904 = vmatprep.subr.mxu0 %v2811
    %5905 = vmatpush1.msra.mxu0 %v2810
    %5906 = vmatprep.subr.mxu0 %v2803
    %5907 = vmatpush1.msra.mxu0 %v2802
    %5908 = vmatprep.subr.mxu0 %v2795
    %5909 = vmatpush1.msra.mxu0 %v2794
    %5910 = vmatprep.subr.mxu0 %v3043
    %5911 = vmatpush2.msra.mxu0 %v3042
    %5912 = vmatprep.subr.mxu0 %v3035
    %5913 = vmatpush2.msra.mxu0 %v3034
    %5914 = vmatprep.subr.mxu0 %v3027
    %5915 = vmatpush2.msra.mxu0 %v3026
    %5916 = vmatprep.subr.mxu0 %v3019
    %5917 = vmatpush2.msra.mxu0 %v3018
    %5918 = vmatprep.subr.mxu0 %v3011
    %5919 = vmatpush2.msra.mxu0 %v3010
    %5920 = vmatprep.subr.mxu0 %v3003
    %5921 = vmatpush2.msra.mxu0 %v3002
    %5922 = vmatprep.subr.mxu0 %v2995
    %5923 = vmatpush2.msra.mxu0 %v2994
    %5924 = vmatprep.subr.mxu0 %v2987
    %5925 = vmatpush2.msra.mxu0 %v2986
    %5926 = vmatprep.subr.mxu0 %v2979
    %5927 = vmatpush2.msra.mxu0 %v2978
    %5928 = vmatprep.subr.mxu0 %v2971
    %5929 = vmatpush2.msra.mxu0 %v2970
    %5930 = vmatprep.subr.mxu0 %v2963
    %5931 = vmatpush2.msra.mxu0 %v2962
    %5932 = vmatprep.subr.mxu0 %v2955
    %5933 = vmatpush2.msra.mxu0 %v2954
    %5934 = vmatprep.subr.mxu0 %v2947
    %5935 = vmatpush2.msra.mxu0 %v2946
    %5936 = vmatprep.subr.mxu0 %v2939
    %5937 = vmatpush2.msra.mxu0 %v2938
    %5938 = vmatprep.subr.mxu0 %v2931
    %5939 = vmatpush2.msra.mxu0 %v2930
    %5940 = vmatprep.subr.mxu0 %v2923
    %5941 = vmatpush2.msra.mxu0 %v2922
    %5942 = vmatprep.mubr.f32.mxu0 %v5734
    %5943 = vmatmul.mubr.f32.gmra.mxu0 %v5706
    %v5944 = vpop.f32.mrf.mxu0
    %v5945 = vadd.f32 0.0, %v5944
    %v5946 = vpop.f32.mrf.mxu0
    %v5947 = vadd.f32 0.0, %v5946
    %5948 = vdwg.mxu0
    %5949 = vmatprep.subr.mxu0 %v2917
    %5950 = vmatpush1.msra.mxu0 %v2916
    %5951 = vmatprep.subr.mxu0 %v2909
    %5952 = vmatpush1.msra.mxu0 %v2908
    %5953 = vmatprep.subr.mxu0 %v2901
    %5954 = vmatpush1.msra.mxu0 %v2900
    %5955 = vmatprep.subr.mxu0 %v2893
    %5956 = vmatpush1.msra.mxu0 %v2892
    %5957 = vmatprep.subr.mxu0 %v2885
    %5958 = vmatpush1.msra.mxu0 %v2884
    %5959 = vmatprep.subr.mxu0 %v2877
    %5960 = vmatpush1.msra.mxu0 %v2876
    %5961 = vmatprep.subr.mxu0 %v2869
    %5962 = vmatpush1.msra.mxu0 %v2868
    %5963 = vmatprep.subr.mxu0 %v2861
    %5964 = vmatpush1.msra.mxu0 %v2860
    %5965 = vmatprep.subr.mxu0 %v2853
    %5966 = vmatpush1.msra.mxu0 %v2852
    %5967 = vmatprep.subr.mxu0 %v2845
    %5968 = vmatpush1.msra.mxu0 %v2844
    %5969 = vmatprep.subr.mxu0 %v2837
    %5970 = vmatpush1.msra.mxu0 %v2836
    %5971 = vmatprep.subr.mxu0 %v2829
    %5972 = vmatpush1.msra.mxu0 %v2828
    %5973 = vmatprep.subr.mxu0 %v2821
    %5974 = vmatpush1.msra.mxu0 %v2820
    %5975 = vmatprep.subr.mxu0 %v2813
    %5976 = vmatpush1.msra.mxu0 %v2812
    %5977 = vmatprep.subr.mxu0 %v2805
    %5978 = vmatpush1.msra.mxu0 %v2804
    %5979 = vmatprep.subr.mxu0 %v2797
    %5980 = vmatpush1.msra.mxu0 %v2796
    %5981 = vmatprep.subr.mxu0 %v3045
    %5982 = vmatpush2.msra.mxu0 %v3044
    %5983 = vmatprep.subr.mxu0 %v3037
    %5984 = vmatpush2.msra.mxu0 %v3036
    %5985 = vmatprep.subr.mxu0 %v3029
    %5986 = vmatpush2.msra.mxu0 %v3028
    %5987 = vmatprep.subr.mxu0 %v3021
    %5988 = vmatpush2.msra.mxu0 %v3020
    %5989 = vmatprep.subr.mxu0 %v3013
    %5990 = vmatpush2.msra.mxu0 %v3012
    %5991 = vmatprep.subr.mxu0 %v3005
    %5992 = vmatpush2.msra.mxu0 %v3004
    %5993 = vmatprep.subr.mxu0 %v2997
    %5994 = vmatpush2.msra.mxu0 %v2996
    %5995 = vmatprep.subr.mxu0 %v2989
    %5996 = vmatpush2.msra.mxu0 %v2988
    %5997 = vmatprep.subr.mxu0 %v2981
    %5998 = vmatpush2.msra.mxu0 %v2980
    %5999 = vmatprep.subr.mxu0 %v2973
    %6000 = vmatpush2.msra.mxu0 %v2972
    %6001 = vmatprep.subr.mxu0 %v2965
    %6002 = vmatpush2.msra.mxu0 %v2964
    %6003 = vmatprep.subr.mxu0 %v2957
    %6004 = vmatpush2.msra.mxu0 %v2956
    %6005 = vmatprep.subr.mxu0 %v2949
    %6006 = vmatpush2.msra.mxu0 %v2948
    %6007 = vmatprep.subr.mxu0 %v2941
    %6008 = vmatpush2.msra.mxu0 %v2940
    %6009 = vmatprep.subr.mxu0 %v2933
    %6010 = vmatpush2.msra.mxu0 %v2932
    %6011 = vmatprep.subr.mxu0 %v2925
    %6012 = vmatpush2.msra.mxu0 %v2924
    %6013 = vmatprep.mubr.f32.mxu0 %v5734
    %6014 = vmatmul.mubr.f32.gmra.mxu0 %v5706
    %v6015 = vpop.f32.mrf.mxu0
    %v6016 = vadd.f32 0.0, %v6015
    %v6017 = vpop.f32.mrf.mxu0
    %v6018 = vadd.f32 0.0, %v6017
    %6019 = vdwg.mxu0
    %v6020 = vld [vmem:[#allocation2 + $0x40] sm:$0x3]
    %v6021 = vld [vmem:[#allocation2 + $0x48] sm:$0x3]
    %v6022 = vld [vmem:[#allocation2 + $0x50] sm:$0x3]
    %v6023 = vld [vmem:[#allocation2 + $0x58] sm:$0x3]
    %v6024 = vadd.f32 %v5803, %v6020
    %v6025 = vadd.f32 %v5805, %v6021
    %v6026 = vadd.f32 %v5874, %v6022
    %v6027 = vadd.f32 %v5876, %v6023
    %v6028 = vxor.u32 %v6024, 2147483648
    %v6029 = vmul.f32 %v6028, 1.442695
    %v6030 = vpow.pop %v6029
    %v6031 = vadd.f32 %v6030, 1.0
    %v6032 = vrcp.pop %v6031
    %v6033 = vmul.f32 1.0, %v6032
    %v6034 = vxor.u32 %v6025, 2147483648
    %v6035 = vmul.f32 %v6034, 1.442695
    %v6036 = vpow.pop %v6035
    %v6037 = vadd.f32 %v6036, 1.0
    %v6038 = vrcp.pop %v6037
    %v6039 = vmul.f32 1.0, %v6038
    %v6040 = vtanh.pop %v6026
    %v6041 = vxor.u32 %v6027, 2147483648
    %v6042 = vmul.f32 %v6041, 1.442695
    %v6043 = vpow.pop %v6042
    %v6044 = vadd.f32 %v6043, 1.0
    %v6045 = vrcp.pop %v6044
    %v6046 = vmul.f32 1.0, %v6045
    %v6047 = vmul.f32 %v6039, %v5704
    %v6048 = vmul.f32 %v6033, %v6040
    %v6049 = vadd.f32 %v6047, %v6048
    %v6050 = vtanh.pop %v6049
    %v6051 = vmul.f32 %v6046, %v6050
    %v6052 = vadd.f32 %v5945, %v3560
    %v6053 = vadd.f32 %v5947, %v3564
    %v6054 = vadd.f32 %v6016, %v3568
    %v6055 = vadd.f32 %v6018, %v3572
    %v6056 = vxor.u32 %v6052, 2147483648
    %v6057 = vmul.f32 %v6056, 1.442695
    %v6058 = vpow.pop %v6057
    %v6059 = vadd.f32 %v6058, 1.0
    %v6060 = vrcp.pop %v6059
    %v6061 = vmul.f32 1.0, %v6060
    %v6062 = vxor.u32 %v6053, 2147483648
    %v6063 = vmul.f32 %v6062, 1.442695
    %v6064 = vpow.pop %v6063
    %v6065 = vadd.f32 %v6064, 1.0
    %v6066 = vrcp.pop %v6065
    %v6067 = vmul.f32 1.0, %v6066
    %v6068 = vtanh.pop %v6054
    %v6069 = vxor.u32 %v6055, 2147483648
    %v6070 = vmul.f32 %v6069, 1.442695
    %v6071 = vpow.pop %v6070
    %v6072 = vadd.f32 %v6071, 1.0
    %v6073 = vrcp.pop %v6072
    %v6074 = vmul.f32 1.0, %v6073
    %v6075 = vmul.f32 %v6067, %v5732
    %v6076 = vmul.f32 %v6061, %v6068
    %v6077 = vadd.f32 %v6075, %v6076
    %v6078 = vtanh.pop %v6077
    %v6079 = vmul.f32 %v6074, %v6078
    %6080 = vst [vmem:[#allocation3 + $0xe] sm:$0x3] %v6079
    %6081 = vmatprep.subr.mxu0 %v2911
    %6082 = vmatpush1.msra.mxu0 %v2910
    %6083 = vmatprep.subr.mxu0 %v2903
    %6084 = vmatpush1.msra.mxu0 %v2902
    %6085 = vmatprep.subr.mxu0 %v2895
    %6086 = vmatpush1.msra.mxu0 %v2894
    %6087 = vmatprep.subr.mxu0 %v2887
    %6088 = vmatpush1.msra.mxu0 %v2886
    %6089 = vmatprep.subr.mxu0 %v2879
    %6090 = vmatpush1.msra.mxu0 %v2878
    %6091 = vmatprep.subr.mxu0 %v2871
    %6092 = vmatpush1.msra.mxu0 %v2870
    %6093 = vmatprep.subr.mxu0 %v2863
    %6094 = vmatpush1.msra.mxu0 %v2862
    %6095 = vmatprep.subr.mxu0 %v2855
    %6096 = vmatpush1.msra.mxu0 %v2854
    %6097 = vmatprep.subr.mxu0 %v2847
    %6098 = vmatpush1.msra.mxu0 %v2846
    %6099 = vmatprep.subr.mxu0 %v2839
    %6100 = vmatpush1.msra.mxu0 %v2838
    %6101 = vmatprep.subr.mxu0 %v2831
    %6102 = vmatpush1.msra.mxu0 %v2830
    %6103 = vmatprep.subr.mxu0 %v2823
    %6104 = vmatpush1.msra.mxu0 %v2822
    %6105 = vmatprep.subr.mxu0 %v2815
    %6106 = vmatpush1.msra.mxu0 %v2814
    %6107 = vmatprep.subr.mxu0 %v2807
    %6108 = vmatpush1.msra.mxu0 %v2806
    %6109 = vmatprep.subr.mxu0 %v2799
    %6110 = vmatpush1.msra.mxu0 %v2798
    %6111 = vmatprep.subr.mxu0 %v2791
    %6112 = vmatpush1.msra.mxu0 %v2790
    %6113 = vmatprep.subr.mxu0 %v3039
    %6114 = vmatpush2.msra.mxu0 %v3038
    %6115 = vmatprep.subr.mxu0 %v3031
    %6116 = vmatpush2.msra.mxu0 %v3030
    %6117 = vmatprep.subr.mxu0 %v3023
    %6118 = vmatpush2.msra.mxu0 %v3022
    %6119 = vmatprep.subr.mxu0 %v3015
    %6120 = vmatpush2.msra.mxu0 %v3014
    %6121 = vmatprep.subr.mxu0 %v3007
    %6122 = vmatpush2.msra.mxu0 %v3006
    %6123 = vmatprep.subr.mxu0 %v2999
    %6124 = vmatpush2.msra.mxu0 %v2998
    %6125 = vmatprep.subr.mxu0 %v2991
    %6126 = vmatpush2.msra.mxu0 %v2990
    %6127 = vmatprep.subr.mxu0 %v2983
    %6128 = vmatpush2.msra.mxu0 %v2982
    %6129 = vmatprep.subr.mxu0 %v2975
    %6130 = vmatpush2.msra.mxu0 %v2974
    %6131 = vmatprep.subr.mxu0 %v2967
    %6132 = vmatpush2.msra.mxu0 %v2966
    %6133 = vmatprep.subr.mxu0 %v2959
    %6134 = vmatpush2.msra.mxu0 %v2958
    %6135 = vmatprep.subr.mxu0 %v2951
    %6136 = vmatpush2.msra.mxu0 %v2950
    %6137 = vmatprep.subr.mxu0 %v2943
    %6138 = vmatpush2.msra.mxu0 %v2942
    %6139 = vmatprep.subr.mxu0 %v2935
    %6140 = vmatpush2.msra.mxu0 %v2934
    %6141 = vmatprep.subr.mxu0 %v2927
    %6142 = vmatpush2.msra.mxu0 %v2926
    %6143 = vmatprep.subr.mxu0 %v2919
    %6144 = vmatpush2.msra.mxu0 %v2918
    %6145 = vmatprep.mubr.f32.mxu0 %v6079
    %6146 = vmatmul.mubr.f32.gmra.mxu0 %v6051
    %v6147 = vpop.f32.mrf.mxu0
    %v6148 = vadd.f32 0.0, %v6147
    %v6149 = vpop.f32.mrf.mxu0
    %v6150 = vadd.f32 0.0, %v6149
    %6151 = vdwg.mxu0
    %6152 = vmatprep.subr.mxu0 %v2913
    %6153 = vmatpush1.msra.mxu0 %v2912
    %6154 = vmatprep.subr.mxu0 %v2905
    %6155 = vmatpush1.msra.mxu0 %v2904
    %6156 = vmatprep.subr.mxu0 %v2897
    %6157 = vmatpush1.msra.mxu0 %v2896
    %6158 = vmatprep.subr.mxu0 %v2889
    %6159 = vmatpush1.msra.mxu0 %v2888
    %6160 = vmatprep.subr.mxu0 %v2881
    %6161 = vmatpush1.msra.mxu0 %v2880
    %6162 = vmatprep.subr.mxu0 %v2873
    %6163 = vmatpush1.msra.mxu0 %v2872
    %6164 = vmatprep.subr.mxu0 %v2865
    %6165 = vmatpush1.msra.mxu0 %v2864
    %6166 = vmatprep.subr.mxu0 %v2857
    %6167 = vmatpush1.msra.mxu0 %v2856
    %6168 = vmatprep.subr.mxu0 %v2849
    %6169 = vmatpush1.msra.mxu0 %v2848
    %6170 = vmatprep.subr.mxu0 %v2841
    %6171 = vmatpush1.msra.mxu0 %v2840
    %6172 = vmatprep.subr.mxu0 %v2833
    %6173 = vmatpush1.msra.mxu0 %v2832
    %6174 = vmatprep.subr.mxu0 %v2825
    %6175 = vmatpush1.msra.mxu0 %v2824
    %6176 = vmatprep.subr.mxu0 %v2817
    %6177 = vmatpush1.msra.mxu0 %v2816
    %6178 = vmatprep.subr.mxu0 %v2809
    %6179 = vmatpush1.msra.mxu0 %v2808
    %6180 = vmatprep.subr.mxu0 %v2801
    %6181 = vmatpush1.msra.mxu0 %v2800
    %6182 = vmatprep.subr.mxu0 %v2793
    %6183 = vmatpush1.msra.mxu0 %v2792
    %6184 = vmatprep.subr.mxu0 %v3041
    %6185 = vmatpush2.msra.mxu0 %v3040
    %6186 = vmatprep.subr.mxu0 %v3033
    %6187 = vmatpush2.msra.mxu0 %v3032
    %6188 = vmatprep.subr.mxu0 %v3025
    %6189 = vmatpush2.msra.mxu0 %v3024
    %6190 = vmatprep.subr.mxu0 %v3017
    %6191 = vmatpush2.msra.mxu0 %v3016
    %6192 = vmatprep.subr.mxu0 %v3009
    %6193 = vmatpush2.msra.mxu0 %v3008
    %6194 = vmatprep.subr.mxu0 %v3001
    %6195 = vmatpush2.msra.mxu0 %v3000
    %6196 = vmatprep.subr.mxu0 %v2993
    %6197 = vmatpush2.msra.mxu0 %v2992
    %6198 = vmatprep.subr.mxu0 %v2985
    %6199 = vmatpush2.msra.mxu0 %v2984
    %6200 = vmatprep.subr.mxu0 %v2977
    %6201 = vmatpush2.msra.mxu0 %v2976
    %6202 = vmatprep.subr.mxu0 %v2969
    %6203 = vmatpush2.msra.mxu0 %v2968
    %6204 = vmatprep.subr.mxu0 %v2961
    %6205 = vmatpush2.msra.mxu0 %v2960
    %6206 = vmatprep.subr.mxu0 %v2953
    %6207 = vmatpush2.msra.mxu0 %v2952
    %6208 = vmatprep.subr.mxu0 %v2945
    %6209 = vmatpush2.msra.mxu0 %v2944
    %6210 = vmatprep.subr.mxu0 %v2937
    %6211 = vmatpush2.msra.mxu0 %v2936
    %6212 = vmatprep.subr.mxu0 %v2929
    %6213 = vmatpush2.msra.mxu0 %v2928
    %6214 = vmatprep.subr.mxu0 %v2921
    %6215 = vmatpush2.msra.mxu0 %v2920
    %6216 = vmatprep.mubr.f32.mxu0 %v6079
    %6217 = vmatmul.mubr.f32.gmra.mxu0 %v6051
    %v6218 = vpop.f32.mrf.mxu0
    %v6219 = vadd.f32 0.0, %v6218
    %v6220 = vpop.f32.mrf.mxu0
    %v6221 = vadd.f32 0.0, %v6220
    %6222 = vdwg.mxu0
    %6223 = vmatprep.subr.mxu0 %v2915
    %6224 = vmatpush1.msra.mxu0 %v2914
    %6225 = vmatprep.subr.mxu0 %v2907
    %6226 = vmatpush1.msra.mxu0 %v2906
    %6227 = vmatprep.subr.mxu0 %v2899
    %6228 = vmatpush1.msra.mxu0 %v2898
    %6229 = vmatprep.subr.mxu0 %v2891
    %6230 = vmatpush1.msra.mxu0 %v2890
    %6231 = vmatprep.subr.mxu0 %v2883
    %6232 = vmatpush1.msra.mxu0 %v2882
    %6233 = vmatprep.subr.mxu0 %v2875
    %6234 = vmatpush1.msra.mxu0 %v2874
    %6235 = vmatprep.subr.mxu0 %v2867
    %6236 = vmatpush1.msra.mxu0 %v2866
    %6237 = vmatprep.subr.mxu0 %v2859
    %6238 = vmatpush1.msra.mxu0 %v2858
    %6239 = vmatprep.subr.mxu0 %v2851
    %6240 = vmatpush1.msra.mxu0 %v2850
    %6241 = vmatprep.subr.mxu0 %v2843
    %6242 = vmatpush1.msra.mxu0 %v2842
    %6243 = vmatprep.subr.mxu0 %v2835
    %6244 = vmatpush1.msra.mxu0 %v2834
    %6245 = vmatprep.subr.mxu0 %v2827
    %6246 = vmatpush1.msra.mxu0 %v2826
    %6247 = vmatprep.subr.mxu0 %v2819
    %6248 = vmatpush1.msra.mxu0 %v2818
    %6249 = vmatprep.subr.mxu0 %v2811
    %6250 = vmatpush1.msra.mxu0 %v2810
    %6251 = vmatprep.subr.mxu0 %v2803
    %6252 = vmatpush1.msra.mxu0 %v2802
    %6253 = vmatprep.subr.mxu0 %v2795
    %6254 = vmatpush1.msra.mxu0 %v2794
    %6255 = vmatprep.subr.mxu0 %v3043
    %6256 = vmatpush2.msra.mxu0 %v3042
    %6257 = vmatprep.subr.mxu0 %v3035
    %6258 = vmatpush2.msra.mxu0 %v3034
    %6259 = vmatprep.subr.mxu0 %v3027
    %6260 = vmatpush2.msra.mxu0 %v3026
    %6261 = vmatprep.subr.mxu0 %v3019
    %6262 = vmatpush2.msra.mxu0 %v3018
    %6263 = vmatprep.subr.mxu0 %v3011
    %6264 = vmatpush2.msra.mxu0 %v3010
    %6265 = vmatprep.subr.mxu0 %v3003
    %6266 = vmatpush2.msra.mxu0 %v3002
    %6267 = vmatprep.subr.mxu0 %v2995
    %6268 = vmatpush2.msra.mxu0 %v2994
    %6269 = vmatprep.subr.mxu0 %v2987
    %6270 = vmatpush2.msra.mxu0 %v2986
    %6271 = vmatprep.subr.mxu0 %v2979
    %6272 = vmatpush2.msra.mxu0 %v2978
    %6273 = vmatprep.subr.mxu0 %v2971
    %6274 = vmatpush2.msra.mxu0 %v2970
    %6275 = vmatprep.subr.mxu0 %v2963
    %6276 = vmatpush2.msra.mxu0 %v2962
    %6277 = vmatprep.subr.mxu0 %v2955
    %6278 = vmatpush2.msra.mxu0 %v2954
    %6279 = vmatprep.subr.mxu0 %v2947
    %6280 = vmatpush2.msra.mxu0 %v2946
    %6281 = vmatprep.subr.mxu0 %v2939
    %6282 = vmatpush2.msra.mxu0 %v2938
    %6283 = vmatprep.subr.mxu0 %v2931
    %6284 = vmatpush2.msra.mxu0 %v2930
    %6285 = vmatprep.subr.mxu0 %v2923
    %6286 = vmatpush2.msra.mxu0 %v2922
    %6287 = vmatprep.mubr.f32.mxu0 %v6079
    %6288 = vmatmul.mubr.f32.gmra.mxu0 %v6051
    %v6289 = vpop.f32.mrf.mxu0
    %v6290 = vadd.f32 0.0, %v6289
    %v6291 = vpop.f32.mrf.mxu0
    %v6292 = vadd.f32 0.0, %v6291
    %6293 = vdwg.mxu0
    %6294 = vmatprep.subr.mxu0 %v2917
    %6295 = vmatpush1.msra.mxu0 %v2916
    %6296 = vmatprep.subr.mxu0 %v2909
    %6297 = vmatpush1.msra.mxu0 %v2908
    %6298 = vmatprep.subr.mxu0 %v2901
    %6299 = vmatpush1.msra.mxu0 %v2900
    %6300 = vmatprep.subr.mxu0 %v2893
    %6301 = vmatpush1.msra.mxu0 %v2892
    %6302 = vmatprep.subr.mxu0 %v2885
    %6303 = vmatpush1.msra.mxu0 %v2884
    %6304 = vmatprep.subr.mxu0 %v2877
    %6305 = vmatpush1.msra.mxu0 %v2876
    %6306 = vmatprep.subr.mxu0 %v2869
    %6307 = vmatpush1.msra.mxu0 %v2868
    %6308 = vmatprep.subr.mxu0 %v2861
    %6309 = vmatpush1.msra.mxu0 %v2860
    %6310 = vmatprep.subr.mxu0 %v2853
    %6311 = vmatpush1.msra.mxu0 %v2852
    %6312 = vmatprep.subr.mxu0 %v2845
    %6313 = vmatpush1.msra.mxu0 %v2844
    %6314 = vmatprep.subr.mxu0 %v2837
    %6315 = vmatpush1.msra.mxu0 %v2836
    %6316 = vmatprep.subr.mxu0 %v2829
    %6317 = vmatpush1.msra.mxu0 %v2828
    %6318 = vmatprep.subr.mxu0 %v2821
    %6319 = vmatpush1.msra.mxu0 %v2820
    %6320 = vmatprep.subr.mxu0 %v2813
    %6321 = vmatpush1.msra.mxu0 %v2812
    %6322 = vmatprep.subr.mxu0 %v2805
    %6323 = vmatpush1.msra.mxu0 %v2804
    %6324 = vmatprep.subr.mxu0 %v2797
    %6325 = vmatpush1.msra.mxu0 %v2796
    %6326 = vmatprep.subr.mxu0 %v3045
    %6327 = vmatpush2.msra.mxu0 %v3044
    %6328 = vmatprep.subr.mxu0 %v3037
    %6329 = vmatpush2.msra.mxu0 %v3036
    %6330 = vmatprep.subr.mxu0 %v3029
    %6331 = vmatpush2.msra.mxu0 %v3028
    %6332 = vmatprep.subr.mxu0 %v3021
    %6333 = vmatpush2.msra.mxu0 %v3020
    %6334 = vmatprep.subr.mxu0 %v3013
    %6335 = vmatpush2.msra.mxu0 %v3012
    %6336 = vmatprep.subr.mxu0 %v3005
    %6337 = vmatpush2.msra.mxu0 %v3004
    %6338 = vmatprep.subr.mxu0 %v2997
    %6339 = vmatpush2.msra.mxu0 %v2996
    %6340 = vmatprep.subr.mxu0 %v2989
    %6341 = vmatpush2.msra.mxu0 %v2988
    %6342 = vmatprep.subr.mxu0 %v2981
    %6343 = vmatpush2.msra.mxu0 %v2980
    %6344 = vmatprep.subr.mxu0 %v2973
    %6345 = vmatpush2.msra.mxu0 %v2972
    %6346 = vmatprep.subr.mxu0 %v2965
    %6347 = vmatpush2.msra.mxu0 %v2964
    %6348 = vmatprep.subr.mxu0 %v2957
    %6349 = vmatpush2.msra.mxu0 %v2956
    %6350 = vmatprep.subr.mxu0 %v2949
    %6351 = vmatpush2.msra.mxu0 %v2948
    %6352 = vmatprep.subr.mxu0 %v2941
    %6353 = vmatpush2.msra.mxu0 %v2940
    %6354 = vmatprep.subr.mxu0 %v2933
    %6355 = vmatpush2.msra.mxu0 %v2932
    %6356 = vmatprep.subr.mxu0 %v2925
    %6357 = vmatpush2.msra.mxu0 %v2924
    %6358 = vmatprep.mubr.f32.mxu0 %v6079
    %6359 = vmatmul.mubr.f32.gmra.mxu0 %v6051
    %v6360 = vpop.f32.mrf.mxu0
    %v6361 = vadd.f32 0.0, %v6360
    %v6362 = vpop.f32.mrf.mxu0
    %v6363 = vadd.f32 0.0, %v6362
    %6364 = vdwg.mxu0
    %v6365 = vld [vmem:[#allocation2 + $0x40] sm:$0xc]
    %v6366 = vld [vmem:[#allocation2 + $0x48] sm:$0xc]
    %v6367 = vld [vmem:[#allocation2 + $0x50] sm:$0xc]
    %v6368 = vld [vmem:[#allocation2 + $0x58] sm:$0xc]
    %v6373 = vrot.slane %v6365, 2
    %v6374 = vrot.slane %v6366, 2
    %v6375 = vrot.slane %v6367, 2
    %v6376 = vrot.slane %v6368, 2
    %v6381 = vadd.f32 %v6148, %v6373
    %v6382 = vadd.f32 %v6150, %v6374
    %v6383 = vadd.f32 %v6219, %v6375
    %v6384 = vadd.f32 %v6221, %v6376
    %v6385 = vxor.u32 %v6381, 2147483648
    %v6386 = vmul.f32 %v6385, 1.442695
    %v6387 = vpow.pop %v6386
    %v6388 = vadd.f32 %v6387, 1.0
    %v6389 = vrcp.pop %v6388
    %v6390 = vmul.f32 1.0, %v6389
    %v6391 = vxor.u32 %v6382, 2147483648
    %v6392 = vmul.f32 %v6391, 1.442695
    %v6393 = vpow.pop %v6392
    %v6394 = vadd.f32 %v6393, 1.0
    %v6395 = vrcp.pop %v6394
    %v6396 = vmul.f32 1.0, %v6395
    %v6397 = vtanh.pop %v6383
    %v6398 = vxor.u32 %v6384, 2147483648
    %v6399 = vmul.f32 %v6398, 1.442695
    %v6400 = vpow.pop %v6399
    %v6401 = vadd.f32 %v6400, 1.0
    %v6402 = vrcp.pop %v6401
    %v6403 = vmul.f32 1.0, %v6402
    %v6404 = vmul.f32 %v6396, %v6049
    %v6405 = vmul.f32 %v6390, %v6397
    %v6406 = vadd.f32 %v6404, %v6405
    %v6407 = vtanh.pop %v6406
    %v6408 = vmul.f32 %v6403, %v6407
    %v6409 = vadd.f32 %v6290, %v3560
    %v6410 = vadd.f32 %v6292, %v3564
    %v6411 = vadd.f32 %v6361, %v3568
    %v6412 = vadd.f32 %v6363, %v3572
    %v6413 = vxor.u32 %v6409, 2147483648
    %v6414 = vmul.f32 %v6413, 1.442695
    %v6415 = vpow.pop %v6414
    %v6416 = vadd.f32 %v6415, 1.0
    %v6417 = vrcp.pop %v6416
    %v6418 = vmul.f32 1.0, %v6417
    %v6419 = vxor.u32 %v6410, 2147483648
    %v6420 = vmul.f32 %v6419, 1.442695
    %v6421 = vpow.pop %v6420
    %v6422 = vadd.f32 %v6421, 1.0
    %v6423 = vrcp.pop %v6422
    %v6424 = vmul.f32 1.0, %v6423
    %v6425 = vtanh.pop %v6411
    %v6426 = vxor.u32 %v6412, 2147483648
    %v6427 = vmul.f32 %v6426, 1.442695
    %v6428 = vpow.pop %v6427
    %v6429 = vadd.f32 %v6428, 1.0
    %v6430 = vrcp.pop %v6429
    %v6431 = vmul.f32 1.0, %v6430
    %v6432 = vmul.f32 %v6424, %v6077
    %v6433 = vmul.f32 %v6418, %v6425
    %v6434 = vadd.f32 %v6432, %v6433
    %v6435 = vtanh.pop %v6434
    %v6436 = vmul.f32 %v6431, %v6435
    %6437 = vst [vmem:[#allocation3 + $0x10] sm:$0x3] %v6436
    %6438 = vmatprep.subr.mxu0 %v2911
    %6439 = vmatpush1.msra.mxu0 %v2910
    %6440 = vmatprep.subr.mxu0 %v2903
    %6441 = vmatpush1.msra.mxu0 %v2902
    %6442 = vmatprep.subr.mxu0 %v2895
    %6443 = vmatpush1.msra.mxu0 %v2894
    %6444 = vmatprep.subr.mxu0 %v2887
    %6445 = vmatpush1.msra.mxu0 %v2886
    %6446 = vmatprep.subr.mxu0 %v2879
    %6447 = vmatpush1.msra.mxu0 %v2878
    %6448 = vmatprep.subr.mxu0 %v2871
    %6449 = vmatpush1.msra.mxu0 %v2870
    %6450 = vmatprep.subr.mxu0 %v2863
    %6451 = vmatpush1.msra.mxu0 %v2862
    %6452 = vmatprep.subr.mxu0 %v2855
    %6453 = vmatpush1.msra.mxu0 %v2854
    %6454 = vmatprep.subr.mxu0 %v2847
    %6455 = vmatpush1.msra.mxu0 %v2846
    %6456 = vmatprep.subr.mxu0 %v2839
    %6457 = vmatpush1.msra.mxu0 %v2838
    %6458 = vmatprep.subr.mxu0 %v2831
    %6459 = vmatpush1.msra.mxu0 %v2830
    %6460 = vmatprep.subr.mxu0 %v2823
    %6461 = vmatpush1.msra.mxu0 %v2822
    %6462 = vmatprep.subr.mxu0 %v2815
    %6463 = vmatpush1.msra.mxu0 %v2814
    %6464 = vmatprep.subr.mxu0 %v2807
    %6465 = vmatpush1.msra.mxu0 %v2806
    %6466 = vmatprep.subr.mxu0 %v2799
    %6467 = vmatpush1.msra.mxu0 %v2798
    %6468 = vmatprep.subr.mxu0 %v2791
    %6469 = vmatpush1.msra.mxu0 %v2790
    %6470 = vmatprep.subr.mxu0 %v3039
    %6471 = vmatpush2.msra.mxu0 %v3038
    %6472 = vmatprep.subr.mxu0 %v3031
    %6473 = vmatpush2.msra.mxu0 %v3030
    %6474 = vmatprep.subr.mxu0 %v3023
    %6475 = vmatpush2.msra.mxu0 %v3022
    %6476 = vmatprep.subr.mxu0 %v3015
    %6477 = vmatpush2.msra.mxu0 %v3014
    %6478 = vmatprep.subr.mxu0 %v3007
    %6479 = vmatpush2.msra.mxu0 %v3006
    %6480 = vmatprep.subr.mxu0 %v2999
    %6481 = vmatpush2.msra.mxu0 %v2998
    %6482 = vmatprep.subr.mxu0 %v2991
    %6483 = vmatpush2.msra.mxu0 %v2990
    %6484 = vmatprep.subr.mxu0 %v2983
    %6485 = vmatpush2.msra.mxu0 %v2982
    %6486 = vmatprep.subr.mxu0 %v2975
    %6487 = vmatpush2.msra.mxu0 %v2974
    %6488 = vmatprep.subr.mxu0 %v2967
    %6489 = vmatpush2.msra.mxu0 %v2966
    %6490 = vmatprep.subr.mxu0 %v2959
    %6491 = vmatpush2.msra.mxu0 %v2958
    %6492 = vmatprep.subr.mxu0 %v2951
    %6493 = vmatpush2.msra.mxu0 %v2950
    %6494 = vmatprep.subr.mxu0 %v2943
    %6495 = vmatpush2.msra.mxu0 %v2942
    %6496 = vmatprep.subr.mxu0 %v2935
    %6497 = vmatpush2.msra.mxu0 %v2934
    %6498 = vmatprep.subr.mxu0 %v2927
    %6499 = vmatpush2.msra.mxu0 %v2926
    %6500 = vmatprep.subr.mxu0 %v2919
    %6501 = vmatpush2.msra.mxu0 %v2918
    %6502 = vmatprep.mubr.f32.mxu0 %v6436
    %6503 = vmatmul.mubr.f32.gmra.mxu0 %v6408
    %v6504 = vpop.f32.mrf.mxu0
    %v6505 = vadd.f32 0.0, %v6504
    %v6506 = vpop.f32.mrf.mxu0
    %v6507 = vadd.f32 0.0, %v6506
    %6508 = vdwg.mxu0
    %6509 = vmatprep.subr.mxu0 %v2913
    %6510 = vmatpush1.msra.mxu0 %v2912
    %6511 = vmatprep.subr.mxu0 %v2905
    %6512 = vmatpush1.msra.mxu0 %v2904
    %6513 = vmatprep.subr.mxu0 %v2897
    %6514 = vmatpush1.msra.mxu0 %v2896
    %6515 = vmatprep.subr.mxu0 %v2889
    %6516 = vmatpush1.msra.mxu0 %v2888
    %6517 = vmatprep.subr.mxu0 %v2881
    %6518 = vmatpush1.msra.mxu0 %v2880
    %6519 = vmatprep.subr.mxu0 %v2873
    %6520 = vmatpush1.msra.mxu0 %v2872
    %6521 = vmatprep.subr.mxu0 %v2865
    %6522 = vmatpush1.msra.mxu0 %v2864
    %6523 = vmatprep.subr.mxu0 %v2857
    %6524 = vmatpush1.msra.mxu0 %v2856
    %6525 = vmatprep.subr.mxu0 %v2849
    %6526 = vmatpush1.msra.mxu0 %v2848
    %6527 = vmatprep.subr.mxu0 %v2841
    %6528 = vmatpush1.msra.mxu0 %v2840
    %6529 = vmatprep.subr.mxu0 %v2833
    %6530 = vmatpush1.msra.mxu0 %v2832
    %6531 = vmatprep.subr.mxu0 %v2825
    %6532 = vmatpush1.msra.mxu0 %v2824
    %6533 = vmatprep.subr.mxu0 %v2817
    %6534 = vmatpush1.msra.mxu0 %v2816
    %6535 = vmatprep.subr.mxu0 %v2809
    %6536 = vmatpush1.msra.mxu0 %v2808
    %6537 = vmatprep.subr.mxu0 %v2801
    %6538 = vmatpush1.msra.mxu0 %v2800
    %6539 = vmatprep.subr.mxu0 %v2793
    %6540 = vmatpush1.msra.mxu0 %v2792
    %6541 = vmatprep.subr.mxu0 %v3041
    %6542 = vmatpush2.msra.mxu0 %v3040
    %6543 = vmatprep.subr.mxu0 %v3033
    %6544 = vmatpush2.msra.mxu0 %v3032
    %6545 = vmatprep.subr.mxu0 %v3025
    %6546 = vmatpush2.msra.mxu0 %v3024
    %6547 = vmatprep.subr.mxu0 %v3017
    %6548 = vmatpush2.msra.mxu0 %v3016
    %6549 = vmatprep.subr.mxu0 %v3009
    %6550 = vmatpush2.msra.mxu0 %v3008
    %6551 = vmatprep.subr.mxu0 %v3001
    %6552 = vmatpush2.msra.mxu0 %v3000
    %6553 = vmatprep.subr.mxu0 %v2993
    %6554 = vmatpush2.msra.mxu0 %v2992
    %6555 = vmatprep.subr.mxu0 %v2985
    %6556 = vmatpush2.msra.mxu0 %v2984
    %6557 = vmatprep.subr.mxu0 %v2977
    %6558 = vmatpush2.msra.mxu0 %v2976
    %6559 = vmatprep.subr.mxu0 %v2969
    %6560 = vmatpush2.msra.mxu0 %v2968
    %6561 = vmatprep.subr.mxu0 %v2961
    %6562 = vmatpush2.msra.mxu0 %v2960
    %6563 = vmatprep.subr.mxu0 %v2953
    %6564 = vmatpush2.msra.mxu0 %v2952
    %6565 = vmatprep.subr.mxu0 %v2945
    %6566 = vmatpush2.msra.mxu0 %v2944
    %6567 = vmatprep.subr.mxu0 %v2937
    %6568 = vmatpush2.msra.mxu0 %v2936
    %6569 = vmatprep.subr.mxu0 %v2929
    %6570 = vmatpush2.msra.mxu0 %v2928
    %6571 = vmatprep.subr.mxu0 %v2921
    %6572 = vmatpush2.msra.mxu0 %v2920
    %6573 = vmatprep.mubr.f32.mxu0 %v6436
    %6574 = vmatmul.mubr.f32.gmra.mxu0 %v6408
    %v6575 = vpop.f32.mrf.mxu0
    %v6576 = vadd.f32 0.0, %v6575
    %v6577 = vpop.f32.mrf.mxu0
    %v6578 = vadd.f32 0.0, %v6577
    %6579 = vdwg.mxu0
    %6580 = vmatprep.subr.mxu0 %v2915
    %6581 = vmatpush1.msra.mxu0 %v2914
    %6582 = vmatprep.subr.mxu0 %v2907
    %6583 = vmatpush1.msra.mxu0 %v2906
    %6584 = vmatprep.subr.mxu0 %v2899
    %6585 = vmatpush1.msra.mxu0 %v2898
    %6586 = vmatprep.subr.mxu0 %v2891
    %6587 = vmatpush1.msra.mxu0 %v2890
    %6588 = vmatprep.subr.mxu0 %v2883
    %6589 = vmatpush1.msra.mxu0 %v2882
    %6590 = vmatprep.subr.mxu0 %v2875
    %6591 = vmatpush1.msra.mxu0 %v2874
    %6592 = vmatprep.subr.mxu0 %v2867
    %6593 = vmatpush1.msra.mxu0 %v2866
    %6594 = vmatprep.subr.mxu0 %v2859
    %6595 = vmatpush1.msra.mxu0 %v2858
    %6596 = vmatprep.subr.mxu0 %v2851
    %6597 = vmatpush1.msra.mxu0 %v2850
    %6598 = vmatprep.subr.mxu0 %v2843
    %6599 = vmatpush1.msra.mxu0 %v2842
    %6600 = vmatprep.subr.mxu0 %v2835
    %6601 = vmatpush1.msra.mxu0 %v2834
    %6602 = vmatprep.subr.mxu0 %v2827
    %6603 = vmatpush1.msra.mxu0 %v2826
    %6604 = vmatprep.subr.mxu0 %v2819
    %6605 = vmatpush1.msra.mxu0 %v2818
    %6606 = vmatprep.subr.mxu0 %v2811
    %6607 = vmatpush1.msra.mxu0 %v2810
    %6608 = vmatprep.subr.mxu0 %v2803
    %6609 = vmatpush1.msra.mxu0 %v2802
    %6610 = vmatprep.subr.mxu0 %v2795
    %6611 = vmatpush1.msra.mxu0 %v2794
    %6612 = vmatprep.subr.mxu0 %v3043
    %6613 = vmatpush2.msra.mxu0 %v3042
    %6614 = vmatprep.subr.mxu0 %v3035
    %6615 = vmatpush2.msra.mxu0 %v3034
    %6616 = vmatprep.subr.mxu0 %v3027
    %6617 = vmatpush2.msra.mxu0 %v3026
    %6618 = vmatprep.subr.mxu0 %v3019
    %6619 = vmatpush2.msra.mxu0 %v3018
    %6620 = vmatprep.subr.mxu0 %v3011
    %6621 = vmatpush2.msra.mxu0 %v3010
    %6622 = vmatprep.subr.mxu0 %v3003
    %6623 = vmatpush2.msra.mxu0 %v3002
    %6624 = vmatprep.subr.mxu0 %v2995
    %6625 = vmatpush2.msra.mxu0 %v2994
    %6626 = vmatprep.subr.mxu0 %v2987
    %6627 = vmatpush2.msra.mxu0 %v2986
    %6628 = vmatprep.subr.mxu0 %v2979
    %6629 = vmatpush2.msra.mxu0 %v2978
    %6630 = vmatprep.subr.mxu0 %v2971
    %6631 = vmatpush2.msra.mxu0 %v2970
    %6632 = vmatprep.subr.mxu0 %v2963
    %6633 = vmatpush2.msra.mxu0 %v2962
    %6634 = vmatprep.subr.mxu0 %v2955
    %6635 = vmatpush2.msra.mxu0 %v2954
    %6636 = vmatprep.subr.mxu0 %v2947
    %6637 = vmatpush2.msra.mxu0 %v2946
    %6638 = vmatprep.subr.mxu0 %v2939
    %6639 = vmatpush2.msra.mxu0 %v2938
    %6640 = vmatprep.subr.mxu0 %v2931
    %6641 = vmatpush2.msra.mxu0 %v2930
    %6642 = vmatprep.subr.mxu0 %v2923
    %6643 = vmatpush2.msra.mxu0 %v2922
    %6644 = vmatprep.mubr.f32.mxu0 %v6436
    %6645 = vmatmul.mubr.f32.gmra.mxu0 %v6408
    %v6646 = vpop.f32.mrf.mxu0
    %v6647 = vadd.f32 0.0, %v6646
    %v6648 = vpop.f32.mrf.mxu0
    %v6649 = vadd.f32 0.0, %v6648
    %6650 = vdwg.mxu0
    %6651 = vmatprep.subr.mxu0 %v2917
    %6652 = vmatpush1.msra.mxu0 %v2916
    %6653 = vmatprep.subr.mxu0 %v2909
    %6654 = vmatpush1.msra.mxu0 %v2908
    %6655 = vmatprep.subr.mxu0 %v2901
    %6656 = vmatpush1.msra.mxu0 %v2900
    %6657 = vmatprep.subr.mxu0 %v2893
    %6658 = vmatpush1.msra.mxu0 %v2892
    %6659 = vmatprep.subr.mxu0 %v2885
    %6660 = vmatpush1.msra.mxu0 %v2884
    %6661 = vmatprep.subr.mxu0 %v2877
    %6662 = vmatpush1.msra.mxu0 %v2876
    %6663 = vmatprep.subr.mxu0 %v2869
    %6664 = vmatpush1.msra.mxu0 %v2868
    %6665 = vmatprep.subr.mxu0 %v2861
    %6666 = vmatpush1.msra.mxu0 %v2860
    %6667 = vmatprep.subr.mxu0 %v2853
    %6668 = vmatpush1.msra.mxu0 %v2852
    %6669 = vmatprep.subr.mxu0 %v2845
    %6670 = vmatpush1.msra.mxu0 %v2844
    %6671 = vmatprep.subr.mxu0 %v2837
    %6672 = vmatpush1.msra.mxu0 %v2836
    %6673 = vmatprep.subr.mxu0 %v2829
    %6674 = vmatpush1.msra.mxu0 %v2828
    %6675 = vmatprep.subr.mxu0 %v2821
    %6676 = vmatpush1.msra.mxu0 %v2820
    %6677 = vmatprep.subr.mxu0 %v2813
    %6678 = vmatpush1.msra.mxu0 %v2812
    %6679 = vmatprep.subr.mxu0 %v2805
    %6680 = vmatpush1.msra.mxu0 %v2804
    %6681 = vmatprep.subr.mxu0 %v2797
    %6682 = vmatpush1.msra.mxu0 %v2796
    %6683 = vmatprep.subr.mxu0 %v3045
    %6684 = vmatpush2.msra.mxu0 %v3044
    %6685 = vmatprep.subr.mxu0 %v3037
    %6686 = vmatpush2.msra.mxu0 %v3036
    %6687 = vmatprep.subr.mxu0 %v3029
    %6688 = vmatpush2.msra.mxu0 %v3028
    %6689 = vmatprep.subr.mxu0 %v3021
    %6690 = vmatpush2.msra.mxu0 %v3020
    %6691 = vmatprep.subr.mxu0 %v3013
    %6692 = vmatpush2.msra.mxu0 %v3012
    %6693 = vmatprep.subr.mxu0 %v3005
    %6694 = vmatpush2.msra.mxu0 %v3004
    %6695 = vmatprep.subr.mxu0 %v2997
    %6696 = vmatpush2.msra.mxu0 %v2996
    %6697 = vmatprep.subr.mxu0 %v2989
    %6698 = vmatpush2.msra.mxu0 %v2988
    %6699 = vmatprep.subr.mxu0 %v2981
    %6700 = vmatpush2.msra.mxu0 %v2980
    %6701 = vmatprep.subr.mxu0 %v2973
    %6702 = vmatpush2.msra.mxu0 %v2972
    %6703 = vmatprep.subr.mxu0 %v2965
    %6704 = vmatpush2.msra.mxu0 %v2964
    %6705 = vmatprep.subr.mxu0 %v2957
    %6706 = vmatpush2.msra.mxu0 %v2956
    %6707 = vmatprep.subr.mxu0 %v2949
    %6708 = vmatpush2.msra.mxu0 %v2948
    %6709 = vmatprep.subr.mxu0 %v2941
    %6710 = vmatpush2.msra.mxu0 %v2940
    %6711 = vmatprep.subr.mxu0 %v2933
    %6712 = vmatpush2.msra.mxu0 %v2932
    %6713 = vmatprep.subr.mxu0 %v2925
    %6714 = vmatpush2.msra.mxu0 %v2924
    %6715 = vmatprep.mubr.f32.mxu0 %v6436
    %6716 = vmatmul.mubr.f32.gmra.mxu0 %v6408
    %v6717 = vpop.f32.mrf.mxu0
    %v6718 = vadd.f32 0.0, %v6717
    %v6719 = vpop.f32.mrf.mxu0
    %v6720 = vadd.f32 0.0, %v6719
    %6721 = vdwg.mxu0
    %v6722 = vld [vmem:[#allocation2 + $0x40] sm:$0x30]
    %v6723 = vld [vmem:[#allocation2 + $0x48] sm:$0x30]
    %v6724 = vld [vmem:[#allocation2 + $0x50] sm:$0x30]
    %v6725 = vld [vmem:[#allocation2 + $0x58] sm:$0x30]
    %v6730 = vrot.slane %v6722, 4
    %v6731 = vrot.slane %v6723, 4
    %v6732 = vrot.slane %v6724, 4
    %v6733 = vrot.slane %v6725, 4
    %v6738 = vadd.f32 %v6505, %v6730
    %v6739 = vadd.f32 %v6507, %v6731
    %v6740 = vadd.f32 %v6576, %v6732
    %v6741 = vadd.f32 %v6578, %v6733
    %v6742 = vxor.u32 %v6738, 2147483648
    %v6743 = vmul.f32 %v6742, 1.442695
    %v6744 = vpow.pop %v6743
    %v6745 = vadd.f32 %v6744, 1.0
    %v6746 = vrcp.pop %v6745
    %v6747 = vmul.f32 1.0, %v6746
    %v6748 = vxor.u32 %v6739, 2147483648
    %v6749 = vmul.f32 %v6748, 1.442695
    %v6750 = vpow.pop %v6749
    %v6751 = vadd.f32 %v6750, 1.0
    %v6752 = vrcp.pop %v6751
    %v6753 = vmul.f32 1.0, %v6752
    %v6754 = vtanh.pop %v6740
    %v6755 = vxor.u32 %v6741, 2147483648
    %v6756 = vmul.f32 %v6755, 1.442695
    %v6757 = vpow.pop %v6756
    %v6758 = vadd.f32 %v6757, 1.0
    %v6759 = vrcp.pop %v6758
    %v6760 = vmul.f32 1.0, %v6759
    %v6761 = vmul.f32 %v6753, %v6406
    %v6762 = vmul.f32 %v6747, %v6754
    %v6763 = vadd.f32 %v6761, %v6762
    %v6764 = vtanh.pop %v6763
    %v6765 = vmul.f32 %v6760, %v6764
    %v6766 = vadd.f32 %v6647, %v3560
    %v6767 = vadd.f32 %v6649, %v3564
    %v6768 = vadd.f32 %v6718, %v3568
    %v6769 = vadd.f32 %v6720, %v3572
    %v6770 = vxor.u32 %v6766, 2147483648
    %v6771 = vmul.f32 %v6770, 1.442695
    %v6772 = vpow.pop %v6771
    %v6773 = vadd.f32 %v6772, 1.0
    %v6774 = vrcp.pop %v6773
    %v6775 = vmul.f32 1.0, %v6774
    %v6776 = vxor.u32 %v6767, 2147483648
    %v6777 = vmul.f32 %v6776, 1.442695
    %v6778 = vpow.pop %v6777
    %v6779 = vadd.f32 %v6778, 1.0
    %v6780 = vrcp.pop %v6779
    %v6781 = vmul.f32 1.0, %v6780
    %v6782 = vtanh.pop %v6768
    %v6783 = vxor.u32 %v6769, 2147483648
    %v6784 = vmul.f32 %v6783, 1.442695
    %v6785 = vpow.pop %v6784
    %v6786 = vadd.f32 %v6785, 1.0
    %v6787 = vrcp.pop %v6786
    %v6788 = vmul.f32 1.0, %v6787
    %v6789 = vmul.f32 %v6781, %v6434
    %v6790 = vmul.f32 %v6775, %v6782
    %v6791 = vadd.f32 %v6789, %v6790
    %v6792 = vtanh.pop %v6791
    %v6793 = vmul.f32 %v6788, %v6792
    %6794 = vst [vmem:[#allocation3 + $0x12] sm:$0x3] %v6793
    %6795 = vmatprep.subr.mxu0 %v2911
    %6796 = vmatpush1.msra.mxu0 %v2910
    %6797 = vmatprep.subr.mxu0 %v2903
    %6798 = vmatpush1.msra.mxu0 %v2902
    %6799 = vmatprep.subr.mxu0 %v2895
    %6800 = vmatpush1.msra.mxu0 %v2894
    %6801 = vmatprep.subr.mxu0 %v2887
    %6802 = vmatpush1.msra.mxu0 %v2886
    %6803 = vmatprep.subr.mxu0 %v2879
    %6804 = vmatpush1.msra.mxu0 %v2878
    %6805 = vmatprep.subr.mxu0 %v2871
    %6806 = vmatpush1.msra.mxu0 %v2870
    %6807 = vmatprep.subr.mxu0 %v2863
    %6808 = vmatpush1.msra.mxu0 %v2862
    %6809 = vmatprep.subr.mxu0 %v2855
    %6810 = vmatpush1.msra.mxu0 %v2854
    %6811 = vmatprep.subr.mxu0 %v2847
    %6812 = vmatpush1.msra.mxu0 %v2846
    %6813 = vmatprep.subr.mxu0 %v2839
    %6814 = vmatpush1.msra.mxu0 %v2838
    %6815 = vmatprep.subr.mxu0 %v2831
    %6816 = vmatpush1.msra.mxu0 %v2830
    %6817 = vmatprep.subr.mxu0 %v2823
    %6818 = vmatpush1.msra.mxu0 %v2822
    %6819 = vmatprep.subr.mxu0 %v2815
    %6820 = vmatpush1.msra.mxu0 %v2814
    %6821 = vmatprep.subr.mxu0 %v2807
    %6822 = vmatpush1.msra.mxu0 %v2806
    %6823 = vmatprep.subr.mxu0 %v2799
    %6824 = vmatpush1.msra.mxu0 %v2798
    %6825 = vmatprep.subr.mxu0 %v2791
    %6826 = vmatpush1.msra.mxu0 %v2790
    %6827 = vmatprep.subr.mxu0 %v3039
    %6828 = vmatpush2.msra.mxu0 %v3038
    %6829 = vmatprep.subr.mxu0 %v3031
    %6830 = vmatpush2.msra.mxu0 %v3030
    %6831 = vmatprep.subr.mxu0 %v3023
    %6832 = vmatpush2.msra.mxu0 %v3022
    %6833 = vmatprep.subr.mxu0 %v3015
    %6834 = vmatpush2.msra.mxu0 %v3014
    %6835 = vmatprep.subr.mxu0 %v3007
    %6836 = vmatpush2.msra.mxu0 %v3006
    %6837 = vmatprep.subr.mxu0 %v2999
    %6838 = vmatpush2.msra.mxu0 %v2998
    %6839 = vmatprep.subr.mxu0 %v2991
    %6840 = vmatpush2.msra.mxu0 %v2990
    %6841 = vmatprep.subr.mxu0 %v2983
    %6842 = vmatpush2.msra.mxu0 %v2982
    %6843 = vmatprep.subr.mxu0 %v2975
    %6844 = vmatpush2.msra.mxu0 %v2974
    %6845 = vmatprep.subr.mxu0 %v2967
    %6846 = vmatpush2.msra.mxu0 %v2966
    %6847 = vmatprep.subr.mxu0 %v2959
    %6848 = vmatpush2.msra.mxu0 %v2958
    %6849 = vmatprep.subr.mxu0 %v2951
    %6850 = vmatpush2.msra.mxu0 %v2950
    %6851 = vmatprep.subr.mxu0 %v2943
    %6852 = vmatpush2.msra.mxu0 %v2942
    %6853 = vmatprep.subr.mxu0 %v2935
    %6854 = vmatpush2.msra.mxu0 %v2934
    %6855 = vmatprep.subr.mxu0 %v2927
    %6856 = vmatpush2.msra.mxu0 %v2926
    %6857 = vmatprep.subr.mxu0 %v2919
    %6858 = vmatpush2.msra.mxu0 %v2918
    %6859 = vmatprep.mubr.f32.mxu0 %v6793
    %6860 = vmatmul.mubr.f32.gmra.mxu0 %v6765
    %v6861 = vpop.f32.mrf.mxu0
    %v6862 = vadd.f32 0.0, %v6861
    %v6863 = vpop.f32.mrf.mxu0
    %v6864 = vadd.f32 0.0, %v6863
    %6865 = vdwg.mxu0
    %6866 = vmatprep.subr.mxu0 %v2913
    %6867 = vmatpush1.msra.mxu0 %v2912
    %6868 = vmatprep.subr.mxu0 %v2905
    %6869 = vmatpush1.msra.mxu0 %v2904
    %6870 = vmatprep.subr.mxu0 %v2897
    %6871 = vmatpush1.msra.mxu0 %v2896
    %6872 = vmatprep.subr.mxu0 %v2889
    %6873 = vmatpush1.msra.mxu0 %v2888
    %6874 = vmatprep.subr.mxu0 %v2881
    %6875 = vmatpush1.msra.mxu0 %v2880
    %6876 = vmatprep.subr.mxu0 %v2873
    %6877 = vmatpush1.msra.mxu0 %v2872
    %6878 = vmatprep.subr.mxu0 %v2865
    %6879 = vmatpush1.msra.mxu0 %v2864
    %6880 = vmatprep.subr.mxu0 %v2857
    %6881 = vmatpush1.msra.mxu0 %v2856
    %6882 = vmatprep.subr.mxu0 %v2849
    %6883 = vmatpush1.msra.mxu0 %v2848
    %6884 = vmatprep.subr.mxu0 %v2841
    %6885 = vmatpush1.msra.mxu0 %v2840
    %6886 = vmatprep.subr.mxu0 %v2833
    %6887 = vmatpush1.msra.mxu0 %v2832
    %6888 = vmatprep.subr.mxu0 %v2825
    %6889 = vmatpush1.msra.mxu0 %v2824
    %6890 = vmatprep.subr.mxu0 %v2817
    %6891 = vmatpush1.msra.mxu0 %v2816
    %6892 = vmatprep.subr.mxu0 %v2809
    %6893 = vmatpush1.msra.mxu0 %v2808
    %6894 = vmatprep.subr.mxu0 %v2801
    %6895 = vmatpush1.msra.mxu0 %v2800
    %6896 = vmatprep.subr.mxu0 %v2793
    %6897 = vmatpush1.msra.mxu0 %v2792
    %6898 = vmatprep.subr.mxu0 %v3041
    %6899 = vmatpush2.msra.mxu0 %v3040
    %6900 = vmatprep.subr.mxu0 %v3033
    %6901 = vmatpush2.msra.mxu0 %v3032
    %6902 = vmatprep.subr.mxu0 %v3025
    %6903 = vmatpush2.msra.mxu0 %v3024
    %6904 = vmatprep.subr.mxu0 %v3017
    %6905 = vmatpush2.msra.mxu0 %v3016
    %6906 = vmatprep.subr.mxu0 %v3009
    %6907 = vmatpush2.msra.mxu0 %v3008
    %6908 = vmatprep.subr.mxu0 %v3001
    %6909 = vmatpush2.msra.mxu0 %v3000
    %6910 = vmatprep.subr.mxu0 %v2993
    %6911 = vmatpush2.msra.mxu0 %v2992
    %6912 = vmatprep.subr.mxu0 %v2985
    %6913 = vmatpush2.msra.mxu0 %v2984
    %6914 = vmatprep.subr.mxu0 %v2977
    %6915 = vmatpush2.msra.mxu0 %v2976
    %6916 = vmatprep.subr.mxu0 %v2969
    %6917 = vmatpush2.msra.mxu0 %v2968
    %6918 = vmatprep.subr.mxu0 %v2961
    %6919 = vmatpush2.msra.mxu0 %v2960
    %6920 = vmatprep.subr.mxu0 %v2953
    %6921 = vmatpush2.msra.mxu0 %v2952
    %6922 = vmatprep.subr.mxu0 %v2945
    %6923 = vmatpush2.msra.mxu0 %v2944
    %6924 = vmatprep.subr.mxu0 %v2937
    %6925 = vmatpush2.msra.mxu0 %v2936
    %6926 = vmatprep.subr.mxu0 %v2929
    %6927 = vmatpush2.msra.mxu0 %v2928
    %6928 = vmatprep.subr.mxu0 %v2921
    %6929 = vmatpush2.msra.mxu0 %v2920
    %6930 = vmatprep.mubr.f32.mxu0 %v6793
    %6931 = vmatmul.mubr.f32.gmra.mxu0 %v6765
    %v6932 = vpop.f32.mrf.mxu0
    %v6933 = vadd.f32 0.0, %v6932
    %v6934 = vpop.f32.mrf.mxu0
    %v6935 = vadd.f32 0.0, %v6934
    %6936 = vdwg.mxu0
    %6937 = vmatprep.subr.mxu0 %v2915
    %6938 = vmatpush1.msra.mxu0 %v2914
    %6939 = vmatprep.subr.mxu0 %v2907
    %6940 = vmatpush1.msra.mxu0 %v2906
    %6941 = vmatprep.subr.mxu0 %v2899
    %6942 = vmatpush1.msra.mxu0 %v2898
    %6943 = vmatprep.subr.mxu0 %v2891
    %6944 = vmatpush1.msra.mxu0 %v2890
    %6945 = vmatprep.subr.mxu0 %v2883
    %6946 = vmatpush1.msra.mxu0 %v2882
    %6947 = vmatprep.subr.mxu0 %v2875
    %6948 = vmatpush1.msra.mxu0 %v2874
    %6949 = vmatprep.subr.mxu0 %v2867
    %6950 = vmatpush1.msra.mxu0 %v2866
    %6951 = vmatprep.subr.mxu0 %v2859
    %6952 = vmatpush1.msra.mxu0 %v2858
    %6953 = vmatprep.subr.mxu0 %v2851
    %6954 = vmatpush1.msra.mxu0 %v2850
    %6955 = vmatprep.subr.mxu0 %v2843
    %6956 = vmatpush1.msra.mxu0 %v2842
    %6957 = vmatprep.subr.mxu0 %v2835
    %6958 = vmatpush1.msra.mxu0 %v2834
    %6959 = vmatprep.subr.mxu0 %v2827
    %6960 = vmatpush1.msra.mxu0 %v2826
    %6961 = vmatprep.subr.mxu0 %v2819
    %6962 = vmatpush1.msra.mxu0 %v2818
    %6963 = vmatprep.subr.mxu0 %v2811
    %6964 = vmatpush1.msra.mxu0 %v2810
    %6965 = vmatprep.subr.mxu0 %v2803
    %6966 = vmatpush1.msra.mxu0 %v2802
    %6967 = vmatprep.subr.mxu0 %v2795
    %6968 = vmatpush1.msra.mxu0 %v2794
    %6969 = vmatprep.subr.mxu0 %v3043
    %6970 = vmatpush2.msra.mxu0 %v3042
    %6971 = vmatprep.subr.mxu0 %v3035
    %6972 = vmatpush2.msra.mxu0 %v3034
    %6973 = vmatprep.subr.mxu0 %v3027
    %6974 = vmatpush2.msra.mxu0 %v3026
    %6975 = vmatprep.subr.mxu0 %v3019
    %6976 = vmatpush2.msra.mxu0 %v3018
    %6977 = vmatprep.subr.mxu0 %v3011
    %6978 = vmatpush2.msra.mxu0 %v3010
    %6979 = vmatprep.subr.mxu0 %v3003
    %6980 = vmatpush2.msra.mxu0 %v3002
    %6981 = vmatprep.subr.mxu0 %v2995
    %6982 = vmatpush2.msra.mxu0 %v2994
    %6983 = vmatprep.subr.mxu0 %v2987
    %6984 = vmatpush2.msra.mxu0 %v2986
    %6985 = vmatprep.subr.mxu0 %v2979
    %6986 = vmatpush2.msra.mxu0 %v2978
    %6987 = vmatprep.subr.mxu0 %v2971
    %6988 = vmatpush2.msra.mxu0 %v2970
    %6989 = vmatprep.subr.mxu0 %v2963
    %6990 = vmatpush2.msra.mxu0 %v2962
    %6991 = vmatprep.subr.mxu0 %v2955
    %6992 = vmatpush2.msra.mxu0 %v2954
    %6993 = vmatprep.subr.mxu0 %v2947
    %6994 = vmatpush2.msra.mxu0 %v2946
    %6995 = vmatprep.subr.mxu0 %v2939
    %6996 = vmatpush2.msra.mxu0 %v2938
    %6997 = vmatprep.subr.mxu0 %v2931
    %6998 = vmatpush2.msra.mxu0 %v2930
    %6999 = vmatprep.subr.mxu0 %v2923
    %7000 = vmatpush2.msra.mxu0 %v2922
    %7001 = vmatprep.mubr.f32.mxu0 %v6793
    %7002 = vmatmul.mubr.f32.gmra.mxu0 %v6765
    %v7003 = vpop.f32.mrf.mxu0
    %v7004 = vadd.f32 0.0, %v7003
    %v7005 = vpop.f32.mrf.mxu0
    %v7006 = vadd.f32 0.0, %v7005
    %7007 = vdwg.mxu0
    %7008 = vmatprep.subr.mxu0 %v2917
    %7009 = vmatpush1.msra.mxu0 %v2916
    %7010 = vmatprep.subr.mxu0 %v2909
    %7011 = vmatpush1.msra.mxu0 %v2908
    %7012 = vmatprep.subr.mxu0 %v2901
    %7013 = vmatpush1.msra.mxu0 %v2900
    %7014 = vmatprep.subr.mxu0 %v2893
    %7015 = vmatpush1.msra.mxu0 %v2892
    %7016 = vmatprep.subr.mxu0 %v2885
    %7017 = vmatpush1.msra.mxu0 %v2884
    %7018 = vmatprep.subr.mxu0 %v2877
    %7019 = vmatpush1.msra.mxu0 %v2876
    %7020 = vmatprep.subr.mxu0 %v2869
    %7021 = vmatpush1.msra.mxu0 %v2868
    %7022 = vmatprep.subr.mxu0 %v2861
    %7023 = vmatpush1.msra.mxu0 %v2860
    %7024 = vmatprep.subr.mxu0 %v2853
    %7025 = vmatpush1.msra.mxu0 %v2852
    %7026 = vmatprep.subr.mxu0 %v2845
    %7027 = vmatpush1.msra.mxu0 %v2844
    %7028 = vmatprep.subr.mxu0 %v2837
    %7029 = vmatpush1.msra.mxu0 %v2836
    %7030 = vmatprep.subr.mxu0 %v2829
    %7031 = vmatpush1.msra.mxu0 %v2828
    %7032 = vmatprep.subr.mxu0 %v2821
    %7033 = vmatpush1.msra.mxu0 %v2820
    %7034 = vmatprep.subr.mxu0 %v2813
    %7035 = vmatpush1.msra.mxu0 %v2812
    %7036 = vmatprep.subr.mxu0 %v2805
    %7037 = vmatpush1.msra.mxu0 %v2804
    %7038 = vmatprep.subr.mxu0 %v2797
    %7039 = vmatpush1.msra.mxu0 %v2796
    %7040 = vmatprep.subr.mxu0 %v3045
    %7041 = vmatpush2.msra.mxu0 %v3044
    %7042 = vmatprep.subr.mxu0 %v3037
    %7043 = vmatpush2.msra.mxu0 %v3036
    %7044 = vmatprep.subr.mxu0 %v3029
    %7045 = vmatpush2.msra.mxu0 %v3028
    %7046 = vmatprep.subr.mxu0 %v3021
    %7047 = vmatpush2.msra.mxu0 %v3020
    %7048 = vmatprep.subr.mxu0 %v3013
    %7049 = vmatpush2.msra.mxu0 %v3012
    %7050 = vmatprep.subr.mxu0 %v3005
    %7051 = vmatpush2.msra.mxu0 %v3004
    %7052 = vmatprep.subr.mxu0 %v2997
    %7053 = vmatpush2.msra.mxu0 %v2996
    %7054 = vmatprep.subr.mxu0 %v2989
    %7055 = vmatpush2.msra.mxu0 %v2988
    %7056 = vmatprep.subr.mxu0 %v2981
    %7057 = vmatpush2.msra.mxu0 %v2980
    %7058 = vmatprep.subr.mxu0 %v2973
    %7059 = vmatpush2.msra.mxu0 %v2972
    %7060 = vmatprep.subr.mxu0 %v2965
    %7061 = vmatpush2.msra.mxu0 %v2964
    %7062 = vmatprep.subr.mxu0 %v2957
    %7063 = vmatpush2.msra.mxu0 %v2956
    %7064 = vmatprep.subr.mxu0 %v2949
    %7065 = vmatpush2.msra.mxu0 %v2948
    %7066 = vmatprep.subr.mxu0 %v2941
    %7067 = vmatpush2.msra.mxu0 %v2940
    %7068 = vmatprep.subr.mxu0 %v2933
    %7069 = vmatpush2.msra.mxu0 %v2932
    %7070 = vmatprep.subr.mxu0 %v2925
    %7071 = vmatpush2.msra.mxu0 %v2924
    %7072 = vmatprep.mubr.f32.mxu0 %v6793
    %7073 = vmatmul.mubr.f32.gmra.mxu0 %v6765
    %v7074 = vpop.f32.mrf.mxu0
    %v7075 = vadd.f32 0.0, %v7074
    %v7076 = vpop.f32.mrf.mxu0
    %v7077 = vadd.f32 0.0, %v7076
    %7078 = vdwg.mxu0
    %v7079 = vld [vmem:[#allocation2 + $0x40] sm:$0xc0]
    %v7080 = vld [vmem:[#allocation2 + $0x48] sm:$0xc0]
    %v7081 = vld [vmem:[#allocation2 + $0x50] sm:$0xc0]
    %v7082 = vld [vmem:[#allocation2 + $0x58] sm:$0xc0]
    %v7087 = vrot.slane %v7079, 6
    %v7088 = vrot.slane %v7080, 6
    %v7089 = vrot.slane %v7081, 6
    %v7090 = vrot.slane %v7082, 6
    %v7095 = vadd.f32 %v6862, %v7087
    %v7096 = vadd.f32 %v6864, %v7088
    %v7097 = vadd.f32 %v6933, %v7089
    %v7098 = vadd.f32 %v6935, %v7090
    %v7099 = vxor.u32 %v7095, 2147483648
    %v7100 = vmul.f32 %v7099, 1.442695
    %v7101 = vpow.pop %v7100
    %v7102 = vadd.f32 %v7101, 1.0
    %v7103 = vrcp.pop %v7102
    %v7104 = vmul.f32 1.0, %v7103
    %v7105 = vxor.u32 %v7096, 2147483648
    %v7106 = vmul.f32 %v7105, 1.442695
    %v7107 = vpow.pop %v7106
    %v7108 = vadd.f32 %v7107, 1.0
    %v7109 = vrcp.pop %v7108
    %v7110 = vmul.f32 1.0, %v7109
    %v7111 = vtanh.pop %v7097
    %v7112 = vxor.u32 %v7098, 2147483648
    %v7113 = vmul.f32 %v7112, 1.442695
    %v7114 = vpow.pop %v7113
    %v7115 = vadd.f32 %v7114, 1.0
    %v7116 = vrcp.pop %v7115
    %v7117 = vmul.f32 1.0, %v7116
    %v7118 = vmul.f32 %v7110, %v6763
    %v7119 = vmul.f32 %v7104, %v7111
    %v7120 = vadd.f32 %v7118, %v7119
    %v7121 = vtanh.pop %v7120
    %v7122 = vmul.f32 %v7117, %v7121
    %v7123 = vadd.f32 %v7004, %v3560
    %v7124 = vadd.f32 %v7006, %v3564
    %v7125 = vadd.f32 %v7075, %v3568
    %v7126 = vadd.f32 %v7077, %v3572
    %v7127 = vxor.u32 %v7123, 2147483648
    %v7128 = vmul.f32 %v7127, 1.442695
    %v7129 = vpow.pop %v7128
    %v7130 = vadd.f32 %v7129, 1.0
    %v7131 = vrcp.pop %v7130
    %v7132 = vmul.f32 1.0, %v7131
    %v7133 = vxor.u32 %v7124, 2147483648
    %v7134 = vmul.f32 %v7133, 1.442695
    %v7135 = vpow.pop %v7134
    %v7136 = vadd.f32 %v7135, 1.0
    %v7137 = vrcp.pop %v7136
    %v7138 = vmul.f32 1.0, %v7137
    %v7139 = vtanh.pop %v7125
    %v7140 = vxor.u32 %v7126, 2147483648
    %v7141 = vmul.f32 %v7140, 1.442695
    %v7142 = vpow.pop %v7141
    %v7143 = vadd.f32 %v7142, 1.0
    %v7144 = vrcp.pop %v7143
    %v7145 = vmul.f32 1.0, %v7144
    %v7146 = vmul.f32 %v7138, %v6791
    %v7147 = vmul.f32 %v7132, %v7139
    %v7148 = vadd.f32 %v7146, %v7147
    %v7149 = vtanh.pop %v7148
    %v7150 = vmul.f32 %v7145, %v7149
    %7151 = vst [vmem:[#allocation3 + $0x14] sm:$0x3] %v7150
    %7152 = vmatprep.subr.mxu0 %v2911
    %7153 = vmatpush1.msra.mxu0 %v2910
    %7154 = vmatprep.subr.mxu0 %v2903
    %7155 = vmatpush1.msra.mxu0 %v2902
    %7156 = vmatprep.subr.mxu0 %v2895
    %7157 = vmatpush1.msra.mxu0 %v2894
    %7158 = vmatprep.subr.mxu0 %v2887
    %7159 = vmatpush1.msra.mxu0 %v2886
    %7160 = vmatprep.subr.mxu0 %v2879
    %7161 = vmatpush1.msra.mxu0 %v2878
    %7162 = vmatprep.subr.mxu0 %v2871
    %7163 = vmatpush1.msra.mxu0 %v2870
    %7164 = vmatprep.subr.mxu0 %v2863
    %7165 = vmatpush1.msra.mxu0 %v2862
    %7166 = vmatprep.subr.mxu0 %v2855
    %7167 = vmatpush1.msra.mxu0 %v2854
    %7168 = vmatprep.subr.mxu0 %v2847
    %7169 = vmatpush1.msra.mxu0 %v2846
    %7170 = vmatprep.subr.mxu0 %v2839
    %7171 = vmatpush1.msra.mxu0 %v2838
    %7172 = vmatprep.subr.mxu0 %v2831
    %7173 = vmatpush1.msra.mxu0 %v2830
    %7174 = vmatprep.subr.mxu0 %v2823
    %7175 = vmatpush1.msra.mxu0 %v2822
    %7176 = vmatprep.subr.mxu0 %v2815
    %7177 = vmatpush1.msra.mxu0 %v2814
    %7178 = vmatprep.subr.mxu0 %v2807
    %7179 = vmatpush1.msra.mxu0 %v2806
    %7180 = vmatprep.subr.mxu0 %v2799
    %7181 = vmatpush1.msra.mxu0 %v2798
    %7182 = vmatprep.subr.mxu0 %v2791
    %7183 = vmatpush1.msra.mxu0 %v2790
    %7184 = vmatprep.subr.mxu0 %v3039
    %7185 = vmatpush2.msra.mxu0 %v3038
    %7186 = vmatprep.subr.mxu0 %v3031
    %7187 = vmatpush2.msra.mxu0 %v3030
    %7188 = vmatprep.subr.mxu0 %v3023
    %7189 = vmatpush2.msra.mxu0 %v3022
    %7190 = vmatprep.subr.mxu0 %v3015
    %7191 = vmatpush2.msra.mxu0 %v3014
    %7192 = vmatprep.subr.mxu0 %v3007
    %7193 = vmatpush2.msra.mxu0 %v3006
    %7194 = vmatprep.subr.mxu0 %v2999
    %7195 = vmatpush2.msra.mxu0 %v2998
    %7196 = vmatprep.subr.mxu0 %v2991
    %7197 = vmatpush2.msra.mxu0 %v2990
    %7198 = vmatprep.subr.mxu0 %v2983
    %7199 = vmatpush2.msra.mxu0 %v2982
    %7200 = vmatprep.subr.mxu0 %v2975
    %7201 = vmatpush2.msra.mxu0 %v2974
    %7202 = vmatprep.subr.mxu0 %v2967
    %7203 = vmatpush2.msra.mxu0 %v2966
    %7204 = vmatprep.subr.mxu0 %v2959
    %7205 = vmatpush2.msra.mxu0 %v2958
    %7206 = vmatprep.subr.mxu0 %v2951
    %7207 = vmatpush2.msra.mxu0 %v2950
    %7208 = vmatprep.subr.mxu0 %v2943
    %7209 = vmatpush2.msra.mxu0 %v2942
    %7210 = vmatprep.subr.mxu0 %v2935
    %7211 = vmatpush2.msra.mxu0 %v2934
    %7212 = vmatprep.subr.mxu0 %v2927
    %7213 = vmatpush2.msra.mxu0 %v2926
    %7214 = vmatprep.subr.mxu0 %v2919
    %7215 = vmatpush2.msra.mxu0 %v2918
    %7216 = vmatprep.mubr.f32.mxu0 %v7150
    %7217 = vmatmul.mubr.f32.gmra.mxu0 %v7122
    %v7218 = vpop.f32.mrf.mxu0
    %v7219 = vadd.f32 0.0, %v7218
    %v7220 = vpop.f32.mrf.mxu0
    %v7221 = vadd.f32 0.0, %v7220
    %7222 = vdwg.mxu0
    %7223 = vmatprep.subr.mxu0 %v2913
    %7224 = vmatpush1.msra.mxu0 %v2912
    %7225 = vmatprep.subr.mxu0 %v2905
    %7226 = vmatpush1.msra.mxu0 %v2904
    %7227 = vmatprep.subr.mxu0 %v2897
    %7228 = vmatpush1.msra.mxu0 %v2896
    %7229 = vmatprep.subr.mxu0 %v2889
    %7230 = vmatpush1.msra.mxu0 %v2888
    %7231 = vmatprep.subr.mxu0 %v2881
    %7232 = vmatpush1.msra.mxu0 %v2880
    %7233 = vmatprep.subr.mxu0 %v2873
    %7234 = vmatpush1.msra.mxu0 %v2872
    %7235 = vmatprep.subr.mxu0 %v2865
    %7236 = vmatpush1.msra.mxu0 %v2864
    %7237 = vmatprep.subr.mxu0 %v2857
    %7238 = vmatpush1.msra.mxu0 %v2856
    %7239 = vmatprep.subr.mxu0 %v2849
    %7240 = vmatpush1.msra.mxu0 %v2848
    %7241 = vmatprep.subr.mxu0 %v2841
    %7242 = vmatpush1.msra.mxu0 %v2840
    %7243 = vmatprep.subr.mxu0 %v2833
    %7244 = vmatpush1.msra.mxu0 %v2832
    %7245 = vmatprep.subr.mxu0 %v2825
    %7246 = vmatpush1.msra.mxu0 %v2824
    %7247 = vmatprep.subr.mxu0 %v2817
    %7248 = vmatpush1.msra.mxu0 %v2816
    %7249 = vmatprep.subr.mxu0 %v2809
    %7250 = vmatpush1.msra.mxu0 %v2808
    %7251 = vmatprep.subr.mxu0 %v2801
    %7252 = vmatpush1.msra.mxu0 %v2800
    %7253 = vmatprep.subr.mxu0 %v2793
    %7254 = vmatpush1.msra.mxu0 %v2792
    %7255 = vmatprep.subr.mxu0 %v3041
    %7256 = vmatpush2.msra.mxu0 %v3040
    %7257 = vmatprep.subr.mxu0 %v3033
    %7258 = vmatpush2.msra.mxu0 %v3032
    %7259 = vmatprep.subr.mxu0 %v3025
    %7260 = vmatpush2.msra.mxu0 %v3024
    %7261 = vmatprep.subr.mxu0 %v3017
    %7262 = vmatpush2.msra.mxu0 %v3016
    %7263 = vmatprep.subr.mxu0 %v3009
    %7264 = vmatpush2.msra.mxu0 %v3008
    %7265 = vmatprep.subr.mxu0 %v3001
    %7266 = vmatpush2.msra.mxu0 %v3000
    %7267 = vmatprep.subr.mxu0 %v2993
    %7268 = vmatpush2.msra.mxu0 %v2992
    %7269 = vmatprep.subr.mxu0 %v2985
    %7270 = vmatpush2.msra.mxu0 %v2984
    %7271 = vmatprep.subr.mxu0 %v2977
    %7272 = vmatpush2.msra.mxu0 %v2976
    %7273 = vmatprep.subr.mxu0 %v2969
    %7274 = vmatpush2.msra.mxu0 %v2968
    %7275 = vmatprep.subr.mxu0 %v2961
    %7276 = vmatpush2.msra.mxu0 %v2960
    %7277 = vmatprep.subr.mxu0 %v2953
    %7278 = vmatpush2.msra.mxu0 %v2952
    %7279 = vmatprep.subr.mxu0 %v2945
    %7280 = vmatpush2.msra.mxu0 %v2944
    %7281 = vmatprep.subr.mxu0 %v2937
    %7282 = vmatpush2.msra.mxu0 %v2936
    %7283 = vmatprep.subr.mxu0 %v2929
    %7284 = vmatpush2.msra.mxu0 %v2928
    %7285 = vmatprep.subr.mxu0 %v2921
    %7286 = vmatpush2.msra.mxu0 %v2920
    %7287 = vmatprep.mubr.f32.mxu0 %v7150
    %7288 = vmatmul.mubr.f32.gmra.mxu0 %v7122
    %v7289 = vpop.f32.mrf.mxu0
    %v7290 = vadd.f32 0.0, %v7289
    %v7291 = vpop.f32.mrf.mxu0
    %v7292 = vadd.f32 0.0, %v7291
    %7293 = vdwg.mxu0
    %7294 = vmatprep.subr.mxu0 %v2915
    %7295 = vmatpush1.msra.mxu0 %v2914
    %7296 = vmatprep.subr.mxu0 %v2907
    %7297 = vmatpush1.msra.mxu0 %v2906
    %7298 = vmatprep.subr.mxu0 %v2899
    %7299 = vmatpush1.msra.mxu0 %v2898
    %7300 = vmatprep.subr.mxu0 %v2891
    %7301 = vmatpush1.msra.mxu0 %v2890
    %7302 = vmatprep.subr.mxu0 %v2883
    %7303 = vmatpush1.msra.mxu0 %v2882
    %7304 = vmatprep.subr.mxu0 %v2875
    %7305 = vmatpush1.msra.mxu0 %v2874
    %7306 = vmatprep.subr.mxu0 %v2867
    %7307 = vmatpush1.msra.mxu0 %v2866
    %7308 = vmatprep.subr.mxu0 %v2859
    %7309 = vmatpush1.msra.mxu0 %v2858
    %7310 = vmatprep.subr.mxu0 %v2851
    %7311 = vmatpush1.msra.mxu0 %v2850
    %7312 = vmatprep.subr.mxu0 %v2843
    %7313 = vmatpush1.msra.mxu0 %v2842
    %7314 = vmatprep.subr.mxu0 %v2835
    %7315 = vmatpush1.msra.mxu0 %v2834
    %7316 = vmatprep.subr.mxu0 %v2827
    %7317 = vmatpush1.msra.mxu0 %v2826
    %7318 = vmatprep.subr.mxu0 %v2819
    %7319 = vmatpush1.msra.mxu0 %v2818
    %7320 = vmatprep.subr.mxu0 %v2811
    %7321 = vmatpush1.msra.mxu0 %v2810
    %7322 = vmatprep.subr.mxu0 %v2803
    %7323 = vmatpush1.msra.mxu0 %v2802
    %7324 = vmatprep.subr.mxu0 %v2795
    %7325 = vmatpush1.msra.mxu0 %v2794
    %7326 = vmatprep.subr.mxu0 %v3043
    %7327 = vmatpush2.msra.mxu0 %v3042
    %7328 = vmatprep.subr.mxu0 %v3035
    %7329 = vmatpush2.msra.mxu0 %v3034
    %7330 = vmatprep.subr.mxu0 %v3027
    %7331 = vmatpush2.msra.mxu0 %v3026
    %7332 = vmatprep.subr.mxu0 %v3019
    %7333 = vmatpush2.msra.mxu0 %v3018
    %7334 = vmatprep.subr.mxu0 %v3011
    %7335 = vmatpush2.msra.mxu0 %v3010
    %7336 = vmatprep.subr.mxu0 %v3003
    %7337 = vmatpush2.msra.mxu0 %v3002
    %7338 = vmatprep.subr.mxu0 %v2995
    %7339 = vmatpush2.msra.mxu0 %v2994
    %7340 = vmatprep.subr.mxu0 %v2987
    %7341 = vmatpush2.msra.mxu0 %v2986
    %7342 = vmatprep.subr.mxu0 %v2979
    %7343 = vmatpush2.msra.mxu0 %v2978
    %7344 = vmatprep.subr.mxu0 %v2971
    %7345 = vmatpush2.msra.mxu0 %v2970
    %7346 = vmatprep.subr.mxu0 %v2963
    %7347 = vmatpush2.msra.mxu0 %v2962
    %7348 = vmatprep.subr.mxu0 %v2955
    %7349 = vmatpush2.msra.mxu0 %v2954
    %7350 = vmatprep.subr.mxu0 %v2947
    %7351 = vmatpush2.msra.mxu0 %v2946
    %7352 = vmatprep.subr.mxu0 %v2939
    %7353 = vmatpush2.msra.mxu0 %v2938
    %7354 = vmatprep.subr.mxu0 %v2931
    %7355 = vmatpush2.msra.mxu0 %v2930
    %7356 = vmatprep.subr.mxu0 %v2923
    %7357 = vmatpush2.msra.mxu0 %v2922
    %7358 = vmatprep.mubr.f32.mxu0 %v7150
    %7359 = vmatmul.mubr.f32.gmra.mxu0 %v7122
    %v7360 = vpop.f32.mrf.mxu0
    %v7361 = vadd.f32 0.0, %v7360
    %v7362 = vpop.f32.mrf.mxu0
    %v7363 = vadd.f32 0.0, %v7362
    %7364 = vdwg.mxu0
    %7365 = vmatprep.subr.mxu0 %v2917
    %7366 = vmatpush1.msra.mxu0 %v2916
    %7367 = vmatprep.subr.mxu0 %v2909
    %7368 = vmatpush1.msra.mxu0 %v2908
    %7369 = vmatprep.subr.mxu0 %v2901
    %7370 = vmatpush1.msra.mxu0 %v2900
    %7371 = vmatprep.subr.mxu0 %v2893
    %7372 = vmatpush1.msra.mxu0 %v2892
    %7373 = vmatprep.subr.mxu0 %v2885
    %7374 = vmatpush1.msra.mxu0 %v2884
    %7375 = vmatprep.subr.mxu0 %v2877
    %7376 = vmatpush1.msra.mxu0 %v2876
    %7377 = vmatprep.subr.mxu0 %v2869
    %7378 = vmatpush1.msra.mxu0 %v2868
    %7379 = vmatprep.subr.mxu0 %v2861
    %7380 = vmatpush1.msra.mxu0 %v2860
    %7381 = vmatprep.subr.mxu0 %v2853
    %7382 = vmatpush1.msra.mxu0 %v2852
    %7383 = vmatprep.subr.mxu0 %v2845
    %7384 = vmatpush1.msra.mxu0 %v2844
    %7385 = vmatprep.subr.mxu0 %v2837
    %7386 = vmatpush1.msra.mxu0 %v2836
    %7387 = vmatprep.subr.mxu0 %v2829
    %7388 = vmatpush1.msra.mxu0 %v2828
    %7389 = vmatprep.subr.mxu0 %v2821
    %7390 = vmatpush1.msra.mxu0 %v2820
    %7391 = vmatprep.subr.mxu0 %v2813
    %7392 = vmatpush1.msra.mxu0 %v2812
    %7393 = vmatprep.subr.mxu0 %v2805
    %7394 = vmatpush1.msra.mxu0 %v2804
    %7395 = vmatprep.subr.mxu0 %v2797
    %7396 = vmatpush1.msra.mxu0 %v2796
    %7397 = vmatprep.subr.mxu0 %v3045
    %7398 = vmatpush2.msra.mxu0 %v3044
    %7399 = vmatprep.subr.mxu0 %v3037
    %7400 = vmatpush2.msra.mxu0 %v3036
    %7401 = vmatprep.subr.mxu0 %v3029
    %7402 = vmatpush2.msra.mxu0 %v3028
    %7403 = vmatprep.subr.mxu0 %v3021
    %7404 = vmatpush2.msra.mxu0 %v3020
    %7405 = vmatprep.subr.mxu0 %v3013
    %7406 = vmatpush2.msra.mxu0 %v3012
    %7407 = vmatprep.subr.mxu0 %v3005
    %7408 = vmatpush2.msra.mxu0 %v3004
    %7409 = vmatprep.subr.mxu0 %v2997
    %7410 = vmatpush2.msra.mxu0 %v2996
    %7411 = vmatprep.subr.mxu0 %v2989
    %7412 = vmatpush2.msra.mxu0 %v2988
    %7413 = vmatprep.subr.mxu0 %v2981
    %7414 = vmatpush2.msra.mxu0 %v2980
    %7415 = vmatprep.subr.mxu0 %v2973
    %7416 = vmatpush2.msra.mxu0 %v2972
    %7417 = vmatprep.subr.mxu0 %v2965
    %7418 = vmatpush2.msra.mxu0 %v2964
    %7419 = vmatprep.subr.mxu0 %v2957
    %7420 = vmatpush2.msra.mxu0 %v2956
    %7421 = vmatprep.subr.mxu0 %v2949
    %7422 = vmatpush2.msra.mxu0 %v2948
    %7423 = vmatprep.subr.mxu0 %v2941
    %7424 = vmatpush2.msra.mxu0 %v2940
    %7425 = vmatprep.subr.mxu0 %v2933
    %7426 = vmatpush2.msra.mxu0 %v2932
    %7427 = vmatprep.subr.mxu0 %v2925
    %7428 = vmatpush2.msra.mxu0 %v2924
    %7429 = vmatprep.mubr.f32.mxu0 %v7150
    %7430 = vmatmul.mubr.f32.gmra.mxu0 %v7122
    %v7431 = vpop.f32.mrf.mxu0
    %v7432 = vadd.f32 0.0, %v7431
    %v7433 = vpop.f32.mrf.mxu0
    %v7434 = vadd.f32 0.0, %v7433
    %7435 = vdwg.mxu0
    %v7436 = vld [vmem:[#allocation2 + $0x60] sm:$0x3]
    %v7437 = vld [vmem:[#allocation2 + $0x68] sm:$0x3]
    %v7438 = vld [vmem:[#allocation2 + $0x70] sm:$0x3]
    %v7439 = vld [vmem:[#allocation2 + $0x78] sm:$0x3]
    %v7440 = vadd.f32 %v7219, %v7436
    %v7441 = vadd.f32 %v7221, %v7437
    %v7442 = vadd.f32 %v7290, %v7438
    %v7443 = vadd.f32 %v7292, %v7439
    %v7444 = vxor.u32 %v7440, 2147483648
    %v7445 = vmul.f32 %v7444, 1.442695
    %v7446 = vpow.pop %v7445
    %v7447 = vadd.f32 %v7446, 1.0
    %v7448 = vrcp.pop %v7447
    %v7449 = vmul.f32 1.0, %v7448
    %v7450 = vxor.u32 %v7441, 2147483648
    %v7451 = vmul.f32 %v7450, 1.442695
    %v7452 = vpow.pop %v7451
    %v7453 = vadd.f32 %v7452, 1.0
    %v7454 = vrcp.pop %v7453
    %v7455 = vmul.f32 1.0, %v7454
    %v7456 = vtanh.pop %v7442
    %v7457 = vxor.u32 %v7443, 2147483648
    %v7458 = vmul.f32 %v7457, 1.442695
    %v7459 = vpow.pop %v7458
    %v7460 = vadd.f32 %v7459, 1.0
    %v7461 = vrcp.pop %v7460
    %v7462 = vmul.f32 1.0, %v7461
    %v7463 = vmul.f32 %v7455, %v7120
    %v7464 = vmul.f32 %v7449, %v7456
    %v7465 = vadd.f32 %v7463, %v7464
    %v7466 = vtanh.pop %v7465
    %v7467 = vmul.f32 %v7462, %v7466
    %v7468 = vadd.f32 %v7361, %v3560
    %v7469 = vadd.f32 %v7363, %v3564
    %v7470 = vadd.f32 %v7432, %v3568
    %v7471 = vadd.f32 %v7434, %v3572
    %v7472 = vxor.u32 %v7468, 2147483648
    %v7473 = vmul.f32 %v7472, 1.442695
    %v7474 = vpow.pop %v7473
    %v7475 = vadd.f32 %v7474, 1.0
    %v7476 = vrcp.pop %v7475
    %v7477 = vmul.f32 1.0, %v7476
    %v7478 = vxor.u32 %v7469, 2147483648
    %v7479 = vmul.f32 %v7478, 1.442695
    %v7480 = vpow.pop %v7479
    %v7481 = vadd.f32 %v7480, 1.0
    %v7482 = vrcp.pop %v7481
    %v7483 = vmul.f32 1.0, %v7482
    %v7484 = vtanh.pop %v7470
    %v7485 = vxor.u32 %v7471, 2147483648
    %v7486 = vmul.f32 %v7485, 1.442695
    %v7487 = vpow.pop %v7486
    %v7488 = vadd.f32 %v7487, 1.0
    %v7489 = vrcp.pop %v7488
    %v7490 = vmul.f32 1.0, %v7489
    %v7491 = vmul.f32 %v7483, %v7148
    %v7492 = vmul.f32 %v7477, %v7484
    %v7493 = vadd.f32 %v7491, %v7492
    %v7494 = vtanh.pop %v7493
    %v7495 = vmul.f32 %v7490, %v7494
    %7496 = vst [vmem:[#allocation3 + $0x16] sm:$0x3] %v7495
    %7497 = vmatprep.subr.mxu0 %v2911
    %7498 = vmatpush1.msra.mxu0 %v2910
    %7499 = vmatprep.subr.mxu0 %v2903
    %7500 = vmatpush1.msra.mxu0 %v2902
    %7501 = vmatprep.subr.mxu0 %v2895
    %7502 = vmatpush1.msra.mxu0 %v2894
    %7503 = vmatprep.subr.mxu0 %v2887
    %7504 = vmatpush1.msra.mxu0 %v2886
    %7505 = vmatprep.subr.mxu0 %v2879
    %7506 = vmatpush1.msra.mxu0 %v2878
    %7507 = vmatprep.subr.mxu0 %v2871
    %7508 = vmatpush1.msra.mxu0 %v2870
    %7509 = vmatprep.subr.mxu0 %v2863
    %7510 = vmatpush1.msra.mxu0 %v2862
    %7511 = vmatprep.subr.mxu0 %v2855
    %7512 = vmatpush1.msra.mxu0 %v2854
    %7513 = vmatprep.subr.mxu0 %v2847
    %7514 = vmatpush1.msra.mxu0 %v2846
    %7515 = vmatprep.subr.mxu0 %v2839
    %7516 = vmatpush1.msra.mxu0 %v2838
    %7517 = vmatprep.subr.mxu0 %v2831
    %7518 = vmatpush1.msra.mxu0 %v2830
    %7519 = vmatprep.subr.mxu0 %v2823
    %7520 = vmatpush1.msra.mxu0 %v2822
    %7521 = vmatprep.subr.mxu0 %v2815
    %7522 = vmatpush1.msra.mxu0 %v2814
    %7523 = vmatprep.subr.mxu0 %v2807
    %7524 = vmatpush1.msra.mxu0 %v2806
    %7525 = vmatprep.subr.mxu0 %v2799
    %7526 = vmatpush1.msra.mxu0 %v2798
    %7527 = vmatprep.subr.mxu0 %v2791
    %7528 = vmatpush1.msra.mxu0 %v2790
    %7529 = vmatprep.subr.mxu0 %v3039
    %7530 = vmatpush2.msra.mxu0 %v3038
    %7531 = vmatprep.subr.mxu0 %v3031
    %7532 = vmatpush2.msra.mxu0 %v3030
    %7533 = vmatprep.subr.mxu0 %v3023
    %7534 = vmatpush2.msra.mxu0 %v3022
    %7535 = vmatprep.subr.mxu0 %v3015
    %7536 = vmatpush2.msra.mxu0 %v3014
    %7537 = vmatprep.subr.mxu0 %v3007
    %7538 = vmatpush2.msra.mxu0 %v3006
    %7539 = vmatprep.subr.mxu0 %v2999
    %7540 = vmatpush2.msra.mxu0 %v2998
    %7541 = vmatprep.subr.mxu0 %v2991
    %7542 = vmatpush2.msra.mxu0 %v2990
    %7543 = vmatprep.subr.mxu0 %v2983
    %7544 = vmatpush2.msra.mxu0 %v2982
    %7545 = vmatprep.subr.mxu0 %v2975
    %7546 = vmatpush2.msra.mxu0 %v2974
    %7547 = vmatprep.subr.mxu0 %v2967
    %7548 = vmatpush2.msra.mxu0 %v2966
    %7549 = vmatprep.subr.mxu0 %v2959
    %7550 = vmatpush2.msra.mxu0 %v2958
    %7551 = vmatprep.subr.mxu0 %v2951
    %7552 = vmatpush2.msra.mxu0 %v2950
    %7553 = vmatprep.subr.mxu0 %v2943
    %7554 = vmatpush2.msra.mxu0 %v2942
    %7555 = vmatprep.subr.mxu0 %v2935
    %7556 = vmatpush2.msra.mxu0 %v2934
    %7557 = vmatprep.subr.mxu0 %v2927
    %7558 = vmatpush2.msra.mxu0 %v2926
    %7559 = vmatprep.subr.mxu0 %v2919
    %7560 = vmatpush2.msra.mxu0 %v2918
    %7561 = vmatprep.mubr.f32.mxu0 %v7495
    %7562 = vmatmul.mubr.f32.gmra.mxu0 %v7467
    %v7563 = vpop.f32.mrf.mxu0
    %v7564 = vadd.f32 0.0, %v7563
    %v7565 = vpop.f32.mrf.mxu0
    %v7566 = vadd.f32 0.0, %v7565
    %7567 = vdwg.mxu0
    %7568 = vmatprep.subr.mxu0 %v2913
    %7569 = vmatpush1.msra.mxu0 %v2912
    %7570 = vmatprep.subr.mxu0 %v2905
    %7571 = vmatpush1.msra.mxu0 %v2904
    %7572 = vmatprep.subr.mxu0 %v2897
    %7573 = vmatpush1.msra.mxu0 %v2896
    %7574 = vmatprep.subr.mxu0 %v2889
    %7575 = vmatpush1.msra.mxu0 %v2888
    %7576 = vmatprep.subr.mxu0 %v2881
    %7577 = vmatpush1.msra.mxu0 %v2880
    %7578 = vmatprep.subr.mxu0 %v2873
    %7579 = vmatpush1.msra.mxu0 %v2872
    %7580 = vmatprep.subr.mxu0 %v2865
    %7581 = vmatpush1.msra.mxu0 %v2864
    %7582 = vmatprep.subr.mxu0 %v2857
    %7583 = vmatpush1.msra.mxu0 %v2856
    %7584 = vmatprep.subr.mxu0 %v2849
    %7585 = vmatpush1.msra.mxu0 %v2848
    %7586 = vmatprep.subr.mxu0 %v2841
    %7587 = vmatpush1.msra.mxu0 %v2840
    %7588 = vmatprep.subr.mxu0 %v2833
    %7589 = vmatpush1.msra.mxu0 %v2832
    %7590 = vmatprep.subr.mxu0 %v2825
    %7591 = vmatpush1.msra.mxu0 %v2824
    %7592 = vmatprep.subr.mxu0 %v2817
    %7593 = vmatpush1.msra.mxu0 %v2816
    %7594 = vmatprep.subr.mxu0 %v2809
    %7595 = vmatpush1.msra.mxu0 %v2808
    %7596 = vmatprep.subr.mxu0 %v2801
    %7597 = vmatpush1.msra.mxu0 %v2800
    %7598 = vmatprep.subr.mxu0 %v2793
    %7599 = vmatpush1.msra.mxu0 %v2792
    %7600 = vmatprep.subr.mxu0 %v3041
    %7601 = vmatpush2.msra.mxu0 %v3040
    %7602 = vmatprep.subr.mxu0 %v3033
    %7603 = vmatpush2.msra.mxu0 %v3032
    %7604 = vmatprep.subr.mxu0 %v3025
    %7605 = vmatpush2.msra.mxu0 %v3024
    %7606 = vmatprep.subr.mxu0 %v3017
    %7607 = vmatpush2.msra.mxu0 %v3016
    %7608 = vmatprep.subr.mxu0 %v3009
    %7609 = vmatpush2.msra.mxu0 %v3008
    %7610 = vmatprep.subr.mxu0 %v3001
    %7611 = vmatpush2.msra.mxu0 %v3000
    %7612 = vmatprep.subr.mxu0 %v2993
    %7613 = vmatpush2.msra.mxu0 %v2992
    %7614 = vmatprep.subr.mxu0 %v2985
    %7615 = vmatpush2.msra.mxu0 %v2984
    %7616 = vmatprep.subr.mxu0 %v2977
    %7617 = vmatpush2.msra.mxu0 %v2976
    %7618 = vmatprep.subr.mxu0 %v2969
    %7619 = vmatpush2.msra.mxu0 %v2968
    %7620 = vmatprep.subr.mxu0 %v2961
    %7621 = vmatpush2.msra.mxu0 %v2960
    %7622 = vmatprep.subr.mxu0 %v2953
    %7623 = vmatpush2.msra.mxu0 %v2952
    %7624 = vmatprep.subr.mxu0 %v2945
    %7625 = vmatpush2.msra.mxu0 %v2944
    %7626 = vmatprep.subr.mxu0 %v2937
    %7627 = vmatpush2.msra.mxu0 %v2936
    %7628 = vmatprep.subr.mxu0 %v2929
    %7629 = vmatpush2.msra.mxu0 %v2928
    %7630 = vmatprep.subr.mxu0 %v2921
    %7631 = vmatpush2.msra.mxu0 %v2920
    %7632 = vmatprep.mubr.f32.mxu0 %v7495
    %7633 = vmatmul.mubr.f32.gmra.mxu0 %v7467
    %v7634 = vpop.f32.mrf.mxu0
    %v7635 = vadd.f32 0.0, %v7634
    %v7636 = vpop.f32.mrf.mxu0
    %v7637 = vadd.f32 0.0, %v7636
    %7638 = vdwg.mxu0
    %7639 = vmatprep.subr.mxu0 %v2915
    %7640 = vmatpush1.msra.mxu0 %v2914
    %7641 = vmatprep.subr.mxu0 %v2907
    %7642 = vmatpush1.msra.mxu0 %v2906
    %7643 = vmatprep.subr.mxu0 %v2899
    %7644 = vmatpush1.msra.mxu0 %v2898
    %7645 = vmatprep.subr.mxu0 %v2891
    %7646 = vmatpush1.msra.mxu0 %v2890
    %7647 = vmatprep.subr.mxu0 %v2883
    %7648 = vmatpush1.msra.mxu0 %v2882
    %7649 = vmatprep.subr.mxu0 %v2875
    %7650 = vmatpush1.msra.mxu0 %v2874
    %7651 = vmatprep.subr.mxu0 %v2867
    %7652 = vmatpush1.msra.mxu0 %v2866
    %7653 = vmatprep.subr.mxu0 %v2859
    %7654 = vmatpush1.msra.mxu0 %v2858
    %7655 = vmatprep.subr.mxu0 %v2851
    %7656 = vmatpush1.msra.mxu0 %v2850
    %7657 = vmatprep.subr.mxu0 %v2843
    %7658 = vmatpush1.msra.mxu0 %v2842
    %7659 = vmatprep.subr.mxu0 %v2835
    %7660 = vmatpush1.msra.mxu0 %v2834
    %7661 = vmatprep.subr.mxu0 %v2827
    %7662 = vmatpush1.msra.mxu0 %v2826
    %7663 = vmatprep.subr.mxu0 %v2819
    %7664 = vmatpush1.msra.mxu0 %v2818
    %7665 = vmatprep.subr.mxu0 %v2811
    %7666 = vmatpush1.msra.mxu0 %v2810
    %7667 = vmatprep.subr.mxu0 %v2803
    %7668 = vmatpush1.msra.mxu0 %v2802
    %7669 = vmatprep.subr.mxu0 %v2795
    %7670 = vmatpush1.msra.mxu0 %v2794
    %7671 = vmatprep.subr.mxu0 %v3043
    %7672 = vmatpush2.msra.mxu0 %v3042
    %7673 = vmatprep.subr.mxu0 %v3035
    %7674 = vmatpush2.msra.mxu0 %v3034
    %7675 = vmatprep.subr.mxu0 %v3027
    %7676 = vmatpush2.msra.mxu0 %v3026
    %7677 = vmatprep.subr.mxu0 %v3019
    %7678 = vmatpush2.msra.mxu0 %v3018
    %7679 = vmatprep.subr.mxu0 %v3011
    %7680 = vmatpush2.msra.mxu0 %v3010
    %7681 = vmatprep.subr.mxu0 %v3003
    %7682 = vmatpush2.msra.mxu0 %v3002
    %7683 = vmatprep.subr.mxu0 %v2995
    %7684 = vmatpush2.msra.mxu0 %v2994
    %7685 = vmatprep.subr.mxu0 %v2987
    %7686 = vmatpush2.msra.mxu0 %v2986
    %7687 = vmatprep.subr.mxu0 %v2979
    %7688 = vmatpush2.msra.mxu0 %v2978
    %7689 = vmatprep.subr.mxu0 %v2971
    %7690 = vmatpush2.msra.mxu0 %v2970
    %7691 = vmatprep.subr.mxu0 %v2963
    %7692 = vmatpush2.msra.mxu0 %v2962
    %7693 = vmatprep.subr.mxu0 %v2955
    %7694 = vmatpush2.msra.mxu0 %v2954
    %7695 = vmatprep.subr.mxu0 %v2947
    %7696 = vmatpush2.msra.mxu0 %v2946
    %7697 = vmatprep.subr.mxu0 %v2939
    %7698 = vmatpush2.msra.mxu0 %v2938
    %7699 = vmatprep.subr.mxu0 %v2931
    %7700 = vmatpush2.msra.mxu0 %v2930
    %7701 = vmatprep.subr.mxu0 %v2923
    %7702 = vmatpush2.msra.mxu0 %v2922
    %7703 = vmatprep.mubr.f32.mxu0 %v7495
    %7704 = vmatmul.mubr.f32.gmra.mxu0 %v7467
    %v7705 = vpop.f32.mrf.mxu0
    %v7706 = vadd.f32 0.0, %v7705
    %v7707 = vpop.f32.mrf.mxu0
    %v7708 = vadd.f32 0.0, %v7707
    %7709 = vdwg.mxu0
    %7710 = vmatprep.subr.mxu0 %v2917
    %7711 = vmatpush1.msra.mxu0 %v2916
    %7712 = vmatprep.subr.mxu0 %v2909
    %7713 = vmatpush1.msra.mxu0 %v2908
    %7714 = vmatprep.subr.mxu0 %v2901
    %7715 = vmatpush1.msra.mxu0 %v2900
    %7716 = vmatprep.subr.mxu0 %v2893
    %7717 = vmatpush1.msra.mxu0 %v2892
    %7718 = vmatprep.subr.mxu0 %v2885
    %7719 = vmatpush1.msra.mxu0 %v2884
    %7720 = vmatprep.subr.mxu0 %v2877
    %7721 = vmatpush1.msra.mxu0 %v2876
    %7722 = vmatprep.subr.mxu0 %v2869
    %7723 = vmatpush1.msra.mxu0 %v2868
    %7724 = vmatprep.subr.mxu0 %v2861
    %7725 = vmatpush1.msra.mxu0 %v2860
    %7726 = vmatprep.subr.mxu0 %v2853
    %7727 = vmatpush1.msra.mxu0 %v2852
    %7728 = vmatprep.subr.mxu0 %v2845
    %7729 = vmatpush1.msra.mxu0 %v2844
    %7730 = vmatprep.subr.mxu0 %v2837
    %7731 = vmatpush1.msra.mxu0 %v2836
    %7732 = vmatprep.subr.mxu0 %v2829
    %7733 = vmatpush1.msra.mxu0 %v2828
    %7734 = vmatprep.subr.mxu0 %v2821
    %7735 = vmatpush1.msra.mxu0 %v2820
    %7736 = vmatprep.subr.mxu0 %v2813
    %7737 = vmatpush1.msra.mxu0 %v2812
    %7738 = vmatprep.subr.mxu0 %v2805
    %7739 = vmatpush1.msra.mxu0 %v2804
    %7740 = vmatprep.subr.mxu0 %v2797
    %7741 = vmatpush1.msra.mxu0 %v2796
    %7742 = vmatprep.subr.mxu0 %v3045
    %7743 = vmatpush2.msra.mxu0 %v3044
    %7744 = vmatprep.subr.mxu0 %v3037
    %7745 = vmatpush2.msra.mxu0 %v3036
    %7746 = vmatprep.subr.mxu0 %v3029
    %7747 = vmatpush2.msra.mxu0 %v3028
    %7748 = vmatprep.subr.mxu0 %v3021
    %7749 = vmatpush2.msra.mxu0 %v3020
    %7750 = vmatprep.subr.mxu0 %v3013
    %7751 = vmatpush2.msra.mxu0 %v3012
    %7752 = vmatprep.subr.mxu0 %v3005
    %7753 = vmatpush2.msra.mxu0 %v3004
    %7754 = vmatprep.subr.mxu0 %v2997
    %7755 = vmatpush2.msra.mxu0 %v2996
    %7756 = vmatprep.subr.mxu0 %v2989
    %7757 = vmatpush2.msra.mxu0 %v2988
    %7758 = vmatprep.subr.mxu0 %v2981
    %7759 = vmatpush2.msra.mxu0 %v2980
    %7760 = vmatprep.subr.mxu0 %v2973
    %7761 = vmatpush2.msra.mxu0 %v2972
    %7762 = vmatprep.subr.mxu0 %v2965
    %7763 = vmatpush2.msra.mxu0 %v2964
    %7764 = vmatprep.subr.mxu0 %v2957
    %7765 = vmatpush2.msra.mxu0 %v2956
    %7766 = vmatprep.subr.mxu0 %v2949
    %7767 = vmatpush2.msra.mxu0 %v2948
    %7768 = vmatprep.subr.mxu0 %v2941
    %7769 = vmatpush2.msra.mxu0 %v2940
    %7770 = vmatprep.subr.mxu0 %v2933
    %7771 = vmatpush2.msra.mxu0 %v2932
    %7772 = vmatprep.subr.mxu0 %v2925
    %7773 = vmatpush2.msra.mxu0 %v2924
    %7774 = vmatprep.mubr.f32.mxu0 %v7495
    %7775 = vmatmul.mubr.f32.gmra.mxu0 %v7467
    %v7776 = vpop.f32.mrf.mxu0
    %v7777 = vadd.f32 0.0, %v7776
    %v7778 = vpop.f32.mrf.mxu0
    %v7779 = vadd.f32 0.0, %v7778
    %7780 = vdwg.mxu0
    %v7781 = vld [vmem:[#allocation2 + $0x60] sm:$0xc]
    %v7782 = vld [vmem:[#allocation2 + $0x68] sm:$0xc]
    %v7783 = vld [vmem:[#allocation2 + $0x70] sm:$0xc]
    %v7784 = vld [vmem:[#allocation2 + $0x78] sm:$0xc]
    %v7789 = vrot.slane %v7781, 2
    %v7790 = vrot.slane %v7782, 2
    %v7791 = vrot.slane %v7783, 2
    %v7792 = vrot.slane %v7784, 2
    %v7797 = vadd.f32 %v7564, %v7789
    %v7798 = vadd.f32 %v7566, %v7790
    %v7799 = vadd.f32 %v7635, %v7791
    %v7800 = vadd.f32 %v7637, %v7792
    %v7801 = vxor.u32 %v7797, 2147483648
    %v7802 = vmul.f32 %v7801, 1.442695
    %v7803 = vpow.pop %v7802
    %v7804 = vadd.f32 %v7803, 1.0
    %v7805 = vrcp.pop %v7804
    %v7806 = vmul.f32 1.0, %v7805
    %v7807 = vxor.u32 %v7798, 2147483648
    %v7808 = vmul.f32 %v7807, 1.442695
    %v7809 = vpow.pop %v7808
    %v7810 = vadd.f32 %v7809, 1.0
    %v7811 = vrcp.pop %v7810
    %v7812 = vmul.f32 1.0, %v7811
    %v7813 = vtanh.pop %v7799
    %v7814 = vxor.u32 %v7800, 2147483648
    %v7815 = vmul.f32 %v7814, 1.442695
    %v7816 = vpow.pop %v7815
    %v7817 = vadd.f32 %v7816, 1.0
    %v7818 = vrcp.pop %v7817
    %v7819 = vmul.f32 1.0, %v7818
    %v7820 = vmul.f32 %v7812, %v7465
    %v7821 = vmul.f32 %v7806, %v7813
    %v7822 = vadd.f32 %v7820, %v7821
    %v7823 = vtanh.pop %v7822
    %v7824 = vmul.f32 %v7819, %v7823
    %v7825 = vadd.f32 %v7706, %v3560
    %v7826 = vadd.f32 %v7708, %v3564
    %v7827 = vadd.f32 %v7777, %v3568
    %v7828 = vadd.f32 %v7779, %v3572
    %v7829 = vxor.u32 %v7825, 2147483648
    %v7830 = vmul.f32 %v7829, 1.442695
    %v7831 = vpow.pop %v7830
    %v7832 = vadd.f32 %v7831, 1.0
    %v7833 = vrcp.pop %v7832
    %v7834 = vmul.f32 1.0, %v7833
    %v7835 = vxor.u32 %v7826, 2147483648
    %v7836 = vmul.f32 %v7835, 1.442695
    %v7837 = vpow.pop %v7836
    %v7838 = vadd.f32 %v7837, 1.0
    %v7839 = vrcp.pop %v7838
    %v7840 = vmul.f32 1.0, %v7839
    %v7841 = vtanh.pop %v7827
    %v7842 = vxor.u32 %v7828, 2147483648
    %v7843 = vmul.f32 %v7842, 1.442695
    %v7844 = vpow.pop %v7843
    %v7845 = vadd.f32 %v7844, 1.0
    %v7846 = vrcp.pop %v7845
    %v7847 = vmul.f32 1.0, %v7846
    %v7848 = vmul.f32 %v7840, %v7493
    %v7849 = vmul.f32 %v7834, %v7841
    %v7850 = vadd.f32 %v7848, %v7849
    %v7851 = vtanh.pop %v7850
    %v7852 = vmul.f32 %v7847, %v7851
    %7853 = vst [vmem:[#allocation3 + $0x18] sm:$0x3] %v7852
    %7854 = vmatprep.subr.mxu0 %v2911
    %7855 = vmatpush1.msra.mxu0 %v2910
    %7856 = vmatprep.subr.mxu0 %v2903
    %7857 = vmatpush1.msra.mxu0 %v2902
    %7858 = vmatprep.subr.mxu0 %v2895
    %7859 = vmatpush1.msra.mxu0 %v2894
    %7860 = vmatprep.subr.mxu0 %v2887
    %7861 = vmatpush1.msra.mxu0 %v2886
    %7862 = vmatprep.subr.mxu0 %v2879
    %7863 = vmatpush1.msra.mxu0 %v2878
    %7864 = vmatprep.subr.mxu0 %v2871
    %7865 = vmatpush1.msra.mxu0 %v2870
    %7866 = vmatprep.subr.mxu0 %v2863
    %7867 = vmatpush1.msra.mxu0 %v2862
    %7868 = vmatprep.subr.mxu0 %v2855
    %7869 = vmatpush1.msra.mxu0 %v2854
    %7870 = vmatprep.subr.mxu0 %v2847
    %7871 = vmatpush1.msra.mxu0 %v2846
    %7872 = vmatprep.subr.mxu0 %v2839
    %7873 = vmatpush1.msra.mxu0 %v2838
    %7874 = vmatprep.subr.mxu0 %v2831
    %7875 = vmatpush1.msra.mxu0 %v2830
    %7876 = vmatprep.subr.mxu0 %v2823
    %7877 = vmatpush1.msra.mxu0 %v2822
    %7878 = vmatprep.subr.mxu0 %v2815
    %7879 = vmatpush1.msra.mxu0 %v2814
    %7880 = vmatprep.subr.mxu0 %v2807
    %7881 = vmatpush1.msra.mxu0 %v2806
    %7882 = vmatprep.subr.mxu0 %v2799
    %7883 = vmatpush1.msra.mxu0 %v2798
    %7884 = vmatprep.subr.mxu0 %v2791
    %7885 = vmatpush1.msra.mxu0 %v2790
    %7886 = vmatprep.subr.mxu0 %v3039
    %7887 = vmatpush2.msra.mxu0 %v3038
    %7888 = vmatprep.subr.mxu0 %v3031
    %7889 = vmatpush2.msra.mxu0 %v3030
    %7890 = vmatprep.subr.mxu0 %v3023
    %7891 = vmatpush2.msra.mxu0 %v3022
    %7892 = vmatprep.subr.mxu0 %v3015
    %7893 = vmatpush2.msra.mxu0 %v3014
    %7894 = vmatprep.subr.mxu0 %v3007
    %7895 = vmatpush2.msra.mxu0 %v3006
    %7896 = vmatprep.subr.mxu0 %v2999
    %7897 = vmatpush2.msra.mxu0 %v2998
    %7898 = vmatprep.subr.mxu0 %v2991
    %7899 = vmatpush2.msra.mxu0 %v2990
    %7900 = vmatprep.subr.mxu0 %v2983
    %7901 = vmatpush2.msra.mxu0 %v2982
    %7902 = vmatprep.subr.mxu0 %v2975
    %7903 = vmatpush2.msra.mxu0 %v2974
    %7904 = vmatprep.subr.mxu0 %v2967
    %7905 = vmatpush2.msra.mxu0 %v2966
    %7906 = vmatprep.subr.mxu0 %v2959
    %7907 = vmatpush2.msra.mxu0 %v2958
    %7908 = vmatprep.subr.mxu0 %v2951
    %7909 = vmatpush2.msra.mxu0 %v2950
    %7910 = vmatprep.subr.mxu0 %v2943
    %7911 = vmatpush2.msra.mxu0 %v2942
    %7912 = vmatprep.subr.mxu0 %v2935
    %7913 = vmatpush2.msra.mxu0 %v2934
    %7914 = vmatprep.subr.mxu0 %v2927
    %7915 = vmatpush2.msra.mxu0 %v2926
    %7916 = vmatprep.subr.mxu0 %v2919
    %7917 = vmatpush2.msra.mxu0 %v2918
    %7918 = vmatprep.mubr.f32.mxu0 %v7852
    %7919 = vmatmul.mubr.f32.gmra.mxu0 %v7824
    %v7920 = vpop.f32.mrf.mxu0
    %v7921 = vadd.f32 0.0, %v7920
    %v7922 = vpop.f32.mrf.mxu0
    %v7923 = vadd.f32 0.0, %v7922
    %7924 = vdwg.mxu0
    %7925 = vmatprep.subr.mxu0 %v2913
    %7926 = vmatpush1.msra.mxu0 %v2912
    %7927 = vmatprep.subr.mxu0 %v2905
    %7928 = vmatpush1.msra.mxu0 %v2904
    %7929 = vmatprep.subr.mxu0 %v2897
    %7930 = vmatpush1.msra.mxu0 %v2896
    %7931 = vmatprep.subr.mxu0 %v2889
    %7932 = vmatpush1.msra.mxu0 %v2888
    %7933 = vmatprep.subr.mxu0 %v2881
    %7934 = vmatpush1.msra.mxu0 %v2880
    %7935 = vmatprep.subr.mxu0 %v2873
    %7936 = vmatpush1.msra.mxu0 %v2872
    %7937 = vmatprep.subr.mxu0 %v2865
    %7938 = vmatpush1.msra.mxu0 %v2864
    %7939 = vmatprep.subr.mxu0 %v2857
    %7940 = vmatpush1.msra.mxu0 %v2856
    %7941 = vmatprep.subr.mxu0 %v2849
    %7942 = vmatpush1.msra.mxu0 %v2848
    %7943 = vmatprep.subr.mxu0 %v2841
    %7944 = vmatpush1.msra.mxu0 %v2840
    %7945 = vmatprep.subr.mxu0 %v2833
    %7946 = vmatpush1.msra.mxu0 %v2832
    %7947 = vmatprep.subr.mxu0 %v2825
    %7948 = vmatpush1.msra.mxu0 %v2824
    %7949 = vmatprep.subr.mxu0 %v2817
    %7950 = vmatpush1.msra.mxu0 %v2816
    %7951 = vmatprep.subr.mxu0 %v2809
    %7952 = vmatpush1.msra.mxu0 %v2808
    %7953 = vmatprep.subr.mxu0 %v2801
    %7954 = vmatpush1.msra.mxu0 %v2800
    %7955 = vmatprep.subr.mxu0 %v2793
    %7956 = vmatpush1.msra.mxu0 %v2792
    %7957 = vmatprep.subr.mxu0 %v3041
    %7958 = vmatpush2.msra.mxu0 %v3040
    %7959 = vmatprep.subr.mxu0 %v3033
    %7960 = vmatpush2.msra.mxu0 %v3032
    %7961 = vmatprep.subr.mxu0 %v3025
    %7962 = vmatpush2.msra.mxu0 %v3024
    %7963 = vmatprep.subr.mxu0 %v3017
    %7964 = vmatpush2.msra.mxu0 %v3016
    %7965 = vmatprep.subr.mxu0 %v3009
    %7966 = vmatpush2.msra.mxu0 %v3008
    %7967 = vmatprep.subr.mxu0 %v3001
    %7968 = vmatpush2.msra.mxu0 %v3000
    %7969 = vmatprep.subr.mxu0 %v2993
    %7970 = vmatpush2.msra.mxu0 %v2992
    %7971 = vmatprep.subr.mxu0 %v2985
    %7972 = vmatpush2.msra.mxu0 %v2984
    %7973 = vmatprep.subr.mxu0 %v2977
    %7974 = vmatpush2.msra.mxu0 %v2976
    %7975 = vmatprep.subr.mxu0 %v2969
    %7976 = vmatpush2.msra.mxu0 %v2968
    %7977 = vmatprep.subr.mxu0 %v2961
    %7978 = vmatpush2.msra.mxu0 %v2960
    %7979 = vmatprep.subr.mxu0 %v2953
    %7980 = vmatpush2.msra.mxu0 %v2952
    %7981 = vmatprep.subr.mxu0 %v2945
    %7982 = vmatpush2.msra.mxu0 %v2944
    %7983 = vmatprep.subr.mxu0 %v2937
    %7984 = vmatpush2.msra.mxu0 %v2936
    %7985 = vmatprep.subr.mxu0 %v2929
    %7986 = vmatpush2.msra.mxu0 %v2928
    %7987 = vmatprep.subr.mxu0 %v2921
    %7988 = vmatpush2.msra.mxu0 %v2920
    %7989 = vmatprep.mubr.f32.mxu0 %v7852
    %7990 = vmatmul.mubr.f32.gmra.mxu0 %v7824
    %v7991 = vpop.f32.mrf.mxu0
    %v7992 = vadd.f32 0.0, %v7991
    %v7993 = vpop.f32.mrf.mxu0
    %v7994 = vadd.f32 0.0, %v7993
    %7995 = vdwg.mxu0
    %7996 = vmatprep.subr.mxu0 %v2915
    %7997 = vmatpush1.msra.mxu0 %v2914
    %7998 = vmatprep.subr.mxu0 %v2907
    %7999 = vmatpush1.msra.mxu0 %v2906
    %8000 = vmatprep.subr.mxu0 %v2899
    %8001 = vmatpush1.msra.mxu0 %v2898
    %8002 = vmatprep.subr.mxu0 %v2891
    %8003 = vmatpush1.msra.mxu0 %v2890
    %8004 = vmatprep.subr.mxu0 %v2883
    %8005 = vmatpush1.msra.mxu0 %v2882
    %8006 = vmatprep.subr.mxu0 %v2875
    %8007 = vmatpush1.msra.mxu0 %v2874
    %8008 = vmatprep.subr.mxu0 %v2867
    %8009 = vmatpush1.msra.mxu0 %v2866
    %8010 = vmatprep.subr.mxu0 %v2859
    %8011 = vmatpush1.msra.mxu0 %v2858
    %8012 = vmatprep.subr.mxu0 %v2851
    %8013 = vmatpush1.msra.mxu0 %v2850
    %8014 = vmatprep.subr.mxu0 %v2843
    %8015 = vmatpush1.msra.mxu0 %v2842
    %8016 = vmatprep.subr.mxu0 %v2835
    %8017 = vmatpush1.msra.mxu0 %v2834
    %8018 = vmatprep.subr.mxu0 %v2827
    %8019 = vmatpush1.msra.mxu0 %v2826
    %8020 = vmatprep.subr.mxu0 %v2819
    %8021 = vmatpush1.msra.mxu0 %v2818
    %8022 = vmatprep.subr.mxu0 %v2811
    %8023 = vmatpush1.msra.mxu0 %v2810
    %8024 = vmatprep.subr.mxu0 %v2803
    %8025 = vmatpush1.msra.mxu0 %v2802
    %8026 = vmatprep.subr.mxu0 %v2795
    %8027 = vmatpush1.msra.mxu0 %v2794
    %8028 = vmatprep.subr.mxu0 %v3043
    %8029 = vmatpush2.msra.mxu0 %v3042
    %8030 = vmatprep.subr.mxu0 %v3035
    %8031 = vmatpush2.msra.mxu0 %v3034
    %8032 = vmatprep.subr.mxu0 %v3027
    %8033 = vmatpush2.msra.mxu0 %v3026
    %8034 = vmatprep.subr.mxu0 %v3019
    %8035 = vmatpush2.msra.mxu0 %v3018
    %8036 = vmatprep.subr.mxu0 %v3011
    %8037 = vmatpush2.msra.mxu0 %v3010
    %8038 = vmatprep.subr.mxu0 %v3003
    %8039 = vmatpush2.msra.mxu0 %v3002
    %8040 = vmatprep.subr.mxu0 %v2995
    %8041 = vmatpush2.msra.mxu0 %v2994
    %8042 = vmatprep.subr.mxu0 %v2987
    %8043 = vmatpush2.msra.mxu0 %v2986
    %8044 = vmatprep.subr.mxu0 %v2979
    %8045 = vmatpush2.msra.mxu0 %v2978
    %8046 = vmatprep.subr.mxu0 %v2971
    %8047 = vmatpush2.msra.mxu0 %v2970
    %8048 = vmatprep.subr.mxu0 %v2963
    %8049 = vmatpush2.msra.mxu0 %v2962
    %8050 = vmatprep.subr.mxu0 %v2955
    %8051 = vmatpush2.msra.mxu0 %v2954
    %8052 = vmatprep.subr.mxu0 %v2947
    %8053 = vmatpush2.msra.mxu0 %v2946
    %8054 = vmatprep.subr.mxu0 %v2939
    %8055 = vmatpush2.msra.mxu0 %v2938
    %8056 = vmatprep.subr.mxu0 %v2931
    %8057 = vmatpush2.msra.mxu0 %v2930
    %8058 = vmatprep.subr.mxu0 %v2923
    %8059 = vmatpush2.msra.mxu0 %v2922
    %8060 = vmatprep.mubr.f32.mxu0 %v7852
    %8061 = vmatmul.mubr.f32.gmra.mxu0 %v7824
    %v8062 = vpop.f32.mrf.mxu0
    %v8063 = vadd.f32 0.0, %v8062
    %v8064 = vpop.f32.mrf.mxu0
    %v8065 = vadd.f32 0.0, %v8064
    %8066 = vdwg.mxu0
    %8067 = vmatprep.subr.mxu0 %v2917
    %8068 = vmatpush1.msra.mxu0 %v2916
    %8069 = vmatprep.subr.mxu0 %v2909
    %8070 = vmatpush1.msra.mxu0 %v2908
    %8071 = vmatprep.subr.mxu0 %v2901
    %8072 = vmatpush1.msra.mxu0 %v2900
    %8073 = vmatprep.subr.mxu0 %v2893
    %8074 = vmatpush1.msra.mxu0 %v2892
    %8075 = vmatprep.subr.mxu0 %v2885
    %8076 = vmatpush1.msra.mxu0 %v2884
    %8077 = vmatprep.subr.mxu0 %v2877
    %8078 = vmatpush1.msra.mxu0 %v2876
    %8079 = vmatprep.subr.mxu0 %v2869
    %8080 = vmatpush1.msra.mxu0 %v2868
    %8081 = vmatprep.subr.mxu0 %v2861
    %8082 = vmatpush1.msra.mxu0 %v2860
    %8083 = vmatprep.subr.mxu0 %v2853
    %8084 = vmatpush1.msra.mxu0 %v2852
    %8085 = vmatprep.subr.mxu0 %v2845
    %8086 = vmatpush1.msra.mxu0 %v2844
    %8087 = vmatprep.subr.mxu0 %v2837
    %8088 = vmatpush1.msra.mxu0 %v2836
    %8089 = vmatprep.subr.mxu0 %v2829
    %8090 = vmatpush1.msra.mxu0 %v2828
    %8091 = vmatprep.subr.mxu0 %v2821
    %8092 = vmatpush1.msra.mxu0 %v2820
    %8093 = vmatprep.subr.mxu0 %v2813
    %8094 = vmatpush1.msra.mxu0 %v2812
    %8095 = vmatprep.subr.mxu0 %v2805
    %8096 = vmatpush1.msra.mxu0 %v2804
    %8097 = vmatprep.subr.mxu0 %v2797
    %8098 = vmatpush1.msra.mxu0 %v2796
    %8099 = vmatprep.subr.mxu0 %v3045
    %8100 = vmatpush2.msra.mxu0 %v3044
    %8101 = vmatprep.subr.mxu0 %v3037
    %8102 = vmatpush2.msra.mxu0 %v3036
    %8103 = vmatprep.subr.mxu0 %v3029
    %8104 = vmatpush2.msra.mxu0 %v3028
    %8105 = vmatprep.subr.mxu0 %v3021
    %8106 = vmatpush2.msra.mxu0 %v3020
    %8107 = vmatprep.subr.mxu0 %v3013
    %8108 = vmatpush2.msra.mxu0 %v3012
    %8109 = vmatprep.subr.mxu0 %v3005
    %8110 = vmatpush2.msra.mxu0 %v3004
    %8111 = vmatprep.subr.mxu0 %v2997
    %8112 = vmatpush2.msra.mxu0 %v2996
    %8113 = vmatprep.subr.mxu0 %v2989
    %8114 = vmatpush2.msra.mxu0 %v2988
    %8115 = vmatprep.subr.mxu0 %v2981
    %8116 = vmatpush2.msra.mxu0 %v2980
    %8117 = vmatprep.subr.mxu0 %v2973
    %8118 = vmatpush2.msra.mxu0 %v2972
    %8119 = vmatprep.subr.mxu0 %v2965
    %8120 = vmatpush2.msra.mxu0 %v2964
    %8121 = vmatprep.subr.mxu0 %v2957
    %8122 = vmatpush2.msra.mxu0 %v2956
    %8123 = vmatprep.subr.mxu0 %v2949
    %8124 = vmatpush2.msra.mxu0 %v2948
    %8125 = vmatprep.subr.mxu0 %v2941
    %8126 = vmatpush2.msra.mxu0 %v2940
    %8127 = vmatprep.subr.mxu0 %v2933
    %8128 = vmatpush2.msra.mxu0 %v2932
    %8129 = vmatprep.subr.mxu0 %v2925
    %8130 = vmatpush2.msra.mxu0 %v2924
    %8131 = vmatprep.mubr.f32.mxu0 %v7852
    %8132 = vmatmul.mubr.f32.gmra.mxu0 %v7824
    %v8133 = vpop.f32.mrf.mxu0
    %v8134 = vadd.f32 0.0, %v8133
    %v8135 = vpop.f32.mrf.mxu0
    %v8136 = vadd.f32 0.0, %v8135
    %8137 = vdwg.mxu0
    %v8138 = vld [vmem:[#allocation2 + $0x60] sm:$0x30]
    %v8139 = vld [vmem:[#allocation2 + $0x68] sm:$0x30]
    %v8140 = vld [vmem:[#allocation2 + $0x70] sm:$0x30]
    %v8141 = vld [vmem:[#allocation2 + $0x78] sm:$0x30]
    %v8146 = vrot.slane %v8138, 4
    %v8147 = vrot.slane %v8139, 4
    %v8148 = vrot.slane %v8140, 4
    %v8149 = vrot.slane %v8141, 4
    %v8154 = vadd.f32 %v7921, %v8146
    %v8155 = vadd.f32 %v7923, %v8147
    %v8156 = vadd.f32 %v7992, %v8148
    %v8157 = vadd.f32 %v7994, %v8149
    %v8158 = vxor.u32 %v8154, 2147483648
    %v8159 = vmul.f32 %v8158, 1.442695
    %v8160 = vpow.pop %v8159
    %v8161 = vadd.f32 %v8160, 1.0
    %v8162 = vrcp.pop %v8161
    %v8163 = vmul.f32 1.0, %v8162
    %v8164 = vxor.u32 %v8155, 2147483648
    %v8165 = vmul.f32 %v8164, 1.442695
    %v8166 = vpow.pop %v8165
    %v8167 = vadd.f32 %v8166, 1.0
    %v8168 = vrcp.pop %v8167
    %v8169 = vmul.f32 1.0, %v8168
    %v8170 = vtanh.pop %v8156
    %v8171 = vxor.u32 %v8157, 2147483648
    %v8172 = vmul.f32 %v8171, 1.442695
    %v8173 = vpow.pop %v8172
    %v8174 = vadd.f32 %v8173, 1.0
    %v8175 = vrcp.pop %v8174
    %v8176 = vmul.f32 1.0, %v8175
    %v8177 = vmul.f32 %v8169, %v7822
    %v8178 = vmul.f32 %v8163, %v8170
    %v8179 = vadd.f32 %v8177, %v8178
    %v8180 = vtanh.pop %v8179
    %v8181 = vmul.f32 %v8176, %v8180
    %v8182 = vadd.f32 %v8063, %v3560
    %v8183 = vadd.f32 %v8065, %v3564
    %v8184 = vadd.f32 %v8134, %v3568
    %v8185 = vadd.f32 %v8136, %v3572
    %v8186 = vxor.u32 %v8182, 2147483648
    %v8187 = vmul.f32 %v8186, 1.442695
    %v8188 = vpow.pop %v8187
    %v8189 = vadd.f32 %v8188, 1.0
    %v8190 = vrcp.pop %v8189
    %v8191 = vmul.f32 1.0, %v8190
    %v8192 = vxor.u32 %v8183, 2147483648
    %v8193 = vmul.f32 %v8192, 1.442695
    %v8194 = vpow.pop %v8193
    %v8195 = vadd.f32 %v8194, 1.0
    %v8196 = vrcp.pop %v8195
    %v8197 = vmul.f32 1.0, %v8196
    %v8198 = vtanh.pop %v8184
    %v8199 = vxor.u32 %v8185, 2147483648
    %v8200 = vmul.f32 %v8199, 1.442695
    %v8201 = vpow.pop %v8200
    %v8202 = vadd.f32 %v8201, 1.0
    %v8203 = vrcp.pop %v8202
    %v8204 = vmul.f32 1.0, %v8203
    %v8205 = vmul.f32 %v8197, %v7850
    %v8206 = vmul.f32 %v8191, %v8198
    %v8207 = vadd.f32 %v8205, %v8206
    %v8208 = vtanh.pop %v8207
    %v8209 = vmul.f32 %v8204, %v8208
    %8210 = vst [vmem:[#allocation3 + $0x1a] sm:$0x3] %v8209
    %8211 = vmatprep.subr.mxu0 %v2911
    %8212 = vmatpush1.msra.mxu0 %v2910
    %8213 = vmatprep.subr.mxu0 %v2903
    %8214 = vmatpush1.msra.mxu0 %v2902
    %8215 = vmatprep.subr.mxu0 %v2895
    %8216 = vmatpush1.msra.mxu0 %v2894
    %8217 = vmatprep.subr.mxu0 %v2887
    %8218 = vmatpush1.msra.mxu0 %v2886
    %8219 = vmatprep.subr.mxu0 %v2879
    %8220 = vmatpush1.msra.mxu0 %v2878
    %8221 = vmatprep.subr.mxu0 %v2871
    %8222 = vmatpush1.msra.mxu0 %v2870
    %8223 = vmatprep.subr.mxu0 %v2863
    %8224 = vmatpush1.msra.mxu0 %v2862
    %8225 = vmatprep.subr.mxu0 %v2855
    %8226 = vmatpush1.msra.mxu0 %v2854
    %8227 = vmatprep.subr.mxu0 %v2847
    %8228 = vmatpush1.msra.mxu0 %v2846
    %8229 = vmatprep.subr.mxu0 %v2839
    %8230 = vmatpush1.msra.mxu0 %v2838
    %8231 = vmatprep.subr.mxu0 %v2831
    %8232 = vmatpush1.msra.mxu0 %v2830
    %8233 = vmatprep.subr.mxu0 %v2823
    %8234 = vmatpush1.msra.mxu0 %v2822
    %8235 = vmatprep.subr.mxu0 %v2815
    %8236 = vmatpush1.msra.mxu0 %v2814
    %8237 = vmatprep.subr.mxu0 %v2807
    %8238 = vmatpush1.msra.mxu0 %v2806
    %8239 = vmatprep.subr.mxu0 %v2799
    %8240 = vmatpush1.msra.mxu0 %v2798
    %8241 = vmatprep.subr.mxu0 %v2791
    %8242 = vmatpush1.msra.mxu0 %v2790
    %8243 = vmatprep.subr.mxu0 %v3039
    %8244 = vmatpush2.msra.mxu0 %v3038
    %8245 = vmatprep.subr.mxu0 %v3031
    %8246 = vmatpush2.msra.mxu0 %v3030
    %8247 = vmatprep.subr.mxu0 %v3023
    %8248 = vmatpush2.msra.mxu0 %v3022
    %8249 = vmatprep.subr.mxu0 %v3015
    %8250 = vmatpush2.msra.mxu0 %v3014
    %8251 = vmatprep.subr.mxu0 %v3007
    %8252 = vmatpush2.msra.mxu0 %v3006
    %8253 = vmatprep.subr.mxu0 %v2999
    %8254 = vmatpush2.msra.mxu0 %v2998
    %8255 = vmatprep.subr.mxu0 %v2991
    %8256 = vmatpush2.msra.mxu0 %v2990
    %8257 = vmatprep.subr.mxu0 %v2983
    %8258 = vmatpush2.msra.mxu0 %v2982
    %8259 = vmatprep.subr.mxu0 %v2975
    %8260 = vmatpush2.msra.mxu0 %v2974
    %8261 = vmatprep.subr.mxu0 %v2967
    %8262 = vmatpush2.msra.mxu0 %v2966
    %8263 = vmatprep.subr.mxu0 %v2959
    %8264 = vmatpush2.msra.mxu0 %v2958
    %8265 = vmatprep.subr.mxu0 %v2951
    %8266 = vmatpush2.msra.mxu0 %v2950
    %8267 = vmatprep.subr.mxu0 %v2943
    %8268 = vmatpush2.msra.mxu0 %v2942
    %8269 = vmatprep.subr.mxu0 %v2935
    %8270 = vmatpush2.msra.mxu0 %v2934
    %8271 = vmatprep.subr.mxu0 %v2927
    %8272 = vmatpush2.msra.mxu0 %v2926
    %8273 = vmatprep.subr.mxu0 %v2919
    %8274 = vmatpush2.msra.mxu0 %v2918
    %8275 = vmatprep.mubr.f32.mxu0 %v8209
    %8276 = vmatmul.mubr.f32.gmra.mxu0 %v8181
    %v8277 = vpop.f32.mrf.mxu0
    %v8278 = vadd.f32 0.0, %v8277
    %v8279 = vpop.f32.mrf.mxu0
    %v8280 = vadd.f32 0.0, %v8279
    %8281 = vdwg.mxu0
    %8282 = vmatprep.subr.mxu0 %v2913
    %8283 = vmatpush1.msra.mxu0 %v2912
    %8284 = vmatprep.subr.mxu0 %v2905
    %8285 = vmatpush1.msra.mxu0 %v2904
    %8286 = vmatprep.subr.mxu0 %v2897
    %8287 = vmatpush1.msra.mxu0 %v2896
    %8288 = vmatprep.subr.mxu0 %v2889
    %8289 = vmatpush1.msra.mxu0 %v2888
    %8290 = vmatprep.subr.mxu0 %v2881
    %8291 = vmatpush1.msra.mxu0 %v2880
    %8292 = vmatprep.subr.mxu0 %v2873
    %8293 = vmatpush1.msra.mxu0 %v2872
    %8294 = vmatprep.subr.mxu0 %v2865
    %8295 = vmatpush1.msra.mxu0 %v2864
    %8296 = vmatprep.subr.mxu0 %v2857
    %8297 = vmatpush1.msra.mxu0 %v2856
    %8298 = vmatprep.subr.mxu0 %v2849
    %8299 = vmatpush1.msra.mxu0 %v2848
    %8300 = vmatprep.subr.mxu0 %v2841
    %8301 = vmatpush1.msra.mxu0 %v2840
    %8302 = vmatprep.subr.mxu0 %v2833
    %8303 = vmatpush1.msra.mxu0 %v2832
    %8304 = vmatprep.subr.mxu0 %v2825
    %8305 = vmatpush1.msra.mxu0 %v2824
    %8306 = vmatprep.subr.mxu0 %v2817
    %8307 = vmatpush1.msra.mxu0 %v2816
    %8308 = vmatprep.subr.mxu0 %v2809
    %8309 = vmatpush1.msra.mxu0 %v2808
    %8310 = vmatprep.subr.mxu0 %v2801
    %8311 = vmatpush1.msra.mxu0 %v2800
    %8312 = vmatprep.subr.mxu0 %v2793
    %8313 = vmatpush1.msra.mxu0 %v2792
    %8314 = vmatprep.subr.mxu0 %v3041
    %8315 = vmatpush2.msra.mxu0 %v3040
    %8316 = vmatprep.subr.mxu0 %v3033
    %8317 = vmatpush2.msra.mxu0 %v3032
    %8318 = vmatprep.subr.mxu0 %v3025
    %8319 = vmatpush2.msra.mxu0 %v3024
    %8320 = vmatprep.subr.mxu0 %v3017
    %8321 = vmatpush2.msra.mxu0 %v3016
    %8322 = vmatprep.subr.mxu0 %v3009
    %8323 = vmatpush2.msra.mxu0 %v3008
    %8324 = vmatprep.subr.mxu0 %v3001
    %8325 = vmatpush2.msra.mxu0 %v3000
    %8326 = vmatprep.subr.mxu0 %v2993
    %8327 = vmatpush2.msra.mxu0 %v2992
    %8328 = vmatprep.subr.mxu0 %v2985
    %8329 = vmatpush2.msra.mxu0 %v2984
    %8330 = vmatprep.subr.mxu0 %v2977
    %8331 = vmatpush2.msra.mxu0 %v2976
    %8332 = vmatprep.subr.mxu0 %v2969
    %8333 = vmatpush2.msra.mxu0 %v2968
    %8334 = vmatprep.subr.mxu0 %v2961
    %8335 = vmatpush2.msra.mxu0 %v2960
    %8336 = vmatprep.subr.mxu0 %v2953
    %8337 = vmatpush2.msra.mxu0 %v2952
    %8338 = vmatprep.subr.mxu0 %v2945
    %8339 = vmatpush2.msra.mxu0 %v2944
    %8340 = vmatprep.subr.mxu0 %v2937
    %8341 = vmatpush2.msra.mxu0 %v2936
    %8342 = vmatprep.subr.mxu0 %v2929
    %8343 = vmatpush2.msra.mxu0 %v2928
    %8344 = vmatprep.subr.mxu0 %v2921
    %8345 = vmatpush2.msra.mxu0 %v2920
    %8346 = vmatprep.mubr.f32.mxu0 %v8209
    %8347 = vmatmul.mubr.f32.gmra.mxu0 %v8181
    %v8348 = vpop.f32.mrf.mxu0
    %v8349 = vadd.f32 0.0, %v8348
    %v8350 = vpop.f32.mrf.mxu0
    %v8351 = vadd.f32 0.0, %v8350
    %8352 = vdwg.mxu0
    %8353 = vmatprep.subr.mxu0 %v2915
    %8354 = vmatpush1.msra.mxu0 %v2914
    %8355 = vmatprep.subr.mxu0 %v2907
    %8356 = vmatpush1.msra.mxu0 %v2906
    %8357 = vmatprep.subr.mxu0 %v2899
    %8358 = vmatpush1.msra.mxu0 %v2898
    %8359 = vmatprep.subr.mxu0 %v2891
    %8360 = vmatpush1.msra.mxu0 %v2890
    %8361 = vmatprep.subr.mxu0 %v2883
    %8362 = vmatpush1.msra.mxu0 %v2882
    %8363 = vmatprep.subr.mxu0 %v2875
    %8364 = vmatpush1.msra.mxu0 %v2874
    %8365 = vmatprep.subr.mxu0 %v2867
    %8366 = vmatpush1.msra.mxu0 %v2866
    %8367 = vmatprep.subr.mxu0 %v2859
    %8368 = vmatpush1.msra.mxu0 %v2858
    %8369 = vmatprep.subr.mxu0 %v2851
    %8370 = vmatpush1.msra.mxu0 %v2850
    %8371 = vmatprep.subr.mxu0 %v2843
    %8372 = vmatpush1.msra.mxu0 %v2842
    %8373 = vmatprep.subr.mxu0 %v2835
    %8374 = vmatpush1.msra.mxu0 %v2834
    %8375 = vmatprep.subr.mxu0 %v2827
    %8376 = vmatpush1.msra.mxu0 %v2826
    %8377 = vmatprep.subr.mxu0 %v2819
    %8378 = vmatpush1.msra.mxu0 %v2818
    %8379 = vmatprep.subr.mxu0 %v2811
    %8380 = vmatpush1.msra.mxu0 %v2810
    %8381 = vmatprep.subr.mxu0 %v2803
    %8382 = vmatpush1.msra.mxu0 %v2802
    %8383 = vmatprep.subr.mxu0 %v2795
    %8384 = vmatpush1.msra.mxu0 %v2794
    %8385 = vmatprep.subr.mxu0 %v3043
    %8386 = vmatpush2.msra.mxu0 %v3042
    %8387 = vmatprep.subr.mxu0 %v3035
    %8388 = vmatpush2.msra.mxu0 %v3034
    %8389 = vmatprep.subr.mxu0 %v3027
    %8390 = vmatpush2.msra.mxu0 %v3026
    %8391 = vmatprep.subr.mxu0 %v3019
    %8392 = vmatpush2.msra.mxu0 %v3018
    %8393 = vmatprep.subr.mxu0 %v3011
    %8394 = vmatpush2.msra.mxu0 %v3010
    %8395 = vmatprep.subr.mxu0 %v3003
    %8396 = vmatpush2.msra.mxu0 %v3002
    %8397 = vmatprep.subr.mxu0 %v2995
    %8398 = vmatpush2.msra.mxu0 %v2994
    %8399 = vmatprep.subr.mxu0 %v2987
    %8400 = vmatpush2.msra.mxu0 %v2986
    %8401 = vmatprep.subr.mxu0 %v2979
    %8402 = vmatpush2.msra.mxu0 %v2978
    %8403 = vmatprep.subr.mxu0 %v2971
    %8404 = vmatpush2.msra.mxu0 %v2970
    %8405 = vmatprep.subr.mxu0 %v2963
    %8406 = vmatpush2.msra.mxu0 %v2962
    %8407 = vmatprep.subr.mxu0 %v2955
    %8408 = vmatpush2.msra.mxu0 %v2954
    %8409 = vmatprep.subr.mxu0 %v2947
    %8410 = vmatpush2.msra.mxu0 %v2946
    %8411 = vmatprep.subr.mxu0 %v2939
    %8412 = vmatpush2.msra.mxu0 %v2938
    %8413 = vmatprep.subr.mxu0 %v2931
    %8414 = vmatpush2.msra.mxu0 %v2930
    %8415 = vmatprep.subr.mxu0 %v2923
    %8416 = vmatpush2.msra.mxu0 %v2922
    %8417 = vmatprep.mubr.f32.mxu0 %v8209
    %8418 = vmatmul.mubr.f32.gmra.mxu0 %v8181
    %v8419 = vpop.f32.mrf.mxu0
    %v8420 = vadd.f32 0.0, %v8419
    %v8421 = vpop.f32.mrf.mxu0
    %v8422 = vadd.f32 0.0, %v8421
    %8423 = vdwg.mxu0
    %8424 = vmatprep.subr.mxu0 %v2917
    %8425 = vmatpush1.msra.mxu0 %v2916
    %8426 = vmatprep.subr.mxu0 %v2909
    %8427 = vmatpush1.msra.mxu0 %v2908
    %8428 = vmatprep.subr.mxu0 %v2901
    %8429 = vmatpush1.msra.mxu0 %v2900
    %8430 = vmatprep.subr.mxu0 %v2893
    %8431 = vmatpush1.msra.mxu0 %v2892
    %8432 = vmatprep.subr.mxu0 %v2885
    %8433 = vmatpush1.msra.mxu0 %v2884
    %8434 = vmatprep.subr.mxu0 %v2877
    %8435 = vmatpush1.msra.mxu0 %v2876
    %8436 = vmatprep.subr.mxu0 %v2869
    %8437 = vmatpush1.msra.mxu0 %v2868
    %8438 = vmatprep.subr.mxu0 %v2861
    %8439 = vmatpush1.msra.mxu0 %v2860
    %8440 = vmatprep.subr.mxu0 %v2853
    %8441 = vmatpush1.msra.mxu0 %v2852
    %8442 = vmatprep.subr.mxu0 %v2845
    %8443 = vmatpush1.msra.mxu0 %v2844
    %8444 = vmatprep.subr.mxu0 %v2837
    %8445 = vmatpush1.msra.mxu0 %v2836
    %8446 = vmatprep.subr.mxu0 %v2829
    %8447 = vmatpush1.msra.mxu0 %v2828
    %8448 = vmatprep.subr.mxu0 %v2821
    %8449 = vmatpush1.msra.mxu0 %v2820
    %8450 = vmatprep.subr.mxu0 %v2813
    %8451 = vmatpush1.msra.mxu0 %v2812
    %8452 = vmatprep.subr.mxu0 %v2805
    %8453 = vmatpush1.msra.mxu0 %v2804
    %8454 = vmatprep.subr.mxu0 %v2797
    %8455 = vmatpush1.msra.mxu0 %v2796
    %8456 = vmatprep.subr.mxu0 %v3045
    %8457 = vmatpush2.msra.mxu0 %v3044
    %8458 = vmatprep.subr.mxu0 %v3037
    %8459 = vmatpush2.msra.mxu0 %v3036
    %8460 = vmatprep.subr.mxu0 %v3029
    %8461 = vmatpush2.msra.mxu0 %v3028
    %8462 = vmatprep.subr.mxu0 %v3021
    %8463 = vmatpush2.msra.mxu0 %v3020
    %8464 = vmatprep.subr.mxu0 %v3013
    %8465 = vmatpush2.msra.mxu0 %v3012
    %8466 = vmatprep.subr.mxu0 %v3005
    %8467 = vmatpush2.msra.mxu0 %v3004
    %8468 = vmatprep.subr.mxu0 %v2997
    %8469 = vmatpush2.msra.mxu0 %v2996
    %8470 = vmatprep.subr.mxu0 %v2989
    %8471 = vmatpush2.msra.mxu0 %v2988
    %8472 = vmatprep.subr.mxu0 %v2981
    %8473 = vmatpush2.msra.mxu0 %v2980
    %8474 = vmatprep.subr.mxu0 %v2973
    %8475 = vmatpush2.msra.mxu0 %v2972
    %8476 = vmatprep.subr.mxu0 %v2965
    %8477 = vmatpush2.msra.mxu0 %v2964
    %8478 = vmatprep.subr.mxu0 %v2957
    %8479 = vmatpush2.msra.mxu0 %v2956
    %8480 = vmatprep.subr.mxu0 %v2949
    %8481 = vmatpush2.msra.mxu0 %v2948
    %8482 = vmatprep.subr.mxu0 %v2941
    %8483 = vmatpush2.msra.mxu0 %v2940
    %8484 = vmatprep.subr.mxu0 %v2933
    %8485 = vmatpush2.msra.mxu0 %v2932
    %8486 = vmatprep.subr.mxu0 %v2925
    %8487 = vmatpush2.msra.mxu0 %v2924
    %8488 = vmatprep.mubr.f32.mxu0 %v8209
    %8489 = vmatmul.mubr.f32.gmra.mxu0 %v8181
    %v8490 = vpop.f32.mrf.mxu0
    %v8491 = vadd.f32 0.0, %v8490
    %v8492 = vpop.f32.mrf.mxu0
    %v8493 = vadd.f32 0.0, %v8492
    %8494 = vdwg.mxu0
    %v8495 = vld [vmem:[#allocation2 + $0x60] sm:$0xc0]
    %v8496 = vld [vmem:[#allocation2 + $0x68] sm:$0xc0]
    %v8497 = vld [vmem:[#allocation2 + $0x70] sm:$0xc0]
    %v8498 = vld [vmem:[#allocation2 + $0x78] sm:$0xc0]
    %v8503 = vrot.slane %v8495, 6
    %v8504 = vrot.slane %v8496, 6
    %v8505 = vrot.slane %v8497, 6
    %v8506 = vrot.slane %v8498, 6
    %v8511 = vadd.f32 %v8278, %v8503
    %v8512 = vadd.f32 %v8280, %v8504
    %v8513 = vadd.f32 %v8349, %v8505
    %v8514 = vadd.f32 %v8351, %v8506
    %v8515 = vxor.u32 %v8511, 2147483648
    %v8516 = vmul.f32 %v8515, 1.442695
    %v8517 = vpow.pop %v8516
    %v8518 = vadd.f32 %v8517, 1.0
    %v8519 = vrcp.pop %v8518
    %v8520 = vmul.f32 1.0, %v8519
    %v8521 = vxor.u32 %v8512, 2147483648
    %v8522 = vmul.f32 %v8521, 1.442695
    %v8523 = vpow.pop %v8522
    %v8524 = vadd.f32 %v8523, 1.0
    %v8525 = vrcp.pop %v8524
    %v8526 = vmul.f32 1.0, %v8525
    %v8527 = vtanh.pop %v8513
    %v8528 = vxor.u32 %v8514, 2147483648
    %v8529 = vmul.f32 %v8528, 1.442695
    %v8530 = vpow.pop %v8529
    %v8531 = vadd.f32 %v8530, 1.0
    %v8532 = vrcp.pop %v8531
    %v8533 = vmul.f32 1.0, %v8532
    %v8534 = vmul.f32 %v8526, %v8179
    %v8535 = vmul.f32 %v8520, %v8527
    %v8536 = vadd.f32 %v8534, %v8535
    %v8537 = vtanh.pop %v8536
    %v8538 = vmul.f32 %v8533, %v8537
    %v8539 = vadd.f32 %v8420, %v3560
    %v8540 = vadd.f32 %v8422, %v3564
    %v8541 = vadd.f32 %v8491, %v3568
    %v8542 = vadd.f32 %v8493, %v3572
    %v8543 = vxor.u32 %v8539, 2147483648
    %v8544 = vmul.f32 %v8543, 1.442695
    %v8545 = vpow.pop %v8544
    %v8546 = vadd.f32 %v8545, 1.0
    %v8547 = vrcp.pop %v8546
    %v8548 = vmul.f32 1.0, %v8547
    %v8549 = vxor.u32 %v8540, 2147483648
    %v8550 = vmul.f32 %v8549, 1.442695
    %v8551 = vpow.pop %v8550
    %v8552 = vadd.f32 %v8551, 1.0
    %v8553 = vrcp.pop %v8552
    %v8554 = vmul.f32 1.0, %v8553
    %v8555 = vtanh.pop %v8541
    %v8556 = vxor.u32 %v8542, 2147483648
    %v8557 = vmul.f32 %v8556, 1.442695
    %v8558 = vpow.pop %v8557
    %v8559 = vadd.f32 %v8558, 1.0
    %v8560 = vrcp.pop %v8559
    %v8561 = vmul.f32 1.0, %v8560
    %v8562 = vmul.f32 %v8554, %v8207
    %v8563 = vmul.f32 %v8548, %v8555
    %v8564 = vadd.f32 %v8562, %v8563
    %v8565 = vtanh.pop %v8564
    %v8566 = vmul.f32 %v8561, %v8565
    %8567 = vst [vmem:[#allocation3 + $0x1c] sm:$0x3] %v8566
    %8568 = vmatprep.subr.mxu0 %v2915
    %8569 = vmatpush1.msra.mxu0 %v2914
    %8570 = vmatprep.subr.mxu0 %v2907
    %8571 = vmatpush1.msra.mxu0 %v2906
    %8572 = vmatprep.subr.mxu0 %v2899
    %8573 = vmatpush1.msra.mxu0 %v2898
    %8574 = vmatprep.subr.mxu0 %v2891
    %8575 = vmatpush1.msra.mxu0 %v2890
    %8576 = vmatprep.subr.mxu0 %v2883
    %8577 = vmatpush1.msra.mxu0 %v2882
    %8578 = vmatprep.subr.mxu0 %v2875
    %8579 = vmatpush1.msra.mxu0 %v2874
    %8580 = vmatprep.subr.mxu0 %v2867
    %8581 = vmatpush1.msra.mxu0 %v2866
    %8582 = vmatprep.subr.mxu0 %v2859
    %8583 = vmatpush1.msra.mxu0 %v2858
    %8584 = vmatprep.subr.mxu0 %v2851
    %8585 = vmatpush1.msra.mxu0 %v2850
    %8586 = vmatprep.subr.mxu0 %v2843
    %8587 = vmatpush1.msra.mxu0 %v2842
    %8588 = vmatprep.subr.mxu0 %v2835
    %8589 = vmatpush1.msra.mxu0 %v2834
    %8590 = vmatprep.subr.mxu0 %v2827
    %8591 = vmatpush1.msra.mxu0 %v2826
    %8592 = vmatprep.subr.mxu0 %v2819
    %8593 = vmatpush1.msra.mxu0 %v2818
    %8594 = vmatprep.subr.mxu0 %v2811
    %8595 = vmatpush1.msra.mxu0 %v2810
    %8596 = vmatprep.subr.mxu0 %v2803
    %8597 = vmatpush1.msra.mxu0 %v2802
    %8598 = vmatprep.subr.mxu0 %v2795
    %8599 = vmatpush1.msra.mxu0 %v2794
    %8600 = vmatprep.subr.mxu0 %v3043
    %8601 = vmatpush2.msra.mxu0 %v3042
    %8602 = vmatprep.subr.mxu0 %v3035
    %8603 = vmatpush2.msra.mxu0 %v3034
    %8604 = vmatprep.subr.mxu0 %v3027
    %8605 = vmatpush2.msra.mxu0 %v3026
    %8606 = vmatprep.subr.mxu0 %v3019
    %8607 = vmatpush2.msra.mxu0 %v3018
    %8608 = vmatprep.subr.mxu0 %v3011
    %8609 = vmatpush2.msra.mxu0 %v3010
    %8610 = vmatprep.subr.mxu0 %v3003
    %8611 = vmatpush2.msra.mxu0 %v3002
    %8612 = vmatprep.subr.mxu0 %v2995
    %8613 = vmatpush2.msra.mxu0 %v2994
    %8614 = vmatprep.subr.mxu0 %v2987
    %8615 = vmatpush2.msra.mxu0 %v2986
    %8616 = vmatprep.subr.mxu0 %v2979
    %8617 = vmatpush2.msra.mxu0 %v2978
    %8618 = vmatprep.subr.mxu0 %v2971
    %8619 = vmatpush2.msra.mxu0 %v2970
    %8620 = vmatprep.subr.mxu0 %v2963
    %8621 = vmatpush2.msra.mxu0 %v2962
    %8622 = vmatprep.subr.mxu0 %v2955
    %8623 = vmatpush2.msra.mxu0 %v2954
    %8624 = vmatprep.subr.mxu0 %v2947
    %8625 = vmatpush2.msra.mxu0 %v2946
    %8626 = vmatprep.subr.mxu0 %v2939
    %8627 = vmatpush2.msra.mxu0 %v2938
    %8628 = vmatprep.subr.mxu0 %v2931
    %8629 = vmatpush2.msra.mxu0 %v2930
    %8630 = vmatprep.subr.mxu0 %v2923
    %8631 = vmatpush2.msra.mxu0 %v2922
    %8632 = vmatprep.mubr.f32.mxu0 %v8566
    %8633 = vmatmul.mubr.f32.gmra.mxu0 %v8538
    %v8634 = vpop.f32.mrf.mxu0
    %v8635 = vadd.f32 0.0, %v8634
    %v8636 = vpop.f32.mrf.mxu0
    %v8637 = vadd.f32 0.0, %v8636
    %8638 = vdwg.mxu0
    %8639 = vmatprep.subr.mxu0 %v2917
    %8640 = vmatpush1.msra.mxu0 %v2916
    %8641 = vmatprep.subr.mxu0 %v2909
    %8642 = vmatpush1.msra.mxu0 %v2908
    %8643 = vmatprep.subr.mxu0 %v2901
    %8644 = vmatpush1.msra.mxu0 %v2900
    %8645 = vmatprep.subr.mxu0 %v2893
    %8646 = vmatpush1.msra.mxu0 %v2892
    %8647 = vmatprep.subr.mxu0 %v2885
    %8648 = vmatpush1.msra.mxu0 %v2884
    %8649 = vmatprep.subr.mxu0 %v2877
    %8650 = vmatpush1.msra.mxu0 %v2876
    %8651 = vmatprep.subr.mxu0 %v2869
    %8652 = vmatpush1.msra.mxu0 %v2868
    %8653 = vmatprep.subr.mxu0 %v2861
    %8654 = vmatpush1.msra.mxu0 %v2860
    %8655 = vmatprep.subr.mxu0 %v2853
    %8656 = vmatpush1.msra.mxu0 %v2852
    %8657 = vmatprep.subr.mxu0 %v2845
    %8658 = vmatpush1.msra.mxu0 %v2844
    %8659 = vmatprep.subr.mxu0 %v2837
    %8660 = vmatpush1.msra.mxu0 %v2836
    %8661 = vmatprep.subr.mxu0 %v2829
    %8662 = vmatpush1.msra.mxu0 %v2828
    %8663 = vmatprep.subr.mxu0 %v2821
    %8664 = vmatpush1.msra.mxu0 %v2820
    %8665 = vmatprep.subr.mxu0 %v2813
    %8666 = vmatpush1.msra.mxu0 %v2812
    %8667 = vmatprep.subr.mxu0 %v2805
    %8668 = vmatpush1.msra.mxu0 %v2804
    %8669 = vmatprep.subr.mxu0 %v2797
    %8670 = vmatpush1.msra.mxu0 %v2796
    %8671 = vmatprep.subr.mxu0 %v3045
    %8672 = vmatpush2.msra.mxu0 %v3044
    %8673 = vmatprep.subr.mxu0 %v3037
    %8674 = vmatpush2.msra.mxu0 %v3036
    %8675 = vmatprep.subr.mxu0 %v3029
    %8676 = vmatpush2.msra.mxu0 %v3028
    %8677 = vmatprep.subr.mxu0 %v3021
    %8678 = vmatpush2.msra.mxu0 %v3020
    %8679 = vmatprep.subr.mxu0 %v3013
    %8680 = vmatpush2.msra.mxu0 %v3012
    %8681 = vmatprep.subr.mxu0 %v3005
    %8682 = vmatpush2.msra.mxu0 %v3004
    %8683 = vmatprep.subr.mxu0 %v2997
    %8684 = vmatpush2.msra.mxu0 %v2996
    %8685 = vmatprep.subr.mxu0 %v2989
    %8686 = vmatpush2.msra.mxu0 %v2988
    %8687 = vmatprep.subr.mxu0 %v2981
    %8688 = vmatpush2.msra.mxu0 %v2980
    %8689 = vmatprep.subr.mxu0 %v2973
    %8690 = vmatpush2.msra.mxu0 %v2972
    %8691 = vmatprep.subr.mxu0 %v2965
    %8692 = vmatpush2.msra.mxu0 %v2964
    %8693 = vmatprep.subr.mxu0 %v2957
    %8694 = vmatpush2.msra.mxu0 %v2956
    %8695 = vmatprep.subr.mxu0 %v2949
    %8696 = vmatpush2.msra.mxu0 %v2948
    %8697 = vmatprep.subr.mxu0 %v2941
    %8698 = vmatpush2.msra.mxu0 %v2940
    %8699 = vmatprep.subr.mxu0 %v2933
    %8700 = vmatpush2.msra.mxu0 %v2932
    %8701 = vmatprep.subr.mxu0 %v2925
    %8702 = vmatpush2.msra.mxu0 %v2924
    %8703 = vmatprep.mubr.f32.mxu0 %v8566
    %8704 = vmatmul.mubr.f32.gmra.mxu0 %v8538
    %v8705 = vpop.f32.mrf.mxu0
    %v8706 = vadd.f32 0.0, %v8705
    %v8707 = vpop.f32.mrf.mxu0
    %v8708 = vadd.f32 0.0, %v8707
    %8709 = vdwg.mxu0
    %v8710 = vadd.f32 %v8635, %v3560
    %v8711 = vadd.f32 %v8637, %v3564
    %v8712 = vadd.f32 %v8706, %v3568
    %v8713 = vadd.f32 %v8708, %v3572
    %v8714 = vxor.u32 %v8710, 2147483648
    %v8715 = vmul.f32 %v8714, 1.442695
    %v8716 = vpow.pop %v8715
    %v8717 = vadd.f32 %v8716, 1.0
    %v8718 = vrcp.pop %v8717
    %v8719 = vmul.f32 1.0, %v8718
    %v8720 = vxor.u32 %v8711, 2147483648
    %v8721 = vmul.f32 %v8720, 1.442695
    %v8722 = vpow.pop %v8721
    %v8723 = vadd.f32 %v8722, 1.0
    %v8724 = vrcp.pop %v8723
    %v8725 = vmul.f32 1.0, %v8724
    %v8726 = vtanh.pop %v8712
    %v8727 = vxor.u32 %v8713, 2147483648
    %v8728 = vmul.f32 %v8727, 1.442695
    %v8729 = vpow.pop %v8728
    %v8730 = vadd.f32 %v8729, 1.0
    %v8731 = vrcp.pop %v8730
    %v8732 = vmul.f32 1.0, %v8731
    %v8733 = vmul.f32 %v8725, %v8564
    %v8734 = vmul.f32 %v8719, %v8726
    %v8735 = vadd.f32 %v8733, %v8734
    %v8736 = vtanh.pop %v8735
    %v8737 = vmul.f32 %v8732, %v8736
    %8738 = vst [vmem:[#allocation3 + $0x1e] sm:$0x3] %v8737
    %v8739 = vld [vmem:[#allocation3] sm:$0xff]
    %v8740 = vld [vmem:[#allocation3 + $0x8] sm:$0xff]
    %v8741 = vld [vmem:[#allocation3 + $0x10] sm:$0xff]
    %v8742 = vld [vmem:[#allocation3 + $0x18] sm:$0xff]
    %v8743 = vld [vmem:[%s5] sm:$0xff]
    %v8744 = vld [vmem:[%s5 + $0x8] sm:$0xff]
    %v8745 = vld [vmem:[%s5 + $0x10] sm:$0xff]
    %v8746 = vld [vmem:[%s5 + $0x18] sm:$0xff]
    %v8747 = vld [vmem:[%s5 + $0x20] sm:$0xff]
    %v8748 = vld [vmem:[%s5 + $0x28] sm:$0xff]
    %v8749 = vld [vmem:[%s5 + $0x30] sm:$0xff]
    %v8750 = vld [vmem:[%s5 + $0x38] sm:$0xff]
    %v8751 = vld [vmem:[%s5 + $0x40] sm:$0xff]
    %v8752 = vld [vmem:[%s5 + $0x48] sm:$0xff]
    %v8753 = vld [vmem:[%s5 + $0x50] sm:$0xff]
    %v8754 = vld [vmem:[%s5 + $0x58] sm:$0xff]
    %v8755 = vld [vmem:[%s5 + $0x60] sm:$0xff]
    %v8756 = vld [vmem:[%s5 + $0x68] sm:$0xff]
    %v8757 = vld [vmem:[%s5 + $0x70] sm:$0xff]
    %v8758 = vld [vmem:[%s5 + $0x78] sm:$0xff]
    %v8759 = vld [vmem:[%s5 + $0x80] sm:$0x1]
    %v8760 = vlaneseq
    %v8761 = vshrl.u32 %v8760, 7
    %v8762 = vsub.s32 0, %v8761
    %v8763 = vrot.slane %v8759, %v8762
    %8764 = vmatprep.subr.mxu0 0.0
    %8765 = vmatpush1.msra.mxu0 %v8758
    %8766 = vmatprep.subr.mxu0 0.0
    %8767 = vmatpush1.msra.mxu0 %v8757
    %8768 = vmatprep.subr.mxu0 0.0
    %8769 = vmatpush1.msra.mxu0 %v8756
    %8770 = vmatprep.subr.mxu0 0.0
    %8771 = vmatpush1.msra.mxu0 %v8755
    %8772 = vmatprep.subr.mxu0 0.0
    %8773 = vmatpush1.msra.mxu0 %v8754
    %8774 = vmatprep.subr.mxu0 0.0
    %8775 = vmatpush1.msra.mxu0 %v8753
    %8776 = vmatprep.subr.mxu0 0.0
    %8777 = vmatpush1.msra.mxu0 %v8752
    %8778 = vmatprep.subr.mxu0 0.0
    %8779 = vmatpush1.msra.mxu0 %v8751
    %8780 = vmatprep.subr.mxu0 0.0
    %8781 = vmatpush1.msra.mxu0 %v8750
    %8782 = vmatprep.subr.mxu0 0.0
    %8783 = vmatpush1.msra.mxu0 %v8749
    %8784 = vmatprep.subr.mxu0 0.0
    %8785 = vmatpush1.msra.mxu0 %v8748
    %8786 = vmatprep.subr.mxu0 0.0
    %8787 = vmatpush1.msra.mxu0 %v8747
    %8788 = vmatprep.subr.mxu0 0.0
    %8789 = vmatpush1.msra.mxu0 %v8746
    %8790 = vmatprep.subr.mxu0 0.0
    %8791 = vmatpush1.msra.mxu0 %v8745
    %8792 = vmatprep.subr.mxu0 0.0
    %8793 = vmatpush1.msra.mxu0 %v8744
    %8794 = vmatprep.subr.mxu0 0.0
    %8795 = vmatpush1.msra.mxu0 %v8743
    %8796 = vmatprep.subr.mxu0 0.0
    %8797 = vmatpush2.msra.mxu0 0.0
    %8798 = vmatprep.subr.mxu0 0.0
    %8799 = vmatpush2.msra.mxu0 0.0
    %8800 = vmatprep.subr.mxu0 0.0
    %8801 = vmatpush2.msra.mxu0 0.0
    %8802 = vmatprep.subr.mxu0 0.0
    %8803 = vmatpush2.msra.mxu0 0.0
    %8804 = vmatprep.subr.mxu0 0.0
    %8805 = vmatpush2.msra.mxu0 0.0
    %8806 = vmatprep.subr.mxu0 0.0
    %8807 = vmatpush2.msra.mxu0 0.0
    %8808 = vmatprep.subr.mxu0 0.0
    %8809 = vmatpush2.msra.mxu0 0.0
    %8810 = vmatprep.subr.mxu0 0.0
    %8811 = vmatpush2.msra.mxu0 0.0
    %8812 = vmatprep.subr.mxu0 0.0
    %8813 = vmatpush2.msra.mxu0 0.0
    %8814 = vmatprep.subr.mxu0 0.0
    %8815 = vmatpush2.msra.mxu0 0.0
    %8816 = vmatprep.subr.mxu0 0.0
    %8817 = vmatpush2.msra.mxu0 0.0
    %8818 = vmatprep.subr.mxu0 0.0
    %8819 = vmatpush2.msra.mxu0 0.0
    %8820 = vmatprep.subr.mxu0 0.0
    %8821 = vmatpush2.msra.mxu0 0.0
    %8822 = vmatprep.subr.mxu0 0.0
    %8823 = vmatpush2.msra.mxu0 0.0
    %8824 = vmatprep.subr.mxu0 0.0
    %8825 = vmatpush2.msra.mxu0 0.0
    %8826 = vmatprep.subr.mxu0 0.0
    %8827 = vmatpush2.msra.mxu0 0.0
    %8828 = vmatprep.mubr.f32.mxu0 0.0
    %8829 = vmatmul.mubr.f32.gmra.mxu0 %v8739
    %v8830 = vpop.f32.mrf.mxu0
    %v8831 = vadd.f32 %v8763, %v8830
    %v8832 = vpop.f32.mrf.mxu0
    %8833 = vmatprep.mubr.f32.mxu0 0.0
    %8834 = vmatmul.mubr.f32.gmra.mxu0 %v8740
    %v8835 = vpop.f32.mrf.mxu0
    %v8836 = vadd.f32 %v8763, %v8835
    %v8837 = vpop.f32.mrf.mxu0
    %8838 = vmatprep.mubr.f32.mxu0 0.0
    %8839 = vmatmul.mubr.f32.gmra.mxu0 %v8741
    %v8840 = vpop.f32.mrf.mxu0
    %v8841 = vadd.f32 %v8763, %v8840
    %v8842 = vpop.f32.mrf.mxu0
    %8843 = vmatprep.mubr.f32.mxu0 0.0
    %8844 = vmatmul.mubr.f32.gmra.mxu0 %v8742
    %v8845 = vpop.f32.mrf.mxu0
    %v8846 = vadd.f32 %v8763, %v8845
    %v8847 = vpop.f32.mrf.mxu0
    %8848 = vdwg.mxu0
    %vm8849 = vcmask 64512
    %8850 = vst.msk [vmem:[%s8] sm:$0xff] %vm8849, %v8831
    %8851 = vst.msk [vmem:[%s8 + $0x8] sm:$0xff] %vm8849, %v8836
    %8852 = vst.msk [vmem:[%s8 + $0x10] sm:$0xff] %vm8849, %v8841
    %8853 = vst.msk [vmem:[%s8 + $0x18] sm:$0xff] %vm8849, %v8846
    // Predicated region
    $region42: #{rbm_lstm_forward.1} parent=1 // pred_check
      _
    $region43: #{rbm_lstm_forward.1} parent=1 // pred_check_branch
      %8855 = sbr.rel (0) target = $region45
    $region44: #{rbm_lstm_forward.1} parent=1 // pred_region
      _
    $region45: #{rbm_lstm_forward.1} parent=1 // pred_fallthru
      _
    // Predicated region
    $region46: #{rbm_lstm_forward.1} parent=1 // pred_check
      _
    $region47: #{rbm_lstm_forward.1} parent=1 // pred_check_branch
      %8857 = sbr.rel (0) target = $region49
    $region48: #{rbm_lstm_forward.1} parent=1 // pred_region
      _
    $region49: #{rbm_lstm_forward.1} parent=1 // pred_fallthru
      _
    %8858 = vsyncpa [#allocation5], 1
    %8859 = vsyncpa [#allocation7], 1

</llo_original>
